<compile_context>
chip_gen: v7x
topology: tpu7x:2x2x1
jax: 0.10.0
libtpu: 0.0.40
codegen_flags: <defaults>
</compile_context>

<pallas_src>
import jax
import jax.numpy as jnp
from jax.experimental import pallas as pl
from jax.experimental.pallas import tpu as pltpu

# ---- testModel3 config ----
C_IN = 256
C_OUT = 512
KH = KW = 3
GROUPS = 4
CG_IN = C_IN // GROUPS       # 64
CG_OUT = C_OUT // GROUPS     # 128
G_PAIRS = GROUPS // 2        # process 2 groups (256 output lanes) per grid step


def _make_kernel(W, HW, M_ROWS):
    """Kernel closure over static spatial sizes.

    Refs per grid step (one image, one pair of groups):
      x_ref: (1, 2, HW, CG_IN)          bf16  channels-last, spatially flattened
      w_ref: (2, KH*KW, CG_IN, CG_OUT)  bf16
      b_ref: (1, 1, 2*CG_OUT)           f32
      o_ref: (1, M_ROWS, 2*CG_OUT)      f32   rows m = oh*W + ow (cols ow >= OW are junk)
    """
    def kernel(x_ref, w_ref, b_ref, o_ref):
        # Bias init of the whole block (hoisted out of the tap loops; also covers
        # the junk columns that get sliced away outside).
        o_ref[0] = jnp.broadcast_to(b_ref[0], (M_ROWS, 2 * CG_OUT))
        for gg in range(2):                        # the two groups of this pair
            c0 = gg * CG_OUT
            for kh in range(KH):
                for kw in range(KW):
                    off = kh * W + kw              # shifted-row offset of this tap
                    rows = min(M_ROWS, HW - off)   # clamp; truncated rows are junk outputs
                    lhs = x_ref[0, gg, off:off + rows, :]          # (rows, CG_IN) bf16
                    w_tap = w_ref[gg, kh * KW + kw]                # (CG_IN, CG_OUT) bf16
                    o_ref[0, 0:rows, c0:c0 + CG_OUT] += jnp.dot(
                        lhs, w_tap, preferred_element_type=jnp.float32)
    return kernel


@jax.jit
def grouped_conv2d_pallas(x, weight, bias):
    """Grouped VALID 3x3 conv, stride 1.  x: (N, C_IN, H, W) NCHW f32 -> NCHW f32."""
    N, C, H, W = x.shape
    assert C == C_IN
    OH, OW = H - KH + 1, W - KW + 1
    HW = H * W
    M_ROWS = OH * W            # rows computed per image (ow >= OW columns discarded)

    # ---- light JAX glue (no patch materialization) ----
    # x -> (N, GROUPS, H*W, CG_IN) channels-last per group, bf16.
    x_g = x.reshape(N, GROUPS, CG_IN, H, W)
    x_g = jnp.transpose(x_g, (0, 1, 3, 4, 2)).reshape(N, GROUPS, HW, CG_IN)
    x_g = x_g.astype(jnp.bfloat16)
    # weight (C_OUT, CG_IN, KH, KW) -> (GROUPS, KH*KW, CG_IN, CG_OUT), bf16.
    w_g = weight.reshape(GROUPS, CG_OUT, CG_IN, KH, KW)
    w_g = jnp.transpose(w_g, (0, 3, 4, 2, 1)).reshape(GROUPS, KH * KW, CG_IN, CG_OUT)
    w_g = w_g.astype(jnp.bfloat16)
    # bias (C_OUT,) -> (G_PAIRS, 1, 2*CG_OUT), kept f32.
    b_g = bias.astype(jnp.float32).reshape(G_PAIRS, 1, 2 * CG_OUT)

    kernel = _make_kernel(W, HW, M_ROWS)

    flops = 2 * N * GROUPS * M_ROWS * (CG_IN * KH * KW) * CG_OUT
    bytes_accessed = (x_g.size * 2 + w_g.size * 2 + b_g.size * 4
                      + N * M_ROWS * C_OUT * 4)

    out_flat = pl.pallas_call(
        kernel,
        out_shape=jax.ShapeDtypeStruct((N, M_ROWS, C_OUT), jnp.float32),
        grid_spec=pl.GridSpec(
            grid=(G_PAIRS, N),   # inner axis = batch; weights stay resident across it
            in_specs=[
                pl.BlockSpec((1, 2, HW, CG_IN), lambda gp, n: (n, gp, 0, 0)),
                pl.BlockSpec((2, KH * KW, CG_IN, CG_OUT), lambda gp, n: (gp, 0, 0, 0)),
                pl.BlockSpec((1, 1, 2 * CG_OUT), lambda gp, n: (gp, 0, 0)),
            ],
            out_specs=pl.BlockSpec((1, M_ROWS, 2 * CG_OUT), lambda gp, n: (n, 0, gp)),
        ),
        compiler_params=pltpu.CompilerParams(
            dimension_semantics=("parallel", "parallel")),
        cost_estimate=pl.CostEstimate(
            flops=flops, transcendentals=0, bytes_accessed=bytes_accessed),
    )(x_g, w_g, b_g)

    # ---- drop junk columns + single permute back to NCHW ----
    out = out_flat.reshape(N, OH, W, C_OUT)[:, :, :OW, :]    # (N, OH, OW, C_OUT)
    return jnp.transpose(out, (0, 3, 1, 2))                  # (N, C_OUT, OH, OW)


def _reference_conv(x, weight, bias):
    y = jax.lax.conv_general_dilated(
        x, weight, window_strides=(1, 1), padding="VALID",
        dimension_numbers=("NCHW", "OIHW", "NCHW"),
        feature_group_count=GROUPS)
    return y + bias[None, :, None, None]


if __name__ == "__main__":
    key = jax.random.PRNGKey(0)
    kx, kw_, kb = jax.random.split(key, 3)

    # small but consistent shapes: batch=2, 16x16 spatial -> 14x14 output
    x = jax.random.normal(kx, (2, C_IN, 16, 16), dtype=jnp.float32)
    weight = jax.random.normal(kw_, (C_OUT, CG_IN, KH, KW), dtype=jnp.float32) * 0.05
    bias = jax.random.normal(kb, (C_OUT,), dtype=jnp.float32) * 0.1

    y = jax.block_until_ready(grouped_conv2d_pallas(x, weight, bias))
    y_ref = jax.block_until_ready(_reference_conv(x, weight, bias))

    assert y.shape == (2, C_OUT, 14, 14), y.shape
    max_err = float(jnp.max(jnp.abs(y - y_ref)))
    # bf16 inputs/weights with f32 accumulation over K=576 -> loosened tolerance.
    assert jnp.allclose(y, y_ref, atol=5e-2, rtol=5e-2), max_err
    print("KERNEL_OK")
</pallas_src>

<mosaic_0001>
module attributes {stable_mosaic.version = 11 : i64} {
  func.func @kernel(%arg0: i32, %arg1: i32, %arg2: memref<1x2x256x64xbf16, #tpu.memory_space<vmem>>, %arg3: memref<2x9x64x128xbf16, #tpu.memory_space<vmem>>, %arg4: memref<1x1x256xf32, #tpu.memory_space<vmem>>, %arg5: memref<1x224x256xf32, #tpu.memory_space<vmem>>) attributes {dimension_semantics = [#tpu.dimension_semantics<parallel>, #tpu.dimension_semantics<parallel>], iteration_bounds = array<i64: 2, 2>, scalar_prefetch = 0 : i64, scratch_operands = 0 : i64, tpu.core_type = #tpu.core_type<tc>, window_params = [{transform_indices = @transform_0, window_bounds = array<i64: 1, 2, 256, 64>}, {transform_indices = @transform_1, window_bounds = array<i64: 2, 9, 64, 128>}, {transform_indices = @transform_2, window_bounds = array<i64: 1, 1, 256>}, {transform_indices = @transform_3, window_bounds = array<i64: 1, 224, 256>}]} {
    %c0 = arith.constant 0 : index
    %c0_0 = arith.constant 0 : index
    %c0_1 = arith.constant 0 : index
    %0 = vector.load %arg4[%c0, %c0_0, %c0_1] : memref<1x1x256xf32, #tpu.memory_space<vmem>>, vector<1x1x256xf32>
    %1 = vector.shape_cast %0 : vector<1x1x256xf32> to vector<1x256xf32>
    %2 = vector.shape_cast %1 : vector<1x256xf32> to vector<1x256xf32>
    %3 = vector.broadcast %2 : vector<1x256xf32> to vector<224x256xf32>
    %c0_2 = arith.constant 0 : index
    %c0_3 = arith.constant 0 : index
    %c0_4 = arith.constant 0 : index
    %4 = vector.load %arg5[%c0_2, %c0_3, %c0_4] : memref<1x224x256xf32, #tpu.memory_space<vmem>>, vector<1x224x256xf32>
    %5 = vector.shape_cast %4 : vector<1x224x256xf32> to vector<224x256xf32>
    %6 = vector.shape_cast %3 : vector<224x256xf32> to vector<1x224x256xf32>
    tpu.vector_store %arg5[%c0_2, %c0_3, %c0_4], %6 {strides = array<i32>} : memref<1x224x256xf32, #tpu.memory_space<vmem>>, vector<1x224x256xf32>,
    %c0_5 = arith.constant 0 : index
    %c0_6 = arith.constant 0 : index
    %c0_7 = arith.constant 0 : index
    %c0_8 = arith.constant 0 : index
    %7 = vector.load %arg2[%c0_5, %c0_6, %c0_7, %c0_8] : memref<1x2x256x64xbf16, #tpu.memory_space<vmem>>, vector<1x1x224x64xbf16>
    %8 = vector.shape_cast %7 : vector<1x1x224x64xbf16> to vector<224x64xbf16>
    %c0_9 = arith.constant 0 : index
    %c0_10 = arith.constant 0 : index
    %c0_11 = arith.constant 0 : index
    %c0_12 = arith.constant 0 : index
    %9 = vector.load %arg3[%c0_9, %c0_10, %c0_11, %c0_12] : memref<2x9x64x128xbf16, #tpu.memory_space<vmem>>, vector<1x1x64x128xbf16>
    %10 = vector.shape_cast %9 : vector<1x1x64x128xbf16> to vector<64x128xbf16>
    %c0_13 = arith.constant 0 : index
    %c0_14 = arith.constant 0 : index
    %c0_15 = arith.constant 0 : index
    %11 = vector.load %arg5[%c0_13, %c0_14, %c0_15] : memref<1x224x256xf32, #tpu.memory_space<vmem>>, vector<1x224x128xf32>
    %12 = vector.shape_cast %11 : vector<1x224x128xf32> to vector<224x128xf32>
    %cst = arith.constant dense<0.000000e+00> : vector<224x128xf32>
    %13 = tpu.matmul %8, %10, %cst {dimension_numbers = #tpu.dot_dimension_numbers<[1], [0], [0], [1], [0, 0, 1, 1], [], []>} : vector<224x64xbf16>, vector<64x128xbf16>, vector<224x128xf32> -> vector<224x128xf32>
    %14 = arith.addf %12, %13 : vector<224x128xf32>
    %c0_16 = arith.constant 0 : index
    %c0_17 = arith.constant 0 : index
    %c0_18 = arith.constant 0 : index
    %15 = vector.load %arg5[%c0_16, %c0_17, %c0_18] : memref<1x224x256xf32, #tpu.memory_space<vmem>>, vector<1x224x128xf32>
    %16 = vector.shape_cast %15 : vector<1x224x128xf32> to vector<224x128xf32>
    %17 = vector.shape_cast %14 : vector<224x128xf32> to vector<1x224x128xf32>
    tpu.vector_store %arg5[%c0_16, %c0_17, %c0_18], %17 {strides = array<i32>} : memref<1x224x256xf32, #tpu.memory_space<vmem>>, vector<1x224x128xf32>,
    %c0_19 = arith.constant 0 : index
    %c0_20 = arith.constant 0 : index
    %c1 = arith.constant 1 : index
    %c0_21 = arith.constant 0 : index
    %18 = vector.load %arg2[%c0_19, %c0_20, %c1, %c0_21] : memref<1x2x256x64xbf16, #tpu.memory_space<vmem>>, vector<1x1x224x64xbf16>
    %19 = vector.shape_cast %18 : vector<1x1x224x64xbf16> to vector<224x64xbf16>
    %c0_22 = arith.constant 0 : index
    %c1_23 = arith.constant 1 : index
    %c0_24 = arith.constant 0 : index
    %c0_25 = arith.constant 0 : index
    %20 = vector.load %arg3[%c0_22, %c1_23, %c0_24, %c0_25] : memref<2x9x64x128xbf16, #tpu.memory_space<vmem>>, vector<1x1x64x128xbf16>
    %21 = vector.shape_cast %20 : vector<1x1x64x128xbf16> to vector<64x128xbf16>
    %c0_26 = arith.constant 0 : index
    %c0_27 = arith.constant 0 : index
    %c0_28 = arith.constant 0 : index
    %22 = vector.load %arg5[%c0_26, %c0_27, %c0_28] : memref<1x224x256xf32, #tpu.memory_space<vmem>>, vector<1x224x128xf32>
    %23 = vector.shape_cast %22 : vector<1x224x128xf32> to vector<224x128xf32>
    %cst_29 = arith.constant dense<0.000000e+00> : vector<224x128xf32>
    %24 = tpu.matmul %19, %21, %cst_29 {dimension_numbers = #tpu.dot_dimension_numbers<[1], [0], [0], [1], [0, 0, 1, 1], [], []>} : vector<224x64xbf16>, vector<64x128xbf16>, vector<224x128xf32> -> vector<224x128xf32>
    %25 = arith.addf %23, %24 : vector<224x128xf32>
    %c0_30 = arith.constant 0 : index
    %c0_31 = arith.constant 0 : index
    %c0_32 = arith.constant 0 : index
    %26 = vector.load %arg5[%c0_30, %c0_31, %c0_32] : memref<1x224x256xf32, #tpu.memory_space<vmem>>, vector<1x224x128xf32>
    %27 = vector.shape_cast %26 : vector<1x224x128xf32> to vector<224x128xf32>
    %28 = vector.shape_cast %25 : vector<224x128xf32> to vector<1x224x128xf32>
    tpu.vector_store %arg5[%c0_30, %c0_31, %c0_32], %28 {strides = array<i32>} : memref<1x224x256xf32, #tpu.memory_space<vmem>>, vector<1x224x128xf32>,
    %c0_33 = arith.constant 0 : index
    %c0_34 = arith.constant 0 : index
    %c2 = arith.constant 2 : index
    %c0_35 = arith.constant 0 : index
    %29 = vector.load %arg2[%c0_33, %c0_34, %c2, %c0_35] : memref<1x2x256x64xbf16, #tpu.memory_space<vmem>>, vector<1x1x224x64xbf16>
    %30 = vector.shape_cast %29 : vector<1x1x224x64xbf16> to vector<224x64xbf16>
    %c0_36 = arith.constant 0 : index
    %c2_37 = arith.constant 2 : index
    %c0_38 = arith.constant 0 : index
    %c0_39 = arith.constant 0 : index
    %31 = vector.load %arg3[%c0_36, %c2_37, %c0_38, %c0_39] : memref<2x9x64x128xbf16, #tpu.memory_space<vmem>>, vector<1x1x64x128xbf16>
    %32 = vector.shape_cast %31 : vector<1x1x64x128xbf16> to vector<64x128xbf16>
    %c0_40 = arith.constant 0 : index
    %c0_41 = arith.constant 0 : index
    %c0_42 = arith.constant 0 : index
    %33 = vector.load %arg5[%c0_40, %c0_41, %c0_42] : memref<1x224x256xf32, #tpu.memory_space<vmem>>, vector<1x224x128xf32>
    %34 = vector.shape_cast %33 : vector<1x224x128xf32> to vector<224x128xf32>
    %cst_43 = arith.constant dense<0.000000e+00> : vector<224x128xf32>
    %35 = tpu.matmul %30, %32, %cst_43 {dimension_numbers = #tpu.dot_dimension_numbers<[1], [0], [0], [1], [0, 0, 1, 1], [], []>} : vector<224x64xbf16>, vector<64x128xbf16>, vector<224x128xf32> -> vector<224x128xf32>
    %36 = arith.addf %34, %35 : vector<224x128xf32>
    %c0_44 = arith.constant 0 : index
    %c0_45 = arith.constant 0 : index
    %c0_46 = arith.constant 0 : index
    %37 = vector.load %arg5[%c0_44, %c0_45, %c0_46] : memref<1x224x256xf32, #tpu.memory_space<vmem>>, vector<1x224x128xf32>
    %38 = vector.shape_cast %37 : vector<1x224x128xf32> to vector<224x128xf32>
    %39 = vector.shape_cast %36 : vector<224x128xf32> to vector<1x224x128xf32>
    tpu.vector_store %arg5[%c0_44, %c0_45, %c0_46], %39 {strides = array<i32>} : memref<1x224x256xf32, #tpu.memory_space<vmem>>, vector<1x224x128xf32>,
    %c0_47 = arith.constant 0 : index
    %c0_48 = arith.constant 0 : index
    %c16 = arith.constant 16 : index
    %c0_49 = arith.constant 0 : index
    %40 = vector.load %arg2[%c0_47, %c0_48, %c16, %c0_49] : memref<1x2x256x64xbf16, #tpu.memory_space<vmem>>, vector<1x1x224x64xbf16>
    %41 = vector.shape_cast %40 : vector<1x1x224x64xbf16> to vector<224x64xbf16>
    %c0_50 = arith.constant 0 : index
    %c3 = arith.constant 3 : index
    %c0_51 = arith.constant 0 : index
    %c0_52 = arith.constant 0 : index
    %42 = vector.load %arg3[%c0_50, %c3, %c0_51, %c0_52] : memref<2x9x64x128xbf16, #tpu.memory_space<vmem>>, vector<1x1x64x128xbf16>
    %43 = vector.shape_cast %42 : vector<1x1x64x128xbf16> to vector<64x128xbf16>
    %c0_53 = arith.constant 0 : index
    %c0_54 = arith.constant 0 : index
    %c0_55 = arith.constant 0 : index
    %44 = vector.load %arg5[%c0_53, %c0_54, %c0_55] : memref<1x224x256xf32, #tpu.memory_space<vmem>>, vector<1x224x128xf32>
    %45 = vector.shape_cast %44 : vector<1x224x128xf32> to vector<224x128xf32>
    %cst_56 = arith.constant dense<0.000000e+00> : vector<224x128xf32>
    %46 = tpu.matmul %41, %43, %cst_56 {dimension_numbers = #tpu.dot_dimension_numbers<[1], [0], [0], [1], [0, 0, 1, 1], [], []>} : vector<224x64xbf16>, vector<64x128xbf16>, vector<224x128xf32> -> vector<224x128xf32>
    %47 = arith.addf %45, %46 : vector<224x128xf32>
    %c0_57 = arith.constant 0 : index
    %c0_58 = arith.constant 0 : index
    %c0_59 = arith.constant 0 : index
    %48 = vector.load %arg5[%c0_57, %c0_58, %c0_59] : memref<1x224x256xf32, #tpu.memory_space<vmem>>, vector<1x224x128xf32>
    %49 = vector.shape_cast %48 : vector<1x224x128xf32> to vector<224x128xf32>
    %50 = vector.shape_cast %47 : vector<224x128xf32> to vector<1x224x128xf32>
    tpu.vector_store %arg5[%c0_57, %c0_58, %c0_59], %50 {strides = array<i32>} : memref<1x224x256xf32, #tpu.memory_space<vmem>>, vector<1x224x128xf32>,
    %c0_60 = arith.constant 0 : index
    %c0_61 = arith.constant 0 : index
    %c17 = arith.constant 17 : index
    %c0_62 = arith.constant 0 : index
    %51 = vector.load %arg2[%c0_60, %c0_61, %c17, %c0_62] : memref<1x2x256x64xbf16, #tpu.memory_space<vmem>>, vector<1x1x224x64xbf16>
    %52 = vector.shape_cast %51 : vector<1x1x224x64xbf16> to vector<224x64xbf16>
    %c0_63 = arith.constant 0 : index
    %c4 = arith.constant 4 : index
    %c0_64 = arith.constant 0 : index
    %c0_65 = arith.constant 0 : index
    %53 = vector.load %arg3[%c0_63, %c4, %c0_64, %c0_65] : memref<2x9x64x128xbf16, #tpu.memory_space<vmem>>, vector<1x1x64x128xbf16>
    %54 = vector.shape_cast %53 : vector<1x1x64x128xbf16> to vector<64x128xbf16>
    %c0_66 = arith.constant 0 : index
    %c0_67 = arith.constant 0 : index
    %c0_68 = arith.constant 0 : index
    %55 = vector.load %arg5[%c0_66, %c0_67, %c0_68] : memref<1x224x256xf32, #tpu.memory_space<vmem>>, vector<1x224x128xf32>
    %56 = vector.shape_cast %55 : vector<1x224x128xf32> to vector<224x128xf32>
    %cst_69 = arith.constant dense<0.000000e+00> : vector<224x128xf32>
    %57 = tpu.matmul %52, %54, %cst_69 {dimension_numbers = #tpu.dot_dimension_numbers<[1], [0], [0], [1], [0, 0, 1, 1], [], []>} : vector<224x64xbf16>, vector<64x128xbf16>, vector<224x128xf32> -> vector<224x128xf32>
    %58 = arith.addf %56, %57 : vector<224x128xf32>
    %c0_70 = arith.constant 0 : index
    %c0_71 = arith.constant 0 : index
    %c0_72 = arith.constant 0 : index
    %59 = vector.load %arg5[%c0_70, %c0_71, %c0_72] : memref<1x224x256xf32, #tpu.memory_space<vmem>>, vector<1x224x128xf32>
    %60 = vector.shape_cast %59 : vector<1x224x128xf32> to vector<224x128xf32>
    %61 = vector.shape_cast %58 : vector<224x128xf32> to vector<1x224x128xf32>
    tpu.vector_store %arg5[%c0_70, %c0_71, %c0_72], %61 {strides = array<i32>} : memref<1x224x256xf32, #tpu.memory_space<vmem>>, vector<1x224x128xf32>,
    %c0_73 = arith.constant 0 : index
    %c0_74 = arith.constant 0 : index
    %c18 = arith.constant 18 : index
    %c0_75 = arith.constant 0 : index
    %62 = vector.load %arg2[%c0_73, %c0_74, %c18, %c0_75] : memref<1x2x256x64xbf16, #tpu.memory_space<vmem>>, vector<1x1x224x64xbf16>
    %63 = vector.shape_cast %62 : vector<1x1x224x64xbf16> to vector<224x64xbf16>
    %c0_76 = arith.constant 0 : index
    %c5 = arith.constant 5 : index
    %c0_77 = arith.constant 0 : index
    %c0_78 = arith.constant 0 : index
    %64 = vector.load %arg3[%c0_76, %c5, %c0_77, %c0_78] : memref<2x9x64x128xbf16, #tpu.memory_space<vmem>>, vector<1x1x64x128xbf16>
    %65 = vector.shape_cast %64 : vector<1x1x64x128xbf16> to vector<64x128xbf16>
    %c0_79 = arith.constant 0 : index
    %c0_80 = arith.constant 0 : index
    %c0_81 = arith.constant 0 : index
    %66 = vector.load %arg5[%c0_79, %c0_80, %c0_81] : memref<1x224x256xf32, #tpu.memory_space<vmem>>, vector<1x224x128xf32>
    %67 = vector.shape_cast %66 : vector<1x224x128xf32> to vector<224x128xf32>
    %cst_82 = arith.constant dense<0.000000e+00> : vector<224x128xf32>
    %68 = tpu.matmul %63, %65, %cst_82 {dimension_numbers = #tpu.dot_dimension_numbers<[1], [0], [0], [1], [0, 0, 1, 1], [], []>} : vector<224x64xbf16>, vector<64x128xbf16>, vector<224x128xf32> -> vector<224x128xf32>
    %69 = arith.addf %67, %68 : vector<224x128xf32>
    %c0_83 = arith.constant 0 : index
    %c0_84 = arith.constant 0 : index
    %c0_85 = arith.constant 0 : index
    %70 = vector.load %arg5[%c0_83, %c0_84, %c0_85] : memref<1x224x256xf32, #tpu.memory_space<vmem>>, vector<1x224x128xf32>
    %71 = vector.shape_cast %70 : vector<1x224x128xf32> to vector<224x128xf32>
    %72 = vector.shape_cast %69 : vector<224x128xf32> to vector<1x224x128xf32>
    tpu.vector_store %arg5[%c0_83, %c0_84, %c0_85], %72 {strides = array<i32>} : memref<1x224x256xf32, #tpu.memory_space<vmem>>, vector<1x224x128xf32>,
    %c0_86 = arith.constant 0 : index
    %c0_87 = arith.constant 0 : index
    %c32 = arith.constant 32 : index
    %c0_88 = arith.constant 0 : index
    %73 = vector.load %arg2[%c0_86, %c0_87, %c32, %c0_88] : memref<1x2x256x64xbf16, #tpu.memory_space<vmem>>, vector<1x1x224x64xbf16>
    %74 = vector.shape_cast %73 : vector<1x1x224x64xbf16> to vector<224x64xbf16>
    %c0_89 = arith.constant 0 : index
    %c6 = arith.constant 6 : index
    %c0_90 = arith.constant 0 : index
    %c0_91 = arith.constant 0 : index
    %75 = vector.load %arg3[%c0_89, %c6, %c0_90, %c0_91] : memref<2x9x64x128xbf16, #tpu.memory_space<vmem>>, vector<1x1x64x128xbf16>
    %76 = vector.shape_cast %75 : vector<1x1x64x128xbf16> to vector<64x128xbf16>
    %c0_92 = arith.constant 0 : index
    %c0_93 = arith.constant 0 : index
    %c0_94 = arith.constant 0 : index
    %77 = vector.load %arg5[%c0_92, %c0_93, %c0_94] : memref<1x224x256xf32, #tpu.memory_space<vmem>>, vector<1x224x128xf32>
    %78 = vector.shape_cast %77 : vector<1x224x128xf32> to vector<224x128xf32>
    %cst_95 = arith.constant dense<0.000000e+00> : vector<224x128xf32>
    %79 = tpu.matmul %74, %76, %cst_95 {dimension_numbers = #tpu.dot_dimension_numbers<[1], [0], [0], [1], [0, 0, 1, 1], [], []>} : vector<224x64xbf16>, vector<64x128xbf16>, vector<224x128xf32> -> vector<224x128xf32>
    %80 = arith.addf %78, %79 : vector<224x128xf32>
    %c0_96 = arith.constant 0 : index
    %c0_97 = arith.constant 0 : index
    %c0_98 = arith.constant 0 : index
    %81 = vector.load %arg5[%c0_96, %c0_97, %c0_98] : memref<1x224x256xf32, #tpu.memory_space<vmem>>, vector<1x224x128xf32>
    %82 = vector.shape_cast %81 : vector<1x224x128xf32> to vector<224x128xf32>
    %83 = vector.shape_cast %80 : vector<224x128xf32> to vector<1x224x128xf32>
    tpu.vector_store %arg5[%c0_96, %c0_97, %c0_98], %83 {strides = array<i32>} : memref<1x224x256xf32, #tpu.memory_space<vmem>>, vector<1x224x128xf32>,
    %c0_99 = arith.constant 0 : index
    %c0_100 = arith.constant 0 : index
    %c33 = arith.constant 33 : index
    %c0_101 = arith.constant 0 : index
    %84 = vector.load %arg2[%c0_99, %c0_100, %c33, %c0_101] : memref<1x2x256x64xbf16, #tpu.memory_space<vmem>>, vector<1x1x223x64xbf16>
    %85 = vector.shape_cast %84 : vector<1x1x223x64xbf16> to vector<223x64xbf16>
    %c0_102 = arith.constant 0 : index
    %c7 = arith.constant 7 : index
    %c0_103 = arith.constant 0 : index
    %c0_104 = arith.constant 0 : index
    %86 = vector.load %arg3[%c0_102, %c7, %c0_103, %c0_104] : memref<2x9x64x128xbf16, #tpu.memory_space<vmem>>, vector<1x1x64x128xbf16>
    %87 = vector.shape_cast %86 : vector<1x1x64x128xbf16> to vector<64x128xbf16>
    %c0_105 = arith.constant 0 : index
    %c0_106 = arith.constant 0 : index
    %c0_107 = arith.constant 0 : index
    %88 = vector.load %arg5[%c0_105, %c0_106, %c0_107] : memref<1x224x256xf32, #tpu.memory_space<vmem>>, vector<1x223x128xf32>
    %89 = vector.shape_cast %88 : vector<1x223x128xf32> to vector<223x128xf32>
    %cst_108 = arith.constant dense<0.000000e+00> : vector<223x128xf32>
    %90 = tpu.matmul %85, %87, %cst_108 {dimension_numbers = #tpu.dot_dimension_numbers<[1], [0], [0], [1], [0, 0, 1, 1], [], []>} : vector<223x64xbf16>, vector<64x128xbf16>, vector<223x128xf32> -> vector<223x128xf32>
    %91 = arith.addf %89, %90 : vector<223x128xf32>
    %c0_109 = arith.constant 0 : index
    %c0_110 = arith.constant 0 : index
    %c0_111 = arith.constant 0 : index
    %92 = vector.load %arg5[%c0_109, %c0_110, %c0_111] : memref<1x224x256xf32, #tpu.memory_space<vmem>>, vector<1x223x128xf32>
    %93 = vector.shape_cast %92 : vector<1x223x128xf32> to vector<223x128xf32>
    %94 = vector.shape_cast %91 : vector<223x128xf32> to vector<1x223x128xf32>
    tpu.vector_store %arg5[%c0_109, %c0_110, %c0_111], %94 {strides = array<i32>} : memref<1x224x256xf32, #tpu.memory_space<vmem>>, vector<1x223x128xf32>,
    %c0_112 = arith.constant 0 : index
    %c0_113 = arith.constant 0 : index
    %c34 = arith.constant 34 : index
    %c0_114 = arith.constant 0 : index
    %95 = vector.load %arg2[%c0_112, %c0_113, %c34, %c0_114] : memref<1x2x256x64xbf16, #tpu.memory_space<vmem>>, vector<1x1x222x64xbf16>
    %96 = vector.shape_cast %95 : vector<1x1x222x64xbf16> to vector<222x64xbf16>
    %c0_115 = arith.constant 0 : index
    %c8 = arith.constant 8 : index
    %c0_116 = arith.constant 0 : index
    %c0_117 = arith.constant 0 : index
    %97 = vector.load %arg3[%c0_115, %c8, %c0_116, %c0_117] : memref<2x9x64x128xbf16, #tpu.memory_space<vmem>>, vector<1x1x64x128xbf16>
    %98 = vector.shape_cast %97 : vector<1x1x64x128xbf16> to vector<64x128xbf16>
    %c0_118 = arith.constant 0 : index
    %c0_119 = arith.constant 0 : index
    %c0_120 = arith.constant 0 : index
    %99 = vector.load %arg5[%c0_118, %c0_119, %c0_120] : memref<1x224x256xf32, #tpu.memory_space<vmem>>, vector<1x222x128xf32>
    %100 = vector.shape_cast %99 : vector<1x222x128xf32> to vector<222x128xf32>
    %cst_121 = arith.constant dense<0.000000e+00> : vector<222x128xf32>
    %101 = tpu.matmul %96, %98, %cst_121 {dimension_numbers = #tpu.dot_dimension_numbers<[1], [0], [0], [1], [0, 0, 1, 1], [], []>} : vector<222x64xbf16>, vector<64x128xbf16>, vector<222x128xf32> -> vector<222x128xf32>
    %102 = arith.addf %100, %101 : vector<222x128xf32>
    %c0_122 = arith.constant 0 : index
    %c0_123 = arith.constant 0 : index
    %c0_124 = arith.constant 0 : index
    %103 = vector.load %arg5[%c0_122, %c0_123, %c0_124] : memref<1x224x256xf32, #tpu.memory_space<vmem>>, vector<1x222x128xf32>
    %104 = vector.shape_cast %103 : vector<1x222x128xf32> to vector<222x128xf32>
    %105 = vector.shape_cast %102 : vector<222x128xf32> to vector<1x222x128xf32>
    tpu.vector_store %arg5[%c0_122, %c0_123, %c0_124], %105 {strides = array<i32>} : memref<1x224x256xf32, #tpu.memory_space<vmem>>, vector<1x222x128xf32>,
    %c0_125 = arith.constant 0 : index
    %c1_126 = arith.constant 1 : index
    %c0_127 = arith.constant 0 : index
    %c0_128 = arith.constant 0 : index
    %106 = vector.load %arg2[%c0_125, %c1_126, %c0_127, %c0_128] : memref<1x2x256x64xbf16, #tpu.memory_space<vmem>>, vector<1x1x224x64xbf16>
    %107 = vector.shape_cast %106 : vector<1x1x224x64xbf16> to vector<224x64xbf16>
    %c1_129 = arith.constant 1 : index
    %c0_130 = arith.constant 0 : index
    %c0_131 = arith.constant 0 : index
    %c0_132 = arith.constant 0 : index
    %108 = vector.load %arg3[%c1_129, %c0_130, %c0_131, %c0_132] : memref<2x9x64x128xbf16, #tpu.memory_space<vmem>>, vector<1x1x64x128xbf16>
    %109 = vector.shape_cast %108 : vector<1x1x64x128xbf16> to vector<64x128xbf16>
    %c0_133 = arith.constant 0 : index
    %c0_134 = arith.constant 0 : index
    %c128 = arith.constant 128 : index
    %110 = vector.load %arg5[%c0_133, %c0_134, %c128] : memref<1x224x256xf32, #tpu.memory_space<vmem>>, vector<1x224x128xf32>
    %111 = vector.shape_cast %110 : vector<1x224x128xf32> to vector<224x128xf32>
    %cst_135 = arith.constant dense<0.000000e+00> : vector<224x128xf32>
    %112 = tpu.matmul %107, %109, %cst_135 {dimension_numbers = #tpu.dot_dimension_numbers<[1], [0], [0], [1], [0, 0, 1, 1], [], []>} : vector<224x64xbf16>, vector<64x128xbf16>, vector<224x128xf32> -> vector<224x128xf32>
    %113 = arith.addf %111, %112 : vector<224x128xf32>
    %c0_136 = arith.constant 0 : index
    %c0_137 = arith.constant 0 : index
    %c128_138 = arith.constant 128 : index
    %114 = vector.load %arg5[%c0_136, %c0_137, %c128_138] : memref<1x224x256xf32, #tpu.memory_space<vmem>>, vector<1x224x128xf32>
    %115 = vector.shape_cast %114 : vector<1x224x128xf32> to vector<224x128xf32>
    %116 = vector.shape_cast %113 : vector<224x128xf32> to vector<1x224x128xf32>
    tpu.vector_store %arg5[%c0_136, %c0_137, %c128_138], %116 {strides = array<i32>} : memref<1x224x256xf32, #tpu.memory_space<vmem>>, vector<1x224x128xf32>,
    %c0_139 = arith.constant 0 : index
    %c1_140 = arith.constant 1 : index
    %c1_141 = arith.constant 1 : index
    %c0_142 = arith.constant 0 : index
    %117 = vector.load %arg2[%c0_139, %c1_140, %c1_141, %c0_142] : memref<1x2x256x64xbf16, #tpu.memory_space<vmem>>, vector<1x1x224x64xbf16>
    %118 = vector.shape_cast %117 : vector<1x1x224x64xbf16> to vector<224x64xbf16>
    %c1_143 = arith.constant 1 : index
    %c1_144 = arith.constant 1 : index
    %c0_145 = arith.constant 0 : index
    %c0_146 = arith.constant 0 : index
    %119 = vector.load %arg3[%c1_143, %c1_144, %c0_145, %c0_146] : memref<2x9x64x128xbf16, #tpu.memory_space<vmem>>, vector<1x1x64x128xbf16>
    %120 = vector.shape_cast %119 : vector<1x1x64x128xbf16> to vector<64x128xbf16>
    %c0_147 = arith.constant 0 : index
    %c0_148 = arith.constant 0 : index
    %c128_149 = arith.constant 128 : index
    %121 = vector.load %arg5[%c0_147, %c0_148, %c128_149] : memref<1x224x256xf32, #tpu.memory_space<vmem>>, vector<1x224x128xf32>
    %122 = vector.shape_cast %121 : vector<1x224x128xf32> to vector<224x128xf32>
    %cst_150 = arith.constant dense<0.000000e+00> : vector<224x128xf32>
    %123 = tpu.matmul %118, %120, %cst_150 {dimension_numbers = #tpu.dot_dimension_numbers<[1], [0], [0], [1], [0, 0, 1, 1], [], []>} : vector<224x64xbf16>, vector<64x128xbf16>, vector<224x128xf32> -> vector<224x128xf32>
    %124 = arith.addf %122, %123 : vector<224x128xf32>
    %c0_151 = arith.constant 0 : index
    %c0_152 = arith.constant 0 : index
    %c128_153 = arith.constant 128 : index
    %125 = vector.load %arg5[%c0_151, %c0_152, %c128_153] : memref<1x224x256xf32, #tpu.memory_space<vmem>>, vector<1x224x128xf32>
    %126 = vector.shape_cast %125 : vector<1x224x128xf32> to vector<224x128xf32>
    %127 = vector.shape_cast %124 : vector<224x128xf32> to vector<1x224x128xf32>
    tpu.vector_store %arg5[%c0_151, %c0_152, %c128_153], %127 {strides = array<i32>} : memref<1x224x256xf32, #tpu.memory_space<vmem>>, vector<1x224x128xf32>,
    %c0_154 = arith.constant 0 : index
    %c1_155 = arith.constant 1 : index
    %c2_156 = arith.constant 2 : index
    %c0_157 = arith.constant 0 : index
    %128 = vector.load %arg2[%c0_154, %c1_155, %c2_156, %c0_157] : memref<1x2x256x64xbf16, #tpu.memory_space<vmem>>, vector<1x1x224x64xbf16>
    %129 = vector.shape_cast %128 : vector<1x1x224x64xbf16> to vector<224x64xbf16>
    %c1_158 = arith.constant 1 : index
    %c2_159 = arith.constant 2 : index
    %c0_160 = arith.constant 0 : index
    %c0_161 = arith.constant 0 : index
    %130 = vector.load %arg3[%c1_158, %c2_159, %c0_160, %c0_161] : memref<2x9x64x128xbf16, #tpu.memory_space<vmem>>, vector<1x1x64x128xbf16>
    %131 = vector.shape_cast %130 : vector<1x1x64x128xbf16> to vector<64x128xbf16>
    %c0_162 = arith.constant 0 : index
    %c0_163 = arith.constant 0 : index
    %c128_164 = arith.constant 128 : index
    %132 = vector.load %arg5[%c0_162, %c0_163, %c128_164] : memref<1x224x256xf32, #tpu.memory_space<vmem>>, vector<1x224x128xf32>
    %133 = vector.shape_cast %132 : vector<1x224x128xf32> to vector<224x128xf32>
    %cst_165 = arith.constant dense<0.000000e+00> : vector<224x128xf32>
    %134 = tpu.matmul %129, %131, %cst_165 {dimension_numbers = #tpu.dot_dimension_numbers<[1], [0], [0], [1], [0, 0, 1, 1], [], []>} : vector<224x64xbf16>, vector<64x128xbf16>, vector<224x128xf32> -> vector<224x128xf32>
    %135 = arith.addf %133, %134 : vector<224x128xf32>
    %c0_166 = arith.constant 0 : index
    %c0_167 = arith.constant 0 : index
    %c128_168 = arith.constant 128 : index
    %136 = vector.load %arg5[%c0_166, %c0_167, %c128_168] : memref<1x224x256xf32, #tpu.memory_space<vmem>>, vector<1x224x128xf32>
    %137 = vector.shape_cast %136 : vector<1x224x128xf32> to vector<224x128xf32>
    %138 = vector.shape_cast %135 : vector<224x128xf32> to vector<1x224x128xf32>
    tpu.vector_store %arg5[%c0_166, %c0_167, %c128_168], %138 {strides = array<i32>} : memref<1x224x256xf32, #tpu.memory_space<vmem>>, vector<1x224x128xf32>,
    %c0_169 = arith.constant 0 : index
    %c1_170 = arith.constant 1 : index
    %c16_171 = arith.constant 16 : index
    %c0_172 = arith.constant 0 : index
    %139 = vector.load %arg2[%c0_169, %c1_170, %c16_171, %c0_172] : memref<1x2x256x64xbf16, #tpu.memory_space<vmem>>, vector<1x1x224x64xbf16>
    %140 = vector.shape_cast %139 : vector<1x1x224x64xbf16> to vector<224x64xbf16>
    %c1_173 = arith.constant 1 : index
    %c3_174 = arith.constant 3 : index
    %c0_175 = arith.constant 0 : index
    %c0_176 = arith.constant 0 : index
    %141 = vector.load %arg3[%c1_173, %c3_174, %c0_175, %c0_176] : memref<2x9x64x128xbf16, #tpu.memory_space<vmem>>, vector<1x1x64x128xbf16>
    %142 = vector.shape_cast %141 : vector<1x1x64x128xbf16> to vector<64x128xbf16>
    %c0_177 = arith.constant 0 : index
    %c0_178 = arith.constant 0 : index
    %c128_179 = arith.constant 128 : index
    %143 = vector.load %arg5[%c0_177, %c0_178, %c128_179] : memref<1x224x256xf32, #tpu.memory_space<vmem>>, vector<1x224x128xf32>
    %144 = vector.shape_cast %143 : vector<1x224x128xf32> to vector<224x128xf32>
    %cst_180 = arith.constant dense<0.000000e+00> : vector<224x128xf32>
    %145 = tpu.matmul %140, %142, %cst_180 {dimension_numbers = #tpu.dot_dimension_numbers<[1], [0], [0], [1], [0, 0, 1, 1], [], []>} : vector<224x64xbf16>, vector<64x128xbf16>, vector<224x128xf32> -> vector<224x128xf32>
    %146 = arith.addf %144, %145 : vector<224x128xf32>
    %c0_181 = arith.constant 0 : index
    %c0_182 = arith.constant 0 : index
    %c128_183 = arith.constant 128 : index
    %147 = vector.load %arg5[%c0_181, %c0_182, %c128_183] : memref<1x224x256xf32, #tpu.memory_space<vmem>>, vector<1x224x128xf32>
    %148 = vector.shape_cast %147 : vector<1x224x128xf32> to vector<224x128xf32>
    %149 = vector.shape_cast %146 : vector<224x128xf32> to vector<1x224x128xf32>
    tpu.vector_store %arg5[%c0_181, %c0_182, %c128_183], %149 {strides = array<i32>} : memref<1x224x256xf32, #tpu.memory_space<vmem>>, vector<1x224x128xf32>,
    %c0_184 = arith.constant 0 : index
    %c1_185 = arith.constant 1 : index
    %c17_186 = arith.constant 17 : index
    %c0_187 = arith.constant 0 : index
    %150 = vector.load %arg2[%c0_184, %c1_185, %c17_186, %c0_187] : memref<1x2x256x64xbf16, #tpu.memory_space<vmem>>, vector<1x1x224x64xbf16>
    %151 = vector.shape_cast %150 : vector<1x1x224x64xbf16> to vector<224x64xbf16>
    %c1_188 = arith.constant 1 : index
    %c4_189 = arith.constant 4 : index
    %c0_190 = arith.constant 0 : index
    %c0_191 = arith.constant 0 : index
    %152 = vector.load %arg3[%c1_188, %c4_189, %c0_190, %c0_191] : memref<2x9x64x128xbf16, #tpu.memory_space<vmem>>, vector<1x1x64x128xbf16>
    %153 = vector.shape_cast %152 : vector<1x1x64x128xbf16> to vector<64x128xbf16>
    %c0_192 = arith.constant 0 : index
    %c0_193 = arith.constant 0 : index
    %c128_194 = arith.constant 128 : index
    %154 = vector.load %arg5[%c0_192, %c0_193, %c128_194] : memref<1x224x256xf32, #tpu.memory_space<vmem>>, vector<1x224x128xf32>
    %155 = vector.shape_cast %154 : vector<1x224x128xf32> to vector<224x128xf32>
    %cst_195 = arith.constant dense<0.000000e+00> : vector<224x128xf32>
    %156 = tpu.matmul %151, %153, %cst_195 {dimension_numbers = #tpu.dot_dimension_numbers<[1], [0], [0], [1], [0, 0, 1, 1], [], []>} : vector<224x64xbf16>, vector<64x128xbf16>, vector<224x128xf32> -> vector<224x128xf32>
    %157 = arith.addf %155, %156 : vector<224x128xf32>
    %c0_196 = arith.constant 0 : index
    %c0_197 = arith.constant 0 : index
    %c128_198 = arith.constant 128 : index
    %158 = vector.load %arg5[%c0_196, %c0_197, %c128_198] : memref<1x224x256xf32, #tpu.memory_space<vmem>>, vector<1x224x128xf32>
    %159 = vector.shape_cast %158 : vector<1x224x128xf32> to vector<224x128xf32>
    %160 = vector.shape_cast %157 : vector<224x128xf32> to vector<1x224x128xf32>
    tpu.vector_store %arg5[%c0_196, %c0_197, %c128_198], %160 {strides = array<i32>} : memref<1x224x256xf32, #tpu.memory_space<vmem>>, vector<1x224x128xf32>,
    %c0_199 = arith.constant 0 : index
    %c1_200 = arith.constant 1 : index
    %c18_201 = arith.constant 18 : index
    %c0_202 = arith.constant 0 : index
    %161 = vector.load %arg2[%c0_199, %c1_200, %c18_201, %c0_202] : memref<1x2x256x64xbf16, #tpu.memory_space<vmem>>, vector<1x1x224x64xbf16>
    %162 = vector.shape_cast %161 : vector<1x1x224x64xbf16> to vector<224x64xbf16>
    %c1_203 = arith.constant 1 : index
    %c5_204 = arith.constant 5 : index
    %c0_205 = arith.constant 0 : index
    %c0_206 = arith.constant 0 : index
    %163 = vector.load %arg3[%c1_203, %c5_204, %c0_205, %c0_206] : memref<2x9x64x128xbf16, #tpu.memory_space<vmem>>, vector<1x1x64x128xbf16>
    %164 = vector.shape_cast %163 : vector<1x1x64x128xbf16> to vector<64x128xbf16>
    %c0_207 = arith.constant 0 : index
    %c0_208 = arith.constant 0 : index
    %c128_209 = arith.constant 128 : index
    %165 = vector.load %arg5[%c0_207, %c0_208, %c128_209] : memref<1x224x256xf32, #tpu.memory_space<vmem>>, vector<1x224x128xf32>
    %166 = vector.shape_cast %165 : vector<1x224x128xf32> to vector<224x128xf32>
    %cst_210 = arith.constant dense<0.000000e+00> : vector<224x128xf32>
    %167 = tpu.matmul %162, %164, %cst_210 {dimension_numbers = #tpu.dot_dimension_numbers<[1], [0], [0], [1], [0, 0, 1, 1], [], []>} : vector<224x64xbf16>, vector<64x128xbf16>, vector<224x128xf32> -> vector<224x128xf32>
    %168 = arith.addf %166, %167 : vector<224x128xf32>
    %c0_211 = arith.constant 0 : index
    %c0_212 = arith.constant 0 : index
    %c128_213 = arith.constant 128 : index
    %169 = vector.load %arg5[%c0_211, %c0_212, %c128_213] : memref<1x224x256xf32, #tpu.memory_space<vmem>>, vector<1x224x128xf32>
    %170 = vector.shape_cast %169 : vector<1x224x128xf32> to vector<224x128xf32>
    %171 = vector.shape_cast %168 : vector<224x128xf32> to vector<1x224x128xf32>
    tpu.vector_store %arg5[%c0_211, %c0_212, %c128_213], %171 {strides = array<i32>} : memref<1x224x256xf32, #tpu.memory_space<vmem>>, vector<1x224x128xf32>,
    %c0_214 = arith.constant 0 : index
    %c1_215 = arith.constant 1 : index
    %c32_216 = arith.constant 32 : index
    %c0_217 = arith.constant 0 : index
    %172 = vector.load %arg2[%c0_214, %c1_215, %c32_216, %c0_217] : memref<1x2x256x64xbf16, #tpu.memory_space<vmem>>, vector<1x1x224x64xbf16>
    %173 = vector.shape_cast %172 : vector<1x1x224x64xbf16> to vector<224x64xbf16>
    %c1_218 = arith.constant 1 : index
    %c6_219 = arith.constant 6 : index
    %c0_220 = arith.constant 0 : index
    %c0_221 = arith.constant 0 : index
    %174 = vector.load %arg3[%c1_218, %c6_219, %c0_220, %c0_221] : memref<2x9x64x128xbf16, #tpu.memory_space<vmem>>, vector<1x1x64x128xbf16>
    %175 = vector.shape_cast %174 : vector<1x1x64x128xbf16> to vector<64x128xbf16>
    %c0_222 = arith.constant 0 : index
    %c0_223 = arith.constant 0 : index
    %c128_224 = arith.constant 128 : index
    %176 = vector.load %arg5[%c0_222, %c0_223, %c128_224] : memref<1x224x256xf32, #tpu.memory_space<vmem>>, vector<1x224x128xf32>
    %177 = vector.shape_cast %176 : vector<1x224x128xf32> to vector<224x128xf32>
    %cst_225 = arith.constant dense<0.000000e+00> : vector<224x128xf32>
    %178 = tpu.matmul %173, %175, %cst_225 {dimension_numbers = #tpu.dot_dimension_numbers<[1], [0], [0], [1], [0, 0, 1, 1], [], []>} : vector<224x64xbf16>, vector<64x128xbf16>, vector<224x128xf32> -> vector<224x128xf32>
    %179 = arith.addf %177, %178 : vector<224x128xf32>
    %c0_226 = arith.constant 0 : index
    %c0_227 = arith.constant 0 : index
    %c128_228 = arith.constant 128 : index
    %180 = vector.load %arg5[%c0_226, %c0_227, %c128_228] : memref<1x224x256xf32, #tpu.memory_space<vmem>>, vector<1x224x128xf32>
    %181 = vector.shape_cast %180 : vector<1x224x128xf32> to vector<224x128xf32>
    %182 = vector.shape_cast %179 : vector<224x128xf32> to vector<1x224x128xf32>
    tpu.vector_store %arg5[%c0_226, %c0_227, %c128_228], %182 {strides = array<i32>} : memref<1x224x256xf32, #tpu.memory_space<vmem>>, vector<1x224x128xf32>,
    %c0_229 = arith.constant 0 : index
    %c1_230 = arith.constant 1 : index
    %c33_231 = arith.constant 33 : index
    %c0_232 = arith.constant 0 : index
    %183 = vector.load %arg2[%c0_229, %c1_230, %c33_231, %c0_232] : memref<1x2x256x64xbf16, #tpu.memory_space<vmem>>, vector<1x1x223x64xbf16>
    %184 = vector.shape_cast %183 : vector<1x1x223x64xbf16> to vector<223x64xbf16>
    %c1_233 = arith.constant 1 : index
    %c7_234 = arith.constant 7 : index
    %c0_235 = arith.constant 0 : index
    %c0_236 = arith.constant 0 : index
    %185 = vector.load %arg3[%c1_233, %c7_234, %c0_235, %c0_236] : memref<2x9x64x128xbf16, #tpu.memory_space<vmem>>, vector<1x1x64x128xbf16>
    %186 = vector.shape_cast %185 : vector<1x1x64x128xbf16> to vector<64x128xbf16>
    %c0_237 = arith.constant 0 : index
    %c0_238 = arith.constant 0 : index
    %c128_239 = arith.constant 128 : index
    %187 = vector.load %arg5[%c0_237, %c0_238, %c128_239] : memref<1x224x256xf32, #tpu.memory_space<vmem>>, vector<1x223x128xf32>
    %188 = vector.shape_cast %187 : vector<1x223x128xf32> to vector<223x128xf32>
    %cst_240 = arith.constant dense<0.000000e+00> : vector<223x128xf32>
    %189 = tpu.matmul %184, %186, %cst_240 {dimension_numbers = #tpu.dot_dimension_numbers<[1], [0], [0], [1], [0, 0, 1, 1], [], []>} : vector<223x64xbf16>, vector<64x128xbf16>, vector<223x128xf32> -> vector<223x128xf32>
    %190 = arith.addf %188, %189 : vector<223x128xf32>
    %c0_241 = arith.constant 0 : index
    %c0_242 = arith.constant 0 : index
    %c128_243 = arith.constant 128 : index
    %191 = vector.load %arg5[%c0_241, %c0_242, %c128_243] : memref<1x224x256xf32, #tpu.memory_space<vmem>>, vector<1x223x128xf32>
    %192 = vector.shape_cast %191 : vector<1x223x128xf32> to vector<223x128xf32>
    %193 = vector.shape_cast %190 : vector<223x128xf32> to vector<1x223x128xf32>
    tpu.vector_store %arg5[%c0_241, %c0_242, %c128_243], %193 {strides = array<i32>} : memref<1x224x256xf32, #tpu.memory_space<vmem>>, vector<1x223x128xf32>,
    %c0_244 = arith.constant 0 : index
    %c1_245 = arith.constant 1 : index
    %c34_246 = arith.constant 34 : index
    %c0_247 = arith.constant 0 : index
    %194 = vector.load %arg2[%c0_244, %c1_245, %c34_246, %c0_247] : memref<1x2x256x64xbf16, #tpu.memory_space<vmem>>, vector<1x1x222x64xbf16>
    %195 = vector.shape_cast %194 : vector<1x1x222x64xbf16> to vector<222x64xbf16>
    %c1_248 = arith.constant 1 : index
    %c8_249 = arith.constant 8 : index
    %c0_250 = arith.constant 0 : index
    %c0_251 = arith.constant 0 : index
    %196 = vector.load %arg3[%c1_248, %c8_249, %c0_250, %c0_251] : memref<2x9x64x128xbf16, #tpu.memory_space<vmem>>, vector<1x1x64x128xbf16>
    %197 = vector.shape_cast %196 : vector<1x1x64x128xbf16> to vector<64x128xbf16>
    %c0_252 = arith.constant 0 : index
    %c0_253 = arith.constant 0 : index
    %c128_254 = arith.constant 128 : index
    %198 = vector.load %arg5[%c0_252, %c0_253, %c128_254] : memref<1x224x256xf32, #tpu.memory_space<vmem>>, vector<1x222x128xf32>
    %199 = vector.shape_cast %198 : vector<1x222x128xf32> to vector<222x128xf32>
    %cst_255 = arith.constant dense<0.000000e+00> : vector<222x128xf32>
    %200 = tpu.matmul %195, %197, %cst_255 {dimension_numbers = #tpu.dot_dimension_numbers<[1], [0], [0], [1], [0, 0, 1, 1], [], []>} : vector<222x64xbf16>, vector<64x128xbf16>, vector<222x128xf32> -> vector<222x128xf32>
    %201 = arith.addf %199, %200 : vector<222x128xf32>
    %c0_256 = arith.constant 0 : index
    %c0_257 = arith.constant 0 : index
    %c128_258 = arith.constant 128 : index
    %202 = vector.load %arg5[%c0_256, %c0_257, %c128_258] : memref<1x224x256xf32, #tpu.memory_space<vmem>>, vector<1x222x128xf32>
    %203 = vector.shape_cast %202 : vector<1x222x128xf32> to vector<222x128xf32>
    %204 = vector.shape_cast %201 : vector<222x128xf32> to vector<1x222x128xf32>
    tpu.vector_store %arg5[%c0_256, %c0_257, %c128_258], %204 {strides = array<i32>} : memref<1x224x256xf32, #tpu.memory_space<vmem>>, vector<1x222x128xf32>,
    return
  }
  func.func @transform_0(%arg0: i32, %arg1: i32) -> (i32, i32, i32, i32) {
    %c0_i32 = arith.constant 0 : i32
    %c0_i32_0 = arith.constant 0 : i32
    %c0_i32_1 = arith.constant 0 : i32
    return %arg1, %arg0, %c0_i32, %c0_i32_0 : i32, i32, i32, i32
  }
  func.func @transform_1(%arg0: i32, %arg1: i32) -> (i32, i32, i32, i32) {
    %c0_i32 = arith.constant 0 : i32
    %c0_i32_0 = arith.constant 0 : i32
    %c0_i32_1 = arith.constant 0 : i32
    %c0_i32_2 = arith.constant 0 : i32
    return %arg0, %c0_i32, %c0_i32_0, %c0_i32_1 : i32, i32, i32, i32
  }
  func.func @transform_2(%arg0: i32, %arg1: i32) -> (i32, i32, i32) {
    %c0_i32 = arith.constant 0 : i32
    %c0_i32_0 = arith.constant 0 : i32
    %c0_i32_1 = arith.constant 0 : i32
    return %arg0, %c0_i32, %c0_i32_0 : i32, i32, i32
  }
  func.func @transform_3(%arg0: i32, %arg1: i32) -> (i32, i32, i32) {
    %c0_i32 = arith.constant 0 : i32
    %c0_i32_0 = arith.constant 0 : i32
    return %arg1, %c0_i32, %arg0 : i32, i32, i32
  }
}

</mosaic_0001>

<llo_original>
// kernel: grouped_conv2d_pallas.1
$region0: #{grouped_conv2d_pallas.1}
  #allocation0 [shape = 'u32[]', space=smem, size = 0x4, offset = 0x4, fixed_abs, tag = 'smem constant byte address 0x4 - core index']
  #allocation1 [shape = 'u32[144,128]{1,0:T(1,128)}', space=vmem, size = 0x12000, scoped, tag = 'internal scratch']
  %s0 = inlined_call_operand.vmem [shape: bf16[2,4,256,64], index: 0, kind: input, shape index: {}]
  %s1 = inlined_call_operand.vmem [shape: bf16[4,9,64,128], index: 1, kind: input, shape index: {}]
  %s2 = inlined_call_operand.vmem [shape: f32[2,1,256], index: 2, kind: input, shape index: {}]
  %s3 = inlined_call_operand.vmem [shape: f32[2,224,512], index: 3, kind: output, shape index: {}]
  %s4 = sld [smem:[#allocation0]]
  $region64: #{grouped_conv2d_pallas.1} parent=0
    _
  %s6 = ssub.s32 1, %s4
  %s7 = scalar_select 0, %s6, %s4
  $region1: #{grouped_conv2d_pallas.1} parent=0
    #allocation2 [shape = 'u8[458752]{0}', space=vmem, size = 0x70000, scoped, tag = 'output window, operand 0']
    loop: start=0, step=1, limit=6
    $region2: #{grouped_conv2d_pallas.1} parent=1 // loop_pre_header
      _
    $region3: #{grouped_conv2d_pallas.1} parent=1 // loop_header
      %s9 = sphi 0, %s13
      %p10 = scmp.ge.s32.totalorder %s9, 6
      %s16 = sphi 0, %s28
      %s17 = sphi 0, %s24
      %s18 = sphi 0, %s16
      %s19 = sphi 0, %s17
      %s20 = sphi 0, %s18
      %s21 = sphi 0, %s19
      %s33 = sphi 0, %s35
      %s36 = sphi 0, %s33
      %s37 = sphi 0, %s36
      %s53 = sphi 0, %s37
      %s59 = sphi 0, %s61
      %s62 = sphi 0, %s59
      %s63 = sphi 0, %s62
      %s79 = sphi 0, %s63
      %s85 = sphi 0, %s87
      %s88 = sphi 0, %s85
      %s89 = sphi 0, %s88
      %s105 = sphi 0, %s89
      %s113 = sphi 0, %s115
      %s116 = sphi 0, %s113
      %s117 = sphi 0, %s116
      %s133 = sphi 0, %s117
    $region4: #{grouped_conv2d_pallas.1} parent=1 // loop_header_branch
      %12 = sbr.rel (%p10) target = $region8
    $region5: #{grouped_conv2d_pallas.1} parent=1 // loop_body
      %s14 = ssub.s32 %s9, 1
      %s15 = ssub.s32 %s9, 2
      %s22 = sadd.s32 1, %s17
      %p23 = scmp.ge.s32.totalorder %s22, 2
      %s24 = scalar_select %p23, 0, %s22
      %s25 = sadd.s32 1, %s16
      %s26 = scalar_select %p23, %s25, %s16
      %p27 = scmp.ge.s32.totalorder %s26, 2
      %s28 = scalar_select %p27, 0, %s26
      %s29 = ssub.s32 %s17, %s24
      %s30 = ssub.s32 %s16, %s28
      %s31 = sor.u32 %s29, %s30
      %p32 = scmp.eq.s32.totalorder %s31, 0
      %s34 = sadd.s32 %s33, 1
      %s35 = scalar_select %p32, %s33, %s34
      %p38 = pneg %p32
      %p39 = scmp.eq.s32.totalorder %s9, 3
      %p40 = por %p38, %p39
      %p41 = scmp.ne.s32.totalorder %s33, %s36
      %p42 = scmp.eq.s32.totalorder %s9, 0
      %p43 = por %p41, %p42
      %p44 = scmp.ne.s32.totalorder %s33, %s36
      %p45 = scmp.eq.s32.totalorder %s14, 3
      %p46 = por %p44, %p45
      %p47 = scmp.ne.s32.totalorder %s36, %s37
      %p48 = scmp.eq.s32.totalorder %s14, 0
      %p49 = por %p47, %p48
      %p50 = scmp.ne.s32.totalorder %s36, %s37
      %p51 = scmp.eq.s32.totalorder %s15, 3
      %p52 = por %p50, %p51
      %p54 = scmp.ne.s32.totalorder %s37, %s53
      %p55 = scmp.eq.s32.totalorder %s15, 0
      %p56 = por %p54, %p55
      %s57 = ssub.s32 %s16, %s28
      %p58 = scmp.eq.s32.totalorder %s57, 0
      %s60 = sadd.s32 %s59, 1
      %s61 = scalar_select %p58, %s59, %s60
      %p64 = pneg %p58
      %p65 = scmp.eq.s32.totalorder %s9, 3
      %p66 = por %p64, %p65
      %p67 = scmp.ne.s32.totalorder %s59, %s62
      %p68 = scmp.eq.s32.totalorder %s9, 0
      %p69 = por %p67, %p68
      %p70 = scmp.ne.s32.totalorder %s59, %s62
      %p71 = scmp.eq.s32.totalorder %s14, 3
      %p72 = por %p70, %p71
      %p73 = scmp.ne.s32.totalorder %s62, %s63
      %p74 = scmp.eq.s32.totalorder %s14, 0
      %p75 = por %p73, %p74
      %p76 = scmp.ne.s32.totalorder %s62, %s63
      %p77 = scmp.eq.s32.totalorder %s15, 3
      %p78 = por %p76, %p77
      %p80 = scmp.ne.s32.totalorder %s63, %s79
      %p81 = scmp.eq.s32.totalorder %s15, 0
      %p82 = por %p80, %p81
      %s83 = ssub.s32 %s16, %s28
      %p84 = scmp.eq.s32.totalorder %s83, 0
      %s86 = sadd.s32 %s85, 1
      %s87 = scalar_select %p84, %s85, %s86
      %p90 = pneg %p84
      %p91 = scmp.eq.s32.totalorder %s9, 3
      %p92 = por %p90, %p91
      %p93 = scmp.ne.s32.totalorder %s85, %s88
      %p94 = scmp.eq.s32.totalorder %s9, 0
      %p95 = por %p93, %p94
      %p96 = scmp.ne.s32.totalorder %s85, %s88
      %p97 = scmp.eq.s32.totalorder %s14, 3
      %p98 = por %p96, %p97
      %p99 = scmp.ne.s32.totalorder %s88, %s89
      %p100 = scmp.eq.s32.totalorder %s14, 0
      %p101 = por %p99, %p100
      %p102 = scmp.ne.s32.totalorder %s88, %s89
      %p103 = scmp.eq.s32.totalorder %s15, 3
      %p104 = por %p102, %p103
      %p106 = scmp.ne.s32.totalorder %s89, %s105
      %p107 = scmp.eq.s32.totalorder %s15, 0
      %p108 = por %p106, %p107
      %s109 = ssub.s32 %s17, %s24
      %s110 = ssub.s32 %s16, %s28
      %s111 = sor.u32 %s109, %s110
      %p112 = scmp.eq.s32.totalorder %s111, 0
      %s114 = sadd.s32 %s113, 1
      %s115 = scalar_select %p112, %s113, %s114
      %p118 = pneg %p112
      %p119 = scmp.eq.s32.totalorder %s9, 3
      %p120 = por %p118, %p119
      %p121 = scmp.ne.s32.totalorder %s113, %s116
      %p122 = scmp.eq.s32.totalorder %s9, 0
      %p123 = por %p121, %p122
      %p124 = scmp.ne.s32.totalorder %s113, %s116
      %p125 = scmp.eq.s32.totalorder %s14, 3
      %p126 = por %p124, %p125
      %p127 = scmp.ne.s32.totalorder %s116, %s117
      %p128 = scmp.eq.s32.totalorder %s14, 0
      %p129 = por %p127, %p128
      %p130 = scmp.ne.s32.totalorder %s116, %s117
      %p131 = scmp.eq.s32.totalorder %s15, 3
      %p132 = por %p130, %p131
      %p134 = scmp.ne.s32.totalorder %s117, %s133
      %p135 = scmp.eq.s32.totalorder %s15, 0
      %p136 = por %p134, %p135
      %p137 = scmp.le.s32.totalorder 1, %s9
      %p138 = scmp.lt.s32.totalorder %s9, 5
      %p139 = pnand %p137, %p138
      %p140 = pneg %p139
      // Predicated region
      $region9: #{grouped_conv2d_pallas.1} parent=5 // pred_check
        _
      $region10: #{grouped_conv2d_pallas.1} parent=5 // pred_check_branch
        %142 = sbr.rel (%p139) target = $region12
      $region11: #{grouped_conv2d_pallas.1} parent=5 // pred_region
        %s143 = ssub.s32 %s9, 1
      $region12: #{grouped_conv2d_pallas.1} parent=5 // pred_fallthru
        _
      %p144 = scmp.lt.s32.totalorder %s9, 4
      // Predicated region
      $region13: #{grouped_conv2d_pallas.1} parent=5 // pred_check
        %p145 = pneg %p144
      $region14: #{grouped_conv2d_pallas.1} parent=5 // pred_check_branch
        %147 = sbr.rel (%p145) target = $region16
      $region15: #{grouped_conv2d_pallas.1} parent=5 // pred_region
        // Predicated region
        $region17: #{grouped_conv2d_pallas.1} parent=15 // pred_check
          %p148 = pneg %p43
        $region18: #{grouped_conv2d_pallas.1} parent=15 // pred_check_branch
          %150 = sbr.rel (%p148) target = $region20
        $region19: #{grouped_conv2d_pallas.1} parent=15 // pred_region
          %s151 = smul.u32 2, %s16
          %p152 = scmp.lt.s32.totalorder %s17, 1
          %s153 = scalar_select %p152, %s17, 1
          %p154 = scmp.lt.s32.totalorder %s151, 3
          %s155 = scalar_select %p154, %s151, 3
          %s156 = smul.addr %s155, 32
          %s157 = smul.addr %s153, 128
          %s158 = sadd.s32 %s156, %s157
          %s159 = smul.addr %s158, 4
          %s160 = scalar_lea.vmem %s0, %s159
          %s161 = smul.u32 2, %s16
        $region20: #{grouped_conv2d_pallas.1} parent=15 // pred_fallthru
          _
        // Predicated region
        $region21: #{grouped_conv2d_pallas.1} parent=15 // pred_check
          %p162 = pneg %p69
        $region22: #{grouped_conv2d_pallas.1} parent=15 // pred_check_branch
          %164 = sbr.rel (%p162) target = $region24
        $region23: #{grouped_conv2d_pallas.1} parent=15 // pred_region
          %s165 = smul.u32 2, %s16
          %p166 = scmp.lt.s32.totalorder %s165, 3
          %s167 = scalar_select %p166, %s165, 3
          %s168 = smul.addr %s167, 72
          %s169 = smul.addr %s168, 4
          %s170 = scalar_lea.vmem %s1, %s169
          %s171 = smul.u32 2, %s16
        $region24: #{grouped_conv2d_pallas.1} parent=15 // pred_fallthru
          _
        // Predicated region
        $region25: #{grouped_conv2d_pallas.1} parent=15 // pred_check
          %p172 = pneg %p95
        $region26: #{grouped_conv2d_pallas.1} parent=15 // pred_check_branch
          %174 = sbr.rel (%p172) target = $region28
        $region27: #{grouped_conv2d_pallas.1} parent=15 // pred_region
          %p175 = scmp.lt.s32.totalorder %s16, 1
          %s176 = scalar_select %p175, %s16, 1
          %s177 = smul.addr %s176, 2
          %s178 = scalar_lea.vmem %s2, %s177
        $region28: #{grouped_conv2d_pallas.1} parent=15 // pred_fallthru
          _
      $region16: #{grouped_conv2d_pallas.1} parent=5 // pred_fallthru
        _
      %p179 = scmp.le.s32.totalorder 1, %s9
      %p180 = scmp.lt.s32.totalorder %s9, 5
      %p181 = pnand %p179, %p180
      %p182 = pneg %p181
      // Predicated region
      $region29: #{grouped_conv2d_pallas.1} parent=5 // pred_check
        _
      $region30: #{grouped_conv2d_pallas.1} parent=5 // pred_check_branch
        %184 = sbr.rel (%p181) target = $region32
      $region31: #{grouped_conv2d_pallas.1} parent=5 // pred_region
        %s185 = ssub.s32 %s9, 1
        %s186 = smul.u32 2, %s18
        %p187 = scmp.lt.s32.totalorder %s19, 1
        %s188 = scalar_select %p187, %s19, 1
        %p189 = scmp.lt.s32.totalorder %s186, 3
        %s190 = scalar_select %p189, %s186, 3
        %s191 = smul.addr %s190, 32
        %s192 = smul.addr %s188, 128
        %s193 = sadd.s32 %s191, %s192
        %s194 = smul.addr %s193, 4
        %s195 = scalar_lea.vmem %s0, %s194
        %p196 = pneg %p49
        %p197 = pneg %p46
        %s198 = smul.u32 2, %s18
        %p199 = scmp.lt.s32.totalorder %s198, 3
        %s200 = scalar_select %p199, %s198, 3
        %s201 = smul.addr %s200, 72
        %s202 = smul.addr %s201, 4
        %s203 = scalar_lea.vmem %s1, %s202
        %p204 = pneg %p75
        %p205 = pneg %p72
        %p206 = scmp.lt.s32.totalorder %s18, 1
        %s207 = scalar_select %p206, %s18, 1
        %s208 = smul.addr %s207, 2
        %s209 = scalar_lea.vmem %s2, %s208
        %p210 = pneg %p101
        %p211 = pneg %p98
        %p212 = pneg %p129
        %p213 = pneg %p126
        %s214 = sand.u32 %s116, 1
        %s215 = sand.u32 %s116, 1
        %s216 = smul.addr %s215, 448
        %s217 = scalar_lea.vmem [#allocation2], %s216
        %s218 = smul.u32 2, %s18
        %p219 = scmp.lt.s32.totalorder %s19, 1
        %s220 = scalar_select %p219, %s19, 1
        %p221 = scmp.lt.s32.totalorder %s218, 3
        %s222 = scalar_select %p221, %s218, 3
        %s223 = smul.addr %s222, 32
        %s224 = smul.addr %s220, 128
        %s225 = sadd.s32 %s223, %s224
        %s226 = smul.addr %s225, 4
        %s227 = scalar_lea.vmem %s0, %s226
        %s228 = smul.u32 2, %s18
        %s229 = smul.u32 2, %s18
        %p230 = scmp.lt.s32.totalorder %s229, 3
        %s231 = scalar_select %p230, %s229, 3
        %s232 = smul.addr %s231, 72
        %s233 = smul.addr %s232, 4
        %s234 = scalar_lea.vmem %s1, %s233
        %s235 = smul.u32 2, %s18
        %p236 = scmp.lt.s32.totalorder %s18, 1
        %s237 = scalar_select %p236, %s18, 1
        %s238 = smul.addr %s237, 2
        %s239 = scalar_lea.vmem %s2, %s238
        %s240 = smul.u32 2, %s18
        %v242 = vld [vmem:[%s239] sm:$0x3]
        %v244 = vlaneseq
        %v245 = vshrl.u32 %v244, 7
        %v246 = vsub.s32 0, %v245
        %v247 = vrot.slane %v242, %v246
        %v248 = vlaneseq
        %v249 = vshrl.u32 %v248, 7
        %v250 = vsub.s32 1, %v249
        %v251 = vrot.slane %v242, %v250
        %254 = vst [vmem:[%s217] sm:$0xff] %v247
        %255 = vst [vmem:[%s217 + $0x8] sm:$0xff] %v251
        %256 = vst [vmem:[%s217 + $0x10] sm:$0xff] %v247
        %257 = vst [vmem:[%s217 + $0x18] sm:$0xff] %v251
        %258 = vst [vmem:[%s217 + $0x20] sm:$0xff] %v247
        %259 = vst [vmem:[%s217 + $0x28] sm:$0xff] %v251
        %260 = vst [vmem:[%s217 + $0x30] sm:$0xff] %v247
        %261 = vst [vmem:[%s217 + $0x38] sm:$0xff] %v251
        %262 = vst [vmem:[%s217 + $0x40] sm:$0xff] %v247
        %263 = vst [vmem:[%s217 + $0x48] sm:$0xff] %v251
        %264 = vst [vmem:[%s217 + $0x50] sm:$0xff] %v247
        %265 = vst [vmem:[%s217 + $0x58] sm:$0xff] %v251
        %266 = vst [vmem:[%s217 + $0x60] sm:$0xff] %v247
        %267 = vst [vmem:[%s217 + $0x68] sm:$0xff] %v251
        %268 = vst [vmem:[%s217 + $0x70] sm:$0xff] %v247
        %269 = vst [vmem:[%s217 + $0x78] sm:$0xff] %v251
        %270 = vst [vmem:[%s217 + $0x80] sm:$0xff] %v247
        %271 = vst [vmem:[%s217 + $0x88] sm:$0xff] %v251
        %272 = vst [vmem:[%s217 + $0x90] sm:$0xff] %v247
        %273 = vst [vmem:[%s217 + $0x98] sm:$0xff] %v251
        %274 = vst [vmem:[%s217 + $0xa0] sm:$0xff] %v247
        %275 = vst [vmem:[%s217 + $0xa8] sm:$0xff] %v251
        %276 = vst [vmem:[%s217 + $0xb0] sm:$0xff] %v247
        %277 = vst [vmem:[%s217 + $0xb8] sm:$0xff] %v251
        %278 = vst [vmem:[%s217 + $0xc0] sm:$0xff] %v247
        %279 = vst [vmem:[%s217 + $0xc8] sm:$0xff] %v251
        %280 = vst [vmem:[%s217 + $0xd0] sm:$0xff] %v247
        %281 = vst [vmem:[%s217 + $0xd8] sm:$0xff] %v251
        %282 = vst [vmem:[%s217 + $0xe0] sm:$0xff] %v247
        %283 = vst [vmem:[%s217 + $0xe8] sm:$0xff] %v251
        %284 = vst [vmem:[%s217 + $0xf0] sm:$0xff] %v247
        %285 = vst [vmem:[%s217 + $0xf8] sm:$0xff] %v251
        %286 = vst [vmem:[%s217 + $0x100] sm:$0xff] %v247
        %287 = vst [vmem:[%s217 + $0x108] sm:$0xff] %v251
        %288 = vst [vmem:[%s217 + $0x110] sm:$0xff] %v247
        %289 = vst [vmem:[%s217 + $0x118] sm:$0xff] %v251
        %290 = vst [vmem:[%s217 + $0x120] sm:$0xff] %v247
        %291 = vst [vmem:[%s217 + $0x128] sm:$0xff] %v251
        %292 = vst [vmem:[%s217 + $0x130] sm:$0xff] %v247
        %293 = vst [vmem:[%s217 + $0x138] sm:$0xff] %v251
        %294 = vst [vmem:[%s217 + $0x140] sm:$0xff] %v247
        %295 = vst [vmem:[%s217 + $0x148] sm:$0xff] %v251
        %296 = vst [vmem:[%s217 + $0x150] sm:$0xff] %v247
        %297 = vst [vmem:[%s217 + $0x158] sm:$0xff] %v251
        %298 = vst [vmem:[%s217 + $0x160] sm:$0xff] %v247
        %299 = vst [vmem:[%s217 + $0x168] sm:$0xff] %v251
        %300 = vst [vmem:[%s217 + $0x170] sm:$0xff] %v247
        %301 = vst [vmem:[%s217 + $0x178] sm:$0xff] %v251
        %302 = vst [vmem:[%s217 + $0x180] sm:$0xff] %v247
        %303 = vst [vmem:[%s217 + $0x188] sm:$0xff] %v251
        %304 = vst [vmem:[%s217 + $0x190] sm:$0xff] %v247
        %305 = vst [vmem:[%s217 + $0x198] sm:$0xff] %v251
        %306 = vst [vmem:[%s217 + $0x1a0] sm:$0xff] %v247
        %307 = vst [vmem:[%s217 + $0x1a8] sm:$0xff] %v251
        %308 = vst [vmem:[%s217 + $0x1b0] sm:$0xff] %v247
        %309 = vst [vmem:[%s217 + $0x1b8] sm:$0xff] %v251
        %v310 = vld [vmem:[%s227] sm:$0xf]
        %v311 = vld [vmem:[%s227 + $0x4] sm:$0xf]
        %v312 = vld [vmem:[%s227 + $0x8] sm:$0xf]
        %v313 = vld [vmem:[%s227 + $0xc] sm:$0xf]
        %v314 = vld [vmem:[%s227 + $0x10] sm:$0xf]
        %v315 = vld [vmem:[%s227 + $0x14] sm:$0xf]
        %v316 = vld [vmem:[%s227 + $0x18] sm:$0xf]
        %v317 = vld [vmem:[%s227 + $0x1c] sm:$0xf]
        %v318 = vld [vmem:[%s227 + $0x20] sm:$0xf]
        %v319 = vld [vmem:[%s227 + $0x24] sm:$0xf]
        %v320 = vld [vmem:[%s227 + $0x28] sm:$0xf]
        %v321 = vld [vmem:[%s227 + $0x2c] sm:$0xf]
        %v322 = vld [vmem:[%s227 + $0x30] sm:$0xf]
        %v323 = vld [vmem:[%s227 + $0x34] sm:$0xf]
        %v324 = vld [vmem:[%s227 + $0x38] sm:$0xf]
        %v325 = vld [vmem:[%s227 + $0x3c] sm:$0xf]
        %v326 = vld [vmem:[%s227 + $0x40] sm:$0xf]
        %v327 = vld [vmem:[%s227 + $0x44] sm:$0xf]
        %v328 = vld [vmem:[%s227 + $0x48] sm:$0xf]
        %v329 = vld [vmem:[%s227 + $0x4c] sm:$0xf]
        %v330 = vld [vmem:[%s227 + $0x50] sm:$0xf]
        %v331 = vld [vmem:[%s227 + $0x54] sm:$0xf]
        %v332 = vld [vmem:[%s227 + $0x58] sm:$0xf]
        %v333 = vld [vmem:[%s227 + $0x5c] sm:$0xf]
        %v334 = vld [vmem:[%s227 + $0x60] sm:$0xf]
        %v335 = vld [vmem:[%s227 + $0x64] sm:$0xf]
        %v336 = vld [vmem:[%s227 + $0x68] sm:$0xf]
        %v337 = vld [vmem:[%s227 + $0x6c] sm:$0xf]
        %v338 = vld [vmem:[%s234] sm:$0xf]
        %v339 = vld [vmem:[%s234 + $0x4] sm:$0xf]
        %v340 = vld [vmem:[%s234 + $0x8] sm:$0xf]
        %v341 = vld [vmem:[%s234 + $0xc] sm:$0xf]
        %v342 = vld [vmem:[%s234 + $0x10] sm:$0xf]
        %v343 = vld [vmem:[%s234 + $0x14] sm:$0xf]
        %v344 = vld [vmem:[%s234 + $0x18] sm:$0xf]
        %v345 = vld [vmem:[%s234 + $0x1c] sm:$0xf]
        %v346 = vld [vmem:[%s217] sm:$0xff]
        %v347 = vld [vmem:[%s217 + $0x10] sm:$0xff]
        %v348 = vld [vmem:[%s217 + $0x20] sm:$0xff]
        %v349 = vld [vmem:[%s217 + $0x30] sm:$0xff]
        %v350 = vld [vmem:[%s217 + $0x40] sm:$0xff]
        %v351 = vld [vmem:[%s217 + $0x50] sm:$0xff]
        %v352 = vld [vmem:[%s217 + $0x60] sm:$0xff]
        %v353 = vld [vmem:[%s217 + $0x70] sm:$0xff]
        %v354 = vld [vmem:[%s217 + $0x80] sm:$0xff]
        %v355 = vld [vmem:[%s217 + $0x90] sm:$0xff]
        %v356 = vld [vmem:[%s217 + $0xa0] sm:$0xff]
        %v357 = vld [vmem:[%s217 + $0xb0] sm:$0xff]
        %v358 = vld [vmem:[%s217 + $0xc0] sm:$0xff]
        %v359 = vld [vmem:[%s217 + $0xd0] sm:$0xff]
        %v360 = vld [vmem:[%s217 + $0xe0] sm:$0xff]
        %v361 = vld [vmem:[%s217 + $0xf0] sm:$0xff]
        %v362 = vld [vmem:[%s217 + $0x100] sm:$0xff]
        %v363 = vld [vmem:[%s217 + $0x110] sm:$0xff]
        %v364 = vld [vmem:[%s217 + $0x120] sm:$0xff]
        %v365 = vld [vmem:[%s217 + $0x130] sm:$0xff]
        %v366 = vld [vmem:[%s217 + $0x140] sm:$0xff]
        %v367 = vld [vmem:[%s217 + $0x150] sm:$0xff]
        %v368 = vld [vmem:[%s217 + $0x160] sm:$0xff]
        %v369 = vld [vmem:[%s217 + $0x170] sm:$0xff]
        %v370 = vld [vmem:[%s217 + $0x180] sm:$0xff]
        %v371 = vld [vmem:[%s217 + $0x190] sm:$0xff]
        %v372 = vld [vmem:[%s217 + $0x1a0] sm:$0xff]
        %v373 = vld [vmem:[%s217 + $0x1b0] sm:$0xff]
        %v402 = vunpack.c.l.b16 %v310
        %v403 = vunpack.c.l.b16 %v311
        %v404 = vunpack.c.l.b16 %v312
        %v405 = vunpack.c.l.b16 %v313
        %v406 = vunpack.c.l.b16 %v314
        %v407 = vunpack.c.l.b16 %v315
        %v408 = vunpack.c.l.b16 %v316
        %v409 = vunpack.c.l.b16 %v317
        %v410 = vunpack.c.l.b16 %v318
        %v411 = vunpack.c.l.b16 %v319
        %v412 = vunpack.c.l.b16 %v320
        %v413 = vunpack.c.l.b16 %v321
        %v414 = vunpack.c.l.b16 %v322
        %v415 = vunpack.c.l.b16 %v323
        %v416 = vunpack.c.l.b16 %v324
        %v417 = vunpack.c.l.b16 %v325
        %v418 = vunpack.c.l.b16 %v326
        %v419 = vunpack.c.l.b16 %v327
        %v420 = vunpack.c.l.b16 %v328
        %v421 = vunpack.c.l.b16 %v329
        %v422 = vunpack.c.l.b16 %v330
        %v423 = vunpack.c.l.b16 %v331
        %v424 = vunpack.c.l.b16 %v332
        %v425 = vunpack.c.l.b16 %v333
        %v426 = vunpack.c.l.b16 %v334
        %v427 = vunpack.c.l.b16 %v335
        %v428 = vunpack.c.l.b16 %v336
        %v429 = vunpack.c.l.b16 %v337
        %v430 = vpack.c.b16 %v403, %v402
        %v431 = vpack.c.b16 %v405, %v404
        %v432 = vpack.c.b16 %v407, %v406
        %v433 = vpack.c.b16 %v409, %v408
        %v434 = vpack.c.b16 %v411, %v410
        %v435 = vpack.c.b16 %v413, %v412
        %v436 = vpack.c.b16 %v415, %v414
        %v437 = vpack.c.b16 %v417, %v416
        %v438 = vpack.c.b16 %v419, %v418
        %v439 = vpack.c.b16 %v421, %v420
        %v440 = vpack.c.b16 %v423, %v422
        %v441 = vpack.c.b16 %v425, %v424
        %v442 = vpack.c.b16 %v427, %v426
        %v443 = vpack.c.b16 %v429, %v428
        %v452 = vunpack.c.l.b16 %v338
        %v453 = vunpack.c.l.b16 %v339
        %v454 = vunpack.c.l.b16 %v340
        %v455 = vunpack.c.l.b16 %v341
        %v456 = vunpack.c.l.b16 %v342
        %v457 = vunpack.c.l.b16 %v343
        %v458 = vunpack.c.l.b16 %v344
        %v459 = vunpack.c.l.b16 %v345
        %v460 = vpack.c.b16 %v453, %v452
        %v461 = vpack.c.b16 %v455, %v454
        %v462 = vpack.c.b16 %v457, %v456
        %v463 = vpack.c.b16 %v459, %v458
        %vm468 = vcmask 523264
        %v470 = vsel %vm468, %v430, 0
        %v473 = vsel %vm468, %v431, 0
        %v476 = vsel %vm468, %v432, 0
        %v479 = vsel %vm468, %v433, 0
        %v482 = vsel %vm468, %v434, 0
        %v485 = vsel %vm468, %v435, 0
        %v488 = vsel %vm468, %v436, 0
        %v491 = vsel %vm468, %v437, 0
        %v494 = vsel %vm468, %v438, 0
        %v497 = vsel %vm468, %v439, 0
        %v500 = vsel %vm468, %v440, 0
        %v503 = vsel %vm468, %v441, 0
        %v506 = vsel %vm468, %v442, 0
        %v509 = vsel %vm468, %v443, 0
        %511 = vmatprep.subr.bf16.mxu0 0
        %512 = vmatpush1.bf16.msra.mxu0 %v460
        %513 = vmatprep.subr.bf16.mxu0 0
        %514 = vmatpush1.bf16.msra.mxu0 %v461
        %515 = vmatprep.subr.bf16.mxu0 0
        %516 = vmatpush1.bf16.msra.mxu0 %v462
        %517 = vmatprep.subr.bf16.mxu0 0
        %518 = vmatpush1.bf16.msra.mxu0 %v463
        %519 = vmatprep.subr.bf16.mxu0 0
        %520 = vmatpush1.bf16.msra.mxu0 0
        %521 = vmatprep.subr.bf16.mxu0 0
        %522 = vmatpush1.bf16.msra.mxu0 0
        %523 = vmatprep.subr.bf16.mxu0 0
        %524 = vmatpush1.bf16.msra.mxu0 0
        %525 = vmatprep.subr.bf16.mxu0 0
        %526 = vmatpush1.bf16.msra.mxu0 0
        %527 = vmatprep.subr.bf16.mxu0 0
        %528 = vmatpush1.bf16.msra.mxu0 0
        %529 = vmatprep.subr.bf16.mxu0 0
        %530 = vmatpush1.bf16.msra.mxu0 0
        %531 = vmatprep.subr.bf16.mxu0 0
        %532 = vmatpush1.bf16.msra.mxu0 0
        %533 = vmatprep.subr.bf16.mxu0 0
        %534 = vmatpush1.bf16.msra.mxu0 0
        %535 = vmatprep.subr.bf16.mxu0 0
        %536 = vmatpush1.bf16.msra.mxu0 0
        %537 = vmatprep.subr.bf16.mxu0 0
        %538 = vmatpush1.bf16.msra.mxu0 0
        %539 = vmatprep.subr.bf16.mxu0 0
        %540 = vmatpush1.bf16.msra.mxu0 0
        %541 = vmatprep.subr.bf16.mxu0 0
        %542 = vmatpush1.bf16.msra.mxu0 0
        %543 = vmatprep.mubr.bf16.mxu0 0
        %544 = vmatmul.mubr.bf16.gmra.mrb[0].mxu0 %v470
        %v545 = vpop.f32.mrb[0].mxu0
        %v546 = vadd.f32 0.0, %v545
        %v547 = vpop.f32.mrb[0].mxu0
        %v548 = vpop.f32.mrb[0].mxu0
        %v549 = vadd.f32 0.0, %v548
        %v550 = vpop.f32.mrb[0].mxu0
        %551 = vmatprep.mubr.bf16.mxu0 0
        %552 = vmatmul.mubr.bf16.gmra.mrb[0].mxu0 %v473
        %v553 = vpop.f32.mrb[0].mxu0
        %v554 = vadd.f32 0.0, %v553
        %v555 = vpop.f32.mrb[0].mxu0
        %v556 = vpop.f32.mrb[0].mxu0
        %v557 = vadd.f32 0.0, %v556
        %v558 = vpop.f32.mrb[0].mxu0
        %559 = vmatprep.mubr.bf16.mxu0 0
        %560 = vmatmul.mubr.bf16.gmra.mrb[0].mxu0 %v476
        %v561 = vpop.f32.mrb[0].mxu0
        %v562 = vadd.f32 0.0, %v561
        %v563 = vpop.f32.mrb[0].mxu0
        %v564 = vpop.f32.mrb[0].mxu0
        %v565 = vadd.f32 0.0, %v564
        %v566 = vpop.f32.mrb[0].mxu0
        %567 = vmatprep.mubr.bf16.mxu0 0
        %568 = vmatmul.mubr.bf16.gmra.mrb[0].mxu0 %v479
        %v569 = vpop.f32.mrb[0].mxu0
        %v570 = vadd.f32 0.0, %v569
        %v571 = vpop.f32.mrb[0].mxu0
        %v572 = vpop.f32.mrb[0].mxu0
        %v573 = vadd.f32 0.0, %v572
        %v574 = vpop.f32.mrb[0].mxu0
        %575 = vmatprep.mubr.bf16.mxu0 0
        %576 = vmatmul.mubr.bf16.gmra.mrb[0].mxu0 %v482
        %v577 = vpop.f32.mrb[0].mxu0
        %v578 = vadd.f32 0.0, %v577
        %v579 = vpop.f32.mrb[0].mxu0
        %v580 = vpop.f32.mrb[0].mxu0
        %v581 = vadd.f32 0.0, %v580
        %v582 = vpop.f32.mrb[0].mxu0
        %583 = vmatprep.mubr.bf16.mxu0 0
        %584 = vmatmul.mubr.bf16.gmra.mrb[0].mxu0 %v485
        %v585 = vpop.f32.mrb[0].mxu0
        %v586 = vadd.f32 0.0, %v585
        %v587 = vpop.f32.mrb[0].mxu0
        %v588 = vpop.f32.mrb[0].mxu0
        %v589 = vadd.f32 0.0, %v588
        %v590 = vpop.f32.mrb[0].mxu0
        %591 = vmatprep.mubr.bf16.mxu0 0
        %592 = vmatmul.mubr.bf16.gmra.mrb[0].mxu0 %v488
        %v593 = vpop.f32.mrb[0].mxu0
        %v594 = vadd.f32 0.0, %v593
        %v595 = vpop.f32.mrb[0].mxu0
        %v596 = vpop.f32.mrb[0].mxu0
        %v597 = vadd.f32 0.0, %v596
        %v598 = vpop.f32.mrb[0].mxu0
        %599 = vmatprep.mubr.bf16.mxu0 0
        %600 = vmatmul.mubr.bf16.gmra.mrb[0].mxu0 %v491
        %v601 = vpop.f32.mrb[0].mxu0
        %v602 = vadd.f32 0.0, %v601
        %v603 = vpop.f32.mrb[0].mxu0
        %v604 = vpop.f32.mrb[0].mxu0
        %v605 = vadd.f32 0.0, %v604
        %v606 = vpop.f32.mrb[0].mxu0
        %607 = vmatprep.mubr.bf16.mxu0 0
        %608 = vmatmul.mubr.bf16.gmra.mrb[0].mxu0 %v494
        %v609 = vpop.f32.mrb[0].mxu0
        %v610 = vadd.f32 0.0, %v609
        %v611 = vpop.f32.mrb[0].mxu0
        %v612 = vpop.f32.mrb[0].mxu0
        %v613 = vadd.f32 0.0, %v612
        %v614 = vpop.f32.mrb[0].mxu0
        %615 = vmatprep.mubr.bf16.mxu0 0
        %616 = vmatmul.mubr.bf16.gmra.mrb[0].mxu0 %v497
        %v617 = vpop.f32.mrb[0].mxu0
        %v618 = vadd.f32 0.0, %v617
        %v619 = vpop.f32.mrb[0].mxu0
        %v620 = vpop.f32.mrb[0].mxu0
        %v621 = vadd.f32 0.0, %v620
        %v622 = vpop.f32.mrb[0].mxu0
        %623 = vmatprep.mubr.bf16.mxu0 0
        %624 = vmatmul.mubr.bf16.gmra.mrb[0].mxu0 %v500
        %v625 = vpop.f32.mrb[0].mxu0
        %v626 = vadd.f32 0.0, %v625
        %v627 = vpop.f32.mrb[0].mxu0
        %v628 = vpop.f32.mrb[0].mxu0
        %v629 = vadd.f32 0.0, %v628
        %v630 = vpop.f32.mrb[0].mxu0
        %631 = vmatprep.mubr.bf16.mxu0 0
        %632 = vmatmul.mubr.bf16.gmra.mrb[0].mxu0 %v503
        %v633 = vpop.f32.mrb[0].mxu0
        %v634 = vadd.f32 0.0, %v633
        %v635 = vpop.f32.mrb[0].mxu0
        %v636 = vpop.f32.mrb[0].mxu0
        %v637 = vadd.f32 0.0, %v636
        %v638 = vpop.f32.mrb[0].mxu0
        %639 = vmatprep.mubr.bf16.mxu0 0
        %640 = vmatmul.mubr.bf16.gmra.mrb[0].mxu0 %v506
        %v641 = vpop.f32.mrb[0].mxu0
        %v642 = vadd.f32 0.0, %v641
        %v643 = vpop.f32.mrb[0].mxu0
        %v644 = vpop.f32.mrb[0].mxu0
        %v645 = vadd.f32 0.0, %v644
        %v646 = vpop.f32.mrb[0].mxu0
        %647 = vmatprep.mubr.bf16.mxu0 0
        %648 = vmatmul.mubr.bf16.gmra.mrb[0].mxu0 %v509
        %v649 = vpop.f32.mrb[0].mxu0
        %v650 = vadd.f32 0.0, %v649
        %v651 = vpop.f32.mrb[0].mxu0
        %v652 = vpop.f32.mrb[0].mxu0
        %v653 = vadd.f32 0.0, %v652
        %v654 = vpop.f32.mrb[0].mxu0
        %655 = vdwg.mxu0
        %v656 = vadd.f32 %v346, %v546
        %v657 = vadd.f32 %v347, %v549
        %v658 = vadd.f32 %v348, %v554
        %v659 = vadd.f32 %v349, %v557
        %v660 = vadd.f32 %v350, %v562
        %v661 = vadd.f32 %v351, %v565
        %v662 = vadd.f32 %v352, %v570
        %v663 = vadd.f32 %v353, %v573
        %v664 = vadd.f32 %v354, %v578
        %v665 = vadd.f32 %v355, %v581
        %v666 = vadd.f32 %v356, %v586
        %v667 = vadd.f32 %v357, %v589
        %v668 = vadd.f32 %v358, %v594
        %v669 = vadd.f32 %v359, %v597
        %v670 = vadd.f32 %v360, %v602
        %v671 = vadd.f32 %v361, %v605
        %v672 = vadd.f32 %v362, %v610
        %v673 = vadd.f32 %v363, %v613
        %v674 = vadd.f32 %v364, %v618
        %v675 = vadd.f32 %v365, %v621
        %v676 = vadd.f32 %v366, %v626
        %v677 = vadd.f32 %v367, %v629
        %v678 = vadd.f32 %v368, %v634
        %v679 = vadd.f32 %v369, %v637
        %v680 = vadd.f32 %v370, %v642
        %v681 = vadd.f32 %v371, %v645
        %v682 = vadd.f32 %v372, %v650
        %v683 = vadd.f32 %v373, %v653
        %684 = vst [vmem:[%s217] sm:$0xff] %v656
        %685 = vst [vmem:[%s217 + $0x10] sm:$0xff] %v657
        %686 = vst [vmem:[%s217 + $0x20] sm:$0xff] %v658
        %687 = vst [vmem:[%s217 + $0x30] sm:$0xff] %v659
        %688 = vst [vmem:[%s217 + $0x40] sm:$0xff] %v660
        %689 = vst [vmem:[%s217 + $0x50] sm:$0xff] %v661
        %690 = vst [vmem:[%s217 + $0x60] sm:$0xff] %v662
        %691 = vst [vmem:[%s217 + $0x70] sm:$0xff] %v663
        %692 = vst [vmem:[%s217 + $0x80] sm:$0xff] %v664
        %693 = vst [vmem:[%s217 + $0x90] sm:$0xff] %v665
        %694 = vst [vmem:[%s217 + $0xa0] sm:$0xff] %v666
        %695 = vst [vmem:[%s217 + $0xb0] sm:$0xff] %v667
        %696 = vst [vmem:[%s217 + $0xc0] sm:$0xff] %v668
        %697 = vst [vmem:[%s217 + $0xd0] sm:$0xff] %v669
        %698 = vst [vmem:[%s217 + $0xe0] sm:$0xff] %v670
        %699 = vst [vmem:[%s217 + $0xf0] sm:$0xff] %v671
        %700 = vst [vmem:[%s217 + $0x100] sm:$0xff] %v672
        %701 = vst [vmem:[%s217 + $0x110] sm:$0xff] %v673
        %702 = vst [vmem:[%s217 + $0x120] sm:$0xff] %v674
        %703 = vst [vmem:[%s217 + $0x130] sm:$0xff] %v675
        %704 = vst [vmem:[%s217 + $0x140] sm:$0xff] %v676
        %705 = vst [vmem:[%s217 + $0x150] sm:$0xff] %v677
        %706 = vst [vmem:[%s217 + $0x160] sm:$0xff] %v678
        %707 = vst [vmem:[%s217 + $0x170] sm:$0xff] %v679
        %708 = vst [vmem:[%s217 + $0x180] sm:$0xff] %v680
        %709 = vst [vmem:[%s217 + $0x190] sm:$0xff] %v681
        %710 = vst [vmem:[%s217 + $0x1a0] sm:$0xff] %v682
        %711 = vst [vmem:[%s217 + $0x1b0] sm:$0xff] %v683
        %v712 = vld [vmem:[%s227] sm:$0xf]
        %v713 = vld [vmem:[%s227 + $0x4] sm:$0xf]
        %v714 = vld [vmem:[%s227 + $0x8] sm:$0xf]
        %v715 = vld [vmem:[%s227 + $0xc] sm:$0xf]
        %v716 = vld [vmem:[%s227 + $0x10] sm:$0xf]
        %v717 = vld [vmem:[%s227 + $0x14] sm:$0xf]
        %v718 = vld [vmem:[%s227 + $0x18] sm:$0xf]
        %v719 = vld [vmem:[%s227 + $0x1c] sm:$0xf]
        %v720 = vld [vmem:[%s227 + $0x20] sm:$0xf]
        %v721 = vld [vmem:[%s227 + $0x24] sm:$0xf]
        %v722 = vld [vmem:[%s227 + $0x28] sm:$0xf]
        %v723 = vld [vmem:[%s227 + $0x2c] sm:$0xf]
        %v724 = vld [vmem:[%s227 + $0x30] sm:$0xf]
        %v725 = vld [vmem:[%s227 + $0x34] sm:$0xf]
        %v726 = vld [vmem:[%s227 + $0x38] sm:$0xf]
        %v727 = vld [vmem:[%s227 + $0x3c] sm:$0xf]
        %v728 = vld [vmem:[%s227 + $0x40] sm:$0xf]
        %v729 = vld [vmem:[%s227 + $0x44] sm:$0xf]
        %v730 = vld [vmem:[%s227 + $0x48] sm:$0xf]
        %v731 = vld [vmem:[%s227 + $0x4c] sm:$0xf]
        %v732 = vld [vmem:[%s227 + $0x50] sm:$0xf]
        %v733 = vld [vmem:[%s227 + $0x54] sm:$0xf]
        %v734 = vld [vmem:[%s227 + $0x58] sm:$0xf]
        %v735 = vld [vmem:[%s227 + $0x5c] sm:$0xf]
        %v736 = vld [vmem:[%s227 + $0x60] sm:$0xf]
        %v737 = vld [vmem:[%s227 + $0x64] sm:$0xf]
        %v738 = vld [vmem:[%s227 + $0x68] sm:$0xf]
        %v739 = vld [vmem:[%s227 + $0x6c] sm:$0xf]
        %v740 = vld [vmem:[%s227 + $0x70] sm:$0x1]
        %s741 = scalar_lea.vmem %s234, 32
        %v742 = vld [vmem:[%s741] sm:$0xf]
        %v743 = vld [vmem:[%s741 + $0x4] sm:$0xf]
        %v744 = vld [vmem:[%s741 + $0x8] sm:$0xf]
        %v745 = vld [vmem:[%s741 + $0xc] sm:$0xf]
        %v746 = vld [vmem:[%s741 + $0x10] sm:$0xf]
        %v747 = vld [vmem:[%s741 + $0x14] sm:$0xf]
        %v748 = vld [vmem:[%s741 + $0x18] sm:$0xf]
        %v749 = vld [vmem:[%s741 + $0x1c] sm:$0xf]
        %v750 = vld [vmem:[%s217] sm:$0xff]
        %v751 = vld [vmem:[%s217 + $0x10] sm:$0xff]
        %v752 = vld [vmem:[%s217 + $0x20] sm:$0xff]
        %v753 = vld [vmem:[%s217 + $0x30] sm:$0xff]
        %v754 = vld [vmem:[%s217 + $0x40] sm:$0xff]
        %v755 = vld [vmem:[%s217 + $0x50] sm:$0xff]
        %v756 = vld [vmem:[%s217 + $0x60] sm:$0xff]
        %v757 = vld [vmem:[%s217 + $0x70] sm:$0xff]
        %v758 = vld [vmem:[%s217 + $0x80] sm:$0xff]
        %v759 = vld [vmem:[%s217 + $0x90] sm:$0xff]
        %v760 = vld [vmem:[%s217 + $0xa0] sm:$0xff]
        %v761 = vld [vmem:[%s217 + $0xb0] sm:$0xff]
        %v762 = vld [vmem:[%s217 + $0xc0] sm:$0xff]
        %v763 = vld [vmem:[%s217 + $0xd0] sm:$0xff]
        %v764 = vld [vmem:[%s217 + $0xe0] sm:$0xff]
        %v765 = vld [vmem:[%s217 + $0xf0] sm:$0xff]
        %v766 = vld [vmem:[%s217 + $0x100] sm:$0xff]
        %v767 = vld [vmem:[%s217 + $0x110] sm:$0xff]
        %v768 = vld [vmem:[%s217 + $0x120] sm:$0xff]
        %v769 = vld [vmem:[%s217 + $0x130] sm:$0xff]
        %v770 = vld [vmem:[%s217 + $0x140] sm:$0xff]
        %v771 = vld [vmem:[%s217 + $0x150] sm:$0xff]
        %v772 = vld [vmem:[%s217 + $0x160] sm:$0xff]
        %v773 = vld [vmem:[%s217 + $0x170] sm:$0xff]
        %v774 = vld [vmem:[%s217 + $0x180] sm:$0xff]
        %v775 = vld [vmem:[%s217 + $0x190] sm:$0xff]
        %v776 = vld [vmem:[%s217 + $0x1a0] sm:$0xff]
        %v777 = vld [vmem:[%s217 + $0x1b0] sm:$0xff]
        %v807 = vunpack.c.l.b16 %v712
        %v808 = vunpack.c.l.b16 %v713
        %v809 = vunpack.c.l.b16 %v714
        %v810 = vunpack.c.l.b16 %v715
        %v811 = vunpack.c.l.b16 %v716
        %v812 = vunpack.c.l.b16 %v717
        %v813 = vunpack.c.l.b16 %v718
        %v814 = vunpack.c.l.b16 %v719
        %v815 = vunpack.c.l.b16 %v720
        %v816 = vunpack.c.l.b16 %v721
        %v817 = vunpack.c.l.b16 %v722
        %v818 = vunpack.c.l.b16 %v723
        %v819 = vunpack.c.l.b16 %v724
        %v820 = vunpack.c.l.b16 %v725
        %v821 = vunpack.c.l.b16 %v726
        %v822 = vunpack.c.l.b16 %v727
        %v823 = vunpack.c.l.b16 %v728
        %v824 = vunpack.c.l.b16 %v729
        %v825 = vunpack.c.l.b16 %v730
        %v826 = vunpack.c.l.b16 %v731
        %v827 = vunpack.c.l.b16 %v732
        %v828 = vunpack.c.l.b16 %v733
        %v829 = vunpack.c.l.b16 %v734
        %v830 = vunpack.c.l.b16 %v735
        %v831 = vunpack.c.l.b16 %v736
        %v832 = vunpack.c.l.b16 %v737
        %v833 = vunpack.c.l.b16 %v738
        %v834 = vunpack.c.l.b16 %v739
        %v835 = vunpack.c.l.b16 %v740
        %v836 = vpack.c.b16 %v808, %v807
        %v837 = vpack.c.b16 %v810, %v809
        %v838 = vpack.c.b16 %v812, %v811
        %v839 = vpack.c.b16 %v814, %v813
        %v840 = vpack.c.b16 %v816, %v815
        %v841 = vpack.c.b16 %v818, %v817
        %v842 = vpack.c.b16 %v820, %v819
        %v843 = vpack.c.b16 %v822, %v821
        %v844 = vpack.c.b16 %v824, %v823
        %v845 = vpack.c.b16 %v826, %v825
        %v846 = vpack.c.b16 %v828, %v827
        %v847 = vpack.c.b16 %v830, %v829
        %v848 = vpack.c.b16 %v832, %v831
        %v849 = vpack.c.b16 %v834, %v833
        %v850 = vpack.c.b16 %v835, %v835
        %vm851 = vsmask.f32 7424
        %v853 = vshrl.u32 %v836, 16
        %v855 = vshll.u32 %v836, 16
        %v857 = vrot.slane %v855, 1
        %v858 = vor.u32 %v853, %v857
        %v860 = vshll.u32 %v837, 16
        %v862 = vrot.slane %v860, 1
        %v863 = vsel %vm851, %v858, %v862
        %v864 = vshrl.u32 %v837, 16
        %v866 = vor.u32 %v864, %v862
        %v868 = vshll.u32 %v838, 16
        %v870 = vrot.slane %v868, 1
        %v871 = vsel %vm851, %v866, %v870
        %v872 = vshrl.u32 %v838, 16
        %v874 = vor.u32 %v872, %v870
        %v876 = vshll.u32 %v839, 16
        %v878 = vrot.slane %v876, 1
        %v879 = vsel %vm851, %v874, %v878
        %v880 = vshrl.u32 %v839, 16
        %v882 = vor.u32 %v880, %v878
        %v884 = vshll.u32 %v840, 16
        %v886 = vrot.slane %v884, 1
        %v887 = vsel %vm851, %v882, %v886
        %v888 = vshrl.u32 %v840, 16
        %v890 = vor.u32 %v888, %v886
        %v892 = vshll.u32 %v841, 16
        %v894 = vrot.slane %v892, 1
        %v895 = vsel %vm851, %v890, %v894
        %v896 = vshrl.u32 %v841, 16
        %v898 = vor.u32 %v896, %v894
        %v900 = vshll.u32 %v842, 16
        %v902 = vrot.slane %v900, 1
        %v903 = vsel %vm851, %v898, %v902
        %v904 = vshrl.u32 %v842, 16
        %v906 = vor.u32 %v904, %v902
        %v908 = vshll.u32 %v843, 16
        %v910 = vrot.slane %v908, 1
        %v911 = vsel %vm851, %v906, %v910
        %v912 = vshrl.u32 %v843, 16
        %v914 = vor.u32 %v912, %v910
        %v916 = vshll.u32 %v844, 16
        %v918 = vrot.slane %v916, 1
        %v919 = vsel %vm851, %v914, %v918
        %v920 = vshrl.u32 %v844, 16
        %v922 = vor.u32 %v920, %v918
        %v924 = vshll.u32 %v845, 16
        %v926 = vrot.slane %v924, 1
        %v927 = vsel %vm851, %v922, %v926
        %v928 = vshrl.u32 %v845, 16
        %v930 = vor.u32 %v928, %v926
        %v932 = vshll.u32 %v846, 16
        %v934 = vrot.slane %v932, 1
        %v935 = vsel %vm851, %v930, %v934
        %v936 = vshrl.u32 %v846, 16
        %v938 = vor.u32 %v936, %v934
        %v940 = vshll.u32 %v847, 16
        %v942 = vrot.slane %v940, 1
        %v943 = vsel %vm851, %v938, %v942
        %v944 = vshrl.u32 %v847, 16
        %v946 = vor.u32 %v944, %v942
        %v948 = vshll.u32 %v848, 16
        %v950 = vrot.slane %v948, 1
        %v951 = vsel %vm851, %v946, %v950
        %v952 = vshrl.u32 %v848, 16
        %v954 = vor.u32 %v952, %v950
        %v956 = vshll.u32 %v849, 16
        %v958 = vrot.slane %v956, 1
        %v959 = vsel %vm851, %v954, %v958
        %v960 = vshrl.u32 %v849, 16
        %v962 = vor.u32 %v960, %v958
        %v964 = vshll.u32 %v850, 16
        %v966 = vrot.slane %v964, 1
        %v967 = vsel %vm851, %v962, %v966
        %v976 = vunpack.c.l.b16 %v742
        %v977 = vunpack.c.l.b16 %v743
        %v978 = vunpack.c.l.b16 %v744
        %v979 = vunpack.c.l.b16 %v745
        %v980 = vunpack.c.l.b16 %v746
        %v981 = vunpack.c.l.b16 %v747
        %v982 = vunpack.c.l.b16 %v748
        %v983 = vunpack.c.l.b16 %v749
        %v984 = vpack.c.b16 %v977, %v976
        %v985 = vpack.c.b16 %v979, %v978
        %v986 = vpack.c.b16 %v981, %v980
        %v987 = vpack.c.b16 %v983, %v982
        %v993 = vsel %vm468, %v863, 0
        %v996 = vsel %vm468, %v871, 0
        %v999 = vsel %vm468, %v879, 0
        %v1002 = vsel %vm468, %v887, 0
        %v1005 = vsel %vm468, %v895, 0
        %v1008 = vsel %vm468, %v903, 0
        %v1011 = vsel %vm468, %v911, 0
        %v1014 = vsel %vm468, %v919, 0
        %v1017 = vsel %vm468, %v927, 0
        %v1020 = vsel %vm468, %v935, 0
        %v1023 = vsel %vm468, %v943, 0
        %v1026 = vsel %vm468, %v951, 0
        %v1029 = vsel %vm468, %v959, 0
        %v1032 = vsel %vm468, %v967, 0
        %1034 = vmatprep.subr.bf16.mxu0 0
        %1035 = vmatpush1.bf16.msra.mxu0 %v984
        %1036 = vmatprep.subr.bf16.mxu0 0
        %1037 = vmatpush1.bf16.msra.mxu0 %v985
        %1038 = vmatprep.subr.bf16.mxu0 0
        %1039 = vmatpush1.bf16.msra.mxu0 %v986
        %1040 = vmatprep.subr.bf16.mxu0 0
        %1041 = vmatpush1.bf16.msra.mxu0 %v987
        %1042 = vmatprep.subr.bf16.mxu0 0
        %1043 = vmatpush1.bf16.msra.mxu0 0
        %1044 = vmatprep.subr.bf16.mxu0 0
        %1045 = vmatpush1.bf16.msra.mxu0 0
        %1046 = vmatprep.subr.bf16.mxu0 0
        %1047 = vmatpush1.bf16.msra.mxu0 0
        %1048 = vmatprep.subr.bf16.mxu0 0
        %1049 = vmatpush1.bf16.msra.mxu0 0
        %1050 = vmatprep.subr.bf16.mxu0 0
        %1051 = vmatpush1.bf16.msra.mxu0 0
        %1052 = vmatprep.subr.bf16.mxu0 0
        %1053 = vmatpush1.bf16.msra.mxu0 0
        %1054 = vmatprep.subr.bf16.mxu0 0
        %1055 = vmatpush1.bf16.msra.mxu0 0
        %1056 = vmatprep.subr.bf16.mxu0 0
        %1057 = vmatpush1.bf16.msra.mxu0 0
        %1058 = vmatprep.subr.bf16.mxu0 0
        %1059 = vmatpush1.bf16.msra.mxu0 0
        %1060 = vmatprep.subr.bf16.mxu0 0
        %1061 = vmatpush1.bf16.msra.mxu0 0
        %1062 = vmatprep.subr.bf16.mxu0 0
        %1063 = vmatpush1.bf16.msra.mxu0 0
        %1064 = vmatprep.subr.bf16.mxu0 0
        %1065 = vmatpush1.bf16.msra.mxu0 0
        %1066 = vmatprep.mubr.bf16.mxu0 0
        %1067 = vmatmul.mubr.bf16.gmra.mrb[0].mxu0 %v993
        %v1068 = vpop.f32.mrb[0].mxu0
        %v1069 = vadd.f32 0.0, %v1068
        %v1070 = vpop.f32.mrb[0].mxu0
        %v1071 = vpop.f32.mrb[0].mxu0
        %v1072 = vadd.f32 0.0, %v1071
        %v1073 = vpop.f32.mrb[0].mxu0
        %1074 = vmatprep.mubr.bf16.mxu0 0
        %1075 = vmatmul.mubr.bf16.gmra.mrb[0].mxu0 %v996
        %v1076 = vpop.f32.mrb[0].mxu0
        %v1077 = vadd.f32 0.0, %v1076
        %v1078 = vpop.f32.mrb[0].mxu0
        %v1079 = vpop.f32.mrb[0].mxu0
        %v1080 = vadd.f32 0.0, %v1079
        %v1081 = vpop.f32.mrb[0].mxu0
        %1082 = vmatprep.mubr.bf16.mxu0 0
        %1083 = vmatmul.mubr.bf16.gmra.mrb[0].mxu0 %v999
        %v1084 = vpop.f32.mrb[0].mxu0
        %v1085 = vadd.f32 0.0, %v1084
        %v1086 = vpop.f32.mrb[0].mxu0
        %v1087 = vpop.f32.mrb[0].mxu0
        %v1088 = vadd.f32 0.0, %v1087
        %v1089 = vpop.f32.mrb[0].mxu0
        %1090 = vmatprep.mubr.bf16.mxu0 0
        %1091 = vmatmul.mubr.bf16.gmra.mrb[0].mxu0 %v1002
        %v1092 = vpop.f32.mrb[0].mxu0
        %v1093 = vadd.f32 0.0, %v1092
        %v1094 = vpop.f32.mrb[0].mxu0
        %v1095 = vpop.f32.mrb[0].mxu0
        %v1096 = vadd.f32 0.0, %v1095
        %v1097 = vpop.f32.mrb[0].mxu0
        %1098 = vmatprep.mubr.bf16.mxu0 0
        %1099 = vmatmul.mubr.bf16.gmra.mrb[0].mxu0 %v1005
        %v1100 = vpop.f32.mrb[0].mxu0
        %v1101 = vadd.f32 0.0, %v1100
        %v1102 = vpop.f32.mrb[0].mxu0
        %v1103 = vpop.f32.mrb[0].mxu0
        %v1104 = vadd.f32 0.0, %v1103
        %v1105 = vpop.f32.mrb[0].mxu0
        %1106 = vmatprep.mubr.bf16.mxu0 0
        %1107 = vmatmul.mubr.bf16.gmra.mrb[0].mxu0 %v1008
        %v1108 = vpop.f32.mrb[0].mxu0
        %v1109 = vadd.f32 0.0, %v1108
        %v1110 = vpop.f32.mrb[0].mxu0
        %v1111 = vpop.f32.mrb[0].mxu0
        %v1112 = vadd.f32 0.0, %v1111
        %v1113 = vpop.f32.mrb[0].mxu0
        %1114 = vmatprep.mubr.bf16.mxu0 0
        %1115 = vmatmul.mubr.bf16.gmra.mrb[0].mxu0 %v1011
        %v1116 = vpop.f32.mrb[0].mxu0
        %v1117 = vadd.f32 0.0, %v1116
        %v1118 = vpop.f32.mrb[0].mxu0
        %v1119 = vpop.f32.mrb[0].mxu0
        %v1120 = vadd.f32 0.0, %v1119
        %v1121 = vpop.f32.mrb[0].mxu0
        %1122 = vmatprep.mubr.bf16.mxu0 0
        %1123 = vmatmul.mubr.bf16.gmra.mrb[0].mxu0 %v1014
        %v1124 = vpop.f32.mrb[0].mxu0
        %v1125 = vadd.f32 0.0, %v1124
        %v1126 = vpop.f32.mrb[0].mxu0
        %v1127 = vpop.f32.mrb[0].mxu0
        %v1128 = vadd.f32 0.0, %v1127
        %v1129 = vpop.f32.mrb[0].mxu0
        %1130 = vmatprep.mubr.bf16.mxu0 0
        %1131 = vmatmul.mubr.bf16.gmra.mrb[0].mxu0 %v1017
        %v1132 = vpop.f32.mrb[0].mxu0
        %v1133 = vadd.f32 0.0, %v1132
        %v1134 = vpop.f32.mrb[0].mxu0
        %v1135 = vpop.f32.mrb[0].mxu0
        %v1136 = vadd.f32 0.0, %v1135
        %v1137 = vpop.f32.mrb[0].mxu0
        %1138 = vmatprep.mubr.bf16.mxu0 0
        %1139 = vmatmul.mubr.bf16.gmra.mrb[0].mxu0 %v1020
        %v1140 = vpop.f32.mrb[0].mxu0
        %v1141 = vadd.f32 0.0, %v1140
        %v1142 = vpop.f32.mrb[0].mxu0
        %v1143 = vpop.f32.mrb[0].mxu0
        %v1144 = vadd.f32 0.0, %v1143
        %v1145 = vpop.f32.mrb[0].mxu0
        %1146 = vmatprep.mubr.bf16.mxu0 0
        %1147 = vmatmul.mubr.bf16.gmra.mrb[0].mxu0 %v1023
        %v1148 = vpop.f32.mrb[0].mxu0
        %v1149 = vadd.f32 0.0, %v1148
        %v1150 = vpop.f32.mrb[0].mxu0
        %v1151 = vpop.f32.mrb[0].mxu0
        %v1152 = vadd.f32 0.0, %v1151
        %v1153 = vpop.f32.mrb[0].mxu0
        %1154 = vmatprep.mubr.bf16.mxu0 0
        %1155 = vmatmul.mubr.bf16.gmra.mrb[0].mxu0 %v1026
        %v1156 = vpop.f32.mrb[0].mxu0
        %v1157 = vadd.f32 0.0, %v1156
        %v1158 = vpop.f32.mrb[0].mxu0
        %v1159 = vpop.f32.mrb[0].mxu0
        %v1160 = vadd.f32 0.0, %v1159
        %v1161 = vpop.f32.mrb[0].mxu0
        %1162 = vmatprep.mubr.bf16.mxu0 0
        %1163 = vmatmul.mubr.bf16.gmra.mrb[0].mxu0 %v1029
        %v1164 = vpop.f32.mrb[0].mxu0
        %v1165 = vadd.f32 0.0, %v1164
        %v1166 = vpop.f32.mrb[0].mxu0
        %v1167 = vpop.f32.mrb[0].mxu0
        %v1168 = vadd.f32 0.0, %v1167
        %v1169 = vpop.f32.mrb[0].mxu0
        %1170 = vmatprep.mubr.bf16.mxu0 0
        %1171 = vmatmul.mubr.bf16.gmra.mrb[0].mxu0 %v1032
        %v1172 = vpop.f32.mrb[0].mxu0
        %v1173 = vadd.f32 0.0, %v1172
        %v1174 = vpop.f32.mrb[0].mxu0
        %v1175 = vpop.f32.mrb[0].mxu0
        %v1176 = vadd.f32 0.0, %v1175
        %v1177 = vpop.f32.mrb[0].mxu0
        %1178 = vdwg.mxu0
        %v1179 = vadd.f32 %v750, %v1069
        %v1180 = vadd.f32 %v751, %v1072
        %v1181 = vadd.f32 %v752, %v1077
        %v1182 = vadd.f32 %v753, %v1080
        %v1183 = vadd.f32 %v754, %v1085
        %v1184 = vadd.f32 %v755, %v1088
        %v1185 = vadd.f32 %v756, %v1093
        %v1186 = vadd.f32 %v757, %v1096
        %v1187 = vadd.f32 %v758, %v1101
        %v1188 = vadd.f32 %v759, %v1104
        %v1189 = vadd.f32 %v760, %v1109
        %v1190 = vadd.f32 %v761, %v1112
        %v1191 = vadd.f32 %v762, %v1117
        %v1192 = vadd.f32 %v763, %v1120
        %v1193 = vadd.f32 %v764, %v1125
        %v1194 = vadd.f32 %v765, %v1128
        %v1195 = vadd.f32 %v766, %v1133
        %v1196 = vadd.f32 %v767, %v1136
        %v1197 = vadd.f32 %v768, %v1141
        %v1198 = vadd.f32 %v769, %v1144
        %v1199 = vadd.f32 %v770, %v1149
        %v1200 = vadd.f32 %v771, %v1152
        %v1201 = vadd.f32 %v772, %v1157
        %v1202 = vadd.f32 %v773, %v1160
        %v1203 = vadd.f32 %v774, %v1165
        %v1204 = vadd.f32 %v775, %v1168
        %v1205 = vadd.f32 %v776, %v1173
        %v1206 = vadd.f32 %v777, %v1176
        %1207 = vst [vmem:[%s217] sm:$0xff] %v1179
        %1208 = vst [vmem:[%s217 + $0x10] sm:$0xff] %v1180
        %1209 = vst [vmem:[%s217 + $0x20] sm:$0xff] %v1181
        %1210 = vst [vmem:[%s217 + $0x30] sm:$0xff] %v1182
        %1211 = vst [vmem:[%s217 + $0x40] sm:$0xff] %v1183
        %1212 = vst [vmem:[%s217 + $0x50] sm:$0xff] %v1184
        %1213 = vst [vmem:[%s217 + $0x60] sm:$0xff] %v1185
        %1214 = vst [vmem:[%s217 + $0x70] sm:$0xff] %v1186
        %1215 = vst [vmem:[%s217 + $0x80] sm:$0xff] %v1187
        %1216 = vst [vmem:[%s217 + $0x90] sm:$0xff] %v1188
        %1217 = vst [vmem:[%s217 + $0xa0] sm:$0xff] %v1189
        %1218 = vst [vmem:[%s217 + $0xb0] sm:$0xff] %v1190
        %1219 = vst [vmem:[%s217 + $0xc0] sm:$0xff] %v1191
        %1220 = vst [vmem:[%s217 + $0xd0] sm:$0xff] %v1192
        %1221 = vst [vmem:[%s217 + $0xe0] sm:$0xff] %v1193
        %1222 = vst [vmem:[%s217 + $0xf0] sm:$0xff] %v1194
        %1223 = vst [vmem:[%s217 + $0x100] sm:$0xff] %v1195
        %1224 = vst [vmem:[%s217 + $0x110] sm:$0xff] %v1196
        %1225 = vst [vmem:[%s217 + $0x120] sm:$0xff] %v1197
        %1226 = vst [vmem:[%s217 + $0x130] sm:$0xff] %v1198
        %1227 = vst [vmem:[%s217 + $0x140] sm:$0xff] %v1199
        %1228 = vst [vmem:[%s217 + $0x150] sm:$0xff] %v1200
        %1229 = vst [vmem:[%s217 + $0x160] sm:$0xff] %v1201
        %1230 = vst [vmem:[%s217 + $0x170] sm:$0xff] %v1202
        %1231 = vst [vmem:[%s217 + $0x180] sm:$0xff] %v1203
        %1232 = vst [vmem:[%s217 + $0x190] sm:$0xff] %v1204
        %1233 = vst [vmem:[%s217 + $0x1a0] sm:$0xff] %v1205
        %1234 = vst [vmem:[%s217 + $0x1b0] sm:$0xff] %v1206
        %v1235 = vld [vmem:[%s227] sm:$0xe]
        %v1236 = vld [vmem:[%s227 + $0x4] sm:$0xf]
        %v1237 = vld [vmem:[%s227 + $0x8] sm:$0xf]
        %v1238 = vld [vmem:[%s227 + $0xc] sm:$0xf]
        %v1239 = vld [vmem:[%s227 + $0x10] sm:$0xf]
        %v1240 = vld [vmem:[%s227 + $0x14] sm:$0xf]
        %v1241 = vld [vmem:[%s227 + $0x18] sm:$0xf]
        %v1242 = vld [vmem:[%s227 + $0x1c] sm:$0xf]
        %v1243 = vld [vmem:[%s227 + $0x20] sm:$0xf]
        %v1244 = vld [vmem:[%s227 + $0x24] sm:$0xf]
        %v1245 = vld [vmem:[%s227 + $0x28] sm:$0xf]
        %v1246 = vld [vmem:[%s227 + $0x2c] sm:$0xf]
        %v1247 = vld [vmem:[%s227 + $0x30] sm:$0xf]
        %v1248 = vld [vmem:[%s227 + $0x34] sm:$0xf]
        %v1249 = vld [vmem:[%s227 + $0x38] sm:$0xf]
        %v1250 = vld [vmem:[%s227 + $0x3c] sm:$0xf]
        %v1251 = vld [vmem:[%s227 + $0x40] sm:$0xf]
        %v1252 = vld [vmem:[%s227 + $0x44] sm:$0xf]
        %v1253 = vld [vmem:[%s227 + $0x48] sm:$0xf]
        %v1254 = vld [vmem:[%s227 + $0x4c] sm:$0xf]
        %v1255 = vld [vmem:[%s227 + $0x50] sm:$0xf]
        %v1256 = vld [vmem:[%s227 + $0x54] sm:$0xf]
        %v1257 = vld [vmem:[%s227 + $0x58] sm:$0xf]
        %v1258 = vld [vmem:[%s227 + $0x5c] sm:$0xf]
        %v1259 = vld [vmem:[%s227 + $0x60] sm:$0xf]
        %v1260 = vld [vmem:[%s227 + $0x64] sm:$0xf]
        %v1261 = vld [vmem:[%s227 + $0x68] sm:$0xf]
        %v1262 = vld [vmem:[%s227 + $0x6c] sm:$0xf]
        %v1263 = vld [vmem:[%s227 + $0x70] sm:$0x1]
        %s1264 = scalar_lea.vmem %s234, 64
        %v1265 = vld [vmem:[%s1264] sm:$0xf]
        %v1266 = vld [vmem:[%s1264 + $0x4] sm:$0xf]
        %v1267 = vld [vmem:[%s1264 + $0x8] sm:$0xf]
        %v1268 = vld [vmem:[%s1264 + $0xc] sm:$0xf]
        %v1269 = vld [vmem:[%s1264 + $0x10] sm:$0xf]
        %v1270 = vld [vmem:[%s1264 + $0x14] sm:$0xf]
        %v1271 = vld [vmem:[%s1264 + $0x18] sm:$0xf]
        %v1272 = vld [vmem:[%s1264 + $0x1c] sm:$0xf]
        %v1273 = vld [vmem:[%s217] sm:$0xff]
        %v1274 = vld [vmem:[%s217 + $0x10] sm:$0xff]
        %v1275 = vld [vmem:[%s217 + $0x20] sm:$0xff]
        %v1276 = vld [vmem:[%s217 + $0x30] sm:$0xff]
        %v1277 = vld [vmem:[%s217 + $0x40] sm:$0xff]
        %v1278 = vld [vmem:[%s217 + $0x50] sm:$0xff]
        %v1279 = vld [vmem:[%s217 + $0x60] sm:$0xff]
        %v1280 = vld [vmem:[%s217 + $0x70] sm:$0xff]
        %v1281 = vld [vmem:[%s217 + $0x80] sm:$0xff]
        %v1282 = vld [vmem:[%s217 + $0x90] sm:$0xff]
        %v1283 = vld [vmem:[%s217 + $0xa0] sm:$0xff]
        %v1284 = vld [vmem:[%s217 + $0xb0] sm:$0xff]
        %v1285 = vld [vmem:[%s217 + $0xc0] sm:$0xff]
        %v1286 = vld [vmem:[%s217 + $0xd0] sm:$0xff]
        %v1287 = vld [vmem:[%s217 + $0xe0] sm:$0xff]
        %v1288 = vld [vmem:[%s217 + $0xf0] sm:$0xff]
        %v1289 = vld [vmem:[%s217 + $0x100] sm:$0xff]
        %v1290 = vld [vmem:[%s217 + $0x110] sm:$0xff]
        %v1291 = vld [vmem:[%s217 + $0x120] sm:$0xff]
        %v1292 = vld [vmem:[%s217 + $0x130] sm:$0xff]
        %v1293 = vld [vmem:[%s217 + $0x140] sm:$0xff]
        %v1294 = vld [vmem:[%s217 + $0x150] sm:$0xff]
        %v1295 = vld [vmem:[%s217 + $0x160] sm:$0xff]
        %v1296 = vld [vmem:[%s217 + $0x170] sm:$0xff]
        %v1297 = vld [vmem:[%s217 + $0x180] sm:$0xff]
        %v1298 = vld [vmem:[%s217 + $0x190] sm:$0xff]
        %v1299 = vld [vmem:[%s217 + $0x1a0] sm:$0xff]
        %v1300 = vld [vmem:[%s217 + $0x1b0] sm:$0xff]
        %v1330 = vunpack.c.l.b16 %v1235
        %v1331 = vunpack.c.l.b16 %v1236
        %v1332 = vunpack.c.l.b16 %v1237
        %v1333 = vunpack.c.l.b16 %v1238
        %v1334 = vunpack.c.l.b16 %v1239
        %v1335 = vunpack.c.l.b16 %v1240
        %v1336 = vunpack.c.l.b16 %v1241
        %v1337 = vunpack.c.l.b16 %v1242
        %v1338 = vunpack.c.l.b16 %v1243
        %v1339 = vunpack.c.l.b16 %v1244
        %v1340 = vunpack.c.l.b16 %v1245
        %v1341 = vunpack.c.l.b16 %v1246
        %v1342 = vunpack.c.l.b16 %v1247
        %v1343 = vunpack.c.l.b16 %v1248
        %v1344 = vunpack.c.l.b16 %v1249
        %v1345 = vunpack.c.l.b16 %v1250
        %v1346 = vunpack.c.l.b16 %v1251
        %v1347 = vunpack.c.l.b16 %v1252
        %v1348 = vunpack.c.l.b16 %v1253
        %v1349 = vunpack.c.l.b16 %v1254
        %v1350 = vunpack.c.l.b16 %v1255
        %v1351 = vunpack.c.l.b16 %v1256
        %v1352 = vunpack.c.l.b16 %v1257
        %v1353 = vunpack.c.l.b16 %v1258
        %v1354 = vunpack.c.l.b16 %v1259
        %v1355 = vunpack.c.l.b16 %v1260
        %v1356 = vunpack.c.l.b16 %v1261
        %v1357 = vunpack.c.l.b16 %v1262
        %v1358 = vunpack.c.l.b16 %v1263
        %v1359 = vpack.c.b16 %v1331, %v1330
        %v1360 = vpack.c.b16 %v1333, %v1332
        %v1361 = vpack.c.b16 %v1335, %v1334
        %v1362 = vpack.c.b16 %v1337, %v1336
        %v1363 = vpack.c.b16 %v1339, %v1338
        %v1364 = vpack.c.b16 %v1341, %v1340
        %v1365 = vpack.c.b16 %v1343, %v1342
        %v1366 = vpack.c.b16 %v1345, %v1344
        %v1367 = vpack.c.b16 %v1347, %v1346
        %v1368 = vpack.c.b16 %v1349, %v1348
        %v1369 = vpack.c.b16 %v1351, %v1350
        %v1370 = vpack.c.b16 %v1353, %v1352
        %v1371 = vpack.c.b16 %v1355, %v1354
        %v1372 = vpack.c.b16 %v1357, %v1356
        %v1373 = vpack.c.b16 %v1358, %v1358
        %vm1374 = vcmask 1046528
        %v1375 = vrot.slane %v1359, 1
        %v1376 = vrot.slane %v1360, 1
        %v1377 = vsel %vm1374, %v1375, %v1376
        %v1378 = vrot.slane %v1361, 1
        %v1379 = vsel %vm1374, %v1376, %v1378
        %v1380 = vrot.slane %v1362, 1
        %v1381 = vsel %vm1374, %v1378, %v1380
        %v1382 = vrot.slane %v1363, 1
        %v1383 = vsel %vm1374, %v1380, %v1382
        %v1384 = vrot.slane %v1364, 1
        %v1385 = vsel %vm1374, %v1382, %v1384
        %v1386 = vrot.slane %v1365, 1
        %v1387 = vsel %vm1374, %v1384, %v1386
        %v1388 = vrot.slane %v1366, 1
        %v1389 = vsel %vm1374, %v1386, %v1388
        %v1390 = vrot.slane %v1367, 1
        %v1391 = vsel %vm1374, %v1388, %v1390
        %v1392 = vrot.slane %v1368, 1
        %v1393 = vsel %vm1374, %v1390, %v1392
        %v1394 = vrot.slane %v1369, 1
        %v1395 = vsel %vm1374, %v1392, %v1394
        %v1396 = vrot.slane %v1370, 1
        %v1397 = vsel %vm1374, %v1394, %v1396
        %v1398 = vrot.slane %v1371, 1
        %v1399 = vsel %vm1374, %v1396, %v1398
        %v1400 = vrot.slane %v1372, 1
        %v1401 = vsel %vm1374, %v1398, %v1400
        %v1402 = vrot.slane %v1373, 1
        %v1403 = vsel %vm1374, %v1400, %v1402
        %v1412 = vunpack.c.l.b16 %v1265
        %v1413 = vunpack.c.l.b16 %v1266
        %v1414 = vunpack.c.l.b16 %v1267
        %v1415 = vunpack.c.l.b16 %v1268
        %v1416 = vunpack.c.l.b16 %v1269
        %v1417 = vunpack.c.l.b16 %v1270
        %v1418 = vunpack.c.l.b16 %v1271
        %v1419 = vunpack.c.l.b16 %v1272
        %v1420 = vpack.c.b16 %v1413, %v1412
        %v1421 = vpack.c.b16 %v1415, %v1414
        %v1422 = vpack.c.b16 %v1417, %v1416
        %v1423 = vpack.c.b16 %v1419, %v1418
        %v1429 = vsel %vm468, %v1377, 0
        %v1432 = vsel %vm468, %v1379, 0
        %v1435 = vsel %vm468, %v1381, 0
        %v1438 = vsel %vm468, %v1383, 0
        %v1441 = vsel %vm468, %v1385, 0
        %v1444 = vsel %vm468, %v1387, 0
        %v1447 = vsel %vm468, %v1389, 0
        %v1450 = vsel %vm468, %v1391, 0
        %v1453 = vsel %vm468, %v1393, 0
        %v1456 = vsel %vm468, %v1395, 0
        %v1459 = vsel %vm468, %v1397, 0
        %v1462 = vsel %vm468, %v1399, 0
        %v1465 = vsel %vm468, %v1401, 0
        %v1468 = vsel %vm468, %v1403, 0
        %1470 = vmatprep.subr.bf16.mxu0 0
        %1471 = vmatpush1.bf16.msra.mxu0 %v1420
        %1472 = vmatprep.subr.bf16.mxu0 0
        %1473 = vmatpush1.bf16.msra.mxu0 %v1421
        %1474 = vmatprep.subr.bf16.mxu0 0
        %1475 = vmatpush1.bf16.msra.mxu0 %v1422
        %1476 = vmatprep.subr.bf16.mxu0 0
        %1477 = vmatpush1.bf16.msra.mxu0 %v1423
        %1478 = vmatprep.subr.bf16.mxu0 0
        %1479 = vmatpush1.bf16.msra.mxu0 0
        %1480 = vmatprep.subr.bf16.mxu0 0
        %1481 = vmatpush1.bf16.msra.mxu0 0
        %1482 = vmatprep.subr.bf16.mxu0 0
        %1483 = vmatpush1.bf16.msra.mxu0 0
        %1484 = vmatprep.subr.bf16.mxu0 0
        %1485 = vmatpush1.bf16.msra.mxu0 0
        %1486 = vmatprep.subr.bf16.mxu0 0
        %1487 = vmatpush1.bf16.msra.mxu0 0
        %1488 = vmatprep.subr.bf16.mxu0 0
        %1489 = vmatpush1.bf16.msra.mxu0 0
        %1490 = vmatprep.subr.bf16.mxu0 0
        %1491 = vmatpush1.bf16.msra.mxu0 0
        %1492 = vmatprep.subr.bf16.mxu0 0
        %1493 = vmatpush1.bf16.msra.mxu0 0
        %1494 = vmatprep.subr.bf16.mxu0 0
        %1495 = vmatpush1.bf16.msra.mxu0 0
        %1496 = vmatprep.subr.bf16.mxu0 0
        %1497 = vmatpush1.bf16.msra.mxu0 0
        %1498 = vmatprep.subr.bf16.mxu0 0
        %1499 = vmatpush1.bf16.msra.mxu0 0
        %1500 = vmatprep.subr.bf16.mxu0 0
        %1501 = vmatpush1.bf16.msra.mxu0 0
        %1502 = vmatprep.mubr.bf16.mxu0 0
        %1503 = vmatmul.mubr.bf16.gmra.mrb[0].mxu0 %v1429
        %v1504 = vpop.f32.mrb[0].mxu0
        %v1505 = vadd.f32 0.0, %v1504
        %v1506 = vpop.f32.mrb[0].mxu0
        %v1507 = vpop.f32.mrb[0].mxu0
        %v1508 = vadd.f32 0.0, %v1507
        %v1509 = vpop.f32.mrb[0].mxu0
        %1510 = vmatprep.mubr.bf16.mxu0 0
        %1511 = vmatmul.mubr.bf16.gmra.mrb[0].mxu0 %v1432
        %v1512 = vpop.f32.mrb[0].mxu0
        %v1513 = vadd.f32 0.0, %v1512
        %v1514 = vpop.f32.mrb[0].mxu0
        %v1515 = vpop.f32.mrb[0].mxu0
        %v1516 = vadd.f32 0.0, %v1515
        %v1517 = vpop.f32.mrb[0].mxu0
        %1518 = vmatprep.mubr.bf16.mxu0 0
        %1519 = vmatmul.mubr.bf16.gmra.mrb[0].mxu0 %v1435
        %v1520 = vpop.f32.mrb[0].mxu0
        %v1521 = vadd.f32 0.0, %v1520
        %v1522 = vpop.f32.mrb[0].mxu0
        %v1523 = vpop.f32.mrb[0].mxu0
        %v1524 = vadd.f32 0.0, %v1523
        %v1525 = vpop.f32.mrb[0].mxu0
        %1526 = vmatprep.mubr.bf16.mxu0 0
        %1527 = vmatmul.mubr.bf16.gmra.mrb[0].mxu0 %v1438
        %v1528 = vpop.f32.mrb[0].mxu0
        %v1529 = vadd.f32 0.0, %v1528
        %v1530 = vpop.f32.mrb[0].mxu0
        %v1531 = vpop.f32.mrb[0].mxu0
        %v1532 = vadd.f32 0.0, %v1531
        %v1533 = vpop.f32.mrb[0].mxu0
        %1534 = vmatprep.mubr.bf16.mxu0 0
        %1535 = vmatmul.mubr.bf16.gmra.mrb[0].mxu0 %v1441
        %v1536 = vpop.f32.mrb[0].mxu0
        %v1537 = vadd.f32 0.0, %v1536
        %v1538 = vpop.f32.mrb[0].mxu0
        %v1539 = vpop.f32.mrb[0].mxu0
        %v1540 = vadd.f32 0.0, %v1539
        %v1541 = vpop.f32.mrb[0].mxu0
        %1542 = vmatprep.mubr.bf16.mxu0 0
        %1543 = vmatmul.mubr.bf16.gmra.mrb[0].mxu0 %v1444
        %v1544 = vpop.f32.mrb[0].mxu0
        %v1545 = vadd.f32 0.0, %v1544
        %v1546 = vpop.f32.mrb[0].mxu0
        %v1547 = vpop.f32.mrb[0].mxu0
        %v1548 = vadd.f32 0.0, %v1547
        %v1549 = vpop.f32.mrb[0].mxu0
        %1550 = vmatprep.mubr.bf16.mxu0 0
        %1551 = vmatmul.mubr.bf16.gmra.mrb[0].mxu0 %v1447
        %v1552 = vpop.f32.mrb[0].mxu0
        %v1553 = vadd.f32 0.0, %v1552
        %v1554 = vpop.f32.mrb[0].mxu0
        %v1555 = vpop.f32.mrb[0].mxu0
        %v1556 = vadd.f32 0.0, %v1555
        %v1557 = vpop.f32.mrb[0].mxu0
        %1558 = vmatprep.mubr.bf16.mxu0 0
        %1559 = vmatmul.mubr.bf16.gmra.mrb[0].mxu0 %v1450
        %v1560 = vpop.f32.mrb[0].mxu0
        %v1561 = vadd.f32 0.0, %v1560
        %v1562 = vpop.f32.mrb[0].mxu0
        %v1563 = vpop.f32.mrb[0].mxu0
        %v1564 = vadd.f32 0.0, %v1563
        %v1565 = vpop.f32.mrb[0].mxu0
        %1566 = vmatprep.mubr.bf16.mxu0 0
        %1567 = vmatmul.mubr.bf16.gmra.mrb[0].mxu0 %v1453
        %v1568 = vpop.f32.mrb[0].mxu0
        %v1569 = vadd.f32 0.0, %v1568
        %v1570 = vpop.f32.mrb[0].mxu0
        %v1571 = vpop.f32.mrb[0].mxu0
        %v1572 = vadd.f32 0.0, %v1571
        %v1573 = vpop.f32.mrb[0].mxu0
        %1574 = vmatprep.mubr.bf16.mxu0 0
        %1575 = vmatmul.mubr.bf16.gmra.mrb[0].mxu0 %v1456
        %v1576 = vpop.f32.mrb[0].mxu0
        %v1577 = vadd.f32 0.0, %v1576
        %v1578 = vpop.f32.mrb[0].mxu0
        %v1579 = vpop.f32.mrb[0].mxu0
        %v1580 = vadd.f32 0.0, %v1579
        %v1581 = vpop.f32.mrb[0].mxu0
        %1582 = vmatprep.mubr.bf16.mxu0 0
        %1583 = vmatmul.mubr.bf16.gmra.mrb[0].mxu0 %v1459
        %v1584 = vpop.f32.mrb[0].mxu0
        %v1585 = vadd.f32 0.0, %v1584
        %v1586 = vpop.f32.mrb[0].mxu0
        %v1587 = vpop.f32.mrb[0].mxu0
        %v1588 = vadd.f32 0.0, %v1587
        %v1589 = vpop.f32.mrb[0].mxu0
        %1590 = vmatprep.mubr.bf16.mxu0 0
        %1591 = vmatmul.mubr.bf16.gmra.mrb[0].mxu0 %v1462
        %v1592 = vpop.f32.mrb[0].mxu0
        %v1593 = vadd.f32 0.0, %v1592
        %v1594 = vpop.f32.mrb[0].mxu0
        %v1595 = vpop.f32.mrb[0].mxu0
        %v1596 = vadd.f32 0.0, %v1595
        %v1597 = vpop.f32.mrb[0].mxu0
        %1598 = vmatprep.mubr.bf16.mxu0 0
        %1599 = vmatmul.mubr.bf16.gmra.mrb[0].mxu0 %v1465
        %v1600 = vpop.f32.mrb[0].mxu0
        %v1601 = vadd.f32 0.0, %v1600
        %v1602 = vpop.f32.mrb[0].mxu0
        %v1603 = vpop.f32.mrb[0].mxu0
        %v1604 = vadd.f32 0.0, %v1603
        %v1605 = vpop.f32.mrb[0].mxu0
        %1606 = vmatprep.mubr.bf16.mxu0 0
        %1607 = vmatmul.mubr.bf16.gmra.mrb[0].mxu0 %v1468
        %v1608 = vpop.f32.mrb[0].mxu0
        %v1609 = vadd.f32 0.0, %v1608
        %v1610 = vpop.f32.mrb[0].mxu0
        %v1611 = vpop.f32.mrb[0].mxu0
        %v1612 = vadd.f32 0.0, %v1611
        %v1613 = vpop.f32.mrb[0].mxu0
        %1614 = vdwg.mxu0
        %v1615 = vadd.f32 %v1273, %v1505
        %v1616 = vadd.f32 %v1274, %v1508
        %v1617 = vadd.f32 %v1275, %v1513
        %v1618 = vadd.f32 %v1276, %v1516
        %v1619 = vadd.f32 %v1277, %v1521
        %v1620 = vadd.f32 %v1278, %v1524
        %v1621 = vadd.f32 %v1279, %v1529
        %v1622 = vadd.f32 %v1280, %v1532
        %v1623 = vadd.f32 %v1281, %v1537
        %v1624 = vadd.f32 %v1282, %v1540
        %v1625 = vadd.f32 %v1283, %v1545
        %v1626 = vadd.f32 %v1284, %v1548
        %v1627 = vadd.f32 %v1285, %v1553
        %v1628 = vadd.f32 %v1286, %v1556
        %v1629 = vadd.f32 %v1287, %v1561
        %v1630 = vadd.f32 %v1288, %v1564
        %v1631 = vadd.f32 %v1289, %v1569
        %v1632 = vadd.f32 %v1290, %v1572
        %v1633 = vadd.f32 %v1291, %v1577
        %v1634 = vadd.f32 %v1292, %v1580
        %v1635 = vadd.f32 %v1293, %v1585
        %v1636 = vadd.f32 %v1294, %v1588
        %v1637 = vadd.f32 %v1295, %v1593
        %v1638 = vadd.f32 %v1296, %v1596
        %v1639 = vadd.f32 %v1297, %v1601
        %v1640 = vadd.f32 %v1298, %v1604
        %v1641 = vadd.f32 %v1299, %v1609
        %v1642 = vadd.f32 %v1300, %v1612
        %1643 = vst [vmem:[%s217] sm:$0xff] %v1615
        %1644 = vst [vmem:[%s217 + $0x10] sm:$0xff] %v1616
        %1645 = vst [vmem:[%s217 + $0x20] sm:$0xff] %v1617
        %1646 = vst [vmem:[%s217 + $0x30] sm:$0xff] %v1618
        %1647 = vst [vmem:[%s217 + $0x40] sm:$0xff] %v1619
        %1648 = vst [vmem:[%s217 + $0x50] sm:$0xff] %v1620
        %1649 = vst [vmem:[%s217 + $0x60] sm:$0xff] %v1621
        %1650 = vst [vmem:[%s217 + $0x70] sm:$0xff] %v1622
        %1651 = vst [vmem:[%s217 + $0x80] sm:$0xff] %v1623
        %1652 = vst [vmem:[%s217 + $0x90] sm:$0xff] %v1624
        %1653 = vst [vmem:[%s217 + $0xa0] sm:$0xff] %v1625
        %1654 = vst [vmem:[%s217 + $0xb0] sm:$0xff] %v1626
        %1655 = vst [vmem:[%s217 + $0xc0] sm:$0xff] %v1627
        %1656 = vst [vmem:[%s217 + $0xd0] sm:$0xff] %v1628
        %1657 = vst [vmem:[%s217 + $0xe0] sm:$0xff] %v1629
        %1658 = vst [vmem:[%s217 + $0xf0] sm:$0xff] %v1630
        %1659 = vst [vmem:[%s217 + $0x100] sm:$0xff] %v1631
        %1660 = vst [vmem:[%s217 + $0x110] sm:$0xff] %v1632
        %1661 = vst [vmem:[%s217 + $0x120] sm:$0xff] %v1633
        %1662 = vst [vmem:[%s217 + $0x130] sm:$0xff] %v1634
        %1663 = vst [vmem:[%s217 + $0x140] sm:$0xff] %v1635
        %1664 = vst [vmem:[%s217 + $0x150] sm:$0xff] %v1636
        %1665 = vst [vmem:[%s217 + $0x160] sm:$0xff] %v1637
        %1666 = vst [vmem:[%s217 + $0x170] sm:$0xff] %v1638
        %1667 = vst [vmem:[%s217 + $0x180] sm:$0xff] %v1639
        %1668 = vst [vmem:[%s217 + $0x190] sm:$0xff] %v1640
        %1669 = vst [vmem:[%s217 + $0x1a0] sm:$0xff] %v1641
        %1670 = vst [vmem:[%s217 + $0x1b0] sm:$0xff] %v1642
        %v1671 = vld [vmem:[%s227 + $0x8] sm:$0xf]
        %v1672 = vld [vmem:[%s227 + $0xc] sm:$0xf]
        %v1673 = vld [vmem:[%s227 + $0x10] sm:$0xf]
        %v1674 = vld [vmem:[%s227 + $0x14] sm:$0xf]
        %v1675 = vld [vmem:[%s227 + $0x18] sm:$0xf]
        %v1676 = vld [vmem:[%s227 + $0x1c] sm:$0xf]
        %v1677 = vld [vmem:[%s227 + $0x20] sm:$0xf]
        %v1678 = vld [vmem:[%s227 + $0x24] sm:$0xf]
        %v1679 = vld [vmem:[%s227 + $0x28] sm:$0xf]
        %v1680 = vld [vmem:[%s227 + $0x2c] sm:$0xf]
        %v1681 = vld [vmem:[%s227 + $0x30] sm:$0xf]
        %v1682 = vld [vmem:[%s227 + $0x34] sm:$0xf]
        %v1683 = vld [vmem:[%s227 + $0x38] sm:$0xf]
        %v1684 = vld [vmem:[%s227 + $0x3c] sm:$0xf]
        %v1685 = vld [vmem:[%s227 + $0x40] sm:$0xf]
        %v1686 = vld [vmem:[%s227 + $0x44] sm:$0xf]
        %v1687 = vld [vmem:[%s227 + $0x48] sm:$0xf]
        %v1688 = vld [vmem:[%s227 + $0x4c] sm:$0xf]
        %v1689 = vld [vmem:[%s227 + $0x50] sm:$0xf]
        %v1690 = vld [vmem:[%s227 + $0x54] sm:$0xf]
        %v1691 = vld [vmem:[%s227 + $0x58] sm:$0xf]
        %v1692 = vld [vmem:[%s227 + $0x5c] sm:$0xf]
        %v1693 = vld [vmem:[%s227 + $0x60] sm:$0xf]
        %v1694 = vld [vmem:[%s227 + $0x64] sm:$0xf]
        %v1695 = vld [vmem:[%s227 + $0x68] sm:$0xf]
        %v1696 = vld [vmem:[%s227 + $0x6c] sm:$0xf]
        %v1697 = vld [vmem:[%s227 + $0x70] sm:$0xf]
        %v1698 = vld [vmem:[%s227 + $0x74] sm:$0xf]
        %s1699 = scalar_lea.vmem %s234, 96
        %v1700 = vld [vmem:[%s1699] sm:$0xf]
        %v1701 = vld [vmem:[%s1699 + $0x4] sm:$0xf]
        %v1702 = vld [vmem:[%s1699 + $0x8] sm:$0xf]
        %v1703 = vld [vmem:[%s1699 + $0xc] sm:$0xf]
        %v1704 = vld [vmem:[%s1699 + $0x10] sm:$0xf]
        %v1705 = vld [vmem:[%s1699 + $0x14] sm:$0xf]
        %v1706 = vld [vmem:[%s1699 + $0x18] sm:$0xf]
        %v1707 = vld [vmem:[%s1699 + $0x1c] sm:$0xf]
        %v1708 = vld [vmem:[%s217] sm:$0xff]
        %v1709 = vld [vmem:[%s217 + $0x10] sm:$0xff]
        %v1710 = vld [vmem:[%s217 + $0x20] sm:$0xff]
        %v1711 = vld [vmem:[%s217 + $0x30] sm:$0xff]
        %v1712 = vld [vmem:[%s217 + $0x40] sm:$0xff]
        %v1713 = vld [vmem:[%s217 + $0x50] sm:$0xff]
        %v1714 = vld [vmem:[%s217 + $0x60] sm:$0xff]
        %v1715 = vld [vmem:[%s217 + $0x70] sm:$0xff]
        %v1716 = vld [vmem:[%s217 + $0x80] sm:$0xff]
        %v1717 = vld [vmem:[%s217 + $0x90] sm:$0xff]
        %v1718 = vld [vmem:[%s217 + $0xa0] sm:$0xff]
        %v1719 = vld [vmem:[%s217 + $0xb0] sm:$0xff]
        %v1720 = vld [vmem:[%s217 + $0xc0] sm:$0xff]
        %v1721 = vld [vmem:[%s217 + $0xd0] sm:$0xff]
        %v1722 = vld [vmem:[%s217 + $0xe0] sm:$0xff]
        %v1723 = vld [vmem:[%s217 + $0xf0] sm:$0xff]
        %v1724 = vld [vmem:[%s217 + $0x100] sm:$0xff]
        %v1725 = vld [vmem:[%s217 + $0x110] sm:$0xff]
        %v1726 = vld [vmem:[%s217 + $0x120] sm:$0xff]
        %v1727 = vld [vmem:[%s217 + $0x130] sm:$0xff]
        %v1728 = vld [vmem:[%s217 + $0x140] sm:$0xff]
        %v1729 = vld [vmem:[%s217 + $0x150] sm:$0xff]
        %v1730 = vld [vmem:[%s217 + $0x160] sm:$0xff]
        %v1731 = vld [vmem:[%s217 + $0x170] sm:$0xff]
        %v1732 = vld [vmem:[%s217 + $0x180] sm:$0xff]
        %v1733 = vld [vmem:[%s217 + $0x190] sm:$0xff]
        %v1734 = vld [vmem:[%s217 + $0x1a0] sm:$0xff]
        %v1735 = vld [vmem:[%s217 + $0x1b0] sm:$0xff]
        %v1764 = vunpack.c.l.b16 %v1671
        %v1765 = vunpack.c.l.b16 %v1672
        %v1766 = vunpack.c.l.b16 %v1673
        %v1767 = vunpack.c.l.b16 %v1674
        %v1768 = vunpack.c.l.b16 %v1675
        %v1769 = vunpack.c.l.b16 %v1676
        %v1770 = vunpack.c.l.b16 %v1677
        %v1771 = vunpack.c.l.b16 %v1678
        %v1772 = vunpack.c.l.b16 %v1679
        %v1773 = vunpack.c.l.b16 %v1680
        %v1774 = vunpack.c.l.b16 %v1681
        %v1775 = vunpack.c.l.b16 %v1682
        %v1776 = vunpack.c.l.b16 %v1683
        %v1777 = vunpack.c.l.b16 %v1684
        %v1778 = vunpack.c.l.b16 %v1685
        %v1779 = vunpack.c.l.b16 %v1686
        %v1780 = vunpack.c.l.b16 %v1687
        %v1781 = vunpack.c.l.b16 %v1688
        %v1782 = vunpack.c.l.b16 %v1689
        %v1783 = vunpack.c.l.b16 %v1690
        %v1784 = vunpack.c.l.b16 %v1691
        %v1785 = vunpack.c.l.b16 %v1692
        %v1786 = vunpack.c.l.b16 %v1693
        %v1787 = vunpack.c.l.b16 %v1694
        %v1788 = vunpack.c.l.b16 %v1695
        %v1789 = vunpack.c.l.b16 %v1696
        %v1790 = vunpack.c.l.b16 %v1697
        %v1791 = vunpack.c.l.b16 %v1698
        %v1792 = vpack.c.b16 %v1765, %v1764
        %v1793 = vpack.c.b16 %v1767, %v1766
        %v1794 = vpack.c.b16 %v1769, %v1768
        %v1795 = vpack.c.b16 %v1771, %v1770
        %v1796 = vpack.c.b16 %v1773, %v1772
        %v1797 = vpack.c.b16 %v1775, %v1774
        %v1798 = vpack.c.b16 %v1777, %v1776
        %v1799 = vpack.c.b16 %v1779, %v1778
        %v1800 = vpack.c.b16 %v1781, %v1780
        %v1801 = vpack.c.b16 %v1783, %v1782
        %v1802 = vpack.c.b16 %v1785, %v1784
        %v1803 = vpack.c.b16 %v1787, %v1786
        %v1804 = vpack.c.b16 %v1789, %v1788
        %v1805 = vpack.c.b16 %v1791, %v1790
        %v1814 = vunpack.c.l.b16 %v1700
        %v1815 = vunpack.c.l.b16 %v1701
        %v1816 = vunpack.c.l.b16 %v1702
        %v1817 = vunpack.c.l.b16 %v1703
        %v1818 = vunpack.c.l.b16 %v1704
        %v1819 = vunpack.c.l.b16 %v1705
        %v1820 = vunpack.c.l.b16 %v1706
        %v1821 = vunpack.c.l.b16 %v1707
        %v1822 = vpack.c.b16 %v1815, %v1814
        %v1823 = vpack.c.b16 %v1817, %v1816
        %v1824 = vpack.c.b16 %v1819, %v1818
        %v1825 = vpack.c.b16 %v1821, %v1820
        %v1831 = vsel %vm468, %v1792, 0
        %v1834 = vsel %vm468, %v1793, 0
        %v1837 = vsel %vm468, %v1794, 0
        %v1840 = vsel %vm468, %v1795, 0
        %v1843 = vsel %vm468, %v1796, 0
        %v1846 = vsel %vm468, %v1797, 0
        %v1849 = vsel %vm468, %v1798, 0
        %v1852 = vsel %vm468, %v1799, 0
        %v1855 = vsel %vm468, %v1800, 0
        %v1858 = vsel %vm468, %v1801, 0
        %v1861 = vsel %vm468, %v1802, 0
        %v1864 = vsel %vm468, %v1803, 0
        %v1867 = vsel %vm468, %v1804, 0
        %v1870 = vsel %vm468, %v1805, 0
        %1872 = vmatprep.subr.bf16.mxu0 0
        %1873 = vmatpush1.bf16.msra.mxu0 %v1822
        %1874 = vmatprep.subr.bf16.mxu0 0
        %1875 = vmatpush1.bf16.msra.mxu0 %v1823
        %1876 = vmatprep.subr.bf16.mxu0 0
        %1877 = vmatpush1.bf16.msra.mxu0 %v1824
        %1878 = vmatprep.subr.bf16.mxu0 0
        %1879 = vmatpush1.bf16.msra.mxu0 %v1825
        %1880 = vmatprep.subr.bf16.mxu0 0
        %1881 = vmatpush1.bf16.msra.mxu0 0
        %1882 = vmatprep.subr.bf16.mxu0 0
        %1883 = vmatpush1.bf16.msra.mxu0 0
        %1884 = vmatprep.subr.bf16.mxu0 0
        %1885 = vmatpush1.bf16.msra.mxu0 0
        %1886 = vmatprep.subr.bf16.mxu0 0
        %1887 = vmatpush1.bf16.msra.mxu0 0
        %1888 = vmatprep.subr.bf16.mxu0 0
        %1889 = vmatpush1.bf16.msra.mxu0 0
        %1890 = vmatprep.subr.bf16.mxu0 0
        %1891 = vmatpush1.bf16.msra.mxu0 0
        %1892 = vmatprep.subr.bf16.mxu0 0
        %1893 = vmatpush1.bf16.msra.mxu0 0
        %1894 = vmatprep.subr.bf16.mxu0 0
        %1895 = vmatpush1.bf16.msra.mxu0 0
        %1896 = vmatprep.subr.bf16.mxu0 0
        %1897 = vmatpush1.bf16.msra.mxu0 0
        %1898 = vmatprep.subr.bf16.mxu0 0
        %1899 = vmatpush1.bf16.msra.mxu0 0
        %1900 = vmatprep.subr.bf16.mxu0 0
        %1901 = vmatpush1.bf16.msra.mxu0 0
        %1902 = vmatprep.subr.bf16.mxu0 0
        %1903 = vmatpush1.bf16.msra.mxu0 0
        %1904 = vmatprep.mubr.bf16.mxu0 0
        %1905 = vmatmul.mubr.bf16.gmra.mrb[0].mxu0 %v1831
        %v1906 = vpop.f32.mrb[0].mxu0
        %v1907 = vadd.f32 0.0, %v1906
        %v1908 = vpop.f32.mrb[0].mxu0
        %v1909 = vpop.f32.mrb[0].mxu0
        %v1910 = vadd.f32 0.0, %v1909
        %v1911 = vpop.f32.mrb[0].mxu0
        %1912 = vmatprep.mubr.bf16.mxu0 0
        %1913 = vmatmul.mubr.bf16.gmra.mrb[0].mxu0 %v1834
        %v1914 = vpop.f32.mrb[0].mxu0
        %v1915 = vadd.f32 0.0, %v1914
        %v1916 = vpop.f32.mrb[0].mxu0
        %v1917 = vpop.f32.mrb[0].mxu0
        %v1918 = vadd.f32 0.0, %v1917
        %v1919 = vpop.f32.mrb[0].mxu0
        %1920 = vmatprep.mubr.bf16.mxu0 0
        %1921 = vmatmul.mubr.bf16.gmra.mrb[0].mxu0 %v1837
        %v1922 = vpop.f32.mrb[0].mxu0
        %v1923 = vadd.f32 0.0, %v1922
        %v1924 = vpop.f32.mrb[0].mxu0
        %v1925 = vpop.f32.mrb[0].mxu0
        %v1926 = vadd.f32 0.0, %v1925
        %v1927 = vpop.f32.mrb[0].mxu0
        %1928 = vmatprep.mubr.bf16.mxu0 0
        %1929 = vmatmul.mubr.bf16.gmra.mrb[0].mxu0 %v1840
        %v1930 = vpop.f32.mrb[0].mxu0
        %v1931 = vadd.f32 0.0, %v1930
        %v1932 = vpop.f32.mrb[0].mxu0
        %v1933 = vpop.f32.mrb[0].mxu0
        %v1934 = vadd.f32 0.0, %v1933
        %v1935 = vpop.f32.mrb[0].mxu0
        %1936 = vmatprep.mubr.bf16.mxu0 0
        %1937 = vmatmul.mubr.bf16.gmra.mrb[0].mxu0 %v1843
        %v1938 = vpop.f32.mrb[0].mxu0
        %v1939 = vadd.f32 0.0, %v1938
        %v1940 = vpop.f32.mrb[0].mxu0
        %v1941 = vpop.f32.mrb[0].mxu0
        %v1942 = vadd.f32 0.0, %v1941
        %v1943 = vpop.f32.mrb[0].mxu0
        %1944 = vmatprep.mubr.bf16.mxu0 0
        %1945 = vmatmul.mubr.bf16.gmra.mrb[0].mxu0 %v1846
        %v1946 = vpop.f32.mrb[0].mxu0
        %v1947 = vadd.f32 0.0, %v1946
        %v1948 = vpop.f32.mrb[0].mxu0
        %v1949 = vpop.f32.mrb[0].mxu0
        %v1950 = vadd.f32 0.0, %v1949
        %v1951 = vpop.f32.mrb[0].mxu0
        %1952 = vmatprep.mubr.bf16.mxu0 0
        %1953 = vmatmul.mubr.bf16.gmra.mrb[0].mxu0 %v1849
        %v1954 = vpop.f32.mrb[0].mxu0
        %v1955 = vadd.f32 0.0, %v1954
        %v1956 = vpop.f32.mrb[0].mxu0
        %v1957 = vpop.f32.mrb[0].mxu0
        %v1958 = vadd.f32 0.0, %v1957
        %v1959 = vpop.f32.mrb[0].mxu0
        %1960 = vmatprep.mubr.bf16.mxu0 0
        %1961 = vmatmul.mubr.bf16.gmra.mrb[0].mxu0 %v1852
        %v1962 = vpop.f32.mrb[0].mxu0
        %v1963 = vadd.f32 0.0, %v1962
        %v1964 = vpop.f32.mrb[0].mxu0
        %v1965 = vpop.f32.mrb[0].mxu0
        %v1966 = vadd.f32 0.0, %v1965
        %v1967 = vpop.f32.mrb[0].mxu0
        %1968 = vmatprep.mubr.bf16.mxu0 0
        %1969 = vmatmul.mubr.bf16.gmra.mrb[0].mxu0 %v1855
        %v1970 = vpop.f32.mrb[0].mxu0
        %v1971 = vadd.f32 0.0, %v1970
        %v1972 = vpop.f32.mrb[0].mxu0
        %v1973 = vpop.f32.mrb[0].mxu0
        %v1974 = vadd.f32 0.0, %v1973
        %v1975 = vpop.f32.mrb[0].mxu0
        %1976 = vmatprep.mubr.bf16.mxu0 0
        %1977 = vmatmul.mubr.bf16.gmra.mrb[0].mxu0 %v1858
        %v1978 = vpop.f32.mrb[0].mxu0
        %v1979 = vadd.f32 0.0, %v1978
        %v1980 = vpop.f32.mrb[0].mxu0
        %v1981 = vpop.f32.mrb[0].mxu0
        %v1982 = vadd.f32 0.0, %v1981
        %v1983 = vpop.f32.mrb[0].mxu0
        %1984 = vmatprep.mubr.bf16.mxu0 0
        %1985 = vmatmul.mubr.bf16.gmra.mrb[0].mxu0 %v1861
        %v1986 = vpop.f32.mrb[0].mxu0
        %v1987 = vadd.f32 0.0, %v1986
        %v1988 = vpop.f32.mrb[0].mxu0
        %v1989 = vpop.f32.mrb[0].mxu0
        %v1990 = vadd.f32 0.0, %v1989
        %v1991 = vpop.f32.mrb[0].mxu0
        %1992 = vmatprep.mubr.bf16.mxu0 0
        %1993 = vmatmul.mubr.bf16.gmra.mrb[0].mxu0 %v1864
        %v1994 = vpop.f32.mrb[0].mxu0
        %v1995 = vadd.f32 0.0, %v1994
        %v1996 = vpop.f32.mrb[0].mxu0
        %v1997 = vpop.f32.mrb[0].mxu0
        %v1998 = vadd.f32 0.0, %v1997
        %v1999 = vpop.f32.mrb[0].mxu0
        %2000 = vmatprep.mubr.bf16.mxu0 0
        %2001 = vmatmul.mubr.bf16.gmra.mrb[0].mxu0 %v1867
        %v2002 = vpop.f32.mrb[0].mxu0
        %v2003 = vadd.f32 0.0, %v2002
        %v2004 = vpop.f32.mrb[0].mxu0
        %v2005 = vpop.f32.mrb[0].mxu0
        %v2006 = vadd.f32 0.0, %v2005
        %v2007 = vpop.f32.mrb[0].mxu0
        %2008 = vmatprep.mubr.bf16.mxu0 0
        %2009 = vmatmul.mubr.bf16.gmra.mrb[0].mxu0 %v1870
        %v2010 = vpop.f32.mrb[0].mxu0
        %v2011 = vadd.f32 0.0, %v2010
        %v2012 = vpop.f32.mrb[0].mxu0
        %v2013 = vpop.f32.mrb[0].mxu0
        %v2014 = vadd.f32 0.0, %v2013
        %v2015 = vpop.f32.mrb[0].mxu0
        %2016 = vdwg.mxu0
        %v2017 = vadd.f32 %v1708, %v1907
        %v2018 = vadd.f32 %v1709, %v1910
        %v2019 = vadd.f32 %v1710, %v1915
        %v2020 = vadd.f32 %v1711, %v1918
        %v2021 = vadd.f32 %v1712, %v1923
        %v2022 = vadd.f32 %v1713, %v1926
        %v2023 = vadd.f32 %v1714, %v1931
        %v2024 = vadd.f32 %v1715, %v1934
        %v2025 = vadd.f32 %v1716, %v1939
        %v2026 = vadd.f32 %v1717, %v1942
        %v2027 = vadd.f32 %v1718, %v1947
        %v2028 = vadd.f32 %v1719, %v1950
        %v2029 = vadd.f32 %v1720, %v1955
        %v2030 = vadd.f32 %v1721, %v1958
        %v2031 = vadd.f32 %v1722, %v1963
        %v2032 = vadd.f32 %v1723, %v1966
        %v2033 = vadd.f32 %v1724, %v1971
        %v2034 = vadd.f32 %v1725, %v1974
        %v2035 = vadd.f32 %v1726, %v1979
        %v2036 = vadd.f32 %v1727, %v1982
        %v2037 = vadd.f32 %v1728, %v1987
        %v2038 = vadd.f32 %v1729, %v1990
        %v2039 = vadd.f32 %v1730, %v1995
        %v2040 = vadd.f32 %v1731, %v1998
        %v2041 = vadd.f32 %v1732, %v2003
        %v2042 = vadd.f32 %v1733, %v2006
        %v2043 = vadd.f32 %v1734, %v2011
        %v2044 = vadd.f32 %v1735, %v2014
        %2045 = vst [vmem:[%s217] sm:$0xff] %v2017
        %2046 = vst [vmem:[%s217 + $0x10] sm:$0xff] %v2018
        %2047 = vst [vmem:[%s217 + $0x20] sm:$0xff] %v2019
        %2048 = vst [vmem:[%s217 + $0x30] sm:$0xff] %v2020
        %2049 = vst [vmem:[%s217 + $0x40] sm:$0xff] %v2021
        %2050 = vst [vmem:[%s217 + $0x50] sm:$0xff] %v2022
        %2051 = vst [vmem:[%s217 + $0x60] sm:$0xff] %v2023
        %2052 = vst [vmem:[%s217 + $0x70] sm:$0xff] %v2024
        %2053 = vst [vmem:[%s217 + $0x80] sm:$0xff] %v2025
        %2054 = vst [vmem:[%s217 + $0x90] sm:$0xff] %v2026
        %2055 = vst [vmem:[%s217 + $0xa0] sm:$0xff] %v2027
        %2056 = vst [vmem:[%s217 + $0xb0] sm:$0xff] %v2028
        %2057 = vst [vmem:[%s217 + $0xc0] sm:$0xff] %v2029
        %2058 = vst [vmem:[%s217 + $0xd0] sm:$0xff] %v2030
        %2059 = vst [vmem:[%s217 + $0xe0] sm:$0xff] %v2031
        %2060 = vst [vmem:[%s217 + $0xf0] sm:$0xff] %v2032
        %2061 = vst [vmem:[%s217 + $0x100] sm:$0xff] %v2033
        %2062 = vst [vmem:[%s217 + $0x110] sm:$0xff] %v2034
        %2063 = vst [vmem:[%s217 + $0x120] sm:$0xff] %v2035
        %2064 = vst [vmem:[%s217 + $0x130] sm:$0xff] %v2036
        %2065 = vst [vmem:[%s217 + $0x140] sm:$0xff] %v2037
        %2066 = vst [vmem:[%s217 + $0x150] sm:$0xff] %v2038
        %2067 = vst [vmem:[%s217 + $0x160] sm:$0xff] %v2039
        %2068 = vst [vmem:[%s217 + $0x170] sm:$0xff] %v2040
        %2069 = vst [vmem:[%s217 + $0x180] sm:$0xff] %v2041
        %2070 = vst [vmem:[%s217 + $0x190] sm:$0xff] %v2042
        %2071 = vst [vmem:[%s217 + $0x1a0] sm:$0xff] %v2043
        %2072 = vst [vmem:[%s217 + $0x1b0] sm:$0xff] %v2044
        %v2073 = vld [vmem:[%s227 + $0x8] sm:$0xf]
        %v2074 = vld [vmem:[%s227 + $0xc] sm:$0xf]
        %v2075 = vld [vmem:[%s227 + $0x10] sm:$0xf]
        %v2076 = vld [vmem:[%s227 + $0x14] sm:$0xf]
        %v2077 = vld [vmem:[%s227 + $0x18] sm:$0xf]
        %v2078 = vld [vmem:[%s227 + $0x1c] sm:$0xf]
        %v2079 = vld [vmem:[%s227 + $0x20] sm:$0xf]
        %v2080 = vld [vmem:[%s227 + $0x24] sm:$0xf]
        %v2081 = vld [vmem:[%s227 + $0x28] sm:$0xf]
        %v2082 = vld [vmem:[%s227 + $0x2c] sm:$0xf]
        %v2083 = vld [vmem:[%s227 + $0x30] sm:$0xf]
        %v2084 = vld [vmem:[%s227 + $0x34] sm:$0xf]
        %v2085 = vld [vmem:[%s227 + $0x38] sm:$0xf]
        %v2086 = vld [vmem:[%s227 + $0x3c] sm:$0xf]
        %v2087 = vld [vmem:[%s227 + $0x40] sm:$0xf]
        %v2088 = vld [vmem:[%s227 + $0x44] sm:$0xf]
        %v2089 = vld [vmem:[%s227 + $0x48] sm:$0xf]
        %v2090 = vld [vmem:[%s227 + $0x4c] sm:$0xf]
        %v2091 = vld [vmem:[%s227 + $0x50] sm:$0xf]
        %v2092 = vld [vmem:[%s227 + $0x54] sm:$0xf]
        %v2093 = vld [vmem:[%s227 + $0x58] sm:$0xf]
        %v2094 = vld [vmem:[%s227 + $0x5c] sm:$0xf]
        %v2095 = vld [vmem:[%s227 + $0x60] sm:$0xf]
        %v2096 = vld [vmem:[%s227 + $0x64] sm:$0xf]
        %v2097 = vld [vmem:[%s227 + $0x68] sm:$0xf]
        %v2098 = vld [vmem:[%s227 + $0x6c] sm:$0xf]
        %v2099 = vld [vmem:[%s227 + $0x70] sm:$0xf]
        %v2100 = vld [vmem:[%s227 + $0x74] sm:$0xf]
        %v2101 = vld [vmem:[%s227 + $0x78] sm:$0x1]
        %s2102 = scalar_lea.vmem %s234, 128
        %v2103 = vld [vmem:[%s2102] sm:$0xf]
        %v2104 = vld [vmem:[%s2102 + $0x4] sm:$0xf]
        %v2105 = vld [vmem:[%s2102 + $0x8] sm:$0xf]
        %v2106 = vld [vmem:[%s2102 + $0xc] sm:$0xf]
        %v2107 = vld [vmem:[%s2102 + $0x10] sm:$0xf]
        %v2108 = vld [vmem:[%s2102 + $0x14] sm:$0xf]
        %v2109 = vld [vmem:[%s2102 + $0x18] sm:$0xf]
        %v2110 = vld [vmem:[%s2102 + $0x1c] sm:$0xf]
        %v2111 = vld [vmem:[%s217] sm:$0xff]
        %v2112 = vld [vmem:[%s217 + $0x10] sm:$0xff]
        %v2113 = vld [vmem:[%s217 + $0x20] sm:$0xff]
        %v2114 = vld [vmem:[%s217 + $0x30] sm:$0xff]
        %v2115 = vld [vmem:[%s217 + $0x40] sm:$0xff]
        %v2116 = vld [vmem:[%s217 + $0x50] sm:$0xff]
        %v2117 = vld [vmem:[%s217 + $0x60] sm:$0xff]
        %v2118 = vld [vmem:[%s217 + $0x70] sm:$0xff]
        %v2119 = vld [vmem:[%s217 + $0x80] sm:$0xff]
        %v2120 = vld [vmem:[%s217 + $0x90] sm:$0xff]
        %v2121 = vld [vmem:[%s217 + $0xa0] sm:$0xff]
        %v2122 = vld [vmem:[%s217 + $0xb0] sm:$0xff]
        %v2123 = vld [vmem:[%s217 + $0xc0] sm:$0xff]
        %v2124 = vld [vmem:[%s217 + $0xd0] sm:$0xff]
        %v2125 = vld [vmem:[%s217 + $0xe0] sm:$0xff]
        %v2126 = vld [vmem:[%s217 + $0xf0] sm:$0xff]
        %v2127 = vld [vmem:[%s217 + $0x100] sm:$0xff]
        %v2128 = vld [vmem:[%s217 + $0x110] sm:$0xff]
        %v2129 = vld [vmem:[%s217 + $0x120] sm:$0xff]
        %v2130 = vld [vmem:[%s217 + $0x130] sm:$0xff]
        %v2131 = vld [vmem:[%s217 + $0x140] sm:$0xff]
        %v2132 = vld [vmem:[%s217 + $0x150] sm:$0xff]
        %v2133 = vld [vmem:[%s217 + $0x160] sm:$0xff]
        %v2134 = vld [vmem:[%s217 + $0x170] sm:$0xff]
        %v2135 = vld [vmem:[%s217 + $0x180] sm:$0xff]
        %v2136 = vld [vmem:[%s217 + $0x190] sm:$0xff]
        %v2137 = vld [vmem:[%s217 + $0x1a0] sm:$0xff]
        %v2138 = vld [vmem:[%s217 + $0x1b0] sm:$0xff]
        %v2168 = vunpack.c.l.b16 %v2073
        %v2169 = vunpack.c.l.b16 %v2074
        %v2170 = vunpack.c.l.b16 %v2075
        %v2171 = vunpack.c.l.b16 %v2076
        %v2172 = vunpack.c.l.b16 %v2077
        %v2173 = vunpack.c.l.b16 %v2078
        %v2174 = vunpack.c.l.b16 %v2079
        %v2175 = vunpack.c.l.b16 %v2080
        %v2176 = vunpack.c.l.b16 %v2081
        %v2177 = vunpack.c.l.b16 %v2082
        %v2178 = vunpack.c.l.b16 %v2083
        %v2179 = vunpack.c.l.b16 %v2084
        %v2180 = vunpack.c.l.b16 %v2085
        %v2181 = vunpack.c.l.b16 %v2086
        %v2182 = vunpack.c.l.b16 %v2087
        %v2183 = vunpack.c.l.b16 %v2088
        %v2184 = vunpack.c.l.b16 %v2089
        %v2185 = vunpack.c.l.b16 %v2090
        %v2186 = vunpack.c.l.b16 %v2091
        %v2187 = vunpack.c.l.b16 %v2092
        %v2188 = vunpack.c.l.b16 %v2093
        %v2189 = vunpack.c.l.b16 %v2094
        %v2190 = vunpack.c.l.b16 %v2095
        %v2191 = vunpack.c.l.b16 %v2096
        %v2192 = vunpack.c.l.b16 %v2097
        %v2193 = vunpack.c.l.b16 %v2098
        %v2194 = vunpack.c.l.b16 %v2099
        %v2195 = vunpack.c.l.b16 %v2100
        %v2196 = vunpack.c.l.b16 %v2101
        %v2197 = vpack.c.b16 %v2169, %v2168
        %v2198 = vpack.c.b16 %v2171, %v2170
        %v2199 = vpack.c.b16 %v2173, %v2172
        %v2200 = vpack.c.b16 %v2175, %v2174
        %v2201 = vpack.c.b16 %v2177, %v2176
        %v2202 = vpack.c.b16 %v2179, %v2178
        %v2203 = vpack.c.b16 %v2181, %v2180
        %v2204 = vpack.c.b16 %v2183, %v2182
        %v2205 = vpack.c.b16 %v2185, %v2184
        %v2206 = vpack.c.b16 %v2187, %v2186
        %v2207 = vpack.c.b16 %v2189, %v2188
        %v2208 = vpack.c.b16 %v2191, %v2190
        %v2209 = vpack.c.b16 %v2193, %v2192
        %v2210 = vpack.c.b16 %v2195, %v2194
        %v2211 = vpack.c.b16 %v2196, %v2196
        %v2213 = vshrl.u32 %v2197, 16
        %v2215 = vshll.u32 %v2197, 16
        %v2217 = vrot.slane %v2215, 1
        %v2218 = vor.u32 %v2213, %v2217
        %v2220 = vshll.u32 %v2198, 16
        %v2222 = vrot.slane %v2220, 1
        %v2223 = vsel %vm851, %v2218, %v2222
        %v2224 = vshrl.u32 %v2198, 16
        %v2226 = vor.u32 %v2224, %v2222
        %v2228 = vshll.u32 %v2199, 16
        %v2230 = vrot.slane %v2228, 1
        %v2231 = vsel %vm851, %v2226, %v2230
        %v2232 = vshrl.u32 %v2199, 16
        %v2234 = vor.u32 %v2232, %v2230
        %v2236 = vshll.u32 %v2200, 16
        %v2238 = vrot.slane %v2236, 1
        %v2239 = vsel %vm851, %v2234, %v2238
        %v2240 = vshrl.u32 %v2200, 16
        %v2242 = vor.u32 %v2240, %v2238
        %v2244 = vshll.u32 %v2201, 16
        %v2246 = vrot.slane %v2244, 1
        %v2247 = vsel %vm851, %v2242, %v2246
        %v2248 = vshrl.u32 %v2201, 16
        %v2250 = vor.u32 %v2248, %v2246
        %v2252 = vshll.u32 %v2202, 16
        %v2254 = vrot.slane %v2252, 1
        %v2255 = vsel %vm851, %v2250, %v2254
        %v2256 = vshrl.u32 %v2202, 16
        %v2258 = vor.u32 %v2256, %v2254
        %v2260 = vshll.u32 %v2203, 16
        %v2262 = vrot.slane %v2260, 1
        %v2263 = vsel %vm851, %v2258, %v2262
        %v2264 = vshrl.u32 %v2203, 16
        %v2266 = vor.u32 %v2264, %v2262
        %v2268 = vshll.u32 %v2204, 16
        %v2270 = vrot.slane %v2268, 1
        %v2271 = vsel %vm851, %v2266, %v2270
        %v2272 = vshrl.u32 %v2204, 16
        %v2274 = vor.u32 %v2272, %v2270
        %v2276 = vshll.u32 %v2205, 16
        %v2278 = vrot.slane %v2276, 1
        %v2279 = vsel %vm851, %v2274, %v2278
        %v2280 = vshrl.u32 %v2205, 16
        %v2282 = vor.u32 %v2280, %v2278
        %v2284 = vshll.u32 %v2206, 16
        %v2286 = vrot.slane %v2284, 1
        %v2287 = vsel %vm851, %v2282, %v2286
        %v2288 = vshrl.u32 %v2206, 16
        %v2290 = vor.u32 %v2288, %v2286
        %v2292 = vshll.u32 %v2207, 16
        %v2294 = vrot.slane %v2292, 1
        %v2295 = vsel %vm851, %v2290, %v2294
        %v2296 = vshrl.u32 %v2207, 16
        %v2298 = vor.u32 %v2296, %v2294
        %v2300 = vshll.u32 %v2208, 16
        %v2302 = vrot.slane %v2300, 1
        %v2303 = vsel %vm851, %v2298, %v2302
        %v2304 = vshrl.u32 %v2208, 16
        %v2306 = vor.u32 %v2304, %v2302
        %v2308 = vshll.u32 %v2209, 16
        %v2310 = vrot.slane %v2308, 1
        %v2311 = vsel %vm851, %v2306, %v2310
        %v2312 = vshrl.u32 %v2209, 16
        %v2314 = vor.u32 %v2312, %v2310
        %v2316 = vshll.u32 %v2210, 16
        %v2318 = vrot.slane %v2316, 1
        %v2319 = vsel %vm851, %v2314, %v2318
        %v2320 = vshrl.u32 %v2210, 16
        %v2322 = vor.u32 %v2320, %v2318
        %v2324 = vshll.u32 %v2211, 16
        %v2326 = vrot.slane %v2324, 1
        %v2327 = vsel %vm851, %v2322, %v2326
        %v2336 = vunpack.c.l.b16 %v2103
        %v2337 = vunpack.c.l.b16 %v2104
        %v2338 = vunpack.c.l.b16 %v2105
        %v2339 = vunpack.c.l.b16 %v2106
        %v2340 = vunpack.c.l.b16 %v2107
        %v2341 = vunpack.c.l.b16 %v2108
        %v2342 = vunpack.c.l.b16 %v2109
        %v2343 = vunpack.c.l.b16 %v2110
        %v2344 = vpack.c.b16 %v2337, %v2336
        %v2345 = vpack.c.b16 %v2339, %v2338
        %v2346 = vpack.c.b16 %v2341, %v2340
        %v2347 = vpack.c.b16 %v2343, %v2342
        %v2353 = vsel %vm468, %v2223, 0
        %v2356 = vsel %vm468, %v2231, 0
        %v2359 = vsel %vm468, %v2239, 0
        %v2362 = vsel %vm468, %v2247, 0
        %v2365 = vsel %vm468, %v2255, 0
        %v2368 = vsel %vm468, %v2263, 0
        %v2371 = vsel %vm468, %v2271, 0
        %v2374 = vsel %vm468, %v2279, 0
        %v2377 = vsel %vm468, %v2287, 0
        %v2380 = vsel %vm468, %v2295, 0
        %v2383 = vsel %vm468, %v2303, 0
        %v2386 = vsel %vm468, %v2311, 0
        %v2389 = vsel %vm468, %v2319, 0
        %v2392 = vsel %vm468, %v2327, 0
        %2394 = vmatprep.subr.bf16.mxu0 0
        %2395 = vmatpush1.bf16.msra.mxu0 %v2344
        %2396 = vmatprep.subr.bf16.mxu0 0
        %2397 = vmatpush1.bf16.msra.mxu0 %v2345
        %2398 = vmatprep.subr.bf16.mxu0 0
        %2399 = vmatpush1.bf16.msra.mxu0 %v2346
        %2400 = vmatprep.subr.bf16.mxu0 0
        %2401 = vmatpush1.bf16.msra.mxu0 %v2347
        %2402 = vmatprep.subr.bf16.mxu0 0
        %2403 = vmatpush1.bf16.msra.mxu0 0
        %2404 = vmatprep.subr.bf16.mxu0 0
        %2405 = vmatpush1.bf16.msra.mxu0 0
        %2406 = vmatprep.subr.bf16.mxu0 0
        %2407 = vmatpush1.bf16.msra.mxu0 0
        %2408 = vmatprep.subr.bf16.mxu0 0
        %2409 = vmatpush1.bf16.msra.mxu0 0
        %2410 = vmatprep.subr.bf16.mxu0 0
        %2411 = vmatpush1.bf16.msra.mxu0 0
        %2412 = vmatprep.subr.bf16.mxu0 0
        %2413 = vmatpush1.bf16.msra.mxu0 0
        %2414 = vmatprep.subr.bf16.mxu0 0
        %2415 = vmatpush1.bf16.msra.mxu0 0
        %2416 = vmatprep.subr.bf16.mxu0 0
        %2417 = vmatpush1.bf16.msra.mxu0 0
        %2418 = vmatprep.subr.bf16.mxu0 0
        %2419 = vmatpush1.bf16.msra.mxu0 0
        %2420 = vmatprep.subr.bf16.mxu0 0
        %2421 = vmatpush1.bf16.msra.mxu0 0
        %2422 = vmatprep.subr.bf16.mxu0 0
        %2423 = vmatpush1.bf16.msra.mxu0 0
        %2424 = vmatprep.subr.bf16.mxu0 0
        %2425 = vmatpush1.bf16.msra.mxu0 0
        %2426 = vmatprep.mubr.bf16.mxu0 0
        %2427 = vmatmul.mubr.bf16.gmra.mrb[0].mxu0 %v2353
        %v2428 = vpop.f32.mrb[0].mxu0
        %v2429 = vadd.f32 0.0, %v2428
        %v2430 = vpop.f32.mrb[0].mxu0
        %v2431 = vpop.f32.mrb[0].mxu0
        %v2432 = vadd.f32 0.0, %v2431
        %v2433 = vpop.f32.mrb[0].mxu0
        %2434 = vmatprep.mubr.bf16.mxu0 0
        %2435 = vmatmul.mubr.bf16.gmra.mrb[0].mxu0 %v2356
        %v2436 = vpop.f32.mrb[0].mxu0
        %v2437 = vadd.f32 0.0, %v2436
        %v2438 = vpop.f32.mrb[0].mxu0
        %v2439 = vpop.f32.mrb[0].mxu0
        %v2440 = vadd.f32 0.0, %v2439
        %v2441 = vpop.f32.mrb[0].mxu0
        %2442 = vmatprep.mubr.bf16.mxu0 0
        %2443 = vmatmul.mubr.bf16.gmra.mrb[0].mxu0 %v2359
        %v2444 = vpop.f32.mrb[0].mxu0
        %v2445 = vadd.f32 0.0, %v2444
        %v2446 = vpop.f32.mrb[0].mxu0
        %v2447 = vpop.f32.mrb[0].mxu0
        %v2448 = vadd.f32 0.0, %v2447
        %v2449 = vpop.f32.mrb[0].mxu0
        %2450 = vmatprep.mubr.bf16.mxu0 0
        %2451 = vmatmul.mubr.bf16.gmra.mrb[0].mxu0 %v2362
        %v2452 = vpop.f32.mrb[0].mxu0
        %v2453 = vadd.f32 0.0, %v2452
        %v2454 = vpop.f32.mrb[0].mxu0
        %v2455 = vpop.f32.mrb[0].mxu0
        %v2456 = vadd.f32 0.0, %v2455
        %v2457 = vpop.f32.mrb[0].mxu0
        %2458 = vmatprep.mubr.bf16.mxu0 0
        %2459 = vmatmul.mubr.bf16.gmra.mrb[0].mxu0 %v2365
        %v2460 = vpop.f32.mrb[0].mxu0
        %v2461 = vadd.f32 0.0, %v2460
        %v2462 = vpop.f32.mrb[0].mxu0
        %v2463 = vpop.f32.mrb[0].mxu0
        %v2464 = vadd.f32 0.0, %v2463
        %v2465 = vpop.f32.mrb[0].mxu0
        %2466 = vmatprep.mubr.bf16.mxu0 0
        %2467 = vmatmul.mubr.bf16.gmra.mrb[0].mxu0 %v2368
        %v2468 = vpop.f32.mrb[0].mxu0
        %v2469 = vadd.f32 0.0, %v2468
        %v2470 = vpop.f32.mrb[0].mxu0
        %v2471 = vpop.f32.mrb[0].mxu0
        %v2472 = vadd.f32 0.0, %v2471
        %v2473 = vpop.f32.mrb[0].mxu0
        %2474 = vmatprep.mubr.bf16.mxu0 0
        %2475 = vmatmul.mubr.bf16.gmra.mrb[0].mxu0 %v2371
        %v2476 = vpop.f32.mrb[0].mxu0
        %v2477 = vadd.f32 0.0, %v2476
        %v2478 = vpop.f32.mrb[0].mxu0
        %v2479 = vpop.f32.mrb[0].mxu0
        %v2480 = vadd.f32 0.0, %v2479
        %v2481 = vpop.f32.mrb[0].mxu0
        %2482 = vmatprep.mubr.bf16.mxu0 0
        %2483 = vmatmul.mubr.bf16.gmra.mrb[0].mxu0 %v2374
        %v2484 = vpop.f32.mrb[0].mxu0
        %v2485 = vadd.f32 0.0, %v2484
        %v2486 = vpop.f32.mrb[0].mxu0
        %v2487 = vpop.f32.mrb[0].mxu0
        %v2488 = vadd.f32 0.0, %v2487
        %v2489 = vpop.f32.mrb[0].mxu0
        %2490 = vmatprep.mubr.bf16.mxu0 0
        %2491 = vmatmul.mubr.bf16.gmra.mrb[0].mxu0 %v2377
        %v2492 = vpop.f32.mrb[0].mxu0
        %v2493 = vadd.f32 0.0, %v2492
        %v2494 = vpop.f32.mrb[0].mxu0
        %v2495 = vpop.f32.mrb[0].mxu0
        %v2496 = vadd.f32 0.0, %v2495
        %v2497 = vpop.f32.mrb[0].mxu0
        %2498 = vmatprep.mubr.bf16.mxu0 0
        %2499 = vmatmul.mubr.bf16.gmra.mrb[0].mxu0 %v2380
        %v2500 = vpop.f32.mrb[0].mxu0
        %v2501 = vadd.f32 0.0, %v2500
        %v2502 = vpop.f32.mrb[0].mxu0
        %v2503 = vpop.f32.mrb[0].mxu0
        %v2504 = vadd.f32 0.0, %v2503
        %v2505 = vpop.f32.mrb[0].mxu0
        %2506 = vmatprep.mubr.bf16.mxu0 0
        %2507 = vmatmul.mubr.bf16.gmra.mrb[0].mxu0 %v2383
        %v2508 = vpop.f32.mrb[0].mxu0
        %v2509 = vadd.f32 0.0, %v2508
        %v2510 = vpop.f32.mrb[0].mxu0
        %v2511 = vpop.f32.mrb[0].mxu0
        %v2512 = vadd.f32 0.0, %v2511
        %v2513 = vpop.f32.mrb[0].mxu0
        %2514 = vmatprep.mubr.bf16.mxu0 0
        %2515 = vmatmul.mubr.bf16.gmra.mrb[0].mxu0 %v2386
        %v2516 = vpop.f32.mrb[0].mxu0
        %v2517 = vadd.f32 0.0, %v2516
        %v2518 = vpop.f32.mrb[0].mxu0
        %v2519 = vpop.f32.mrb[0].mxu0
        %v2520 = vadd.f32 0.0, %v2519
        %v2521 = vpop.f32.mrb[0].mxu0
        %2522 = vmatprep.mubr.bf16.mxu0 0
        %2523 = vmatmul.mubr.bf16.gmra.mrb[0].mxu0 %v2389
        %v2524 = vpop.f32.mrb[0].mxu0
        %v2525 = vadd.f32 0.0, %v2524
        %v2526 = vpop.f32.mrb[0].mxu0
        %v2527 = vpop.f32.mrb[0].mxu0
        %v2528 = vadd.f32 0.0, %v2527
        %v2529 = vpop.f32.mrb[0].mxu0
        %2530 = vmatprep.mubr.bf16.mxu0 0
        %2531 = vmatmul.mubr.bf16.gmra.mrb[0].mxu0 %v2392
        %v2532 = vpop.f32.mrb[0].mxu0
        %v2533 = vadd.f32 0.0, %v2532
        %v2534 = vpop.f32.mrb[0].mxu0
        %v2535 = vpop.f32.mrb[0].mxu0
        %v2536 = vadd.f32 0.0, %v2535
        %v2537 = vpop.f32.mrb[0].mxu0
        %2538 = vdwg.mxu0
        %v2539 = vadd.f32 %v2111, %v2429
        %v2540 = vadd.f32 %v2112, %v2432
        %v2541 = vadd.f32 %v2113, %v2437
        %v2542 = vadd.f32 %v2114, %v2440
        %v2543 = vadd.f32 %v2115, %v2445
        %v2544 = vadd.f32 %v2116, %v2448
        %v2545 = vadd.f32 %v2117, %v2453
        %v2546 = vadd.f32 %v2118, %v2456
        %v2547 = vadd.f32 %v2119, %v2461
        %v2548 = vadd.f32 %v2120, %v2464
        %v2549 = vadd.f32 %v2121, %v2469
        %v2550 = vadd.f32 %v2122, %v2472
        %v2551 = vadd.f32 %v2123, %v2477
        %v2552 = vadd.f32 %v2124, %v2480
        %v2553 = vadd.f32 %v2125, %v2485
        %v2554 = vadd.f32 %v2126, %v2488
        %v2555 = vadd.f32 %v2127, %v2493
        %v2556 = vadd.f32 %v2128, %v2496
        %v2557 = vadd.f32 %v2129, %v2501
        %v2558 = vadd.f32 %v2130, %v2504
        %v2559 = vadd.f32 %v2131, %v2509
        %v2560 = vadd.f32 %v2132, %v2512
        %v2561 = vadd.f32 %v2133, %v2517
        %v2562 = vadd.f32 %v2134, %v2520
        %v2563 = vadd.f32 %v2135, %v2525
        %v2564 = vadd.f32 %v2136, %v2528
        %v2565 = vadd.f32 %v2137, %v2533
        %v2566 = vadd.f32 %v2138, %v2536
        %2567 = vst [vmem:[%s217] sm:$0xff] %v2539
        %2568 = vst [vmem:[%s217 + $0x10] sm:$0xff] %v2540
        %2569 = vst [vmem:[%s217 + $0x20] sm:$0xff] %v2541
        %2570 = vst [vmem:[%s217 + $0x30] sm:$0xff] %v2542
        %2571 = vst [vmem:[%s217 + $0x40] sm:$0xff] %v2543
        %2572 = vst [vmem:[%s217 + $0x50] sm:$0xff] %v2544
        %2573 = vst [vmem:[%s217 + $0x60] sm:$0xff] %v2545
        %2574 = vst [vmem:[%s217 + $0x70] sm:$0xff] %v2546
        %2575 = vst [vmem:[%s217 + $0x80] sm:$0xff] %v2547
        %2576 = vst [vmem:[%s217 + $0x90] sm:$0xff] %v2548
        %2577 = vst [vmem:[%s217 + $0xa0] sm:$0xff] %v2549
        %2578 = vst [vmem:[%s217 + $0xb0] sm:$0xff] %v2550
        %2579 = vst [vmem:[%s217 + $0xc0] sm:$0xff] %v2551
        %2580 = vst [vmem:[%s217 + $0xd0] sm:$0xff] %v2552
        %2581 = vst [vmem:[%s217 + $0xe0] sm:$0xff] %v2553
        %2582 = vst [vmem:[%s217 + $0xf0] sm:$0xff] %v2554
        %2583 = vst [vmem:[%s217 + $0x100] sm:$0xff] %v2555
        %2584 = vst [vmem:[%s217 + $0x110] sm:$0xff] %v2556
        %2585 = vst [vmem:[%s217 + $0x120] sm:$0xff] %v2557
        %2586 = vst [vmem:[%s217 + $0x130] sm:$0xff] %v2558
        %2587 = vst [vmem:[%s217 + $0x140] sm:$0xff] %v2559
        %2588 = vst [vmem:[%s217 + $0x150] sm:$0xff] %v2560
        %2589 = vst [vmem:[%s217 + $0x160] sm:$0xff] %v2561
        %2590 = vst [vmem:[%s217 + $0x170] sm:$0xff] %v2562
        %2591 = vst [vmem:[%s217 + $0x180] sm:$0xff] %v2563
        %2592 = vst [vmem:[%s217 + $0x190] sm:$0xff] %v2564
        %2593 = vst [vmem:[%s217 + $0x1a0] sm:$0xff] %v2565
        %2594 = vst [vmem:[%s217 + $0x1b0] sm:$0xff] %v2566
        %v2595 = vld [vmem:[%s227 + $0x8] sm:$0xe]
        %v2596 = vld [vmem:[%s227 + $0xc] sm:$0xf]
        %v2597 = vld [vmem:[%s227 + $0x10] sm:$0xf]
        %v2598 = vld [vmem:[%s227 + $0x14] sm:$0xf]
        %v2599 = vld [vmem:[%s227 + $0x18] sm:$0xf]
        %v2600 = vld [vmem:[%s227 + $0x1c] sm:$0xf]
        %v2601 = vld [vmem:[%s227 + $0x20] sm:$0xf]
        %v2602 = vld [vmem:[%s227 + $0x24] sm:$0xf]
        %v2603 = vld [vmem:[%s227 + $0x28] sm:$0xf]
        %v2604 = vld [vmem:[%s227 + $0x2c] sm:$0xf]
        %v2605 = vld [vmem:[%s227 + $0x30] sm:$0xf]
        %v2606 = vld [vmem:[%s227 + $0x34] sm:$0xf]
        %v2607 = vld [vmem:[%s227 + $0x38] sm:$0xf]
        %v2608 = vld [vmem:[%s227 + $0x3c] sm:$0xf]
        %v2609 = vld [vmem:[%s227 + $0x40] sm:$0xf]
        %v2610 = vld [vmem:[%s227 + $0x44] sm:$0xf]
        %v2611 = vld [vmem:[%s227 + $0x48] sm:$0xf]
        %v2612 = vld [vmem:[%s227 + $0x4c] sm:$0xf]
        %v2613 = vld [vmem:[%s227 + $0x50] sm:$0xf]
        %v2614 = vld [vmem:[%s227 + $0x54] sm:$0xf]
        %v2615 = vld [vmem:[%s227 + $0x58] sm:$0xf]
        %v2616 = vld [vmem:[%s227 + $0x5c] sm:$0xf]
        %v2617 = vld [vmem:[%s227 + $0x60] sm:$0xf]
        %v2618 = vld [vmem:[%s227 + $0x64] sm:$0xf]
        %v2619 = vld [vmem:[%s227 + $0x68] sm:$0xf]
        %v2620 = vld [vmem:[%s227 + $0x6c] sm:$0xf]
        %v2621 = vld [vmem:[%s227 + $0x70] sm:$0xf]
        %v2622 = vld [vmem:[%s227 + $0x74] sm:$0xf]
        %v2623 = vld [vmem:[%s227 + $0x78] sm:$0x1]
        %s2624 = scalar_lea.vmem %s234, 160
        %v2625 = vld [vmem:[%s2624] sm:$0xf]
        %v2626 = vld [vmem:[%s2624 + $0x4] sm:$0xf]
        %v2627 = vld [vmem:[%s2624 + $0x8] sm:$0xf]
        %v2628 = vld [vmem:[%s2624 + $0xc] sm:$0xf]
        %v2629 = vld [vmem:[%s2624 + $0x10] sm:$0xf]
        %v2630 = vld [vmem:[%s2624 + $0x14] sm:$0xf]
        %v2631 = vld [vmem:[%s2624 + $0x18] sm:$0xf]
        %v2632 = vld [vmem:[%s2624 + $0x1c] sm:$0xf]
        %v2633 = vld [vmem:[%s217] sm:$0xff]
        %v2634 = vld [vmem:[%s217 + $0x10] sm:$0xff]
        %v2635 = vld [vmem:[%s217 + $0x20] sm:$0xff]
        %v2636 = vld [vmem:[%s217 + $0x30] sm:$0xff]
        %v2637 = vld [vmem:[%s217 + $0x40] sm:$0xff]
        %v2638 = vld [vmem:[%s217 + $0x50] sm:$0xff]
        %v2639 = vld [vmem:[%s217 + $0x60] sm:$0xff]
        %v2640 = vld [vmem:[%s217 + $0x70] sm:$0xff]
        %v2641 = vld [vmem:[%s217 + $0x80] sm:$0xff]
        %v2642 = vld [vmem:[%s217 + $0x90] sm:$0xff]
        %v2643 = vld [vmem:[%s217 + $0xa0] sm:$0xff]
        %v2644 = vld [vmem:[%s217 + $0xb0] sm:$0xff]
        %v2645 = vld [vmem:[%s217 + $0xc0] sm:$0xff]
        %v2646 = vld [vmem:[%s217 + $0xd0] sm:$0xff]
        %v2647 = vld [vmem:[%s217 + $0xe0] sm:$0xff]
        %v2648 = vld [vmem:[%s217 + $0xf0] sm:$0xff]
        %v2649 = vld [vmem:[%s217 + $0x100] sm:$0xff]
        %v2650 = vld [vmem:[%s217 + $0x110] sm:$0xff]
        %v2651 = vld [vmem:[%s217 + $0x120] sm:$0xff]
        %v2652 = vld [vmem:[%s217 + $0x130] sm:$0xff]
        %v2653 = vld [vmem:[%s217 + $0x140] sm:$0xff]
        %v2654 = vld [vmem:[%s217 + $0x150] sm:$0xff]
        %v2655 = vld [vmem:[%s217 + $0x160] sm:$0xff]
        %v2656 = vld [vmem:[%s217 + $0x170] sm:$0xff]
        %v2657 = vld [vmem:[%s217 + $0x180] sm:$0xff]
        %v2658 = vld [vmem:[%s217 + $0x190] sm:$0xff]
        %v2659 = vld [vmem:[%s217 + $0x1a0] sm:$0xff]
        %v2660 = vld [vmem:[%s217 + $0x1b0] sm:$0xff]
        %v2690 = vunpack.c.l.b16 %v2595
        %v2691 = vunpack.c.l.b16 %v2596
        %v2692 = vunpack.c.l.b16 %v2597
        %v2693 = vunpack.c.l.b16 %v2598
        %v2694 = vunpack.c.l.b16 %v2599
        %v2695 = vunpack.c.l.b16 %v2600
        %v2696 = vunpack.c.l.b16 %v2601
        %v2697 = vunpack.c.l.b16 %v2602
        %v2698 = vunpack.c.l.b16 %v2603
        %v2699 = vunpack.c.l.b16 %v2604
        %v2700 = vunpack.c.l.b16 %v2605
        %v2701 = vunpack.c.l.b16 %v2606
        %v2702 = vunpack.c.l.b16 %v2607
        %v2703 = vunpack.c.l.b16 %v2608
        %v2704 = vunpack.c.l.b16 %v2609
        %v2705 = vunpack.c.l.b16 %v2610
        %v2706 = vunpack.c.l.b16 %v2611
        %v2707 = vunpack.c.l.b16 %v2612
        %v2708 = vunpack.c.l.b16 %v2613
        %v2709 = vunpack.c.l.b16 %v2614
        %v2710 = vunpack.c.l.b16 %v2615
        %v2711 = vunpack.c.l.b16 %v2616
        %v2712 = vunpack.c.l.b16 %v2617
        %v2713 = vunpack.c.l.b16 %v2618
        %v2714 = vunpack.c.l.b16 %v2619
        %v2715 = vunpack.c.l.b16 %v2620
        %v2716 = vunpack.c.l.b16 %v2621
        %v2717 = vunpack.c.l.b16 %v2622
        %v2718 = vunpack.c.l.b16 %v2623
        %v2719 = vpack.c.b16 %v2691, %v2690
        %v2720 = vpack.c.b16 %v2693, %v2692
        %v2721 = vpack.c.b16 %v2695, %v2694
        %v2722 = vpack.c.b16 %v2697, %v2696
        %v2723 = vpack.c.b16 %v2699, %v2698
        %v2724 = vpack.c.b16 %v2701, %v2700
        %v2725 = vpack.c.b16 %v2703, %v2702
        %v2726 = vpack.c.b16 %v2705, %v2704
        %v2727 = vpack.c.b16 %v2707, %v2706
        %v2728 = vpack.c.b16 %v2709, %v2708
        %v2729 = vpack.c.b16 %v2711, %v2710
        %v2730 = vpack.c.b16 %v2713, %v2712
        %v2731 = vpack.c.b16 %v2715, %v2714
        %v2732 = vpack.c.b16 %v2717, %v2716
        %v2733 = vpack.c.b16 %v2718, %v2718
        %v2734 = vrot.slane %v2719, 1
        %v2735 = vrot.slane %v2720, 1
        %v2736 = vsel %vm1374, %v2734, %v2735
        %v2737 = vrot.slane %v2721, 1
        %v2738 = vsel %vm1374, %v2735, %v2737
        %v2739 = vrot.slane %v2722, 1
        %v2740 = vsel %vm1374, %v2737, %v2739
        %v2741 = vrot.slane %v2723, 1
        %v2742 = vsel %vm1374, %v2739, %v2741
        %v2743 = vrot.slane %v2724, 1
        %v2744 = vsel %vm1374, %v2741, %v2743
        %v2745 = vrot.slane %v2725, 1
        %v2746 = vsel %vm1374, %v2743, %v2745
        %v2747 = vrot.slane %v2726, 1
        %v2748 = vsel %vm1374, %v2745, %v2747
        %v2749 = vrot.slane %v2727, 1
        %v2750 = vsel %vm1374, %v2747, %v2749
        %v2751 = vrot.slane %v2728, 1
        %v2752 = vsel %vm1374, %v2749, %v2751
        %v2753 = vrot.slane %v2729, 1
        %v2754 = vsel %vm1374, %v2751, %v2753
        %v2755 = vrot.slane %v2730, 1
        %v2756 = vsel %vm1374, %v2753, %v2755
        %v2757 = vrot.slane %v2731, 1
        %v2758 = vsel %vm1374, %v2755, %v2757
        %v2759 = vrot.slane %v2732, 1
        %v2760 = vsel %vm1374, %v2757, %v2759
        %v2761 = vrot.slane %v2733, 1
        %v2762 = vsel %vm1374, %v2759, %v2761
        %v2771 = vunpack.c.l.b16 %v2625
        %v2772 = vunpack.c.l.b16 %v2626
        %v2773 = vunpack.c.l.b16 %v2627
        %v2774 = vunpack.c.l.b16 %v2628
        %v2775 = vunpack.c.l.b16 %v2629
        %v2776 = vunpack.c.l.b16 %v2630
        %v2777 = vunpack.c.l.b16 %v2631
        %v2778 = vunpack.c.l.b16 %v2632
        %v2779 = vpack.c.b16 %v2772, %v2771
        %v2780 = vpack.c.b16 %v2774, %v2773
        %v2781 = vpack.c.b16 %v2776, %v2775
        %v2782 = vpack.c.b16 %v2778, %v2777
        %v2788 = vsel %vm468, %v2736, 0
        %v2791 = vsel %vm468, %v2738, 0
        %v2794 = vsel %vm468, %v2740, 0
        %v2797 = vsel %vm468, %v2742, 0
        %v2800 = vsel %vm468, %v2744, 0
        %v2803 = vsel %vm468, %v2746, 0
        %v2806 = vsel %vm468, %v2748, 0
        %v2809 = vsel %vm468, %v2750, 0
        %v2812 = vsel %vm468, %v2752, 0
        %v2815 = vsel %vm468, %v2754, 0
        %v2818 = vsel %vm468, %v2756, 0
        %v2821 = vsel %vm468, %v2758, 0
        %v2824 = vsel %vm468, %v2760, 0
        %v2827 = vsel %vm468, %v2762, 0
        %2829 = vmatprep.subr.bf16.mxu0 0
        %2830 = vmatpush1.bf16.msra.mxu0 %v2779
        %2831 = vmatprep.subr.bf16.mxu0 0
        %2832 = vmatpush1.bf16.msra.mxu0 %v2780
        %2833 = vmatprep.subr.bf16.mxu0 0
        %2834 = vmatpush1.bf16.msra.mxu0 %v2781
        %2835 = vmatprep.subr.bf16.mxu0 0
        %2836 = vmatpush1.bf16.msra.mxu0 %v2782
        %2837 = vmatprep.subr.bf16.mxu0 0
        %2838 = vmatpush1.bf16.msra.mxu0 0
        %2839 = vmatprep.subr.bf16.mxu0 0
        %2840 = vmatpush1.bf16.msra.mxu0 0
        %2841 = vmatprep.subr.bf16.mxu0 0
        %2842 = vmatpush1.bf16.msra.mxu0 0
        %2843 = vmatprep.subr.bf16.mxu0 0
        %2844 = vmatpush1.bf16.msra.mxu0 0
        %2845 = vmatprep.subr.bf16.mxu0 0
        %2846 = vmatpush1.bf16.msra.mxu0 0
        %2847 = vmatprep.subr.bf16.mxu0 0
        %2848 = vmatpush1.bf16.msra.mxu0 0
        %2849 = vmatprep.subr.bf16.mxu0 0
        %2850 = vmatpush1.bf16.msra.mxu0 0
        %2851 = vmatprep.subr.bf16.mxu0 0
        %2852 = vmatpush1.bf16.msra.mxu0 0
        %2853 = vmatprep.subr.bf16.mxu0 0
        %2854 = vmatpush1.bf16.msra.mxu0 0
        %2855 = vmatprep.subr.bf16.mxu0 0
        %2856 = vmatpush1.bf16.msra.mxu0 0
        %2857 = vmatprep.subr.bf16.mxu0 0
        %2858 = vmatpush1.bf16.msra.mxu0 0
        %2859 = vmatprep.subr.bf16.mxu0 0
        %2860 = vmatpush1.bf16.msra.mxu0 0
        %2861 = vmatprep.mubr.bf16.mxu0 0
        %2862 = vmatmul.mubr.bf16.gmra.mrb[0].mxu0 %v2788
        %v2863 = vpop.f32.mrb[0].mxu0
        %v2864 = vadd.f32 0.0, %v2863
        %v2865 = vpop.f32.mrb[0].mxu0
        %v2866 = vpop.f32.mrb[0].mxu0
        %v2867 = vadd.f32 0.0, %v2866
        %v2868 = vpop.f32.mrb[0].mxu0
        %2869 = vmatprep.mubr.bf16.mxu0 0
        %2870 = vmatmul.mubr.bf16.gmra.mrb[0].mxu0 %v2791
        %v2871 = vpop.f32.mrb[0].mxu0
        %v2872 = vadd.f32 0.0, %v2871
        %v2873 = vpop.f32.mrb[0].mxu0
        %v2874 = vpop.f32.mrb[0].mxu0
        %v2875 = vadd.f32 0.0, %v2874
        %v2876 = vpop.f32.mrb[0].mxu0
        %2877 = vmatprep.mubr.bf16.mxu0 0
        %2878 = vmatmul.mubr.bf16.gmra.mrb[0].mxu0 %v2794
        %v2879 = vpop.f32.mrb[0].mxu0
        %v2880 = vadd.f32 0.0, %v2879
        %v2881 = vpop.f32.mrb[0].mxu0
        %v2882 = vpop.f32.mrb[0].mxu0
        %v2883 = vadd.f32 0.0, %v2882
        %v2884 = vpop.f32.mrb[0].mxu0
        %2885 = vmatprep.mubr.bf16.mxu0 0
        %2886 = vmatmul.mubr.bf16.gmra.mrb[0].mxu0 %v2797
        %v2887 = vpop.f32.mrb[0].mxu0
        %v2888 = vadd.f32 0.0, %v2887
        %v2889 = vpop.f32.mrb[0].mxu0
        %v2890 = vpop.f32.mrb[0].mxu0
        %v2891 = vadd.f32 0.0, %v2890
        %v2892 = vpop.f32.mrb[0].mxu0
        %2893 = vmatprep.mubr.bf16.mxu0 0
        %2894 = vmatmul.mubr.bf16.gmra.mrb[0].mxu0 %v2800
        %v2895 = vpop.f32.mrb[0].mxu0
        %v2896 = vadd.f32 0.0, %v2895
        %v2897 = vpop.f32.mrb[0].mxu0
        %v2898 = vpop.f32.mrb[0].mxu0
        %v2899 = vadd.f32 0.0, %v2898
        %v2900 = vpop.f32.mrb[0].mxu0
        %2901 = vmatprep.mubr.bf16.mxu0 0
        %2902 = vmatmul.mubr.bf16.gmra.mrb[0].mxu0 %v2803
        %v2903 = vpop.f32.mrb[0].mxu0
        %v2904 = vadd.f32 0.0, %v2903
        %v2905 = vpop.f32.mrb[0].mxu0
        %v2906 = vpop.f32.mrb[0].mxu0
        %v2907 = vadd.f32 0.0, %v2906
        %v2908 = vpop.f32.mrb[0].mxu0
        %2909 = vmatprep.mubr.bf16.mxu0 0
        %2910 = vmatmul.mubr.bf16.gmra.mrb[0].mxu0 %v2806
        %v2911 = vpop.f32.mrb[0].mxu0
        %v2912 = vadd.f32 0.0, %v2911
        %v2913 = vpop.f32.mrb[0].mxu0
        %v2914 = vpop.f32.mrb[0].mxu0
        %v2915 = vadd.f32 0.0, %v2914
        %v2916 = vpop.f32.mrb[0].mxu0
        %2917 = vmatprep.mubr.bf16.mxu0 0
        %2918 = vmatmul.mubr.bf16.gmra.mrb[0].mxu0 %v2809
        %v2919 = vpop.f32.mrb[0].mxu0
        %v2920 = vadd.f32 0.0, %v2919
        %v2921 = vpop.f32.mrb[0].mxu0
        %v2922 = vpop.f32.mrb[0].mxu0
        %v2923 = vadd.f32 0.0, %v2922
        %v2924 = vpop.f32.mrb[0].mxu0
        %2925 = vmatprep.mubr.bf16.mxu0 0
        %2926 = vmatmul.mubr.bf16.gmra.mrb[0].mxu0 %v2812
        %v2927 = vpop.f32.mrb[0].mxu0
        %v2928 = vadd.f32 0.0, %v2927
        %v2929 = vpop.f32.mrb[0].mxu0
        %v2930 = vpop.f32.mrb[0].mxu0
        %v2931 = vadd.f32 0.0, %v2930
        %v2932 = vpop.f32.mrb[0].mxu0
        %2933 = vmatprep.mubr.bf16.mxu0 0
        %2934 = vmatmul.mubr.bf16.gmra.mrb[0].mxu0 %v2815
        %v2935 = vpop.f32.mrb[0].mxu0
        %v2936 = vadd.f32 0.0, %v2935
        %v2937 = vpop.f32.mrb[0].mxu0
        %v2938 = vpop.f32.mrb[0].mxu0
        %v2939 = vadd.f32 0.0, %v2938
        %v2940 = vpop.f32.mrb[0].mxu0
        %2941 = vmatprep.mubr.bf16.mxu0 0
        %2942 = vmatmul.mubr.bf16.gmra.mrb[0].mxu0 %v2818
        %v2943 = vpop.f32.mrb[0].mxu0
        %v2944 = vadd.f32 0.0, %v2943
        %v2945 = vpop.f32.mrb[0].mxu0
        %v2946 = vpop.f32.mrb[0].mxu0
        %v2947 = vadd.f32 0.0, %v2946
        %v2948 = vpop.f32.mrb[0].mxu0
        %2949 = vmatprep.mubr.bf16.mxu0 0
        %2950 = vmatmul.mubr.bf16.gmra.mrb[0].mxu0 %v2821
        %v2951 = vpop.f32.mrb[0].mxu0
        %v2952 = vadd.f32 0.0, %v2951
        %v2953 = vpop.f32.mrb[0].mxu0
        %v2954 = vpop.f32.mrb[0].mxu0
        %v2955 = vadd.f32 0.0, %v2954
        %v2956 = vpop.f32.mrb[0].mxu0
        %2957 = vmatprep.mubr.bf16.mxu0 0
        %2958 = vmatmul.mubr.bf16.gmra.mrb[0].mxu0 %v2824
        %v2959 = vpop.f32.mrb[0].mxu0
        %v2960 = vadd.f32 0.0, %v2959
        %v2961 = vpop.f32.mrb[0].mxu0
        %v2962 = vpop.f32.mrb[0].mxu0
        %v2963 = vadd.f32 0.0, %v2962
        %v2964 = vpop.f32.mrb[0].mxu0
        %2965 = vmatprep.mubr.bf16.mxu0 0
        %2966 = vmatmul.mubr.bf16.gmra.mrb[0].mxu0 %v2827
        %v2967 = vpop.f32.mrb[0].mxu0
        %v2968 = vadd.f32 0.0, %v2967
        %v2969 = vpop.f32.mrb[0].mxu0
        %v2970 = vpop.f32.mrb[0].mxu0
        %v2971 = vadd.f32 0.0, %v2970
        %v2972 = vpop.f32.mrb[0].mxu0
        %2973 = vdwg.mxu0
        %v2974 = vadd.f32 %v2633, %v2864
        %v2975 = vadd.f32 %v2634, %v2867
        %v2976 = vadd.f32 %v2635, %v2872
        %v2977 = vadd.f32 %v2636, %v2875
        %v2978 = vadd.f32 %v2637, %v2880
        %v2979 = vadd.f32 %v2638, %v2883
        %v2980 = vadd.f32 %v2639, %v2888
        %v2981 = vadd.f32 %v2640, %v2891
        %v2982 = vadd.f32 %v2641, %v2896
        %v2983 = vadd.f32 %v2642, %v2899
        %v2984 = vadd.f32 %v2643, %v2904
        %v2985 = vadd.f32 %v2644, %v2907
        %v2986 = vadd.f32 %v2645, %v2912
        %v2987 = vadd.f32 %v2646, %v2915
        %v2988 = vadd.f32 %v2647, %v2920
        %v2989 = vadd.f32 %v2648, %v2923
        %v2990 = vadd.f32 %v2649, %v2928
        %v2991 = vadd.f32 %v2650, %v2931
        %v2992 = vadd.f32 %v2651, %v2936
        %v2993 = vadd.f32 %v2652, %v2939
        %v2994 = vadd.f32 %v2653, %v2944
        %v2995 = vadd.f32 %v2654, %v2947
        %v2996 = vadd.f32 %v2655, %v2952
        %v2997 = vadd.f32 %v2656, %v2955
        %v2998 = vadd.f32 %v2657, %v2960
        %v2999 = vadd.f32 %v2658, %v2963
        %v3000 = vadd.f32 %v2659, %v2968
        %v3001 = vadd.f32 %v2660, %v2971
        %3002 = vst [vmem:[%s217] sm:$0xff] %v2974
        %3003 = vst [vmem:[%s217 + $0x10] sm:$0xff] %v2975
        %3004 = vst [vmem:[%s217 + $0x20] sm:$0xff] %v2976
        %3005 = vst [vmem:[%s217 + $0x30] sm:$0xff] %v2977
        %3006 = vst [vmem:[%s217 + $0x40] sm:$0xff] %v2978
        %3007 = vst [vmem:[%s217 + $0x50] sm:$0xff] %v2979
        %3008 = vst [vmem:[%s217 + $0x60] sm:$0xff] %v2980
        %3009 = vst [vmem:[%s217 + $0x70] sm:$0xff] %v2981
        %3010 = vst [vmem:[%s217 + $0x80] sm:$0xff] %v2982
        %3011 = vst [vmem:[%s217 + $0x90] sm:$0xff] %v2983
        %3012 = vst [vmem:[%s217 + $0xa0] sm:$0xff] %v2984
        %3013 = vst [vmem:[%s217 + $0xb0] sm:$0xff] %v2985
        %3014 = vst [vmem:[%s217 + $0xc0] sm:$0xff] %v2986
        %3015 = vst [vmem:[%s217 + $0xd0] sm:$0xff] %v2987
        %3016 = vst [vmem:[%s217 + $0xe0] sm:$0xff] %v2988
        %3017 = vst [vmem:[%s217 + $0xf0] sm:$0xff] %v2989
        %3018 = vst [vmem:[%s217 + $0x100] sm:$0xff] %v2990
        %3019 = vst [vmem:[%s217 + $0x110] sm:$0xff] %v2991
        %3020 = vst [vmem:[%s217 + $0x120] sm:$0xff] %v2992
        %3021 = vst [vmem:[%s217 + $0x130] sm:$0xff] %v2993
        %3022 = vst [vmem:[%s217 + $0x140] sm:$0xff] %v2994
        %3023 = vst [vmem:[%s217 + $0x150] sm:$0xff] %v2995
        %3024 = vst [vmem:[%s217 + $0x160] sm:$0xff] %v2996
        %3025 = vst [vmem:[%s217 + $0x170] sm:$0xff] %v2997
        %3026 = vst [vmem:[%s217 + $0x180] sm:$0xff] %v2998
        %3027 = vst [vmem:[%s217 + $0x190] sm:$0xff] %v2999
        %3028 = vst [vmem:[%s217 + $0x1a0] sm:$0xff] %v3000
        %3029 = vst [vmem:[%s217 + $0x1b0] sm:$0xff] %v3001
        %v3030 = vld [vmem:[%s227 + $0x10] sm:$0xf]
        %v3031 = vld [vmem:[%s227 + $0x14] sm:$0xf]
        %v3032 = vld [vmem:[%s227 + $0x18] sm:$0xf]
        %v3033 = vld [vmem:[%s227 + $0x1c] sm:$0xf]
        %v3034 = vld [vmem:[%s227 + $0x20] sm:$0xf]
        %v3035 = vld [vmem:[%s227 + $0x24] sm:$0xf]
        %v3036 = vld [vmem:[%s227 + $0x28] sm:$0xf]
        %v3037 = vld [vmem:[%s227 + $0x2c] sm:$0xf]
        %v3038 = vld [vmem:[%s227 + $0x30] sm:$0xf]
        %v3039 = vld [vmem:[%s227 + $0x34] sm:$0xf]
        %v3040 = vld [vmem:[%s227 + $0x38] sm:$0xf]
        %v3041 = vld [vmem:[%s227 + $0x3c] sm:$0xf]
        %v3042 = vld [vmem:[%s227 + $0x40] sm:$0xf]
        %v3043 = vld [vmem:[%s227 + $0x44] sm:$0xf]
        %v3044 = vld [vmem:[%s227 + $0x48] sm:$0xf]
        %v3045 = vld [vmem:[%s227 + $0x4c] sm:$0xf]
        %v3046 = vld [vmem:[%s227 + $0x50] sm:$0xf]
        %v3047 = vld [vmem:[%s227 + $0x54] sm:$0xf]
        %v3048 = vld [vmem:[%s227 + $0x58] sm:$0xf]
        %v3049 = vld [vmem:[%s227 + $0x5c] sm:$0xf]
        %v3050 = vld [vmem:[%s227 + $0x60] sm:$0xf]
        %v3051 = vld [vmem:[%s227 + $0x64] sm:$0xf]
        %v3052 = vld [vmem:[%s227 + $0x68] sm:$0xf]
        %v3053 = vld [vmem:[%s227 + $0x6c] sm:$0xf]
        %v3054 = vld [vmem:[%s227 + $0x70] sm:$0xf]
        %v3055 = vld [vmem:[%s227 + $0x74] sm:$0xf]
        %v3056 = vld [vmem:[%s227 + $0x78] sm:$0xf]
        %v3057 = vld [vmem:[%s227 + $0x7c] sm:$0xf]
        %s3058 = scalar_lea.vmem %s234, 192
        %v3059 = vld [vmem:[%s3058] sm:$0xf]
        %v3060 = vld [vmem:[%s3058 + $0x4] sm:$0xf]
        %v3061 = vld [vmem:[%s3058 + $0x8] sm:$0xf]
        %v3062 = vld [vmem:[%s3058 + $0xc] sm:$0xf]
        %v3063 = vld [vmem:[%s3058 + $0x10] sm:$0xf]
        %v3064 = vld [vmem:[%s3058 + $0x14] sm:$0xf]
        %v3065 = vld [vmem:[%s3058 + $0x18] sm:$0xf]
        %v3066 = vld [vmem:[%s3058 + $0x1c] sm:$0xf]
        %v3067 = vld [vmem:[%s217] sm:$0xff]
        %v3068 = vld [vmem:[%s217 + $0x10] sm:$0xff]
        %v3069 = vld [vmem:[%s217 + $0x20] sm:$0xff]
        %v3070 = vld [vmem:[%s217 + $0x30] sm:$0xff]
        %v3071 = vld [vmem:[%s217 + $0x40] sm:$0xff]
        %v3072 = vld [vmem:[%s217 + $0x50] sm:$0xff]
        %v3073 = vld [vmem:[%s217 + $0x60] sm:$0xff]
        %v3074 = vld [vmem:[%s217 + $0x70] sm:$0xff]
        %v3075 = vld [vmem:[%s217 + $0x80] sm:$0xff]
        %v3076 = vld [vmem:[%s217 + $0x90] sm:$0xff]
        %v3077 = vld [vmem:[%s217 + $0xa0] sm:$0xff]
        %v3078 = vld [vmem:[%s217 + $0xb0] sm:$0xff]
        %v3079 = vld [vmem:[%s217 + $0xc0] sm:$0xff]
        %v3080 = vld [vmem:[%s217 + $0xd0] sm:$0xff]
        %v3081 = vld [vmem:[%s217 + $0xe0] sm:$0xff]
        %v3082 = vld [vmem:[%s217 + $0xf0] sm:$0xff]
        %v3083 = vld [vmem:[%s217 + $0x100] sm:$0xff]
        %v3084 = vld [vmem:[%s217 + $0x110] sm:$0xff]
        %v3085 = vld [vmem:[%s217 + $0x120] sm:$0xff]
        %v3086 = vld [vmem:[%s217 + $0x130] sm:$0xff]
        %v3087 = vld [vmem:[%s217 + $0x140] sm:$0xff]
        %v3088 = vld [vmem:[%s217 + $0x150] sm:$0xff]
        %v3089 = vld [vmem:[%s217 + $0x160] sm:$0xff]
        %v3090 = vld [vmem:[%s217 + $0x170] sm:$0xff]
        %v3091 = vld [vmem:[%s217 + $0x180] sm:$0xff]
        %v3092 = vld [vmem:[%s217 + $0x190] sm:$0xff]
        %v3093 = vld [vmem:[%s217 + $0x1a0] sm:$0xff]
        %v3094 = vld [vmem:[%s217 + $0x1b0] sm:$0xff]
        %v3123 = vunpack.c.l.b16 %v3030
        %v3124 = vunpack.c.l.b16 %v3031
        %v3125 = vunpack.c.l.b16 %v3032
        %v3126 = vunpack.c.l.b16 %v3033
        %v3127 = vunpack.c.l.b16 %v3034
        %v3128 = vunpack.c.l.b16 %v3035
        %v3129 = vunpack.c.l.b16 %v3036
        %v3130 = vunpack.c.l.b16 %v3037
        %v3131 = vunpack.c.l.b16 %v3038
        %v3132 = vunpack.c.l.b16 %v3039
        %v3133 = vunpack.c.l.b16 %v3040
        %v3134 = vunpack.c.l.b16 %v3041
        %v3135 = vunpack.c.l.b16 %v3042
        %v3136 = vunpack.c.l.b16 %v3043
        %v3137 = vunpack.c.l.b16 %v3044
        %v3138 = vunpack.c.l.b16 %v3045
        %v3139 = vunpack.c.l.b16 %v3046
        %v3140 = vunpack.c.l.b16 %v3047
        %v3141 = vunpack.c.l.b16 %v3048
        %v3142 = vunpack.c.l.b16 %v3049
        %v3143 = vunpack.c.l.b16 %v3050
        %v3144 = vunpack.c.l.b16 %v3051
        %v3145 = vunpack.c.l.b16 %v3052
        %v3146 = vunpack.c.l.b16 %v3053
        %v3147 = vunpack.c.l.b16 %v3054
        %v3148 = vunpack.c.l.b16 %v3055
        %v3149 = vunpack.c.l.b16 %v3056
        %v3150 = vunpack.c.l.b16 %v3057
        %v3151 = vpack.c.b16 %v3124, %v3123
        %v3152 = vpack.c.b16 %v3126, %v3125
        %v3153 = vpack.c.b16 %v3128, %v3127
        %v3154 = vpack.c.b16 %v3130, %v3129
        %v3155 = vpack.c.b16 %v3132, %v3131
        %v3156 = vpack.c.b16 %v3134, %v3133
        %v3157 = vpack.c.b16 %v3136, %v3135
        %v3158 = vpack.c.b16 %v3138, %v3137
        %v3159 = vpack.c.b16 %v3140, %v3139
        %v3160 = vpack.c.b16 %v3142, %v3141
        %v3161 = vpack.c.b16 %v3144, %v3143
        %v3162 = vpack.c.b16 %v3146, %v3145
        %v3163 = vpack.c.b16 %v3148, %v3147
        %v3164 = vpack.c.b16 %v3150, %v3149
        %v3173 = vunpack.c.l.b16 %v3059
        %v3174 = vunpack.c.l.b16 %v3060
        %v3175 = vunpack.c.l.b16 %v3061
        %v3176 = vunpack.c.l.b16 %v3062
        %v3177 = vunpack.c.l.b16 %v3063
        %v3178 = vunpack.c.l.b16 %v3064
        %v3179 = vunpack.c.l.b16 %v3065
        %v3180 = vunpack.c.l.b16 %v3066
        %v3181 = vpack.c.b16 %v3174, %v3173
        %v3182 = vpack.c.b16 %v3176, %v3175
        %v3183 = vpack.c.b16 %v3178, %v3177
        %v3184 = vpack.c.b16 %v3180, %v3179
        %v3190 = vsel %vm468, %v3151, 0
        %v3193 = vsel %vm468, %v3152, 0
        %v3196 = vsel %vm468, %v3153, 0
        %v3199 = vsel %vm468, %v3154, 0
        %v3202 = vsel %vm468, %v3155, 0
        %v3205 = vsel %vm468, %v3156, 0
        %v3208 = vsel %vm468, %v3157, 0
        %v3211 = vsel %vm468, %v3158, 0
        %v3214 = vsel %vm468, %v3159, 0
        %v3217 = vsel %vm468, %v3160, 0
        %v3220 = vsel %vm468, %v3161, 0
        %v3223 = vsel %vm468, %v3162, 0
        %v3226 = vsel %vm468, %v3163, 0
        %v3229 = vsel %vm468, %v3164, 0
        %3231 = vmatprep.subr.bf16.mxu0 0
        %3232 = vmatpush1.bf16.msra.mxu0 %v3181
        %3233 = vmatprep.subr.bf16.mxu0 0
        %3234 = vmatpush1.bf16.msra.mxu0 %v3182
        %3235 = vmatprep.subr.bf16.mxu0 0
        %3236 = vmatpush1.bf16.msra.mxu0 %v3183
        %3237 = vmatprep.subr.bf16.mxu0 0
        %3238 = vmatpush1.bf16.msra.mxu0 %v3184
        %3239 = vmatprep.subr.bf16.mxu0 0
        %3240 = vmatpush1.bf16.msra.mxu0 0
        %3241 = vmatprep.subr.bf16.mxu0 0
        %3242 = vmatpush1.bf16.msra.mxu0 0
        %3243 = vmatprep.subr.bf16.mxu0 0
        %3244 = vmatpush1.bf16.msra.mxu0 0
        %3245 = vmatprep.subr.bf16.mxu0 0
        %3246 = vmatpush1.bf16.msra.mxu0 0
        %3247 = vmatprep.subr.bf16.mxu0 0
        %3248 = vmatpush1.bf16.msra.mxu0 0
        %3249 = vmatprep.subr.bf16.mxu0 0
        %3250 = vmatpush1.bf16.msra.mxu0 0
        %3251 = vmatprep.subr.bf16.mxu0 0
        %3252 = vmatpush1.bf16.msra.mxu0 0
        %3253 = vmatprep.subr.bf16.mxu0 0
        %3254 = vmatpush1.bf16.msra.mxu0 0
        %3255 = vmatprep.subr.bf16.mxu0 0
        %3256 = vmatpush1.bf16.msra.mxu0 0
        %3257 = vmatprep.subr.bf16.mxu0 0
        %3258 = vmatpush1.bf16.msra.mxu0 0
        %3259 = vmatprep.subr.bf16.mxu0 0
        %3260 = vmatpush1.bf16.msra.mxu0 0
        %3261 = vmatprep.subr.bf16.mxu0 0
        %3262 = vmatpush1.bf16.msra.mxu0 0
        %3263 = vmatprep.mubr.bf16.mxu0 0
        %3264 = vmatmul.mubr.bf16.gmra.mrb[0].mxu0 %v3190
        %v3265 = vpop.f32.mrb[0].mxu0
        %v3266 = vadd.f32 0.0, %v3265
        %v3267 = vpop.f32.mrb[0].mxu0
        %v3268 = vpop.f32.mrb[0].mxu0
        %v3269 = vadd.f32 0.0, %v3268
        %v3270 = vpop.f32.mrb[0].mxu0
        %3271 = vmatprep.mubr.bf16.mxu0 0
        %3272 = vmatmul.mubr.bf16.gmra.mrb[0].mxu0 %v3193
        %v3273 = vpop.f32.mrb[0].mxu0
        %v3274 = vadd.f32 0.0, %v3273
        %v3275 = vpop.f32.mrb[0].mxu0
        %v3276 = vpop.f32.mrb[0].mxu0
        %v3277 = vadd.f32 0.0, %v3276
        %v3278 = vpop.f32.mrb[0].mxu0
        %3279 = vmatprep.mubr.bf16.mxu0 0
        %3280 = vmatmul.mubr.bf16.gmra.mrb[0].mxu0 %v3196
        %v3281 = vpop.f32.mrb[0].mxu0
        %v3282 = vadd.f32 0.0, %v3281
        %v3283 = vpop.f32.mrb[0].mxu0
        %v3284 = vpop.f32.mrb[0].mxu0
        %v3285 = vadd.f32 0.0, %v3284
        %v3286 = vpop.f32.mrb[0].mxu0
        %3287 = vmatprep.mubr.bf16.mxu0 0
        %3288 = vmatmul.mubr.bf16.gmra.mrb[0].mxu0 %v3199
        %v3289 = vpop.f32.mrb[0].mxu0
        %v3290 = vadd.f32 0.0, %v3289
        %v3291 = vpop.f32.mrb[0].mxu0
        %v3292 = vpop.f32.mrb[0].mxu0
        %v3293 = vadd.f32 0.0, %v3292
        %v3294 = vpop.f32.mrb[0].mxu0
        %3295 = vmatprep.mubr.bf16.mxu0 0
        %3296 = vmatmul.mubr.bf16.gmra.mrb[0].mxu0 %v3202
        %v3297 = vpop.f32.mrb[0].mxu0
        %v3298 = vadd.f32 0.0, %v3297
        %v3299 = vpop.f32.mrb[0].mxu0
        %v3300 = vpop.f32.mrb[0].mxu0
        %v3301 = vadd.f32 0.0, %v3300
        %v3302 = vpop.f32.mrb[0].mxu0
        %3303 = vmatprep.mubr.bf16.mxu0 0
        %3304 = vmatmul.mubr.bf16.gmra.mrb[0].mxu0 %v3205
        %v3305 = vpop.f32.mrb[0].mxu0
        %v3306 = vadd.f32 0.0, %v3305
        %v3307 = vpop.f32.mrb[0].mxu0
        %v3308 = vpop.f32.mrb[0].mxu0
        %v3309 = vadd.f32 0.0, %v3308
        %v3310 = vpop.f32.mrb[0].mxu0
        %3311 = vmatprep.mubr.bf16.mxu0 0
        %3312 = vmatmul.mubr.bf16.gmra.mrb[0].mxu0 %v3208
        %v3313 = vpop.f32.mrb[0].mxu0
        %v3314 = vadd.f32 0.0, %v3313
        %v3315 = vpop.f32.mrb[0].mxu0
        %v3316 = vpop.f32.mrb[0].mxu0
        %v3317 = vadd.f32 0.0, %v3316
        %v3318 = vpop.f32.mrb[0].mxu0
        %3319 = vmatprep.mubr.bf16.mxu0 0
        %3320 = vmatmul.mubr.bf16.gmra.mrb[0].mxu0 %v3211
        %v3321 = vpop.f32.mrb[0].mxu0
        %v3322 = vadd.f32 0.0, %v3321
        %v3323 = vpop.f32.mrb[0].mxu0
        %v3324 = vpop.f32.mrb[0].mxu0
        %v3325 = vadd.f32 0.0, %v3324
        %v3326 = vpop.f32.mrb[0].mxu0
        %3327 = vmatprep.mubr.bf16.mxu0 0
        %3328 = vmatmul.mubr.bf16.gmra.mrb[0].mxu0 %v3214
        %v3329 = vpop.f32.mrb[0].mxu0
        %v3330 = vadd.f32 0.0, %v3329
        %v3331 = vpop.f32.mrb[0].mxu0
        %v3332 = vpop.f32.mrb[0].mxu0
        %v3333 = vadd.f32 0.0, %v3332
        %v3334 = vpop.f32.mrb[0].mxu0
        %3335 = vmatprep.mubr.bf16.mxu0 0
        %3336 = vmatmul.mubr.bf16.gmra.mrb[0].mxu0 %v3217
        %v3337 = vpop.f32.mrb[0].mxu0
        %v3338 = vadd.f32 0.0, %v3337
        %v3339 = vpop.f32.mrb[0].mxu0
        %v3340 = vpop.f32.mrb[0].mxu0
        %v3341 = vadd.f32 0.0, %v3340
        %v3342 = vpop.f32.mrb[0].mxu0
        %3343 = vmatprep.mubr.bf16.mxu0 0
        %3344 = vmatmul.mubr.bf16.gmra.mrb[0].mxu0 %v3220
        %v3345 = vpop.f32.mrb[0].mxu0
        %v3346 = vadd.f32 0.0, %v3345
        %v3347 = vpop.f32.mrb[0].mxu0
        %v3348 = vpop.f32.mrb[0].mxu0
        %v3349 = vadd.f32 0.0, %v3348
        %v3350 = vpop.f32.mrb[0].mxu0
        %3351 = vmatprep.mubr.bf16.mxu0 0
        %3352 = vmatmul.mubr.bf16.gmra.mrb[0].mxu0 %v3223
        %v3353 = vpop.f32.mrb[0].mxu0
        %v3354 = vadd.f32 0.0, %v3353
        %v3355 = vpop.f32.mrb[0].mxu0
        %v3356 = vpop.f32.mrb[0].mxu0
        %v3357 = vadd.f32 0.0, %v3356
        %v3358 = vpop.f32.mrb[0].mxu0
        %3359 = vmatprep.mubr.bf16.mxu0 0
        %3360 = vmatmul.mubr.bf16.gmra.mrb[0].mxu0 %v3226
        %v3361 = vpop.f32.mrb[0].mxu0
        %v3362 = vadd.f32 0.0, %v3361
        %v3363 = vpop.f32.mrb[0].mxu0
        %v3364 = vpop.f32.mrb[0].mxu0
        %v3365 = vadd.f32 0.0, %v3364
        %v3366 = vpop.f32.mrb[0].mxu0
        %3367 = vmatprep.mubr.bf16.mxu0 0
        %3368 = vmatmul.mubr.bf16.gmra.mrb[0].mxu0 %v3229
        %v3369 = vpop.f32.mrb[0].mxu0
        %v3370 = vadd.f32 0.0, %v3369
        %v3371 = vpop.f32.mrb[0].mxu0
        %v3372 = vpop.f32.mrb[0].mxu0
        %v3373 = vadd.f32 0.0, %v3372
        %v3374 = vpop.f32.mrb[0].mxu0
        %3375 = vdwg.mxu0
        %v3376 = vadd.f32 %v3067, %v3266
        %v3377 = vadd.f32 %v3068, %v3269
        %v3378 = vadd.f32 %v3069, %v3274
        %v3379 = vadd.f32 %v3070, %v3277
        %v3380 = vadd.f32 %v3071, %v3282
        %v3381 = vadd.f32 %v3072, %v3285
        %v3382 = vadd.f32 %v3073, %v3290
        %v3383 = vadd.f32 %v3074, %v3293
        %v3384 = vadd.f32 %v3075, %v3298
        %v3385 = vadd.f32 %v3076, %v3301
        %v3386 = vadd.f32 %v3077, %v3306
        %v3387 = vadd.f32 %v3078, %v3309
        %v3388 = vadd.f32 %v3079, %v3314
        %v3389 = vadd.f32 %v3080, %v3317
        %v3390 = vadd.f32 %v3081, %v3322
        %v3391 = vadd.f32 %v3082, %v3325
        %v3392 = vadd.f32 %v3083, %v3330
        %v3393 = vadd.f32 %v3084, %v3333
        %v3394 = vadd.f32 %v3085, %v3338
        %v3395 = vadd.f32 %v3086, %v3341
        %v3396 = vadd.f32 %v3087, %v3346
        %v3397 = vadd.f32 %v3088, %v3349
        %v3398 = vadd.f32 %v3089, %v3354
        %v3399 = vadd.f32 %v3090, %v3357
        %v3400 = vadd.f32 %v3091, %v3362
        %v3401 = vadd.f32 %v3092, %v3365
        %v3402 = vadd.f32 %v3093, %v3370
        %v3403 = vadd.f32 %v3094, %v3373
        %3404 = vst [vmem:[%s217] sm:$0xff] %v3376
        %3405 = vst [vmem:[%s217 + $0x10] sm:$0xff] %v3377
        %3406 = vst [vmem:[%s217 + $0x20] sm:$0xff] %v3378
        %3407 = vst [vmem:[%s217 + $0x30] sm:$0xff] %v3379
        %3408 = vst [vmem:[%s217 + $0x40] sm:$0xff] %v3380
        %3409 = vst [vmem:[%s217 + $0x50] sm:$0xff] %v3381
        %3410 = vst [vmem:[%s217 + $0x60] sm:$0xff] %v3382
        %3411 = vst [vmem:[%s217 + $0x70] sm:$0xff] %v3383
        %3412 = vst [vmem:[%s217 + $0x80] sm:$0xff] %v3384
        %3413 = vst [vmem:[%s217 + $0x90] sm:$0xff] %v3385
        %3414 = vst [vmem:[%s217 + $0xa0] sm:$0xff] %v3386
        %3415 = vst [vmem:[%s217 + $0xb0] sm:$0xff] %v3387
        %3416 = vst [vmem:[%s217 + $0xc0] sm:$0xff] %v3388
        %3417 = vst [vmem:[%s217 + $0xd0] sm:$0xff] %v3389
        %3418 = vst [vmem:[%s217 + $0xe0] sm:$0xff] %v3390
        %3419 = vst [vmem:[%s217 + $0xf0] sm:$0xff] %v3391
        %3420 = vst [vmem:[%s217 + $0x100] sm:$0xff] %v3392
        %3421 = vst [vmem:[%s217 + $0x110] sm:$0xff] %v3393
        %3422 = vst [vmem:[%s217 + $0x120] sm:$0xff] %v3394
        %3423 = vst [vmem:[%s217 + $0x130] sm:$0xff] %v3395
        %3424 = vst [vmem:[%s217 + $0x140] sm:$0xff] %v3396
        %3425 = vst [vmem:[%s217 + $0x150] sm:$0xff] %v3397
        %3426 = vst [vmem:[%s217 + $0x160] sm:$0xff] %v3398
        %3427 = vst [vmem:[%s217 + $0x170] sm:$0xff] %v3399
        %3428 = vst [vmem:[%s217 + $0x180] sm:$0xff] %v3400
        %3429 = vst [vmem:[%s217 + $0x190] sm:$0xff] %v3401
        %3430 = vst [vmem:[%s217 + $0x1a0] sm:$0xff] %v3402
        %3431 = vst [vmem:[%s217 + $0x1b0] sm:$0xff] %v3403
        %v3432 = vld [vmem:[%s227 + $0x10] sm:$0xf]
        %v3433 = vld [vmem:[%s227 + $0x14] sm:$0xf]
        %v3434 = vld [vmem:[%s227 + $0x18] sm:$0xf]
        %v3435 = vld [vmem:[%s227 + $0x1c] sm:$0xf]
        %v3436 = vld [vmem:[%s227 + $0x20] sm:$0xf]
        %v3437 = vld [vmem:[%s227 + $0x24] sm:$0xf]
        %v3438 = vld [vmem:[%s227 + $0x28] sm:$0xf]
        %v3439 = vld [vmem:[%s227 + $0x2c] sm:$0xf]
        %v3440 = vld [vmem:[%s227 + $0x30] sm:$0xf]
        %v3441 = vld [vmem:[%s227 + $0x34] sm:$0xf]
        %v3442 = vld [vmem:[%s227 + $0x38] sm:$0xf]
        %v3443 = vld [vmem:[%s227 + $0x3c] sm:$0xf]
        %v3444 = vld [vmem:[%s227 + $0x40] sm:$0xf]
        %v3445 = vld [vmem:[%s227 + $0x44] sm:$0xf]
        %v3446 = vld [vmem:[%s227 + $0x48] sm:$0xf]
        %v3447 = vld [vmem:[%s227 + $0x4c] sm:$0xf]
        %v3448 = vld [vmem:[%s227 + $0x50] sm:$0xf]
        %v3449 = vld [vmem:[%s227 + $0x54] sm:$0xf]
        %v3450 = vld [vmem:[%s227 + $0x58] sm:$0xf]
        %v3451 = vld [vmem:[%s227 + $0x5c] sm:$0xf]
        %v3452 = vld [vmem:[%s227 + $0x60] sm:$0xf]
        %v3453 = vld [vmem:[%s227 + $0x64] sm:$0xf]
        %v3454 = vld [vmem:[%s227 + $0x68] sm:$0xf]
        %v3455 = vld [vmem:[%s227 + $0x6c] sm:$0xf]
        %v3456 = vld [vmem:[%s227 + $0x70] sm:$0xf]
        %v3457 = vld [vmem:[%s227 + $0x74] sm:$0xf]
        %v3458 = vld [vmem:[%s227 + $0x78] sm:$0xf]
        %v3459 = vld [vmem:[%s227 + $0x7c] sm:$0xf]
        %s3460 = scalar_lea.vmem %s234, 224
        %v3461 = vld [vmem:[%s3460] sm:$0xf]
        %v3462 = vld [vmem:[%s3460 + $0x4] sm:$0xf]
        %v3463 = vld [vmem:[%s3460 + $0x8] sm:$0xf]
        %v3464 = vld [vmem:[%s3460 + $0xc] sm:$0xf]
        %v3465 = vld [vmem:[%s3460 + $0x10] sm:$0xf]
        %v3466 = vld [vmem:[%s3460 + $0x14] sm:$0xf]
        %v3467 = vld [vmem:[%s3460 + $0x18] sm:$0xf]
        %v3468 = vld [vmem:[%s3460 + $0x1c] sm:$0xf]
        %v3469 = vld [vmem:[%s217] sm:$0xff]
        %v3470 = vld [vmem:[%s217 + $0x10] sm:$0xff]
        %v3471 = vld [vmem:[%s217 + $0x20] sm:$0xff]
        %v3472 = vld [vmem:[%s217 + $0x30] sm:$0xff]
        %v3473 = vld [vmem:[%s217 + $0x40] sm:$0xff]
        %v3474 = vld [vmem:[%s217 + $0x50] sm:$0xff]
        %v3475 = vld [vmem:[%s217 + $0x60] sm:$0xff]
        %v3476 = vld [vmem:[%s217 + $0x70] sm:$0xff]
        %v3477 = vld [vmem:[%s217 + $0x80] sm:$0xff]
        %v3478 = vld [vmem:[%s217 + $0x90] sm:$0xff]
        %v3479 = vld [vmem:[%s217 + $0xa0] sm:$0xff]
        %v3480 = vld [vmem:[%s217 + $0xb0] sm:$0xff]
        %v3481 = vld [vmem:[%s217 + $0xc0] sm:$0xff]
        %v3482 = vld [vmem:[%s217 + $0xd0] sm:$0xff]
        %v3483 = vld [vmem:[%s217 + $0xe0] sm:$0xff]
        %v3484 = vld [vmem:[%s217 + $0xf0] sm:$0xff]
        %v3485 = vld [vmem:[%s217 + $0x100] sm:$0xff]
        %v3486 = vld [vmem:[%s217 + $0x110] sm:$0xff]
        %v3487 = vld [vmem:[%s217 + $0x120] sm:$0xff]
        %v3488 = vld [vmem:[%s217 + $0x130] sm:$0xff]
        %v3489 = vld [vmem:[%s217 + $0x140] sm:$0xff]
        %v3490 = vld [vmem:[%s217 + $0x150] sm:$0xff]
        %v3491 = vld [vmem:[%s217 + $0x160] sm:$0xff]
        %v3492 = vld [vmem:[%s217 + $0x170] sm:$0xff]
        %v3493 = vld [vmem:[%s217 + $0x180] sm:$0xff]
        %v3494 = vld [vmem:[%s217 + $0x190] sm:$0xff]
        %v3495 = vld [vmem:[%s217 + $0x1a0] sm:$0xff]
        %v3496 = vld [vmem:[%s217 + $0x1b0] sm:$0x7f]
        %v3525 = vunpack.c.l.b16 %v3432
        %v3526 = vunpack.c.l.b16 %v3433
        %v3527 = vunpack.c.l.b16 %v3434
        %v3528 = vunpack.c.l.b16 %v3435
        %v3529 = vunpack.c.l.b16 %v3436
        %v3530 = vunpack.c.l.b16 %v3437
        %v3531 = vunpack.c.l.b16 %v3438
        %v3532 = vunpack.c.l.b16 %v3439
        %v3533 = vunpack.c.l.b16 %v3440
        %v3534 = vunpack.c.l.b16 %v3441
        %v3535 = vunpack.c.l.b16 %v3442
        %v3536 = vunpack.c.l.b16 %v3443
        %v3537 = vunpack.c.l.b16 %v3444
        %v3538 = vunpack.c.l.b16 %v3445
        %v3539 = vunpack.c.l.b16 %v3446
        %v3540 = vunpack.c.l.b16 %v3447
        %v3541 = vunpack.c.l.b16 %v3448
        %v3542 = vunpack.c.l.b16 %v3449
        %v3543 = vunpack.c.l.b16 %v3450
        %v3544 = vunpack.c.l.b16 %v3451
        %v3545 = vunpack.c.l.b16 %v3452
        %v3546 = vunpack.c.l.b16 %v3453
        %v3547 = vunpack.c.l.b16 %v3454
        %v3548 = vunpack.c.l.b16 %v3455
        %v3549 = vunpack.c.l.b16 %v3456
        %v3550 = vunpack.c.l.b16 %v3457
        %v3551 = vunpack.c.l.b16 %v3458
        %v3552 = vunpack.c.l.b16 %v3459
        %v3553 = vpack.c.b16 %v3526, %v3525
        %v3554 = vpack.c.b16 %v3528, %v3527
        %v3555 = vpack.c.b16 %v3530, %v3529
        %v3556 = vpack.c.b16 %v3532, %v3531
        %v3557 = vpack.c.b16 %v3534, %v3533
        %v3558 = vpack.c.b16 %v3536, %v3535
        %v3559 = vpack.c.b16 %v3538, %v3537
        %v3560 = vpack.c.b16 %v3540, %v3539
        %v3561 = vpack.c.b16 %v3542, %v3541
        %v3562 = vpack.c.b16 %v3544, %v3543
        %v3563 = vpack.c.b16 %v3546, %v3545
        %v3564 = vpack.c.b16 %v3548, %v3547
        %v3565 = vpack.c.b16 %v3550, %v3549
        %v3566 = vpack.c.b16 %v3552, %v3551
        %v3568 = vshrl.u32 %v3553, 16
        %v3570 = vshll.u32 %v3553, 16
        %v3572 = vrot.slane %v3570, 1
        %v3573 = vor.u32 %v3568, %v3572
        %v3575 = vshll.u32 %v3554, 16
        %v3577 = vrot.slane %v3575, 1
        %v3578 = vsel %vm851, %v3573, %v3577
        %v3579 = vshrl.u32 %v3554, 16
        %v3581 = vor.u32 %v3579, %v3577
        %v3583 = vshll.u32 %v3555, 16
        %v3585 = vrot.slane %v3583, 1
        %v3586 = vsel %vm851, %v3581, %v3585
        %v3587 = vshrl.u32 %v3555, 16
        %v3589 = vor.u32 %v3587, %v3585
        %v3591 = vshll.u32 %v3556, 16
        %v3593 = vrot.slane %v3591, 1
        %v3594 = vsel %vm851, %v3589, %v3593
        %v3595 = vshrl.u32 %v3556, 16
        %v3597 = vor.u32 %v3595, %v3593
        %v3599 = vshll.u32 %v3557, 16
        %v3601 = vrot.slane %v3599, 1
        %v3602 = vsel %vm851, %v3597, %v3601
        %v3603 = vshrl.u32 %v3557, 16
        %v3605 = vor.u32 %v3603, %v3601
        %v3607 = vshll.u32 %v3558, 16
        %v3609 = vrot.slane %v3607, 1
        %v3610 = vsel %vm851, %v3605, %v3609
        %v3611 = vshrl.u32 %v3558, 16
        %v3613 = vor.u32 %v3611, %v3609
        %v3615 = vshll.u32 %v3559, 16
        %v3617 = vrot.slane %v3615, 1
        %v3618 = vsel %vm851, %v3613, %v3617
        %v3619 = vshrl.u32 %v3559, 16
        %v3621 = vor.u32 %v3619, %v3617
        %v3623 = vshll.u32 %v3560, 16
        %v3625 = vrot.slane %v3623, 1
        %v3626 = vsel %vm851, %v3621, %v3625
        %v3627 = vshrl.u32 %v3560, 16
        %v3629 = vor.u32 %v3627, %v3625
        %v3631 = vshll.u32 %v3561, 16
        %v3633 = vrot.slane %v3631, 1
        %v3634 = vsel %vm851, %v3629, %v3633
        %v3635 = vshrl.u32 %v3561, 16
        %v3637 = vor.u32 %v3635, %v3633
        %v3639 = vshll.u32 %v3562, 16
        %v3641 = vrot.slane %v3639, 1
        %v3642 = vsel %vm851, %v3637, %v3641
        %v3643 = vshrl.u32 %v3562, 16
        %v3645 = vor.u32 %v3643, %v3641
        %v3647 = vshll.u32 %v3563, 16
        %v3649 = vrot.slane %v3647, 1
        %v3650 = vsel %vm851, %v3645, %v3649
        %v3651 = vshrl.u32 %v3563, 16
        %v3653 = vor.u32 %v3651, %v3649
        %v3655 = vshll.u32 %v3564, 16
        %v3657 = vrot.slane %v3655, 1
        %v3658 = vsel %vm851, %v3653, %v3657
        %v3659 = vshrl.u32 %v3564, 16
        %v3661 = vor.u32 %v3659, %v3657
        %v3663 = vshll.u32 %v3565, 16
        %v3665 = vrot.slane %v3663, 1
        %v3666 = vsel %vm851, %v3661, %v3665
        %v3667 = vshrl.u32 %v3565, 16
        %v3669 = vor.u32 %v3667, %v3665
        %v3671 = vshll.u32 %v3566, 16
        %v3673 = vrot.slane %v3671, 1
        %v3674 = vsel %vm851, %v3669, %v3673
        %v3675 = vshrl.u32 %v3566, 16
        %v3677 = vor.u32 %v3675, %v3673
        %v3686 = vunpack.c.l.b16 %v3461
        %v3687 = vunpack.c.l.b16 %v3462
        %v3688 = vunpack.c.l.b16 %v3463
        %v3689 = vunpack.c.l.b16 %v3464
        %v3690 = vunpack.c.l.b16 %v3465
        %v3691 = vunpack.c.l.b16 %v3466
        %v3692 = vunpack.c.l.b16 %v3467
        %v3693 = vunpack.c.l.b16 %v3468
        %v3694 = vpack.c.b16 %v3687, %v3686
        %v3695 = vpack.c.b16 %v3689, %v3688
        %v3696 = vpack.c.b16 %v3691, %v3690
        %v3697 = vpack.c.b16 %v3693, %v3692
        %v3703 = vsel %vm468, %v3578, 0
        %v3706 = vsel %vm468, %v3586, 0
        %v3709 = vsel %vm468, %v3594, 0
        %v3712 = vsel %vm468, %v3602, 0
        %v3715 = vsel %vm468, %v3610, 0
        %v3718 = vsel %vm468, %v3618, 0
        %v3721 = vsel %vm468, %v3626, 0
        %v3724 = vsel %vm468, %v3634, 0
        %v3727 = vsel %vm468, %v3642, 0
        %v3730 = vsel %vm468, %v3650, 0
        %v3733 = vsel %vm468, %v3658, 0
        %v3736 = vsel %vm468, %v3666, 0
        %v3739 = vsel %vm468, %v3674, 0
        %v3742 = vsel %vm468, %v3677, 0
        %3744 = vmatprep.subr.bf16.mxu0 0
        %3745 = vmatpush1.bf16.msra.mxu0 %v3694
        %3746 = vmatprep.subr.bf16.mxu0 0
        %3747 = vmatpush1.bf16.msra.mxu0 %v3695
        %3748 = vmatprep.subr.bf16.mxu0 0
        %3749 = vmatpush1.bf16.msra.mxu0 %v3696
        %3750 = vmatprep.subr.bf16.mxu0 0
        %3751 = vmatpush1.bf16.msra.mxu0 %v3697
        %3752 = vmatprep.subr.bf16.mxu0 0
        %3753 = vmatpush1.bf16.msra.mxu0 0
        %3754 = vmatprep.subr.bf16.mxu0 0
        %3755 = vmatpush1.bf16.msra.mxu0 0
        %3756 = vmatprep.subr.bf16.mxu0 0
        %3757 = vmatpush1.bf16.msra.mxu0 0
        %3758 = vmatprep.subr.bf16.mxu0 0
        %3759 = vmatpush1.bf16.msra.mxu0 0
        %3760 = vmatprep.subr.bf16.mxu0 0
        %3761 = vmatpush1.bf16.msra.mxu0 0
        %3762 = vmatprep.subr.bf16.mxu0 0
        %3763 = vmatpush1.bf16.msra.mxu0 0
        %3764 = vmatprep.subr.bf16.mxu0 0
        %3765 = vmatpush1.bf16.msra.mxu0 0
        %3766 = vmatprep.subr.bf16.mxu0 0
        %3767 = vmatpush1.bf16.msra.mxu0 0
        %3768 = vmatprep.subr.bf16.mxu0 0
        %3769 = vmatpush1.bf16.msra.mxu0 0
        %3770 = vmatprep.subr.bf16.mxu0 0
        %3771 = vmatpush1.bf16.msra.mxu0 0
        %3772 = vmatprep.subr.bf16.mxu0 0
        %3773 = vmatpush1.bf16.msra.mxu0 0
        %3774 = vmatprep.subr.bf16.mxu0 0
        %3775 = vmatpush1.bf16.msra.mxu0 0
        %3776 = vmatprep.mubr.bf16.mxu0 0
        %3777 = vmatmul.mubr.bf16.gmra.mrb[0].mxu0 %v3703
        %v3778 = vpop.f32.mrb[0].mxu0
        %v3779 = vadd.f32 0.0, %v3778
        %v3780 = vpop.f32.mrb[0].mxu0
        %v3781 = vpop.f32.mrb[0].mxu0
        %v3782 = vadd.f32 0.0, %v3781
        %v3783 = vpop.f32.mrb[0].mxu0
        %3784 = vmatprep.mubr.bf16.mxu0 0
        %3785 = vmatmul.mubr.bf16.gmra.mrb[0].mxu0 %v3706
        %v3786 = vpop.f32.mrb[0].mxu0
        %v3787 = vadd.f32 0.0, %v3786
        %v3788 = vpop.f32.mrb[0].mxu0
        %v3789 = vpop.f32.mrb[0].mxu0
        %v3790 = vadd.f32 0.0, %v3789
        %v3791 = vpop.f32.mrb[0].mxu0
        %3792 = vmatprep.mubr.bf16.mxu0 0
        %3793 = vmatmul.mubr.bf16.gmra.mrb[0].mxu0 %v3709
        %v3794 = vpop.f32.mrb[0].mxu0
        %v3795 = vadd.f32 0.0, %v3794
        %v3796 = vpop.f32.mrb[0].mxu0
        %v3797 = vpop.f32.mrb[0].mxu0
        %v3798 = vadd.f32 0.0, %v3797
        %v3799 = vpop.f32.mrb[0].mxu0
        %3800 = vmatprep.mubr.bf16.mxu0 0
        %3801 = vmatmul.mubr.bf16.gmra.mrb[0].mxu0 %v3712
        %v3802 = vpop.f32.mrb[0].mxu0
        %v3803 = vadd.f32 0.0, %v3802
        %v3804 = vpop.f32.mrb[0].mxu0
        %v3805 = vpop.f32.mrb[0].mxu0
        %v3806 = vadd.f32 0.0, %v3805
        %v3807 = vpop.f32.mrb[0].mxu0
        %3808 = vmatprep.mubr.bf16.mxu0 0
        %3809 = vmatmul.mubr.bf16.gmra.mrb[0].mxu0 %v3715
        %v3810 = vpop.f32.mrb[0].mxu0
        %v3811 = vadd.f32 0.0, %v3810
        %v3812 = vpop.f32.mrb[0].mxu0
        %v3813 = vpop.f32.mrb[0].mxu0
        %v3814 = vadd.f32 0.0, %v3813
        %v3815 = vpop.f32.mrb[0].mxu0
        %3816 = vmatprep.mubr.bf16.mxu0 0
        %3817 = vmatmul.mubr.bf16.gmra.mrb[0].mxu0 %v3718
        %v3818 = vpop.f32.mrb[0].mxu0
        %v3819 = vadd.f32 0.0, %v3818
        %v3820 = vpop.f32.mrb[0].mxu0
        %v3821 = vpop.f32.mrb[0].mxu0
        %v3822 = vadd.f32 0.0, %v3821
        %v3823 = vpop.f32.mrb[0].mxu0
        %3824 = vmatprep.mubr.bf16.mxu0 0
        %3825 = vmatmul.mubr.bf16.gmra.mrb[0].mxu0 %v3721
        %v3826 = vpop.f32.mrb[0].mxu0
        %v3827 = vadd.f32 0.0, %v3826
        %v3828 = vpop.f32.mrb[0].mxu0
        %v3829 = vpop.f32.mrb[0].mxu0
        %v3830 = vadd.f32 0.0, %v3829
        %v3831 = vpop.f32.mrb[0].mxu0
        %3832 = vmatprep.mubr.bf16.mxu0 0
        %3833 = vmatmul.mubr.bf16.gmra.mrb[0].mxu0 %v3724
        %v3834 = vpop.f32.mrb[0].mxu0
        %v3835 = vadd.f32 0.0, %v3834
        %v3836 = vpop.f32.mrb[0].mxu0
        %v3837 = vpop.f32.mrb[0].mxu0
        %v3838 = vadd.f32 0.0, %v3837
        %v3839 = vpop.f32.mrb[0].mxu0
        %3840 = vmatprep.mubr.bf16.mxu0 0
        %3841 = vmatmul.mubr.bf16.gmra.mrb[0].mxu0 %v3727
        %v3842 = vpop.f32.mrb[0].mxu0
        %v3843 = vadd.f32 0.0, %v3842
        %v3844 = vpop.f32.mrb[0].mxu0
        %v3845 = vpop.f32.mrb[0].mxu0
        %v3846 = vadd.f32 0.0, %v3845
        %v3847 = vpop.f32.mrb[0].mxu0
        %3848 = vmatprep.mubr.bf16.mxu0 0
        %3849 = vmatmul.mubr.bf16.gmra.mrb[0].mxu0 %v3730
        %v3850 = vpop.f32.mrb[0].mxu0
        %v3851 = vadd.f32 0.0, %v3850
        %v3852 = vpop.f32.mrb[0].mxu0
        %v3853 = vpop.f32.mrb[0].mxu0
        %v3854 = vadd.f32 0.0, %v3853
        %v3855 = vpop.f32.mrb[0].mxu0
        %3856 = vmatprep.mubr.bf16.mxu0 0
        %3857 = vmatmul.mubr.bf16.gmra.mrb[0].mxu0 %v3733
        %v3858 = vpop.f32.mrb[0].mxu0
        %v3859 = vadd.f32 0.0, %v3858
        %v3860 = vpop.f32.mrb[0].mxu0
        %v3861 = vpop.f32.mrb[0].mxu0
        %v3862 = vadd.f32 0.0, %v3861
        %v3863 = vpop.f32.mrb[0].mxu0
        %3864 = vmatprep.mubr.bf16.mxu0 0
        %3865 = vmatmul.mubr.bf16.gmra.mrb[0].mxu0 %v3736
        %v3866 = vpop.f32.mrb[0].mxu0
        %v3867 = vadd.f32 0.0, %v3866
        %v3868 = vpop.f32.mrb[0].mxu0
        %v3869 = vpop.f32.mrb[0].mxu0
        %v3870 = vadd.f32 0.0, %v3869
        %v3871 = vpop.f32.mrb[0].mxu0
        %3872 = vmatprep.mubr.bf16.mxu0 0
        %3873 = vmatmul.mubr.bf16.gmra.mrb[0].mxu0 %v3739
        %v3874 = vpop.f32.mrb[0].mxu0
        %v3875 = vadd.f32 0.0, %v3874
        %v3876 = vpop.f32.mrb[0].mxu0
        %v3877 = vpop.f32.mrb[0].mxu0
        %v3878 = vadd.f32 0.0, %v3877
        %v3879 = vpop.f32.mrb[0].mxu0
        %3880 = vmatprep.mubr.bf16.mxu0 0
        %3881 = vmatmul.mubr.bf16.gmra.mrb[0].mxu0 %v3742
        %v3882 = vpop.f32.mrb[0].mxu0
        %v3883 = vadd.f32 0.0, %v3882
        %v3884 = vpop.f32.mrb[0].mxu0
        %v3885 = vpop.f32.mrb[0].mxu0
        %v3886 = vadd.f32 0.0, %v3885
        %v3887 = vpop.f32.mrb[0].mxu0
        %3888 = vdwg.mxu0
        %v3889 = vadd.f32 %v3469, %v3779
        %v3890 = vadd.f32 %v3470, %v3782
        %v3891 = vadd.f32 %v3471, %v3787
        %v3892 = vadd.f32 %v3472, %v3790
        %v3893 = vadd.f32 %v3473, %v3795
        %v3894 = vadd.f32 %v3474, %v3798
        %v3895 = vadd.f32 %v3475, %v3803
        %v3896 = vadd.f32 %v3476, %v3806
        %v3897 = vadd.f32 %v3477, %v3811
        %v3898 = vadd.f32 %v3478, %v3814
        %v3899 = vadd.f32 %v3479, %v3819
        %v3900 = vadd.f32 %v3480, %v3822
        %v3901 = vadd.f32 %v3481, %v3827
        %v3902 = vadd.f32 %v3482, %v3830
        %v3903 = vadd.f32 %v3483, %v3835
        %v3904 = vadd.f32 %v3484, %v3838
        %v3905 = vadd.f32 %v3485, %v3843
        %v3906 = vadd.f32 %v3486, %v3846
        %v3907 = vadd.f32 %v3487, %v3851
        %v3908 = vadd.f32 %v3488, %v3854
        %v3909 = vadd.f32 %v3489, %v3859
        %v3910 = vadd.f32 %v3490, %v3862
        %v3911 = vadd.f32 %v3491, %v3867
        %v3912 = vadd.f32 %v3492, %v3870
        %v3913 = vadd.f32 %v3493, %v3875
        %v3914 = vadd.f32 %v3494, %v3878
        %v3915 = vadd.f32 %v3495, %v3883
        %v3916 = vadd.f32 %v3496, %v3886
        %3917 = vst [vmem:[%s217] sm:$0xff] %v3889
        %3918 = vst [vmem:[%s217 + $0x10] sm:$0xff] %v3890
        %3919 = vst [vmem:[%s217 + $0x20] sm:$0xff] %v3891
        %3920 = vst [vmem:[%s217 + $0x30] sm:$0xff] %v3892
        %3921 = vst [vmem:[%s217 + $0x40] sm:$0xff] %v3893
        %3922 = vst [vmem:[%s217 + $0x50] sm:$0xff] %v3894
        %3923 = vst [vmem:[%s217 + $0x60] sm:$0xff] %v3895
        %3924 = vst [vmem:[%s217 + $0x70] sm:$0xff] %v3896
        %3925 = vst [vmem:[%s217 + $0x80] sm:$0xff] %v3897
        %3926 = vst [vmem:[%s217 + $0x90] sm:$0xff] %v3898
        %3927 = vst [vmem:[%s217 + $0xa0] sm:$0xff] %v3899
        %3928 = vst [vmem:[%s217 + $0xb0] sm:$0xff] %v3900
        %3929 = vst [vmem:[%s217 + $0xc0] sm:$0xff] %v3901
        %3930 = vst [vmem:[%s217 + $0xd0] sm:$0xff] %v3902
        %3931 = vst [vmem:[%s217 + $0xe0] sm:$0xff] %v3903
        %3932 = vst [vmem:[%s217 + $0xf0] sm:$0xff] %v3904
        %3933 = vst [vmem:[%s217 + $0x100] sm:$0xff] %v3905
        %3934 = vst [vmem:[%s217 + $0x110] sm:$0xff] %v3906
        %3935 = vst [vmem:[%s217 + $0x120] sm:$0xff] %v3907
        %3936 = vst [vmem:[%s217 + $0x130] sm:$0xff] %v3908
        %3937 = vst [vmem:[%s217 + $0x140] sm:$0xff] %v3909
        %3938 = vst [vmem:[%s217 + $0x150] sm:$0xff] %v3910
        %3939 = vst [vmem:[%s217 + $0x160] sm:$0xff] %v3911
        %3940 = vst [vmem:[%s217 + $0x170] sm:$0xff] %v3912
        %3941 = vst [vmem:[%s217 + $0x180] sm:$0xff] %v3913
        %3942 = vst [vmem:[%s217 + $0x190] sm:$0xff] %v3914
        %3943 = vst [vmem:[%s217 + $0x1a0] sm:$0xff] %v3915
        %3944 = vst [vmem:[%s217 + $0x1b0] sm:$0x7f] %v3916
        %v3945 = vld [vmem:[%s227 + $0x10] sm:$0xe]
        %v3946 = vld [vmem:[%s227 + $0x14] sm:$0xf]
        %v3947 = vld [vmem:[%s227 + $0x18] sm:$0xf]
        %v3948 = vld [vmem:[%s227 + $0x1c] sm:$0xf]
        %v3949 = vld [vmem:[%s227 + $0x20] sm:$0xf]
        %v3950 = vld [vmem:[%s227 + $0x24] sm:$0xf]
        %v3951 = vld [vmem:[%s227 + $0x28] sm:$0xf]
        %v3952 = vld [vmem:[%s227 + $0x2c] sm:$0xf]
        %v3953 = vld [vmem:[%s227 + $0x30] sm:$0xf]
        %v3954 = vld [vmem:[%s227 + $0x34] sm:$0xf]
        %v3955 = vld [vmem:[%s227 + $0x38] sm:$0xf]
        %v3956 = vld [vmem:[%s227 + $0x3c] sm:$0xf]
        %v3957 = vld [vmem:[%s227 + $0x40] sm:$0xf]
        %v3958 = vld [vmem:[%s227 + $0x44] sm:$0xf]
        %v3959 = vld [vmem:[%s227 + $0x48] sm:$0xf]
        %v3960 = vld [vmem:[%s227 + $0x4c] sm:$0xf]
        %v3961 = vld [vmem:[%s227 + $0x50] sm:$0xf]
        %v3962 = vld [vmem:[%s227 + $0x54] sm:$0xf]
        %v3963 = vld [vmem:[%s227 + $0x58] sm:$0xf]
        %v3964 = vld [vmem:[%s227 + $0x5c] sm:$0xf]
        %v3965 = vld [vmem:[%s227 + $0x60] sm:$0xf]
        %v3966 = vld [vmem:[%s227 + $0x64] sm:$0xf]
        %v3967 = vld [vmem:[%s227 + $0x68] sm:$0xf]
        %v3968 = vld [vmem:[%s227 + $0x6c] sm:$0xf]
        %v3969 = vld [vmem:[%s227 + $0x70] sm:$0xf]
        %v3970 = vld [vmem:[%s227 + $0x74] sm:$0xf]
        %v3971 = vld [vmem:[%s227 + $0x78] sm:$0xf]
        %v3972 = vld [vmem:[%s227 + $0x7c] sm:$0xf]
        %s3973 = scalar_lea.vmem %s234, 256
        %v3974 = vld [vmem:[%s3973] sm:$0xf]
        %v3975 = vld [vmem:[%s3973 + $0x4] sm:$0xf]
        %v3976 = vld [vmem:[%s3973 + $0x8] sm:$0xf]
        %v3977 = vld [vmem:[%s3973 + $0xc] sm:$0xf]
        %v3978 = vld [vmem:[%s3973 + $0x10] sm:$0xf]
        %v3979 = vld [vmem:[%s3973 + $0x14] sm:$0xf]
        %v3980 = vld [vmem:[%s3973 + $0x18] sm:$0xf]
        %v3981 = vld [vmem:[%s3973 + $0x1c] sm:$0xf]
        %v3982 = vld [vmem:[%s217] sm:$0xff]
        %v3983 = vld [vmem:[%s217 + $0x10] sm:$0xff]
        %v3984 = vld [vmem:[%s217 + $0x20] sm:$0xff]
        %v3985 = vld [vmem:[%s217 + $0x30] sm:$0xff]
        %v3986 = vld [vmem:[%s217 + $0x40] sm:$0xff]
        %v3987 = vld [vmem:[%s217 + $0x50] sm:$0xff]
        %v3988 = vld [vmem:[%s217 + $0x60] sm:$0xff]
        %v3989 = vld [vmem:[%s217 + $0x70] sm:$0xff]
        %v3990 = vld [vmem:[%s217 + $0x80] sm:$0xff]
        %v3991 = vld [vmem:[%s217 + $0x90] sm:$0xff]
        %v3992 = vld [vmem:[%s217 + $0xa0] sm:$0xff]
        %v3993 = vld [vmem:[%s217 + $0xb0] sm:$0xff]
        %v3994 = vld [vmem:[%s217 + $0xc0] sm:$0xff]
        %v3995 = vld [vmem:[%s217 + $0xd0] sm:$0xff]
        %v3996 = vld [vmem:[%s217 + $0xe0] sm:$0xff]
        %v3997 = vld [vmem:[%s217 + $0xf0] sm:$0xff]
        %v3998 = vld [vmem:[%s217 + $0x100] sm:$0xff]
        %v3999 = vld [vmem:[%s217 + $0x110] sm:$0xff]
        %v4000 = vld [vmem:[%s217 + $0x120] sm:$0xff]
        %v4001 = vld [vmem:[%s217 + $0x130] sm:$0xff]
        %v4002 = vld [vmem:[%s217 + $0x140] sm:$0xff]
        %v4003 = vld [vmem:[%s217 + $0x150] sm:$0xff]
        %v4004 = vld [vmem:[%s217 + $0x160] sm:$0xff]
        %v4005 = vld [vmem:[%s217 + $0x170] sm:$0xff]
        %v4006 = vld [vmem:[%s217 + $0x180] sm:$0xff]
        %v4007 = vld [vmem:[%s217 + $0x190] sm:$0xff]
        %v4008 = vld [vmem:[%s217 + $0x1a0] sm:$0xff]
        %v4009 = vld [vmem:[%s217 + $0x1b0] sm:$0x3f]
        %v4038 = vunpack.c.l.b16 %v3945
        %v4039 = vunpack.c.l.b16 %v3946
        %v4040 = vunpack.c.l.b16 %v3947
        %v4041 = vunpack.c.l.b16 %v3948
        %v4042 = vunpack.c.l.b16 %v3949
        %v4043 = vunpack.c.l.b16 %v3950
        %v4044 = vunpack.c.l.b16 %v3951
        %v4045 = vunpack.c.l.b16 %v3952
        %v4046 = vunpack.c.l.b16 %v3953
        %v4047 = vunpack.c.l.b16 %v3954
        %v4048 = vunpack.c.l.b16 %v3955
        %v4049 = vunpack.c.l.b16 %v3956
        %v4050 = vunpack.c.l.b16 %v3957
        %v4051 = vunpack.c.l.b16 %v3958
        %v4052 = vunpack.c.l.b16 %v3959
        %v4053 = vunpack.c.l.b16 %v3960
        %v4054 = vunpack.c.l.b16 %v3961
        %v4055 = vunpack.c.l.b16 %v3962
        %v4056 = vunpack.c.l.b16 %v3963
        %v4057 = vunpack.c.l.b16 %v3964
        %v4058 = vunpack.c.l.b16 %v3965
        %v4059 = vunpack.c.l.b16 %v3966
        %v4060 = vunpack.c.l.b16 %v3967
        %v4061 = vunpack.c.l.b16 %v3968
        %v4062 = vunpack.c.l.b16 %v3969
        %v4063 = vunpack.c.l.b16 %v3970
        %v4064 = vunpack.c.l.b16 %v3971
        %v4065 = vunpack.c.l.b16 %v3972
        %v4066 = vpack.c.b16 %v4039, %v4038
        %v4067 = vpack.c.b16 %v4041, %v4040
        %v4068 = vpack.c.b16 %v4043, %v4042
        %v4069 = vpack.c.b16 %v4045, %v4044
        %v4070 = vpack.c.b16 %v4047, %v4046
        %v4071 = vpack.c.b16 %v4049, %v4048
        %v4072 = vpack.c.b16 %v4051, %v4050
        %v4073 = vpack.c.b16 %v4053, %v4052
        %v4074 = vpack.c.b16 %v4055, %v4054
        %v4075 = vpack.c.b16 %v4057, %v4056
        %v4076 = vpack.c.b16 %v4059, %v4058
        %v4077 = vpack.c.b16 %v4061, %v4060
        %v4078 = vpack.c.b16 %v4063, %v4062
        %v4079 = vpack.c.b16 %v4065, %v4064
        %v4080 = vrot.slane %v4066, 1
        %v4081 = vrot.slane %v4067, 1
        %v4082 = vsel %vm1374, %v4080, %v4081
        %v4083 = vrot.slane %v4068, 1
        %v4084 = vsel %vm1374, %v4081, %v4083
        %v4085 = vrot.slane %v4069, 1
        %v4086 = vsel %vm1374, %v4083, %v4085
        %v4087 = vrot.slane %v4070, 1
        %v4088 = vsel %vm1374, %v4085, %v4087
        %v4089 = vrot.slane %v4071, 1
        %v4090 = vsel %vm1374, %v4087, %v4089
        %v4091 = vrot.slane %v4072, 1
        %v4092 = vsel %vm1374, %v4089, %v4091
        %v4093 = vrot.slane %v4073, 1
        %v4094 = vsel %vm1374, %v4091, %v4093
        %v4095 = vrot.slane %v4074, 1
        %v4096 = vsel %vm1374, %v4093, %v4095
        %v4097 = vrot.slane %v4075, 1
        %v4098 = vsel %vm1374, %v4095, %v4097
        %v4099 = vrot.slane %v4076, 1
        %v4100 = vsel %vm1374, %v4097, %v4099
        %v4101 = vrot.slane %v4077, 1
        %v4102 = vsel %vm1374, %v4099, %v4101
        %v4103 = vrot.slane %v4078, 1
        %v4104 = vsel %vm1374, %v4101, %v4103
        %v4105 = vrot.slane %v4079, 1
        %v4106 = vsel %vm1374, %v4103, %v4105
        %v4115 = vunpack.c.l.b16 %v3974
        %v4116 = vunpack.c.l.b16 %v3975
        %v4117 = vunpack.c.l.b16 %v3976
        %v4118 = vunpack.c.l.b16 %v3977
        %v4119 = vunpack.c.l.b16 %v3978
        %v4120 = vunpack.c.l.b16 %v3979
        %v4121 = vunpack.c.l.b16 %v3980
        %v4122 = vunpack.c.l.b16 %v3981
        %v4123 = vpack.c.b16 %v4116, %v4115
        %v4124 = vpack.c.b16 %v4118, %v4117
        %v4125 = vpack.c.b16 %v4120, %v4119
        %v4126 = vpack.c.b16 %v4122, %v4121
        %v4132 = vsel %vm468, %v4082, 0
        %v4135 = vsel %vm468, %v4084, 0
        %v4138 = vsel %vm468, %v4086, 0
        %v4141 = vsel %vm468, %v4088, 0
        %v4144 = vsel %vm468, %v4090, 0
        %v4147 = vsel %vm468, %v4092, 0
        %v4150 = vsel %vm468, %v4094, 0
        %v4153 = vsel %vm468, %v4096, 0
        %v4156 = vsel %vm468, %v4098, 0
        %v4159 = vsel %vm468, %v4100, 0
        %v4162 = vsel %vm468, %v4102, 0
        %v4165 = vsel %vm468, %v4104, 0
        %v4168 = vsel %vm468, %v4106, 0
        %v4171 = vsel %vm468, %v4105, 0
        %4173 = vmatprep.subr.bf16.mxu0 0
        %4174 = vmatpush1.bf16.msra.mxu0 %v4123
        %4175 = vmatprep.subr.bf16.mxu0 0
        %4176 = vmatpush1.bf16.msra.mxu0 %v4124
        %4177 = vmatprep.subr.bf16.mxu0 0
        %4178 = vmatpush1.bf16.msra.mxu0 %v4125
        %4179 = vmatprep.subr.bf16.mxu0 0
        %4180 = vmatpush1.bf16.msra.mxu0 %v4126
        %4181 = vmatprep.subr.bf16.mxu0 0
        %4182 = vmatpush1.bf16.msra.mxu0 0
        %4183 = vmatprep.subr.bf16.mxu0 0
        %4184 = vmatpush1.bf16.msra.mxu0 0
        %4185 = vmatprep.subr.bf16.mxu0 0
        %4186 = vmatpush1.bf16.msra.mxu0 0
        %4187 = vmatprep.subr.bf16.mxu0 0
        %4188 = vmatpush1.bf16.msra.mxu0 0
        %4189 = vmatprep.subr.bf16.mxu0 0
        %4190 = vmatpush1.bf16.msra.mxu0 0
        %4191 = vmatprep.subr.bf16.mxu0 0
        %4192 = vmatpush1.bf16.msra.mxu0 0
        %4193 = vmatprep.subr.bf16.mxu0 0
        %4194 = vmatpush1.bf16.msra.mxu0 0
        %4195 = vmatprep.subr.bf16.mxu0 0
        %4196 = vmatpush1.bf16.msra.mxu0 0
        %4197 = vmatprep.subr.bf16.mxu0 0
        %4198 = vmatpush1.bf16.msra.mxu0 0
        %4199 = vmatprep.subr.bf16.mxu0 0
        %4200 = vmatpush1.bf16.msra.mxu0 0
        %4201 = vmatprep.subr.bf16.mxu0 0
        %4202 = vmatpush1.bf16.msra.mxu0 0
        %4203 = vmatprep.subr.bf16.mxu0 0
        %4204 = vmatpush1.bf16.msra.mxu0 0
        %4205 = vmatprep.mubr.bf16.mxu0 0
        %4206 = vmatmul.mubr.bf16.gmra.mrb[0].mxu0 %v4132
        %v4207 = vpop.f32.mrb[0].mxu0
        %v4208 = vadd.f32 0.0, %v4207
        %v4209 = vpop.f32.mrb[0].mxu0
        %v4210 = vpop.f32.mrb[0].mxu0
        %v4211 = vadd.f32 0.0, %v4210
        %v4212 = vpop.f32.mrb[0].mxu0
        %4213 = vmatprep.mubr.bf16.mxu0 0
        %4214 = vmatmul.mubr.bf16.gmra.mrb[0].mxu0 %v4135
        %v4215 = vpop.f32.mrb[0].mxu0
        %v4216 = vadd.f32 0.0, %v4215
        %v4217 = vpop.f32.mrb[0].mxu0
        %v4218 = vpop.f32.mrb[0].mxu0
        %v4219 = vadd.f32 0.0, %v4218
        %v4220 = vpop.f32.mrb[0].mxu0
        %4221 = vmatprep.mubr.bf16.mxu0 0
        %4222 = vmatmul.mubr.bf16.gmra.mrb[0].mxu0 %v4138
        %v4223 = vpop.f32.mrb[0].mxu0
        %v4224 = vadd.f32 0.0, %v4223
        %v4225 = vpop.f32.mrb[0].mxu0
        %v4226 = vpop.f32.mrb[0].mxu0
        %v4227 = vadd.f32 0.0, %v4226
        %v4228 = vpop.f32.mrb[0].mxu0
        %4229 = vmatprep.mubr.bf16.mxu0 0
        %4230 = vmatmul.mubr.bf16.gmra.mrb[0].mxu0 %v4141
        %v4231 = vpop.f32.mrb[0].mxu0
        %v4232 = vadd.f32 0.0, %v4231
        %v4233 = vpop.f32.mrb[0].mxu0
        %v4234 = vpop.f32.mrb[0].mxu0
        %v4235 = vadd.f32 0.0, %v4234
        %v4236 = vpop.f32.mrb[0].mxu0
        %4237 = vmatprep.mubr.bf16.mxu0 0
        %4238 = vmatmul.mubr.bf16.gmra.mrb[0].mxu0 %v4144
        %v4239 = vpop.f32.mrb[0].mxu0
        %v4240 = vadd.f32 0.0, %v4239
        %v4241 = vpop.f32.mrb[0].mxu0
        %v4242 = vpop.f32.mrb[0].mxu0
        %v4243 = vadd.f32 0.0, %v4242
        %v4244 = vpop.f32.mrb[0].mxu0
        %4245 = vmatprep.mubr.bf16.mxu0 0
        %4246 = vmatmul.mubr.bf16.gmra.mrb[0].mxu0 %v4147
        %v4247 = vpop.f32.mrb[0].mxu0
        %v4248 = vadd.f32 0.0, %v4247
        %v4249 = vpop.f32.mrb[0].mxu0
        %v4250 = vpop.f32.mrb[0].mxu0
        %v4251 = vadd.f32 0.0, %v4250
        %v4252 = vpop.f32.mrb[0].mxu0
        %4253 = vmatprep.mubr.bf16.mxu0 0
        %4254 = vmatmul.mubr.bf16.gmra.mrb[0].mxu0 %v4150
        %v4255 = vpop.f32.mrb[0].mxu0
        %v4256 = vadd.f32 0.0, %v4255
        %v4257 = vpop.f32.mrb[0].mxu0
        %v4258 = vpop.f32.mrb[0].mxu0
        %v4259 = vadd.f32 0.0, %v4258
        %v4260 = vpop.f32.mrb[0].mxu0
        %4261 = vmatprep.mubr.bf16.mxu0 0
        %4262 = vmatmul.mubr.bf16.gmra.mrb[0].mxu0 %v4153
        %v4263 = vpop.f32.mrb[0].mxu0
        %v4264 = vadd.f32 0.0, %v4263
        %v4265 = vpop.f32.mrb[0].mxu0
        %v4266 = vpop.f32.mrb[0].mxu0
        %v4267 = vadd.f32 0.0, %v4266
        %v4268 = vpop.f32.mrb[0].mxu0
        %4269 = vmatprep.mubr.bf16.mxu0 0
        %4270 = vmatmul.mubr.bf16.gmra.mrb[0].mxu0 %v4156
        %v4271 = vpop.f32.mrb[0].mxu0
        %v4272 = vadd.f32 0.0, %v4271
        %v4273 = vpop.f32.mrb[0].mxu0
        %v4274 = vpop.f32.mrb[0].mxu0
        %v4275 = vadd.f32 0.0, %v4274
        %v4276 = vpop.f32.mrb[0].mxu0
        %4277 = vmatprep.mubr.bf16.mxu0 0
        %4278 = vmatmul.mubr.bf16.gmra.mrb[0].mxu0 %v4159
        %v4279 = vpop.f32.mrb[0].mxu0
        %v4280 = vadd.f32 0.0, %v4279
        %v4281 = vpop.f32.mrb[0].mxu0
        %v4282 = vpop.f32.mrb[0].mxu0
        %v4283 = vadd.f32 0.0, %v4282
        %v4284 = vpop.f32.mrb[0].mxu0
        %4285 = vmatprep.mubr.bf16.mxu0 0
        %4286 = vmatmul.mubr.bf16.gmra.mrb[0].mxu0 %v4162
        %v4287 = vpop.f32.mrb[0].mxu0
        %v4288 = vadd.f32 0.0, %v4287
        %v4289 = vpop.f32.mrb[0].mxu0
        %v4290 = vpop.f32.mrb[0].mxu0
        %v4291 = vadd.f32 0.0, %v4290
        %v4292 = vpop.f32.mrb[0].mxu0
        %4293 = vmatprep.mubr.bf16.mxu0 0
        %4294 = vmatmul.mubr.bf16.gmra.mrb[0].mxu0 %v4165
        %v4295 = vpop.f32.mrb[0].mxu0
        %v4296 = vadd.f32 0.0, %v4295
        %v4297 = vpop.f32.mrb[0].mxu0
        %v4298 = vpop.f32.mrb[0].mxu0
        %v4299 = vadd.f32 0.0, %v4298
        %v4300 = vpop.f32.mrb[0].mxu0
        %4301 = vmatprep.mubr.bf16.mxu0 0
        %4302 = vmatmul.mubr.bf16.gmra.mrb[0].mxu0 %v4168
        %v4303 = vpop.f32.mrb[0].mxu0
        %v4304 = vadd.f32 0.0, %v4303
        %v4305 = vpop.f32.mrb[0].mxu0
        %v4306 = vpop.f32.mrb[0].mxu0
        %v4307 = vadd.f32 0.0, %v4306
        %v4308 = vpop.f32.mrb[0].mxu0
        %4309 = vmatprep.mubr.bf16.mxu0 0
        %4310 = vmatmul.mubr.bf16.gmra.mrb[0].mxu0 %v4171
        %v4311 = vpop.f32.mrb[0].mxu0
        %v4312 = vadd.f32 0.0, %v4311
        %v4313 = vpop.f32.mrb[0].mxu0
        %v4314 = vpop.f32.mrb[0].mxu0
        %v4315 = vadd.f32 0.0, %v4314
        %v4316 = vpop.f32.mrb[0].mxu0
        %4317 = vdwg.mxu0
        %v4318 = vadd.f32 %v3982, %v4208
        %v4319 = vadd.f32 %v3983, %v4211
        %v4320 = vadd.f32 %v3984, %v4216
        %v4321 = vadd.f32 %v3985, %v4219
        %v4322 = vadd.f32 %v3986, %v4224
        %v4323 = vadd.f32 %v3987, %v4227
        %v4324 = vadd.f32 %v3988, %v4232
        %v4325 = vadd.f32 %v3989, %v4235
        %v4326 = vadd.f32 %v3990, %v4240
        %v4327 = vadd.f32 %v3991, %v4243
        %v4328 = vadd.f32 %v3992, %v4248
        %v4329 = vadd.f32 %v3993, %v4251
        %v4330 = vadd.f32 %v3994, %v4256
        %v4331 = vadd.f32 %v3995, %v4259
        %v4332 = vadd.f32 %v3996, %v4264
        %v4333 = vadd.f32 %v3997, %v4267
        %v4334 = vadd.f32 %v3998, %v4272
        %v4335 = vadd.f32 %v3999, %v4275
        %v4336 = vadd.f32 %v4000, %v4280
        %v4337 = vadd.f32 %v4001, %v4283
        %v4338 = vadd.f32 %v4002, %v4288
        %v4339 = vadd.f32 %v4003, %v4291
        %v4340 = vadd.f32 %v4004, %v4296
        %v4341 = vadd.f32 %v4005, %v4299
        %v4342 = vadd.f32 %v4006, %v4304
        %v4343 = vadd.f32 %v4007, %v4307
        %v4344 = vadd.f32 %v4008, %v4312
        %v4345 = vadd.f32 %v4009, %v4315
        %4346 = vst [vmem:[%s217] sm:$0xff] %v4318
        %4347 = vst [vmem:[%s217 + $0x10] sm:$0xff] %v4319
        %4348 = vst [vmem:[%s217 + $0x20] sm:$0xff] %v4320
        %4349 = vst [vmem:[%s217 + $0x30] sm:$0xff] %v4321
        %4350 = vst [vmem:[%s217 + $0x40] sm:$0xff] %v4322
        %4351 = vst [vmem:[%s217 + $0x50] sm:$0xff] %v4323
        %4352 = vst [vmem:[%s217 + $0x60] sm:$0xff] %v4324
        %4353 = vst [vmem:[%s217 + $0x70] sm:$0xff] %v4325
        %4354 = vst [vmem:[%s217 + $0x80] sm:$0xff] %v4326
        %4355 = vst [vmem:[%s217 + $0x90] sm:$0xff] %v4327
        %4356 = vst [vmem:[%s217 + $0xa0] sm:$0xff] %v4328
        %4357 = vst [vmem:[%s217 + $0xb0] sm:$0xff] %v4329
        %4358 = vst [vmem:[%s217 + $0xc0] sm:$0xff] %v4330
        %4359 = vst [vmem:[%s217 + $0xd0] sm:$0xff] %v4331
        %4360 = vst [vmem:[%s217 + $0xe0] sm:$0xff] %v4332
        %4361 = vst [vmem:[%s217 + $0xf0] sm:$0xff] %v4333
        %4362 = vst [vmem:[%s217 + $0x100] sm:$0xff] %v4334
        %4363 = vst [vmem:[%s217 + $0x110] sm:$0xff] %v4335
        %4364 = vst [vmem:[%s217 + $0x120] sm:$0xff] %v4336
        %4365 = vst [vmem:[%s217 + $0x130] sm:$0xff] %v4337
        %4366 = vst [vmem:[%s217 + $0x140] sm:$0xff] %v4338
        %4367 = vst [vmem:[%s217 + $0x150] sm:$0xff] %v4339
        %4368 = vst [vmem:[%s217 + $0x160] sm:$0xff] %v4340
        %4369 = vst [vmem:[%s217 + $0x170] sm:$0xff] %v4341
        %4370 = vst [vmem:[%s217 + $0x180] sm:$0xff] %v4342
        %4371 = vst [vmem:[%s217 + $0x190] sm:$0xff] %v4343
        %4372 = vst [vmem:[%s217 + $0x1a0] sm:$0xff] %v4344
        %4373 = vst [vmem:[%s217 + $0x1b0] sm:$0x3f] %v4345
        %s4374 = scalar_lea.vmem %s227, 128
        %v4375 = vld [vmem:[%s4374] sm:$0xf]
        %v4376 = vld [vmem:[%s4374 + $0x4] sm:$0xf]
        %v4377 = vld [vmem:[%s4374 + $0x8] sm:$0xf]
        %v4378 = vld [vmem:[%s4374 + $0xc] sm:$0xf]
        %v4379 = vld [vmem:[%s4374 + $0x10] sm:$0xf]
        %v4380 = vld [vmem:[%s4374 + $0x14] sm:$0xf]
        %v4381 = vld [vmem:[%s4374 + $0x18] sm:$0xf]
        %v4382 = vld [vmem:[%s4374 + $0x1c] sm:$0xf]
        %v4383 = vld [vmem:[%s4374 + $0x20] sm:$0xf]
        %v4384 = vld [vmem:[%s4374 + $0x24] sm:$0xf]
        %v4385 = vld [vmem:[%s4374 + $0x28] sm:$0xf]
        %v4386 = vld [vmem:[%s4374 + $0x2c] sm:$0xf]
        %v4387 = vld [vmem:[%s4374 + $0x30] sm:$0xf]
        %v4388 = vld [vmem:[%s4374 + $0x34] sm:$0xf]
        %v4389 = vld [vmem:[%s4374 + $0x38] sm:$0xf]
        %v4390 = vld [vmem:[%s4374 + $0x3c] sm:$0xf]
        %v4391 = vld [vmem:[%s4374 + $0x40] sm:$0xf]
        %v4392 = vld [vmem:[%s4374 + $0x44] sm:$0xf]
        %v4393 = vld [vmem:[%s4374 + $0x48] sm:$0xf]
        %v4394 = vld [vmem:[%s4374 + $0x4c] sm:$0xf]
        %v4395 = vld [vmem:[%s4374 + $0x50] sm:$0xf]
        %v4396 = vld [vmem:[%s4374 + $0x54] sm:$0xf]
        %v4397 = vld [vmem:[%s4374 + $0x58] sm:$0xf]
        %v4398 = vld [vmem:[%s4374 + $0x5c] sm:$0xf]
        %v4399 = vld [vmem:[%s4374 + $0x60] sm:$0xf]
        %v4400 = vld [vmem:[%s4374 + $0x64] sm:$0xf]
        %v4401 = vld [vmem:[%s4374 + $0x68] sm:$0xf]
        %v4402 = vld [vmem:[%s4374 + $0x6c] sm:$0xf]
        %s4403 = scalar_lea.vmem %s234, 288
        %v4404 = vld [vmem:[%s4403] sm:$0xf]
        %v4405 = vld [vmem:[%s4403 + $0x4] sm:$0xf]
        %v4406 = vld [vmem:[%s4403 + $0x8] sm:$0xf]
        %v4407 = vld [vmem:[%s4403 + $0xc] sm:$0xf]
        %v4408 = vld [vmem:[%s4403 + $0x10] sm:$0xf]
        %v4409 = vld [vmem:[%s4403 + $0x14] sm:$0xf]
        %v4410 = vld [vmem:[%s4403 + $0x18] sm:$0xf]
        %v4411 = vld [vmem:[%s4403 + $0x1c] sm:$0xf]
        %v4412 = vld [vmem:[%s217 + $0x8] sm:$0xff]
        %v4413 = vld [vmem:[%s217 + $0x18] sm:$0xff]
        %v4414 = vld [vmem:[%s217 + $0x28] sm:$0xff]
        %v4415 = vld [vmem:[%s217 + $0x38] sm:$0xff]
        %v4416 = vld [vmem:[%s217 + $0x48] sm:$0xff]
        %v4417 = vld [vmem:[%s217 + $0x58] sm:$0xff]
        %v4418 = vld [vmem:[%s217 + $0x68] sm:$0xff]
        %v4419 = vld [vmem:[%s217 + $0x78] sm:$0xff]
        %v4420 = vld [vmem:[%s217 + $0x88] sm:$0xff]
        %v4421 = vld [vmem:[%s217 + $0x98] sm:$0xff]
        %v4422 = vld [vmem:[%s217 + $0xa8] sm:$0xff]
        %v4423 = vld [vmem:[%s217 + $0xb8] sm:$0xff]
        %v4424 = vld [vmem:[%s217 + $0xc8] sm:$0xff]
        %v4425 = vld [vmem:[%s217 + $0xd8] sm:$0xff]
        %v4426 = vld [vmem:[%s217 + $0xe8] sm:$0xff]
        %v4427 = vld [vmem:[%s217 + $0xf8] sm:$0xff]
        %v4428 = vld [vmem:[%s217 + $0x108] sm:$0xff]
        %v4429 = vld [vmem:[%s217 + $0x118] sm:$0xff]
        %v4430 = vld [vmem:[%s217 + $0x128] sm:$0xff]
        %v4431 = vld [vmem:[%s217 + $0x138] sm:$0xff]
        %v4432 = vld [vmem:[%s217 + $0x148] sm:$0xff]
        %v4433 = vld [vmem:[%s217 + $0x158] sm:$0xff]
        %v4434 = vld [vmem:[%s217 + $0x168] sm:$0xff]
        %v4435 = vld [vmem:[%s217 + $0x178] sm:$0xff]
        %v4436 = vld [vmem:[%s217 + $0x188] sm:$0xff]
        %v4437 = vld [vmem:[%s217 + $0x198] sm:$0xff]
        %v4438 = vld [vmem:[%s217 + $0x1a8] sm:$0xff]
        %v4439 = vld [vmem:[%s217 + $0x1b8] sm:$0xff]
        %v4468 = vunpack.c.l.b16 %v4375
        %v4469 = vunpack.c.l.b16 %v4376
        %v4470 = vunpack.c.l.b16 %v4377
        %v4471 = vunpack.c.l.b16 %v4378
        %v4472 = vunpack.c.l.b16 %v4379
        %v4473 = vunpack.c.l.b16 %v4380
        %v4474 = vunpack.c.l.b16 %v4381
        %v4475 = vunpack.c.l.b16 %v4382
        %v4476 = vunpack.c.l.b16 %v4383
        %v4477 = vunpack.c.l.b16 %v4384
        %v4478 = vunpack.c.l.b16 %v4385
        %v4479 = vunpack.c.l.b16 %v4386
        %v4480 = vunpack.c.l.b16 %v4387
        %v4481 = vunpack.c.l.b16 %v4388
        %v4482 = vunpack.c.l.b16 %v4389
        %v4483 = vunpack.c.l.b16 %v4390
        %v4484 = vunpack.c.l.b16 %v4391
        %v4485 = vunpack.c.l.b16 %v4392
        %v4486 = vunpack.c.l.b16 %v4393
        %v4487 = vunpack.c.l.b16 %v4394
        %v4488 = vunpack.c.l.b16 %v4395
        %v4489 = vunpack.c.l.b16 %v4396
        %v4490 = vunpack.c.l.b16 %v4397
        %v4491 = vunpack.c.l.b16 %v4398
        %v4492 = vunpack.c.l.b16 %v4399
        %v4493 = vunpack.c.l.b16 %v4400
        %v4494 = vunpack.c.l.b16 %v4401
        %v4495 = vunpack.c.l.b16 %v4402
        %v4496 = vpack.c.b16 %v4469, %v4468
        %v4497 = vpack.c.b16 %v4471, %v4470
        %v4498 = vpack.c.b16 %v4473, %v4472
        %v4499 = vpack.c.b16 %v4475, %v4474
        %v4500 = vpack.c.b16 %v4477, %v4476
        %v4501 = vpack.c.b16 %v4479, %v4478
        %v4502 = vpack.c.b16 %v4481, %v4480
        %v4503 = vpack.c.b16 %v4483, %v4482
        %v4504 = vpack.c.b16 %v4485, %v4484
        %v4505 = vpack.c.b16 %v4487, %v4486
        %v4506 = vpack.c.b16 %v4489, %v4488
        %v4507 = vpack.c.b16 %v4491, %v4490
        %v4508 = vpack.c.b16 %v4493, %v4492
        %v4509 = vpack.c.b16 %v4495, %v4494
        %v4518 = vunpack.c.l.b16 %v4404
        %v4519 = vunpack.c.l.b16 %v4405
        %v4520 = vunpack.c.l.b16 %v4406
        %v4521 = vunpack.c.l.b16 %v4407
        %v4522 = vunpack.c.l.b16 %v4408
        %v4523 = vunpack.c.l.b16 %v4409
        %v4524 = vunpack.c.l.b16 %v4410
        %v4525 = vunpack.c.l.b16 %v4411
        %v4526 = vpack.c.b16 %v4519, %v4518
        %v4527 = vpack.c.b16 %v4521, %v4520
        %v4528 = vpack.c.b16 %v4523, %v4522
        %v4529 = vpack.c.b16 %v4525, %v4524
        %v4535 = vsel %vm468, %v4496, 0
        %v4538 = vsel %vm468, %v4497, 0
        %v4541 = vsel %vm468, %v4498, 0
        %v4544 = vsel %vm468, %v4499, 0
        %v4547 = vsel %vm468, %v4500, 0
        %v4550 = vsel %vm468, %v4501, 0
        %v4553 = vsel %vm468, %v4502, 0
        %v4556 = vsel %vm468, %v4503, 0
        %v4559 = vsel %vm468, %v4504, 0
        %v4562 = vsel %vm468, %v4505, 0
        %v4565 = vsel %vm468, %v4506, 0
        %v4568 = vsel %vm468, %v4507, 0
        %v4571 = vsel %vm468, %v4508, 0
        %v4574 = vsel %vm468, %v4509, 0
        %4576 = vmatprep.subr.bf16.mxu0 0
        %4577 = vmatpush1.bf16.msra.mxu0 %v4526
        %4578 = vmatprep.subr.bf16.mxu0 0
        %4579 = vmatpush1.bf16.msra.mxu0 %v4527
        %4580 = vmatprep.subr.bf16.mxu0 0
        %4581 = vmatpush1.bf16.msra.mxu0 %v4528
        %4582 = vmatprep.subr.bf16.mxu0 0
        %4583 = vmatpush1.bf16.msra.mxu0 %v4529
        %4584 = vmatprep.subr.bf16.mxu0 0
        %4585 = vmatpush1.bf16.msra.mxu0 0
        %4586 = vmatprep.subr.bf16.mxu0 0
        %4587 = vmatpush1.bf16.msra.mxu0 0
        %4588 = vmatprep.subr.bf16.mxu0 0
        %4589 = vmatpush1.bf16.msra.mxu0 0
        %4590 = vmatprep.subr.bf16.mxu0 0
        %4591 = vmatpush1.bf16.msra.mxu0 0
        %4592 = vmatprep.subr.bf16.mxu0 0
        %4593 = vmatpush1.bf16.msra.mxu0 0
        %4594 = vmatprep.subr.bf16.mxu0 0
        %4595 = vmatpush1.bf16.msra.mxu0 0
        %4596 = vmatprep.subr.bf16.mxu0 0
        %4597 = vmatpush1.bf16.msra.mxu0 0
        %4598 = vmatprep.subr.bf16.mxu0 0
        %4599 = vmatpush1.bf16.msra.mxu0 0
        %4600 = vmatprep.subr.bf16.mxu0 0
        %4601 = vmatpush1.bf16.msra.mxu0 0
        %4602 = vmatprep.subr.bf16.mxu0 0
        %4603 = vmatpush1.bf16.msra.mxu0 0
        %4604 = vmatprep.subr.bf16.mxu0 0
        %4605 = vmatpush1.bf16.msra.mxu0 0
        %4606 = vmatprep.subr.bf16.mxu0 0
        %4607 = vmatpush1.bf16.msra.mxu0 0
        %4608 = vmatprep.mubr.bf16.mxu0 0
        %4609 = vmatmul.mubr.bf16.gmra.mrb[0].mxu0 %v4535
        %v4610 = vpop.f32.mrb[0].mxu0
        %v4611 = vadd.f32 0.0, %v4610
        %v4612 = vpop.f32.mrb[0].mxu0
        %v4613 = vpop.f32.mrb[0].mxu0
        %v4614 = vadd.f32 0.0, %v4613
        %v4615 = vpop.f32.mrb[0].mxu0
        %4616 = vmatprep.mubr.bf16.mxu0 0
        %4617 = vmatmul.mubr.bf16.gmra.mrb[0].mxu0 %v4538
        %v4618 = vpop.f32.mrb[0].mxu0
        %v4619 = vadd.f32 0.0, %v4618
        %v4620 = vpop.f32.mrb[0].mxu0
        %v4621 = vpop.f32.mrb[0].mxu0
        %v4622 = vadd.f32 0.0, %v4621
        %v4623 = vpop.f32.mrb[0].mxu0
        %4624 = vmatprep.mubr.bf16.mxu0 0
        %4625 = vmatmul.mubr.bf16.gmra.mrb[0].mxu0 %v4541
        %v4626 = vpop.f32.mrb[0].mxu0
        %v4627 = vadd.f32 0.0, %v4626
        %v4628 = vpop.f32.mrb[0].mxu0
        %v4629 = vpop.f32.mrb[0].mxu0
        %v4630 = vadd.f32 0.0, %v4629
        %v4631 = vpop.f32.mrb[0].mxu0
        %4632 = vmatprep.mubr.bf16.mxu0 0
        %4633 = vmatmul.mubr.bf16.gmra.mrb[0].mxu0 %v4544
        %v4634 = vpop.f32.mrb[0].mxu0
        %v4635 = vadd.f32 0.0, %v4634
        %v4636 = vpop.f32.mrb[0].mxu0
        %v4637 = vpop.f32.mrb[0].mxu0
        %v4638 = vadd.f32 0.0, %v4637
        %v4639 = vpop.f32.mrb[0].mxu0
        %4640 = vmatprep.mubr.bf16.mxu0 0
        %4641 = vmatmul.mubr.bf16.gmra.mrb[0].mxu0 %v4547
        %v4642 = vpop.f32.mrb[0].mxu0
        %v4643 = vadd.f32 0.0, %v4642
        %v4644 = vpop.f32.mrb[0].mxu0
        %v4645 = vpop.f32.mrb[0].mxu0
        %v4646 = vadd.f32 0.0, %v4645
        %v4647 = vpop.f32.mrb[0].mxu0
        %4648 = vmatprep.mubr.bf16.mxu0 0
        %4649 = vmatmul.mubr.bf16.gmra.mrb[0].mxu0 %v4550
        %v4650 = vpop.f32.mrb[0].mxu0
        %v4651 = vadd.f32 0.0, %v4650
        %v4652 = vpop.f32.mrb[0].mxu0
        %v4653 = vpop.f32.mrb[0].mxu0
        %v4654 = vadd.f32 0.0, %v4653
        %v4655 = vpop.f32.mrb[0].mxu0
        %4656 = vmatprep.mubr.bf16.mxu0 0
        %4657 = vmatmul.mubr.bf16.gmra.mrb[0].mxu0 %v4553
        %v4658 = vpop.f32.mrb[0].mxu0
        %v4659 = vadd.f32 0.0, %v4658
        %v4660 = vpop.f32.mrb[0].mxu0
        %v4661 = vpop.f32.mrb[0].mxu0
        %v4662 = vadd.f32 0.0, %v4661
        %v4663 = vpop.f32.mrb[0].mxu0
        %4664 = vmatprep.mubr.bf16.mxu0 0
        %4665 = vmatmul.mubr.bf16.gmra.mrb[0].mxu0 %v4556
        %v4666 = vpop.f32.mrb[0].mxu0
        %v4667 = vadd.f32 0.0, %v4666
        %v4668 = vpop.f32.mrb[0].mxu0
        %v4669 = vpop.f32.mrb[0].mxu0
        %v4670 = vadd.f32 0.0, %v4669
        %v4671 = vpop.f32.mrb[0].mxu0
        %4672 = vmatprep.mubr.bf16.mxu0 0
        %4673 = vmatmul.mubr.bf16.gmra.mrb[0].mxu0 %v4559
        %v4674 = vpop.f32.mrb[0].mxu0
        %v4675 = vadd.f32 0.0, %v4674
        %v4676 = vpop.f32.mrb[0].mxu0
        %v4677 = vpop.f32.mrb[0].mxu0
        %v4678 = vadd.f32 0.0, %v4677
        %v4679 = vpop.f32.mrb[0].mxu0
        %4680 = vmatprep.mubr.bf16.mxu0 0
        %4681 = vmatmul.mubr.bf16.gmra.mrb[0].mxu0 %v4562
        %v4682 = vpop.f32.mrb[0].mxu0
        %v4683 = vadd.f32 0.0, %v4682
        %v4684 = vpop.f32.mrb[0].mxu0
        %v4685 = vpop.f32.mrb[0].mxu0
        %v4686 = vadd.f32 0.0, %v4685
        %v4687 = vpop.f32.mrb[0].mxu0
        %4688 = vmatprep.mubr.bf16.mxu0 0
        %4689 = vmatmul.mubr.bf16.gmra.mrb[0].mxu0 %v4565
        %v4690 = vpop.f32.mrb[0].mxu0
        %v4691 = vadd.f32 0.0, %v4690
        %v4692 = vpop.f32.mrb[0].mxu0
        %v4693 = vpop.f32.mrb[0].mxu0
        %v4694 = vadd.f32 0.0, %v4693
        %v4695 = vpop.f32.mrb[0].mxu0
        %4696 = vmatprep.mubr.bf16.mxu0 0
        %4697 = vmatmul.mubr.bf16.gmra.mrb[0].mxu0 %v4568
        %v4698 = vpop.f32.mrb[0].mxu0
        %v4699 = vadd.f32 0.0, %v4698
        %v4700 = vpop.f32.mrb[0].mxu0
        %v4701 = vpop.f32.mrb[0].mxu0
        %v4702 = vadd.f32 0.0, %v4701
        %v4703 = vpop.f32.mrb[0].mxu0
        %4704 = vmatprep.mubr.bf16.mxu0 0
        %4705 = vmatmul.mubr.bf16.gmra.mrb[0].mxu0 %v4571
        %v4706 = vpop.f32.mrb[0].mxu0
        %v4707 = vadd.f32 0.0, %v4706
        %v4708 = vpop.f32.mrb[0].mxu0
        %v4709 = vpop.f32.mrb[0].mxu0
        %v4710 = vadd.f32 0.0, %v4709
        %v4711 = vpop.f32.mrb[0].mxu0
        %4712 = vmatprep.mubr.bf16.mxu0 0
        %4713 = vmatmul.mubr.bf16.gmra.mrb[0].mxu0 %v4574
        %v4714 = vpop.f32.mrb[0].mxu0
        %v4715 = vadd.f32 0.0, %v4714
        %v4716 = vpop.f32.mrb[0].mxu0
        %v4717 = vpop.f32.mrb[0].mxu0
        %v4718 = vadd.f32 0.0, %v4717
        %v4719 = vpop.f32.mrb[0].mxu0
        %4720 = vdwg.mxu0
        %v4721 = vadd.f32 %v4412, %v4611
        %v4722 = vadd.f32 %v4413, %v4614
        %v4723 = vadd.f32 %v4414, %v4619
        %v4724 = vadd.f32 %v4415, %v4622
        %v4725 = vadd.f32 %v4416, %v4627
        %v4726 = vadd.f32 %v4417, %v4630
        %v4727 = vadd.f32 %v4418, %v4635
        %v4728 = vadd.f32 %v4419, %v4638
        %v4729 = vadd.f32 %v4420, %v4643
        %v4730 = vadd.f32 %v4421, %v4646
        %v4731 = vadd.f32 %v4422, %v4651
        %v4732 = vadd.f32 %v4423, %v4654
        %v4733 = vadd.f32 %v4424, %v4659
        %v4734 = vadd.f32 %v4425, %v4662
        %v4735 = vadd.f32 %v4426, %v4667
        %v4736 = vadd.f32 %v4427, %v4670
        %v4737 = vadd.f32 %v4428, %v4675
        %v4738 = vadd.f32 %v4429, %v4678
        %v4739 = vadd.f32 %v4430, %v4683
        %v4740 = vadd.f32 %v4431, %v4686
        %v4741 = vadd.f32 %v4432, %v4691
        %v4742 = vadd.f32 %v4433, %v4694
        %v4743 = vadd.f32 %v4434, %v4699
        %v4744 = vadd.f32 %v4435, %v4702
        %v4745 = vadd.f32 %v4436, %v4707
        %v4746 = vadd.f32 %v4437, %v4710
        %v4747 = vadd.f32 %v4438, %v4715
        %v4748 = vadd.f32 %v4439, %v4718
        %4749 = vst [vmem:[%s217 + $0x8] sm:$0xff] %v4721
        %4750 = vst [vmem:[%s217 + $0x18] sm:$0xff] %v4722
        %4751 = vst [vmem:[%s217 + $0x28] sm:$0xff] %v4723
        %4752 = vst [vmem:[%s217 + $0x38] sm:$0xff] %v4724
        %4753 = vst [vmem:[%s217 + $0x48] sm:$0xff] %v4725
        %4754 = vst [vmem:[%s217 + $0x58] sm:$0xff] %v4726
        %4755 = vst [vmem:[%s217 + $0x68] sm:$0xff] %v4727
        %4756 = vst [vmem:[%s217 + $0x78] sm:$0xff] %v4728
        %4757 = vst [vmem:[%s217 + $0x88] sm:$0xff] %v4729
        %4758 = vst [vmem:[%s217 + $0x98] sm:$0xff] %v4730
        %4759 = vst [vmem:[%s217 + $0xa8] sm:$0xff] %v4731
        %4760 = vst [vmem:[%s217 + $0xb8] sm:$0xff] %v4732
        %4761 = vst [vmem:[%s217 + $0xc8] sm:$0xff] %v4733
        %4762 = vst [vmem:[%s217 + $0xd8] sm:$0xff] %v4734
        %4763 = vst [vmem:[%s217 + $0xe8] sm:$0xff] %v4735
        %4764 = vst [vmem:[%s217 + $0xf8] sm:$0xff] %v4736
        %4765 = vst [vmem:[%s217 + $0x108] sm:$0xff] %v4737
        %4766 = vst [vmem:[%s217 + $0x118] sm:$0xff] %v4738
        %4767 = vst [vmem:[%s217 + $0x128] sm:$0xff] %v4739
        %4768 = vst [vmem:[%s217 + $0x138] sm:$0xff] %v4740
        %4769 = vst [vmem:[%s217 + $0x148] sm:$0xff] %v4741
        %4770 = vst [vmem:[%s217 + $0x158] sm:$0xff] %v4742
        %4771 = vst [vmem:[%s217 + $0x168] sm:$0xff] %v4743
        %4772 = vst [vmem:[%s217 + $0x178] sm:$0xff] %v4744
        %4773 = vst [vmem:[%s217 + $0x188] sm:$0xff] %v4745
        %4774 = vst [vmem:[%s217 + $0x198] sm:$0xff] %v4746
        %4775 = vst [vmem:[%s217 + $0x1a8] sm:$0xff] %v4747
        %4776 = vst [vmem:[%s217 + $0x1b8] sm:$0xff] %v4748
        %v4777 = vld [vmem:[%s4374] sm:$0xf]
        %v4778 = vld [vmem:[%s4374 + $0x4] sm:$0xf]
        %v4779 = vld [vmem:[%s4374 + $0x8] sm:$0xf]
        %v4780 = vld [vmem:[%s4374 + $0xc] sm:$0xf]
        %v4781 = vld [vmem:[%s4374 + $0x10] sm:$0xf]
        %v4782 = vld [vmem:[%s4374 + $0x14] sm:$0xf]
        %v4783 = vld [vmem:[%s4374 + $0x18] sm:$0xf]
        %v4784 = vld [vmem:[%s4374 + $0x1c] sm:$0xf]
        %v4785 = vld [vmem:[%s4374 + $0x20] sm:$0xf]
        %v4786 = vld [vmem:[%s4374 + $0x24] sm:$0xf]
        %v4787 = vld [vmem:[%s4374 + $0x28] sm:$0xf]
        %v4788 = vld [vmem:[%s4374 + $0x2c] sm:$0xf]
        %v4789 = vld [vmem:[%s4374 + $0x30] sm:$0xf]
        %v4790 = vld [vmem:[%s4374 + $0x34] sm:$0xf]
        %v4791 = vld [vmem:[%s4374 + $0x38] sm:$0xf]
        %v4792 = vld [vmem:[%s4374 + $0x3c] sm:$0xf]
        %v4793 = vld [vmem:[%s4374 + $0x40] sm:$0xf]
        %v4794 = vld [vmem:[%s4374 + $0x44] sm:$0xf]
        %v4795 = vld [vmem:[%s4374 + $0x48] sm:$0xf]
        %v4796 = vld [vmem:[%s4374 + $0x4c] sm:$0xf]
        %v4797 = vld [vmem:[%s4374 + $0x50] sm:$0xf]
        %v4798 = vld [vmem:[%s4374 + $0x54] sm:$0xf]
        %v4799 = vld [vmem:[%s4374 + $0x58] sm:$0xf]
        %v4800 = vld [vmem:[%s4374 + $0x5c] sm:$0xf]
        %v4801 = vld [vmem:[%s4374 + $0x60] sm:$0xf]
        %v4802 = vld [vmem:[%s4374 + $0x64] sm:$0xf]
        %v4803 = vld [vmem:[%s4374 + $0x68] sm:$0xf]
        %v4804 = vld [vmem:[%s4374 + $0x6c] sm:$0xf]
        %v4805 = vld [vmem:[%s4374 + $0x70] sm:$0x1]
        %s4806 = scalar_lea.vmem %s234, 320
        %v4807 = vld [vmem:[%s4806] sm:$0xf]
        %v4808 = vld [vmem:[%s4806 + $0x4] sm:$0xf]
        %v4809 = vld [vmem:[%s4806 + $0x8] sm:$0xf]
        %v4810 = vld [vmem:[%s4806 + $0xc] sm:$0xf]
        %v4811 = vld [vmem:[%s4806 + $0x10] sm:$0xf]
        %v4812 = vld [vmem:[%s4806 + $0x14] sm:$0xf]
        %v4813 = vld [vmem:[%s4806 + $0x18] sm:$0xf]
        %v4814 = vld [vmem:[%s4806 + $0x1c] sm:$0xf]
        %v4815 = vld [vmem:[%s217 + $0x8] sm:$0xff]
        %v4816 = vld [vmem:[%s217 + $0x18] sm:$0xff]
        %v4817 = vld [vmem:[%s217 + $0x28] sm:$0xff]
        %v4818 = vld [vmem:[%s217 + $0x38] sm:$0xff]
        %v4819 = vld [vmem:[%s217 + $0x48] sm:$0xff]
        %v4820 = vld [vmem:[%s217 + $0x58] sm:$0xff]
        %v4821 = vld [vmem:[%s217 + $0x68] sm:$0xff]
        %v4822 = vld [vmem:[%s217 + $0x78] sm:$0xff]
        %v4823 = vld [vmem:[%s217 + $0x88] sm:$0xff]
        %v4824 = vld [vmem:[%s217 + $0x98] sm:$0xff]
        %v4825 = vld [vmem:[%s217 + $0xa8] sm:$0xff]
        %v4826 = vld [vmem:[%s217 + $0xb8] sm:$0xff]
        %v4827 = vld [vmem:[%s217 + $0xc8] sm:$0xff]
        %v4828 = vld [vmem:[%s217 + $0xd8] sm:$0xff]
        %v4829 = vld [vmem:[%s217 + $0xe8] sm:$0xff]
        %v4830 = vld [vmem:[%s217 + $0xf8] sm:$0xff]
        %v4831 = vld [vmem:[%s217 + $0x108] sm:$0xff]
        %v4832 = vld [vmem:[%s217 + $0x118] sm:$0xff]
        %v4833 = vld [vmem:[%s217 + $0x128] sm:$0xff]
        %v4834 = vld [vmem:[%s217 + $0x138] sm:$0xff]
        %v4835 = vld [vmem:[%s217 + $0x148] sm:$0xff]
        %v4836 = vld [vmem:[%s217 + $0x158] sm:$0xff]
        %v4837 = vld [vmem:[%s217 + $0x168] sm:$0xff]
        %v4838 = vld [vmem:[%s217 + $0x178] sm:$0xff]
        %v4839 = vld [vmem:[%s217 + $0x188] sm:$0xff]
        %v4840 = vld [vmem:[%s217 + $0x198] sm:$0xff]
        %v4841 = vld [vmem:[%s217 + $0x1a8] sm:$0xff]
        %v4842 = vld [vmem:[%s217 + $0x1b8] sm:$0xff]
        %v4872 = vunpack.c.l.b16 %v4777
        %v4873 = vunpack.c.l.b16 %v4778
        %v4874 = vunpack.c.l.b16 %v4779
        %v4875 = vunpack.c.l.b16 %v4780
        %v4876 = vunpack.c.l.b16 %v4781
        %v4877 = vunpack.c.l.b16 %v4782
        %v4878 = vunpack.c.l.b16 %v4783
        %v4879 = vunpack.c.l.b16 %v4784
        %v4880 = vunpack.c.l.b16 %v4785
        %v4881 = vunpack.c.l.b16 %v4786
        %v4882 = vunpack.c.l.b16 %v4787
        %v4883 = vunpack.c.l.b16 %v4788
        %v4884 = vunpack.c.l.b16 %v4789
        %v4885 = vunpack.c.l.b16 %v4790
        %v4886 = vunpack.c.l.b16 %v4791
        %v4887 = vunpack.c.l.b16 %v4792
        %v4888 = vunpack.c.l.b16 %v4793
        %v4889 = vunpack.c.l.b16 %v4794
        %v4890 = vunpack.c.l.b16 %v4795
        %v4891 = vunpack.c.l.b16 %v4796
        %v4892 = vunpack.c.l.b16 %v4797
        %v4893 = vunpack.c.l.b16 %v4798
        %v4894 = vunpack.c.l.b16 %v4799
        %v4895 = vunpack.c.l.b16 %v4800
        %v4896 = vunpack.c.l.b16 %v4801
        %v4897 = vunpack.c.l.b16 %v4802
        %v4898 = vunpack.c.l.b16 %v4803
        %v4899 = vunpack.c.l.b16 %v4804
        %v4900 = vunpack.c.l.b16 %v4805
        %v4901 = vpack.c.b16 %v4873, %v4872
        %v4902 = vpack.c.b16 %v4875, %v4874
        %v4903 = vpack.c.b16 %v4877, %v4876
        %v4904 = vpack.c.b16 %v4879, %v4878
        %v4905 = vpack.c.b16 %v4881, %v4880
        %v4906 = vpack.c.b16 %v4883, %v4882
        %v4907 = vpack.c.b16 %v4885, %v4884
        %v4908 = vpack.c.b16 %v4887, %v4886
        %v4909 = vpack.c.b16 %v4889, %v4888
        %v4910 = vpack.c.b16 %v4891, %v4890
        %v4911 = vpack.c.b16 %v4893, %v4892
        %v4912 = vpack.c.b16 %v4895, %v4894
        %v4913 = vpack.c.b16 %v4897, %v4896
        %v4914 = vpack.c.b16 %v4899, %v4898
        %v4915 = vpack.c.b16 %v4900, %v4900
        %v4917 = vshrl.u32 %v4901, 16
        %v4919 = vshll.u32 %v4901, 16
        %v4921 = vrot.slane %v4919, 1
        %v4922 = vor.u32 %v4917, %v4921
        %v4924 = vshll.u32 %v4902, 16
        %v4926 = vrot.slane %v4924, 1
        %v4927 = vsel %vm851, %v4922, %v4926
        %v4928 = vshrl.u32 %v4902, 16
        %v4930 = vor.u32 %v4928, %v4926
        %v4932 = vshll.u32 %v4903, 16
        %v4934 = vrot.slane %v4932, 1
        %v4935 = vsel %vm851, %v4930, %v4934
        %v4936 = vshrl.u32 %v4903, 16
        %v4938 = vor.u32 %v4936, %v4934
        %v4940 = vshll.u32 %v4904, 16
        %v4942 = vrot.slane %v4940, 1
        %v4943 = vsel %vm851, %v4938, %v4942
        %v4944 = vshrl.u32 %v4904, 16
        %v4946 = vor.u32 %v4944, %v4942
        %v4948 = vshll.u32 %v4905, 16
        %v4950 = vrot.slane %v4948, 1
        %v4951 = vsel %vm851, %v4946, %v4950
        %v4952 = vshrl.u32 %v4905, 16
        %v4954 = vor.u32 %v4952, %v4950
        %v4956 = vshll.u32 %v4906, 16
        %v4958 = vrot.slane %v4956, 1
        %v4959 = vsel %vm851, %v4954, %v4958
        %v4960 = vshrl.u32 %v4906, 16
        %v4962 = vor.u32 %v4960, %v4958
        %v4964 = vshll.u32 %v4907, 16
        %v4966 = vrot.slane %v4964, 1
        %v4967 = vsel %vm851, %v4962, %v4966
        %v4968 = vshrl.u32 %v4907, 16
        %v4970 = vor.u32 %v4968, %v4966
        %v4972 = vshll.u32 %v4908, 16
        %v4974 = vrot.slane %v4972, 1
        %v4975 = vsel %vm851, %v4970, %v4974
        %v4976 = vshrl.u32 %v4908, 16
        %v4978 = vor.u32 %v4976, %v4974
        %v4980 = vshll.u32 %v4909, 16
        %v4982 = vrot.slane %v4980, 1
        %v4983 = vsel %vm851, %v4978, %v4982
        %v4984 = vshrl.u32 %v4909, 16
        %v4986 = vor.u32 %v4984, %v4982
        %v4988 = vshll.u32 %v4910, 16
        %v4990 = vrot.slane %v4988, 1
        %v4991 = vsel %vm851, %v4986, %v4990
        %v4992 = vshrl.u32 %v4910, 16
        %v4994 = vor.u32 %v4992, %v4990
        %v4996 = vshll.u32 %v4911, 16
        %v4998 = vrot.slane %v4996, 1
        %v4999 = vsel %vm851, %v4994, %v4998
        %v5000 = vshrl.u32 %v4911, 16
        %v5002 = vor.u32 %v5000, %v4998
        %v5004 = vshll.u32 %v4912, 16
        %v5006 = vrot.slane %v5004, 1
        %v5007 = vsel %vm851, %v5002, %v5006
        %v5008 = vshrl.u32 %v4912, 16
        %v5010 = vor.u32 %v5008, %v5006
        %v5012 = vshll.u32 %v4913, 16
        %v5014 = vrot.slane %v5012, 1
        %v5015 = vsel %vm851, %v5010, %v5014
        %v5016 = vshrl.u32 %v4913, 16
        %v5018 = vor.u32 %v5016, %v5014
        %v5020 = vshll.u32 %v4914, 16
        %v5022 = vrot.slane %v5020, 1
        %v5023 = vsel %vm851, %v5018, %v5022
        %v5024 = vshrl.u32 %v4914, 16
        %v5026 = vor.u32 %v5024, %v5022
        %v5028 = vshll.u32 %v4915, 16
        %v5030 = vrot.slane %v5028, 1
        %v5031 = vsel %vm851, %v5026, %v5030
        %v5040 = vunpack.c.l.b16 %v4807
        %v5041 = vunpack.c.l.b16 %v4808
        %v5042 = vunpack.c.l.b16 %v4809
        %v5043 = vunpack.c.l.b16 %v4810
        %v5044 = vunpack.c.l.b16 %v4811
        %v5045 = vunpack.c.l.b16 %v4812
        %v5046 = vunpack.c.l.b16 %v4813
        %v5047 = vunpack.c.l.b16 %v4814
        %v5048 = vpack.c.b16 %v5041, %v5040
        %v5049 = vpack.c.b16 %v5043, %v5042
        %v5050 = vpack.c.b16 %v5045, %v5044
        %v5051 = vpack.c.b16 %v5047, %v5046
        %v5057 = vsel %vm468, %v4927, 0
        %v5060 = vsel %vm468, %v4935, 0
        %v5063 = vsel %vm468, %v4943, 0
        %v5066 = vsel %vm468, %v4951, 0
        %v5069 = vsel %vm468, %v4959, 0
        %v5072 = vsel %vm468, %v4967, 0
        %v5075 = vsel %vm468, %v4975, 0
        %v5078 = vsel %vm468, %v4983, 0
        %v5081 = vsel %vm468, %v4991, 0
        %v5084 = vsel %vm468, %v4999, 0
        %v5087 = vsel %vm468, %v5007, 0
        %v5090 = vsel %vm468, %v5015, 0
        %v5093 = vsel %vm468, %v5023, 0
        %v5096 = vsel %vm468, %v5031, 0
        %5098 = vmatprep.subr.bf16.mxu0 0
        %5099 = vmatpush1.bf16.msra.mxu0 %v5048
        %5100 = vmatprep.subr.bf16.mxu0 0
        %5101 = vmatpush1.bf16.msra.mxu0 %v5049
        %5102 = vmatprep.subr.bf16.mxu0 0
        %5103 = vmatpush1.bf16.msra.mxu0 %v5050
        %5104 = vmatprep.subr.bf16.mxu0 0
        %5105 = vmatpush1.bf16.msra.mxu0 %v5051
        %5106 = vmatprep.subr.bf16.mxu0 0
        %5107 = vmatpush1.bf16.msra.mxu0 0
        %5108 = vmatprep.subr.bf16.mxu0 0
        %5109 = vmatpush1.bf16.msra.mxu0 0
        %5110 = vmatprep.subr.bf16.mxu0 0
        %5111 = vmatpush1.bf16.msra.mxu0 0
        %5112 = vmatprep.subr.bf16.mxu0 0
        %5113 = vmatpush1.bf16.msra.mxu0 0
        %5114 = vmatprep.subr.bf16.mxu0 0
        %5115 = vmatpush1.bf16.msra.mxu0 0
        %5116 = vmatprep.subr.bf16.mxu0 0
        %5117 = vmatpush1.bf16.msra.mxu0 0
        %5118 = vmatprep.subr.bf16.mxu0 0
        %5119 = vmatpush1.bf16.msra.mxu0 0
        %5120 = vmatprep.subr.bf16.mxu0 0
        %5121 = vmatpush1.bf16.msra.mxu0 0
        %5122 = vmatprep.subr.bf16.mxu0 0
        %5123 = vmatpush1.bf16.msra.mxu0 0
        %5124 = vmatprep.subr.bf16.mxu0 0
        %5125 = vmatpush1.bf16.msra.mxu0 0
        %5126 = vmatprep.subr.bf16.mxu0 0
        %5127 = vmatpush1.bf16.msra.mxu0 0
        %5128 = vmatprep.subr.bf16.mxu0 0
        %5129 = vmatpush1.bf16.msra.mxu0 0
        %5130 = vmatprep.mubr.bf16.mxu0 0
        %5131 = vmatmul.mubr.bf16.gmra.mrb[0].mxu0 %v5057
        %v5132 = vpop.f32.mrb[0].mxu0
        %v5133 = vadd.f32 0.0, %v5132
        %v5134 = vpop.f32.mrb[0].mxu0
        %v5135 = vpop.f32.mrb[0].mxu0
        %v5136 = vadd.f32 0.0, %v5135
        %v5137 = vpop.f32.mrb[0].mxu0
        %5138 = vmatprep.mubr.bf16.mxu0 0
        %5139 = vmatmul.mubr.bf16.gmra.mrb[0].mxu0 %v5060
        %v5140 = vpop.f32.mrb[0].mxu0
        %v5141 = vadd.f32 0.0, %v5140
        %v5142 = vpop.f32.mrb[0].mxu0
        %v5143 = vpop.f32.mrb[0].mxu0
        %v5144 = vadd.f32 0.0, %v5143
        %v5145 = vpop.f32.mrb[0].mxu0
        %5146 = vmatprep.mubr.bf16.mxu0 0
        %5147 = vmatmul.mubr.bf16.gmra.mrb[0].mxu0 %v5063
        %v5148 = vpop.f32.mrb[0].mxu0
        %v5149 = vadd.f32 0.0, %v5148
        %v5150 = vpop.f32.mrb[0].mxu0
        %v5151 = vpop.f32.mrb[0].mxu0
        %v5152 = vadd.f32 0.0, %v5151
        %v5153 = vpop.f32.mrb[0].mxu0
        %5154 = vmatprep.mubr.bf16.mxu0 0
        %5155 = vmatmul.mubr.bf16.gmra.mrb[0].mxu0 %v5066
        %v5156 = vpop.f32.mrb[0].mxu0
        %v5157 = vadd.f32 0.0, %v5156
        %v5158 = vpop.f32.mrb[0].mxu0
        %v5159 = vpop.f32.mrb[0].mxu0
        %v5160 = vadd.f32 0.0, %v5159
        %v5161 = vpop.f32.mrb[0].mxu0
        %5162 = vmatprep.mubr.bf16.mxu0 0
        %5163 = vmatmul.mubr.bf16.gmra.mrb[0].mxu0 %v5069
        %v5164 = vpop.f32.mrb[0].mxu0
        %v5165 = vadd.f32 0.0, %v5164
        %v5166 = vpop.f32.mrb[0].mxu0
        %v5167 = vpop.f32.mrb[0].mxu0
        %v5168 = vadd.f32 0.0, %v5167
        %v5169 = vpop.f32.mrb[0].mxu0
        %5170 = vmatprep.mubr.bf16.mxu0 0
        %5171 = vmatmul.mubr.bf16.gmra.mrb[0].mxu0 %v5072
        %v5172 = vpop.f32.mrb[0].mxu0
        %v5173 = vadd.f32 0.0, %v5172
        %v5174 = vpop.f32.mrb[0].mxu0
        %v5175 = vpop.f32.mrb[0].mxu0
        %v5176 = vadd.f32 0.0, %v5175
        %v5177 = vpop.f32.mrb[0].mxu0
        %5178 = vmatprep.mubr.bf16.mxu0 0
        %5179 = vmatmul.mubr.bf16.gmra.mrb[0].mxu0 %v5075
        %v5180 = vpop.f32.mrb[0].mxu0
        %v5181 = vadd.f32 0.0, %v5180
        %v5182 = vpop.f32.mrb[0].mxu0
        %v5183 = vpop.f32.mrb[0].mxu0
        %v5184 = vadd.f32 0.0, %v5183
        %v5185 = vpop.f32.mrb[0].mxu0
        %5186 = vmatprep.mubr.bf16.mxu0 0
        %5187 = vmatmul.mubr.bf16.gmra.mrb[0].mxu0 %v5078
        %v5188 = vpop.f32.mrb[0].mxu0
        %v5189 = vadd.f32 0.0, %v5188
        %v5190 = vpop.f32.mrb[0].mxu0
        %v5191 = vpop.f32.mrb[0].mxu0
        %v5192 = vadd.f32 0.0, %v5191
        %v5193 = vpop.f32.mrb[0].mxu0
        %5194 = vmatprep.mubr.bf16.mxu0 0
        %5195 = vmatmul.mubr.bf16.gmra.mrb[0].mxu0 %v5081
        %v5196 = vpop.f32.mrb[0].mxu0
        %v5197 = vadd.f32 0.0, %v5196
        %v5198 = vpop.f32.mrb[0].mxu0
        %v5199 = vpop.f32.mrb[0].mxu0
        %v5200 = vadd.f32 0.0, %v5199
        %v5201 = vpop.f32.mrb[0].mxu0
        %5202 = vmatprep.mubr.bf16.mxu0 0
        %5203 = vmatmul.mubr.bf16.gmra.mrb[0].mxu0 %v5084
        %v5204 = vpop.f32.mrb[0].mxu0
        %v5205 = vadd.f32 0.0, %v5204
        %v5206 = vpop.f32.mrb[0].mxu0
        %v5207 = vpop.f32.mrb[0].mxu0
        %v5208 = vadd.f32 0.0, %v5207
        %v5209 = vpop.f32.mrb[0].mxu0
        %5210 = vmatprep.mubr.bf16.mxu0 0
        %5211 = vmatmul.mubr.bf16.gmra.mrb[0].mxu0 %v5087
        %v5212 = vpop.f32.mrb[0].mxu0
        %v5213 = vadd.f32 0.0, %v5212
        %v5214 = vpop.f32.mrb[0].mxu0
        %v5215 = vpop.f32.mrb[0].mxu0
        %v5216 = vadd.f32 0.0, %v5215
        %v5217 = vpop.f32.mrb[0].mxu0
        %5218 = vmatprep.mubr.bf16.mxu0 0
        %5219 = vmatmul.mubr.bf16.gmra.mrb[0].mxu0 %v5090
        %v5220 = vpop.f32.mrb[0].mxu0
        %v5221 = vadd.f32 0.0, %v5220
        %v5222 = vpop.f32.mrb[0].mxu0
        %v5223 = vpop.f32.mrb[0].mxu0
        %v5224 = vadd.f32 0.0, %v5223
        %v5225 = vpop.f32.mrb[0].mxu0
        %5226 = vmatprep.mubr.bf16.mxu0 0
        %5227 = vmatmul.mubr.bf16.gmra.mrb[0].mxu0 %v5093
        %v5228 = vpop.f32.mrb[0].mxu0
        %v5229 = vadd.f32 0.0, %v5228
        %v5230 = vpop.f32.mrb[0].mxu0
        %v5231 = vpop.f32.mrb[0].mxu0
        %v5232 = vadd.f32 0.0, %v5231
        %v5233 = vpop.f32.mrb[0].mxu0
        %5234 = vmatprep.mubr.bf16.mxu0 0
        %5235 = vmatmul.mubr.bf16.gmra.mrb[0].mxu0 %v5096
        %v5236 = vpop.f32.mrb[0].mxu0
        %v5237 = vadd.f32 0.0, %v5236
        %v5238 = vpop.f32.mrb[0].mxu0
        %v5239 = vpop.f32.mrb[0].mxu0
        %v5240 = vadd.f32 0.0, %v5239
        %v5241 = vpop.f32.mrb[0].mxu0
        %5242 = vdwg.mxu0
        %v5243 = vadd.f32 %v4815, %v5133
        %v5244 = vadd.f32 %v4816, %v5136
        %v5245 = vadd.f32 %v4817, %v5141
        %v5246 = vadd.f32 %v4818, %v5144
        %v5247 = vadd.f32 %v4819, %v5149
        %v5248 = vadd.f32 %v4820, %v5152
        %v5249 = vadd.f32 %v4821, %v5157
        %v5250 = vadd.f32 %v4822, %v5160
        %v5251 = vadd.f32 %v4823, %v5165
        %v5252 = vadd.f32 %v4824, %v5168
        %v5253 = vadd.f32 %v4825, %v5173
        %v5254 = vadd.f32 %v4826, %v5176
        %v5255 = vadd.f32 %v4827, %v5181
        %v5256 = vadd.f32 %v4828, %v5184
        %v5257 = vadd.f32 %v4829, %v5189
        %v5258 = vadd.f32 %v4830, %v5192
        %v5259 = vadd.f32 %v4831, %v5197
        %v5260 = vadd.f32 %v4832, %v5200
        %v5261 = vadd.f32 %v4833, %v5205
        %v5262 = vadd.f32 %v4834, %v5208
        %v5263 = vadd.f32 %v4835, %v5213
        %v5264 = vadd.f32 %v4836, %v5216
        %v5265 = vadd.f32 %v4837, %v5221
        %v5266 = vadd.f32 %v4838, %v5224
        %v5267 = vadd.f32 %v4839, %v5229
        %v5268 = vadd.f32 %v4840, %v5232
        %v5269 = vadd.f32 %v4841, %v5237
        %v5270 = vadd.f32 %v4842, %v5240
        %5271 = vst [vmem:[%s217 + $0x8] sm:$0xff] %v5243
        %5272 = vst [vmem:[%s217 + $0x18] sm:$0xff] %v5244
        %5273 = vst [vmem:[%s217 + $0x28] sm:$0xff] %v5245
        %5274 = vst [vmem:[%s217 + $0x38] sm:$0xff] %v5246
        %5275 = vst [vmem:[%s217 + $0x48] sm:$0xff] %v5247
        %5276 = vst [vmem:[%s217 + $0x58] sm:$0xff] %v5248
        %5277 = vst [vmem:[%s217 + $0x68] sm:$0xff] %v5249
        %5278 = vst [vmem:[%s217 + $0x78] sm:$0xff] %v5250
        %5279 = vst [vmem:[%s217 + $0x88] sm:$0xff] %v5251
        %5280 = vst [vmem:[%s217 + $0x98] sm:$0xff] %v5252
        %5281 = vst [vmem:[%s217 + $0xa8] sm:$0xff] %v5253
        %5282 = vst [vmem:[%s217 + $0xb8] sm:$0xff] %v5254
        %5283 = vst [vmem:[%s217 + $0xc8] sm:$0xff] %v5255
        %5284 = vst [vmem:[%s217 + $0xd8] sm:$0xff] %v5256
        %5285 = vst [vmem:[%s217 + $0xe8] sm:$0xff] %v5257
        %5286 = vst [vmem:[%s217 + $0xf8] sm:$0xff] %v5258
        %5287 = vst [vmem:[%s217 + $0x108] sm:$0xff] %v5259
        %5288 = vst [vmem:[%s217 + $0x118] sm:$0xff] %v5260
        %5289 = vst [vmem:[%s217 + $0x128] sm:$0xff] %v5261
        %5290 = vst [vmem:[%s217 + $0x138] sm:$0xff] %v5262
        %5291 = vst [vmem:[%s217 + $0x148] sm:$0xff] %v5263
        %5292 = vst [vmem:[%s217 + $0x158] sm:$0xff] %v5264
        %5293 = vst [vmem:[%s217 + $0x168] sm:$0xff] %v5265
        %5294 = vst [vmem:[%s217 + $0x178] sm:$0xff] %v5266
        %5295 = vst [vmem:[%s217 + $0x188] sm:$0xff] %v5267
        %5296 = vst [vmem:[%s217 + $0x198] sm:$0xff] %v5268
        %5297 = vst [vmem:[%s217 + $0x1a8] sm:$0xff] %v5269
        %5298 = vst [vmem:[%s217 + $0x1b8] sm:$0xff] %v5270
        %v5299 = vld [vmem:[%s4374] sm:$0xe]
        %v5300 = vld [vmem:[%s4374 + $0x4] sm:$0xf]
        %v5301 = vld [vmem:[%s4374 + $0x8] sm:$0xf]
        %v5302 = vld [vmem:[%s4374 + $0xc] sm:$0xf]
        %v5303 = vld [vmem:[%s4374 + $0x10] sm:$0xf]
        %v5304 = vld [vmem:[%s4374 + $0x14] sm:$0xf]
        %v5305 = vld [vmem:[%s4374 + $0x18] sm:$0xf]
        %v5306 = vld [vmem:[%s4374 + $0x1c] sm:$0xf]
        %v5307 = vld [vmem:[%s4374 + $0x20] sm:$0xf]
        %v5308 = vld [vmem:[%s4374 + $0x24] sm:$0xf]
        %v5309 = vld [vmem:[%s4374 + $0x28] sm:$0xf]
        %v5310 = vld [vmem:[%s4374 + $0x2c] sm:$0xf]
        %v5311 = vld [vmem:[%s4374 + $0x30] sm:$0xf]
        %v5312 = vld [vmem:[%s4374 + $0x34] sm:$0xf]
        %v5313 = vld [vmem:[%s4374 + $0x38] sm:$0xf]
        %v5314 = vld [vmem:[%s4374 + $0x3c] sm:$0xf]
        %v5315 = vld [vmem:[%s4374 + $0x40] sm:$0xf]
        %v5316 = vld [vmem:[%s4374 + $0x44] sm:$0xf]
        %v5317 = vld [vmem:[%s4374 + $0x48] sm:$0xf]
        %v5318 = vld [vmem:[%s4374 + $0x4c] sm:$0xf]
        %v5319 = vld [vmem:[%s4374 + $0x50] sm:$0xf]
        %v5320 = vld [vmem:[%s4374 + $0x54] sm:$0xf]
        %v5321 = vld [vmem:[%s4374 + $0x58] sm:$0xf]
        %v5322 = vld [vmem:[%s4374 + $0x5c] sm:$0xf]
        %v5323 = vld [vmem:[%s4374 + $0x60] sm:$0xf]
        %v5324 = vld [vmem:[%s4374 + $0x64] sm:$0xf]
        %v5325 = vld [vmem:[%s4374 + $0x68] sm:$0xf]
        %v5326 = vld [vmem:[%s4374 + $0x6c] sm:$0xf]
        %v5327 = vld [vmem:[%s4374 + $0x70] sm:$0x1]
        %s5328 = scalar_lea.vmem %s234, 352
        %v5329 = vld [vmem:[%s5328] sm:$0xf]
        %v5330 = vld [vmem:[%s5328 + $0x4] sm:$0xf]
        %v5331 = vld [vmem:[%s5328 + $0x8] sm:$0xf]
        %v5332 = vld [vmem:[%s5328 + $0xc] sm:$0xf]
        %v5333 = vld [vmem:[%s5328 + $0x10] sm:$0xf]
        %v5334 = vld [vmem:[%s5328 + $0x14] sm:$0xf]
        %v5335 = vld [vmem:[%s5328 + $0x18] sm:$0xf]
        %v5336 = vld [vmem:[%s5328 + $0x1c] sm:$0xf]
        %v5337 = vld [vmem:[%s217 + $0x8] sm:$0xff]
        %v5338 = vld [vmem:[%s217 + $0x18] sm:$0xff]
        %v5339 = vld [vmem:[%s217 + $0x28] sm:$0xff]
        %v5340 = vld [vmem:[%s217 + $0x38] sm:$0xff]
        %v5341 = vld [vmem:[%s217 + $0x48] sm:$0xff]
        %v5342 = vld [vmem:[%s217 + $0x58] sm:$0xff]
        %v5343 = vld [vmem:[%s217 + $0x68] sm:$0xff]
        %v5344 = vld [vmem:[%s217 + $0x78] sm:$0xff]
        %v5345 = vld [vmem:[%s217 + $0x88] sm:$0xff]
        %v5346 = vld [vmem:[%s217 + $0x98] sm:$0xff]
        %v5347 = vld [vmem:[%s217 + $0xa8] sm:$0xff]
        %v5348 = vld [vmem:[%s217 + $0xb8] sm:$0xff]
        %v5349 = vld [vmem:[%s217 + $0xc8] sm:$0xff]
        %v5350 = vld [vmem:[%s217 + $0xd8] sm:$0xff]
        %v5351 = vld [vmem:[%s217 + $0xe8] sm:$0xff]
        %v5352 = vld [vmem:[%s217 + $0xf8] sm:$0xff]
        %v5353 = vld [vmem:[%s217 + $0x108] sm:$0xff]
        %v5354 = vld [vmem:[%s217 + $0x118] sm:$0xff]
        %v5355 = vld [vmem:[%s217 + $0x128] sm:$0xff]
        %v5356 = vld [vmem:[%s217 + $0x138] sm:$0xff]
        %v5357 = vld [vmem:[%s217 + $0x148] sm:$0xff]
        %v5358 = vld [vmem:[%s217 + $0x158] sm:$0xff]
        %v5359 = vld [vmem:[%s217 + $0x168] sm:$0xff]
        %v5360 = vld [vmem:[%s217 + $0x178] sm:$0xff]
        %v5361 = vld [vmem:[%s217 + $0x188] sm:$0xff]
        %v5362 = vld [vmem:[%s217 + $0x198] sm:$0xff]
        %v5363 = vld [vmem:[%s217 + $0x1a8] sm:$0xff]
        %v5364 = vld [vmem:[%s217 + $0x1b8] sm:$0xff]
        %v5394 = vunpack.c.l.b16 %v5299
        %v5395 = vunpack.c.l.b16 %v5300
        %v5396 = vunpack.c.l.b16 %v5301
        %v5397 = vunpack.c.l.b16 %v5302
        %v5398 = vunpack.c.l.b16 %v5303
        %v5399 = vunpack.c.l.b16 %v5304
        %v5400 = vunpack.c.l.b16 %v5305
        %v5401 = vunpack.c.l.b16 %v5306
        %v5402 = vunpack.c.l.b16 %v5307
        %v5403 = vunpack.c.l.b16 %v5308
        %v5404 = vunpack.c.l.b16 %v5309
        %v5405 = vunpack.c.l.b16 %v5310
        %v5406 = vunpack.c.l.b16 %v5311
        %v5407 = vunpack.c.l.b16 %v5312
        %v5408 = vunpack.c.l.b16 %v5313
        %v5409 = vunpack.c.l.b16 %v5314
        %v5410 = vunpack.c.l.b16 %v5315
        %v5411 = vunpack.c.l.b16 %v5316
        %v5412 = vunpack.c.l.b16 %v5317
        %v5413 = vunpack.c.l.b16 %v5318
        %v5414 = vunpack.c.l.b16 %v5319
        %v5415 = vunpack.c.l.b16 %v5320
        %v5416 = vunpack.c.l.b16 %v5321
        %v5417 = vunpack.c.l.b16 %v5322
        %v5418 = vunpack.c.l.b16 %v5323
        %v5419 = vunpack.c.l.b16 %v5324
        %v5420 = vunpack.c.l.b16 %v5325
        %v5421 = vunpack.c.l.b16 %v5326
        %v5422 = vunpack.c.l.b16 %v5327
        %v5423 = vpack.c.b16 %v5395, %v5394
        %v5424 = vpack.c.b16 %v5397, %v5396
        %v5425 = vpack.c.b16 %v5399, %v5398
        %v5426 = vpack.c.b16 %v5401, %v5400
        %v5427 = vpack.c.b16 %v5403, %v5402
        %v5428 = vpack.c.b16 %v5405, %v5404
        %v5429 = vpack.c.b16 %v5407, %v5406
        %v5430 = vpack.c.b16 %v5409, %v5408
        %v5431 = vpack.c.b16 %v5411, %v5410
        %v5432 = vpack.c.b16 %v5413, %v5412
        %v5433 = vpack.c.b16 %v5415, %v5414
        %v5434 = vpack.c.b16 %v5417, %v5416
        %v5435 = vpack.c.b16 %v5419, %v5418
        %v5436 = vpack.c.b16 %v5421, %v5420
        %v5437 = vpack.c.b16 %v5422, %v5422
        %v5438 = vrot.slane %v5423, 1
        %v5439 = vrot.slane %v5424, 1
        %v5440 = vsel %vm1374, %v5438, %v5439
        %v5441 = vrot.slane %v5425, 1
        %v5442 = vsel %vm1374, %v5439, %v5441
        %v5443 = vrot.slane %v5426, 1
        %v5444 = vsel %vm1374, %v5441, %v5443
        %v5445 = vrot.slane %v5427, 1
        %v5446 = vsel %vm1374, %v5443, %v5445
        %v5447 = vrot.slane %v5428, 1
        %v5448 = vsel %vm1374, %v5445, %v5447
        %v5449 = vrot.slane %v5429, 1
        %v5450 = vsel %vm1374, %v5447, %v5449
        %v5451 = vrot.slane %v5430, 1
        %v5452 = vsel %vm1374, %v5449, %v5451
        %v5453 = vrot.slane %v5431, 1
        %v5454 = vsel %vm1374, %v5451, %v5453
        %v5455 = vrot.slane %v5432, 1
        %v5456 = vsel %vm1374, %v5453, %v5455
        %v5457 = vrot.slane %v5433, 1
        %v5458 = vsel %vm1374, %v5455, %v5457
        %v5459 = vrot.slane %v5434, 1
        %v5460 = vsel %vm1374, %v5457, %v5459
        %v5461 = vrot.slane %v5435, 1
        %v5462 = vsel %vm1374, %v5459, %v5461
        %v5463 = vrot.slane %v5436, 1
        %v5464 = vsel %vm1374, %v5461, %v5463
        %v5465 = vrot.slane %v5437, 1
        %v5466 = vsel %vm1374, %v5463, %v5465
        %v5475 = vunpack.c.l.b16 %v5329
        %v5476 = vunpack.c.l.b16 %v5330
        %v5477 = vunpack.c.l.b16 %v5331
        %v5478 = vunpack.c.l.b16 %v5332
        %v5479 = vunpack.c.l.b16 %v5333
        %v5480 = vunpack.c.l.b16 %v5334
        %v5481 = vunpack.c.l.b16 %v5335
        %v5482 = vunpack.c.l.b16 %v5336
        %v5483 = vpack.c.b16 %v5476, %v5475
        %v5484 = vpack.c.b16 %v5478, %v5477
        %v5485 = vpack.c.b16 %v5480, %v5479
        %v5486 = vpack.c.b16 %v5482, %v5481
        %v5492 = vsel %vm468, %v5440, 0
        %v5495 = vsel %vm468, %v5442, 0
        %v5498 = vsel %vm468, %v5444, 0
        %v5501 = vsel %vm468, %v5446, 0
        %v5504 = vsel %vm468, %v5448, 0
        %v5507 = vsel %vm468, %v5450, 0
        %v5510 = vsel %vm468, %v5452, 0
        %v5513 = vsel %vm468, %v5454, 0
        %v5516 = vsel %vm468, %v5456, 0
        %v5519 = vsel %vm468, %v5458, 0
        %v5522 = vsel %vm468, %v5460, 0
        %v5525 = vsel %vm468, %v5462, 0
        %v5528 = vsel %vm468, %v5464, 0
        %v5531 = vsel %vm468, %v5466, 0
        %5533 = vmatprep.subr.bf16.mxu0 0
        %5534 = vmatpush1.bf16.msra.mxu0 %v5483
        %5535 = vmatprep.subr.bf16.mxu0 0
        %5536 = vmatpush1.bf16.msra.mxu0 %v5484
        %5537 = vmatprep.subr.bf16.mxu0 0
        %5538 = vmatpush1.bf16.msra.mxu0 %v5485
        %5539 = vmatprep.subr.bf16.mxu0 0
        %5540 = vmatpush1.bf16.msra.mxu0 %v5486
        %5541 = vmatprep.subr.bf16.mxu0 0
        %5542 = vmatpush1.bf16.msra.mxu0 0
        %5543 = vmatprep.subr.bf16.mxu0 0
        %5544 = vmatpush1.bf16.msra.mxu0 0
        %5545 = vmatprep.subr.bf16.mxu0 0
        %5546 = vmatpush1.bf16.msra.mxu0 0
        %5547 = vmatprep.subr.bf16.mxu0 0
        %5548 = vmatpush1.bf16.msra.mxu0 0
        %5549 = vmatprep.subr.bf16.mxu0 0
        %5550 = vmatpush1.bf16.msra.mxu0 0
        %5551 = vmatprep.subr.bf16.mxu0 0
        %5552 = vmatpush1.bf16.msra.mxu0 0
        %5553 = vmatprep.subr.bf16.mxu0 0
        %5554 = vmatpush1.bf16.msra.mxu0 0
        %5555 = vmatprep.subr.bf16.mxu0 0
        %5556 = vmatpush1.bf16.msra.mxu0 0
        %5557 = vmatprep.subr.bf16.mxu0 0
        %5558 = vmatpush1.bf16.msra.mxu0 0
        %5559 = vmatprep.subr.bf16.mxu0 0
        %5560 = vmatpush1.bf16.msra.mxu0 0
        %5561 = vmatprep.subr.bf16.mxu0 0
        %5562 = vmatpush1.bf16.msra.mxu0 0
        %5563 = vmatprep.subr.bf16.mxu0 0
        %5564 = vmatpush1.bf16.msra.mxu0 0
        %5565 = vmatprep.mubr.bf16.mxu0 0
        %5566 = vmatmul.mubr.bf16.gmra.mrb[0].mxu0 %v5492
        %v5567 = vpop.f32.mrb[0].mxu0
        %v5568 = vadd.f32 0.0, %v5567
        %v5569 = vpop.f32.mrb[0].mxu0
        %v5570 = vpop.f32.mrb[0].mxu0
        %v5571 = vadd.f32 0.0, %v5570
        %v5572 = vpop.f32.mrb[0].mxu0
        %5573 = vmatprep.mubr.bf16.mxu0 0
        %5574 = vmatmul.mubr.bf16.gmra.mrb[0].mxu0 %v5495
        %v5575 = vpop.f32.mrb[0].mxu0
        %v5576 = vadd.f32 0.0, %v5575
        %v5577 = vpop.f32.mrb[0].mxu0
        %v5578 = vpop.f32.mrb[0].mxu0
        %v5579 = vadd.f32 0.0, %v5578
        %v5580 = vpop.f32.mrb[0].mxu0
        %5581 = vmatprep.mubr.bf16.mxu0 0
        %5582 = vmatmul.mubr.bf16.gmra.mrb[0].mxu0 %v5498
        %v5583 = vpop.f32.mrb[0].mxu0
        %v5584 = vadd.f32 0.0, %v5583
        %v5585 = vpop.f32.mrb[0].mxu0
        %v5586 = vpop.f32.mrb[0].mxu0
        %v5587 = vadd.f32 0.0, %v5586
        %v5588 = vpop.f32.mrb[0].mxu0
        %5589 = vmatprep.mubr.bf16.mxu0 0
        %5590 = vmatmul.mubr.bf16.gmra.mrb[0].mxu0 %v5501
        %v5591 = vpop.f32.mrb[0].mxu0
        %v5592 = vadd.f32 0.0, %v5591
        %v5593 = vpop.f32.mrb[0].mxu0
        %v5594 = vpop.f32.mrb[0].mxu0
        %v5595 = vadd.f32 0.0, %v5594
        %v5596 = vpop.f32.mrb[0].mxu0
        %5597 = vmatprep.mubr.bf16.mxu0 0
        %5598 = vmatmul.mubr.bf16.gmra.mrb[0].mxu0 %v5504
        %v5599 = vpop.f32.mrb[0].mxu0
        %v5600 = vadd.f32 0.0, %v5599
        %v5601 = vpop.f32.mrb[0].mxu0
        %v5602 = vpop.f32.mrb[0].mxu0
        %v5603 = vadd.f32 0.0, %v5602
        %v5604 = vpop.f32.mrb[0].mxu0
        %5605 = vmatprep.mubr.bf16.mxu0 0
        %5606 = vmatmul.mubr.bf16.gmra.mrb[0].mxu0 %v5507
        %v5607 = vpop.f32.mrb[0].mxu0
        %v5608 = vadd.f32 0.0, %v5607
        %v5609 = vpop.f32.mrb[0].mxu0
        %v5610 = vpop.f32.mrb[0].mxu0
        %v5611 = vadd.f32 0.0, %v5610
        %v5612 = vpop.f32.mrb[0].mxu0
        %5613 = vmatprep.mubr.bf16.mxu0 0
        %5614 = vmatmul.mubr.bf16.gmra.mrb[0].mxu0 %v5510
        %v5615 = vpop.f32.mrb[0].mxu0
        %v5616 = vadd.f32 0.0, %v5615
        %v5617 = vpop.f32.mrb[0].mxu0
        %v5618 = vpop.f32.mrb[0].mxu0
        %v5619 = vadd.f32 0.0, %v5618
        %v5620 = vpop.f32.mrb[0].mxu0
        %5621 = vmatprep.mubr.bf16.mxu0 0
        %5622 = vmatmul.mubr.bf16.gmra.mrb[0].mxu0 %v5513
        %v5623 = vpop.f32.mrb[0].mxu0
        %v5624 = vadd.f32 0.0, %v5623
        %v5625 = vpop.f32.mrb[0].mxu0
        %v5626 = vpop.f32.mrb[0].mxu0
        %v5627 = vadd.f32 0.0, %v5626
        %v5628 = vpop.f32.mrb[0].mxu0
        %5629 = vmatprep.mubr.bf16.mxu0 0
        %5630 = vmatmul.mubr.bf16.gmra.mrb[0].mxu0 %v5516
        %v5631 = vpop.f32.mrb[0].mxu0
        %v5632 = vadd.f32 0.0, %v5631
        %v5633 = vpop.f32.mrb[0].mxu0
        %v5634 = vpop.f32.mrb[0].mxu0
        %v5635 = vadd.f32 0.0, %v5634
        %v5636 = vpop.f32.mrb[0].mxu0
        %5637 = vmatprep.mubr.bf16.mxu0 0
        %5638 = vmatmul.mubr.bf16.gmra.mrb[0].mxu0 %v5519
        %v5639 = vpop.f32.mrb[0].mxu0
        %v5640 = vadd.f32 0.0, %v5639
        %v5641 = vpop.f32.mrb[0].mxu0
        %v5642 = vpop.f32.mrb[0].mxu0
        %v5643 = vadd.f32 0.0, %v5642
        %v5644 = vpop.f32.mrb[0].mxu0
        %5645 = vmatprep.mubr.bf16.mxu0 0
        %5646 = vmatmul.mubr.bf16.gmra.mrb[0].mxu0 %v5522
        %v5647 = vpop.f32.mrb[0].mxu0
        %v5648 = vadd.f32 0.0, %v5647
        %v5649 = vpop.f32.mrb[0].mxu0
        %v5650 = vpop.f32.mrb[0].mxu0
        %v5651 = vadd.f32 0.0, %v5650
        %v5652 = vpop.f32.mrb[0].mxu0
        %5653 = vmatprep.mubr.bf16.mxu0 0
        %5654 = vmatmul.mubr.bf16.gmra.mrb[0].mxu0 %v5525
        %v5655 = vpop.f32.mrb[0].mxu0
        %v5656 = vadd.f32 0.0, %v5655
        %v5657 = vpop.f32.mrb[0].mxu0
        %v5658 = vpop.f32.mrb[0].mxu0
        %v5659 = vadd.f32 0.0, %v5658
        %v5660 = vpop.f32.mrb[0].mxu0
        %5661 = vmatprep.mubr.bf16.mxu0 0
        %5662 = vmatmul.mubr.bf16.gmra.mrb[0].mxu0 %v5528
        %v5663 = vpop.f32.mrb[0].mxu0
        %v5664 = vadd.f32 0.0, %v5663
        %v5665 = vpop.f32.mrb[0].mxu0
        %v5666 = vpop.f32.mrb[0].mxu0
        %v5667 = vadd.f32 0.0, %v5666
        %v5668 = vpop.f32.mrb[0].mxu0
        %5669 = vmatprep.mubr.bf16.mxu0 0
        %5670 = vmatmul.mubr.bf16.gmra.mrb[0].mxu0 %v5531
        %v5671 = vpop.f32.mrb[0].mxu0
        %v5672 = vadd.f32 0.0, %v5671
        %v5673 = vpop.f32.mrb[0].mxu0
        %v5674 = vpop.f32.mrb[0].mxu0
        %v5675 = vadd.f32 0.0, %v5674
        %v5676 = vpop.f32.mrb[0].mxu0
        %5677 = vdwg.mxu0
        %v5678 = vadd.f32 %v5337, %v5568
        %v5679 = vadd.f32 %v5338, %v5571
        %v5680 = vadd.f32 %v5339, %v5576
        %v5681 = vadd.f32 %v5340, %v5579
        %v5682 = vadd.f32 %v5341, %v5584
        %v5683 = vadd.f32 %v5342, %v5587
        %v5684 = vadd.f32 %v5343, %v5592
        %v5685 = vadd.f32 %v5344, %v5595
        %v5686 = vadd.f32 %v5345, %v5600
        %v5687 = vadd.f32 %v5346, %v5603
        %v5688 = vadd.f32 %v5347, %v5608
        %v5689 = vadd.f32 %v5348, %v5611
        %v5690 = vadd.f32 %v5349, %v5616
        %v5691 = vadd.f32 %v5350, %v5619
        %v5692 = vadd.f32 %v5351, %v5624
        %v5693 = vadd.f32 %v5352, %v5627
        %v5694 = vadd.f32 %v5353, %v5632
        %v5695 = vadd.f32 %v5354, %v5635
        %v5696 = vadd.f32 %v5355, %v5640
        %v5697 = vadd.f32 %v5356, %v5643
        %v5698 = vadd.f32 %v5357, %v5648
        %v5699 = vadd.f32 %v5358, %v5651
        %v5700 = vadd.f32 %v5359, %v5656
        %v5701 = vadd.f32 %v5360, %v5659
        %v5702 = vadd.f32 %v5361, %v5664
        %v5703 = vadd.f32 %v5362, %v5667
        %v5704 = vadd.f32 %v5363, %v5672
        %v5705 = vadd.f32 %v5364, %v5675
        %5706 = vst [vmem:[%s217 + $0x8] sm:$0xff] %v5678
        %5707 = vst [vmem:[%s217 + $0x18] sm:$0xff] %v5679
        %5708 = vst [vmem:[%s217 + $0x28] sm:$0xff] %v5680
        %5709 = vst [vmem:[%s217 + $0x38] sm:$0xff] %v5681
        %5710 = vst [vmem:[%s217 + $0x48] sm:$0xff] %v5682
        %5711 = vst [vmem:[%s217 + $0x58] sm:$0xff] %v5683
        %5712 = vst [vmem:[%s217 + $0x68] sm:$0xff] %v5684
        %5713 = vst [vmem:[%s217 + $0x78] sm:$0xff] %v5685
        %5714 = vst [vmem:[%s217 + $0x88] sm:$0xff] %v5686
        %5715 = vst [vmem:[%s217 + $0x98] sm:$0xff] %v5687
        %5716 = vst [vmem:[%s217 + $0xa8] sm:$0xff] %v5688
        %5717 = vst [vmem:[%s217 + $0xb8] sm:$0xff] %v5689
        %5718 = vst [vmem:[%s217 + $0xc8] sm:$0xff] %v5690
        %5719 = vst [vmem:[%s217 + $0xd8] sm:$0xff] %v5691
        %5720 = vst [vmem:[%s217 + $0xe8] sm:$0xff] %v5692
        %5721 = vst [vmem:[%s217 + $0xf8] sm:$0xff] %v5693
        %5722 = vst [vmem:[%s217 + $0x108] sm:$0xff] %v5694
        %5723 = vst [vmem:[%s217 + $0x118] sm:$0xff] %v5695
        %5724 = vst [vmem:[%s217 + $0x128] sm:$0xff] %v5696
        %5725 = vst [vmem:[%s217 + $0x138] sm:$0xff] %v5697
        %5726 = vst [vmem:[%s217 + $0x148] sm:$0xff] %v5698
        %5727 = vst [vmem:[%s217 + $0x158] sm:$0xff] %v5699
        %5728 = vst [vmem:[%s217 + $0x168] sm:$0xff] %v5700
        %5729 = vst [vmem:[%s217 + $0x178] sm:$0xff] %v5701
        %5730 = vst [vmem:[%s217 + $0x188] sm:$0xff] %v5702
        %5731 = vst [vmem:[%s217 + $0x198] sm:$0xff] %v5703
        %5732 = vst [vmem:[%s217 + $0x1a8] sm:$0xff] %v5704
        %5733 = vst [vmem:[%s217 + $0x1b8] sm:$0xff] %v5705
        %v5734 = vld [vmem:[%s4374 + $0x8] sm:$0xf]
        %v5735 = vld [vmem:[%s4374 + $0xc] sm:$0xf]
        %v5736 = vld [vmem:[%s4374 + $0x10] sm:$0xf]
        %v5737 = vld [vmem:[%s4374 + $0x14] sm:$0xf]
        %v5738 = vld [vmem:[%s4374 + $0x18] sm:$0xf]
        %v5739 = vld [vmem:[%s4374 + $0x1c] sm:$0xf]
        %v5740 = vld [vmem:[%s4374 + $0x20] sm:$0xf]
        %v5741 = vld [vmem:[%s4374 + $0x24] sm:$0xf]
        %v5742 = vld [vmem:[%s4374 + $0x28] sm:$0xf]
        %v5743 = vld [vmem:[%s4374 + $0x2c] sm:$0xf]
        %v5744 = vld [vmem:[%s4374 + $0x30] sm:$0xf]
        %v5745 = vld [vmem:[%s4374 + $0x34] sm:$0xf]
        %v5746 = vld [vmem:[%s4374 + $0x38] sm:$0xf]
        %v5747 = vld [vmem:[%s4374 + $0x3c] sm:$0xf]
        %v5748 = vld [vmem:[%s4374 + $0x40] sm:$0xf]
        %v5749 = vld [vmem:[%s4374 + $0x44] sm:$0xf]
        %v5750 = vld [vmem:[%s4374 + $0x48] sm:$0xf]
        %v5751 = vld [vmem:[%s4374 + $0x4c] sm:$0xf]
        %v5752 = vld [vmem:[%s4374 + $0x50] sm:$0xf]
        %v5753 = vld [vmem:[%s4374 + $0x54] sm:$0xf]
        %v5754 = vld [vmem:[%s4374 + $0x58] sm:$0xf]
        %v5755 = vld [vmem:[%s4374 + $0x5c] sm:$0xf]
        %v5756 = vld [vmem:[%s4374 + $0x60] sm:$0xf]
        %v5757 = vld [vmem:[%s4374 + $0x64] sm:$0xf]
        %v5758 = vld [vmem:[%s4374 + $0x68] sm:$0xf]
        %v5759 = vld [vmem:[%s4374 + $0x6c] sm:$0xf]
        %v5760 = vld [vmem:[%s4374 + $0x70] sm:$0xf]
        %v5761 = vld [vmem:[%s4374 + $0x74] sm:$0xf]
        %s5762 = scalar_lea.vmem %s234, 384
        %v5763 = vld [vmem:[%s5762] sm:$0xf]
        %v5764 = vld [vmem:[%s5762 + $0x4] sm:$0xf]
        %v5765 = vld [vmem:[%s5762 + $0x8] sm:$0xf]
        %v5766 = vld [vmem:[%s5762 + $0xc] sm:$0xf]
        %v5767 = vld [vmem:[%s5762 + $0x10] sm:$0xf]
        %v5768 = vld [vmem:[%s5762 + $0x14] sm:$0xf]
        %v5769 = vld [vmem:[%s5762 + $0x18] sm:$0xf]
        %v5770 = vld [vmem:[%s5762 + $0x1c] sm:$0xf]
        %v5771 = vld [vmem:[%s217 + $0x8] sm:$0xff]
        %v5772 = vld [vmem:[%s217 + $0x18] sm:$0xff]
        %v5773 = vld [vmem:[%s217 + $0x28] sm:$0xff]
        %v5774 = vld [vmem:[%s217 + $0x38] sm:$0xff]
        %v5775 = vld [vmem:[%s217 + $0x48] sm:$0xff]
        %v5776 = vld [vmem:[%s217 + $0x58] sm:$0xff]
        %v5777 = vld [vmem:[%s217 + $0x68] sm:$0xff]
        %v5778 = vld [vmem:[%s217 + $0x78] sm:$0xff]
        %v5779 = vld [vmem:[%s217 + $0x88] sm:$0xff]
        %v5780 = vld [vmem:[%s217 + $0x98] sm:$0xff]
        %v5781 = vld [vmem:[%s217 + $0xa8] sm:$0xff]
        %v5782 = vld [vmem:[%s217 + $0xb8] sm:$0xff]
        %v5783 = vld [vmem:[%s217 + $0xc8] sm:$0xff]
        %v5784 = vld [vmem:[%s217 + $0xd8] sm:$0xff]
        %v5785 = vld [vmem:[%s217 + $0xe8] sm:$0xff]
        %v5786 = vld [vmem:[%s217 + $0xf8] sm:$0xff]
        %v5787 = vld [vmem:[%s217 + $0x108] sm:$0xff]
        %v5788 = vld [vmem:[%s217 + $0x118] sm:$0xff]
        %v5789 = vld [vmem:[%s217 + $0x128] sm:$0xff]
        %v5790 = vld [vmem:[%s217 + $0x138] sm:$0xff]
        %v5791 = vld [vmem:[%s217 + $0x148] sm:$0xff]
        %v5792 = vld [vmem:[%s217 + $0x158] sm:$0xff]
        %v5793 = vld [vmem:[%s217 + $0x168] sm:$0xff]
        %v5794 = vld [vmem:[%s217 + $0x178] sm:$0xff]
        %v5795 = vld [vmem:[%s217 + $0x188] sm:$0xff]
        %v5796 = vld [vmem:[%s217 + $0x198] sm:$0xff]
        %v5797 = vld [vmem:[%s217 + $0x1a8] sm:$0xff]
        %v5798 = vld [vmem:[%s217 + $0x1b8] sm:$0xff]
        %v5827 = vunpack.c.l.b16 %v5734
        %v5828 = vunpack.c.l.b16 %v5735
        %v5829 = vunpack.c.l.b16 %v5736
        %v5830 = vunpack.c.l.b16 %v5737
        %v5831 = vunpack.c.l.b16 %v5738
        %v5832 = vunpack.c.l.b16 %v5739
        %v5833 = vunpack.c.l.b16 %v5740
        %v5834 = vunpack.c.l.b16 %v5741
        %v5835 = vunpack.c.l.b16 %v5742
        %v5836 = vunpack.c.l.b16 %v5743
        %v5837 = vunpack.c.l.b16 %v5744
        %v5838 = vunpack.c.l.b16 %v5745
        %v5839 = vunpack.c.l.b16 %v5746
        %v5840 = vunpack.c.l.b16 %v5747
        %v5841 = vunpack.c.l.b16 %v5748
        %v5842 = vunpack.c.l.b16 %v5749
        %v5843 = vunpack.c.l.b16 %v5750
        %v5844 = vunpack.c.l.b16 %v5751
        %v5845 = vunpack.c.l.b16 %v5752
        %v5846 = vunpack.c.l.b16 %v5753
        %v5847 = vunpack.c.l.b16 %v5754
        %v5848 = vunpack.c.l.b16 %v5755
        %v5849 = vunpack.c.l.b16 %v5756
        %v5850 = vunpack.c.l.b16 %v5757
        %v5851 = vunpack.c.l.b16 %v5758
        %v5852 = vunpack.c.l.b16 %v5759
        %v5853 = vunpack.c.l.b16 %v5760
        %v5854 = vunpack.c.l.b16 %v5761
        %v5855 = vpack.c.b16 %v5828, %v5827
        %v5856 = vpack.c.b16 %v5830, %v5829
        %v5857 = vpack.c.b16 %v5832, %v5831
        %v5858 = vpack.c.b16 %v5834, %v5833
        %v5859 = vpack.c.b16 %v5836, %v5835
        %v5860 = vpack.c.b16 %v5838, %v5837
        %v5861 = vpack.c.b16 %v5840, %v5839
        %v5862 = vpack.c.b16 %v5842, %v5841
        %v5863 = vpack.c.b16 %v5844, %v5843
        %v5864 = vpack.c.b16 %v5846, %v5845
        %v5865 = vpack.c.b16 %v5848, %v5847
        %v5866 = vpack.c.b16 %v5850, %v5849
        %v5867 = vpack.c.b16 %v5852, %v5851
        %v5868 = vpack.c.b16 %v5854, %v5853
        %v5877 = vunpack.c.l.b16 %v5763
        %v5878 = vunpack.c.l.b16 %v5764
        %v5879 = vunpack.c.l.b16 %v5765
        %v5880 = vunpack.c.l.b16 %v5766
        %v5881 = vunpack.c.l.b16 %v5767
        %v5882 = vunpack.c.l.b16 %v5768
        %v5883 = vunpack.c.l.b16 %v5769
        %v5884 = vunpack.c.l.b16 %v5770
        %v5885 = vpack.c.b16 %v5878, %v5877
        %v5886 = vpack.c.b16 %v5880, %v5879
        %v5887 = vpack.c.b16 %v5882, %v5881
        %v5888 = vpack.c.b16 %v5884, %v5883
        %v5894 = vsel %vm468, %v5855, 0
        %v5897 = vsel %vm468, %v5856, 0
        %v5900 = vsel %vm468, %v5857, 0
        %v5903 = vsel %vm468, %v5858, 0
        %v5906 = vsel %vm468, %v5859, 0
        %v5909 = vsel %vm468, %v5860, 0
        %v5912 = vsel %vm468, %v5861, 0
        %v5915 = vsel %vm468, %v5862, 0
        %v5918 = vsel %vm468, %v5863, 0
        %v5921 = vsel %vm468, %v5864, 0
        %v5924 = vsel %vm468, %v5865, 0
        %v5927 = vsel %vm468, %v5866, 0
        %v5930 = vsel %vm468, %v5867, 0
        %v5933 = vsel %vm468, %v5868, 0
        %5935 = vmatprep.subr.bf16.mxu0 0
        %5936 = vmatpush1.bf16.msra.mxu0 %v5885
        %5937 = vmatprep.subr.bf16.mxu0 0
        %5938 = vmatpush1.bf16.msra.mxu0 %v5886
        %5939 = vmatprep.subr.bf16.mxu0 0
        %5940 = vmatpush1.bf16.msra.mxu0 %v5887
        %5941 = vmatprep.subr.bf16.mxu0 0
        %5942 = vmatpush1.bf16.msra.mxu0 %v5888
        %5943 = vmatprep.subr.bf16.mxu0 0
        %5944 = vmatpush1.bf16.msra.mxu0 0
        %5945 = vmatprep.subr.bf16.mxu0 0
        %5946 = vmatpush1.bf16.msra.mxu0 0
        %5947 = vmatprep.subr.bf16.mxu0 0
        %5948 = vmatpush1.bf16.msra.mxu0 0
        %5949 = vmatprep.subr.bf16.mxu0 0
        %5950 = vmatpush1.bf16.msra.mxu0 0
        %5951 = vmatprep.subr.bf16.mxu0 0
        %5952 = vmatpush1.bf16.msra.mxu0 0
        %5953 = vmatprep.subr.bf16.mxu0 0
        %5954 = vmatpush1.bf16.msra.mxu0 0
        %5955 = vmatprep.subr.bf16.mxu0 0
        %5956 = vmatpush1.bf16.msra.mxu0 0
        %5957 = vmatprep.subr.bf16.mxu0 0
        %5958 = vmatpush1.bf16.msra.mxu0 0
        %5959 = vmatprep.subr.bf16.mxu0 0
        %5960 = vmatpush1.bf16.msra.mxu0 0
        %5961 = vmatprep.subr.bf16.mxu0 0
        %5962 = vmatpush1.bf16.msra.mxu0 0
        %5963 = vmatprep.subr.bf16.mxu0 0
        %5964 = vmatpush1.bf16.msra.mxu0 0
        %5965 = vmatprep.subr.bf16.mxu0 0
        %5966 = vmatpush1.bf16.msra.mxu0 0
        %5967 = vmatprep.mubr.bf16.mxu0 0
        %5968 = vmatmul.mubr.bf16.gmra.mrb[0].mxu0 %v5894
        %v5969 = vpop.f32.mrb[0].mxu0
        %v5970 = vadd.f32 0.0, %v5969
        %v5971 = vpop.f32.mrb[0].mxu0
        %v5972 = vpop.f32.mrb[0].mxu0
        %v5973 = vadd.f32 0.0, %v5972
        %v5974 = vpop.f32.mrb[0].mxu0
        %5975 = vmatprep.mubr.bf16.mxu0 0
        %5976 = vmatmul.mubr.bf16.gmra.mrb[0].mxu0 %v5897
        %v5977 = vpop.f32.mrb[0].mxu0
        %v5978 = vadd.f32 0.0, %v5977
        %v5979 = vpop.f32.mrb[0].mxu0
        %v5980 = vpop.f32.mrb[0].mxu0
        %v5981 = vadd.f32 0.0, %v5980
        %v5982 = vpop.f32.mrb[0].mxu0
        %5983 = vmatprep.mubr.bf16.mxu0 0
        %5984 = vmatmul.mubr.bf16.gmra.mrb[0].mxu0 %v5900
        %v5985 = vpop.f32.mrb[0].mxu0
        %v5986 = vadd.f32 0.0, %v5985
        %v5987 = vpop.f32.mrb[0].mxu0
        %v5988 = vpop.f32.mrb[0].mxu0
        %v5989 = vadd.f32 0.0, %v5988
        %v5990 = vpop.f32.mrb[0].mxu0
        %5991 = vmatprep.mubr.bf16.mxu0 0
        %5992 = vmatmul.mubr.bf16.gmra.mrb[0].mxu0 %v5903
        %v5993 = vpop.f32.mrb[0].mxu0
        %v5994 = vadd.f32 0.0, %v5993
        %v5995 = vpop.f32.mrb[0].mxu0
        %v5996 = vpop.f32.mrb[0].mxu0
        %v5997 = vadd.f32 0.0, %v5996
        %v5998 = vpop.f32.mrb[0].mxu0
        %5999 = vmatprep.mubr.bf16.mxu0 0
        %6000 = vmatmul.mubr.bf16.gmra.mrb[0].mxu0 %v5906
        %v6001 = vpop.f32.mrb[0].mxu0
        %v6002 = vadd.f32 0.0, %v6001
        %v6003 = vpop.f32.mrb[0].mxu0
        %v6004 = vpop.f32.mrb[0].mxu0
        %v6005 = vadd.f32 0.0, %v6004
        %v6006 = vpop.f32.mrb[0].mxu0
        %6007 = vmatprep.mubr.bf16.mxu0 0
        %6008 = vmatmul.mubr.bf16.gmra.mrb[0].mxu0 %v5909
        %v6009 = vpop.f32.mrb[0].mxu0
        %v6010 = vadd.f32 0.0, %v6009
        %v6011 = vpop.f32.mrb[0].mxu0
        %v6012 = vpop.f32.mrb[0].mxu0
        %v6013 = vadd.f32 0.0, %v6012
        %v6014 = vpop.f32.mrb[0].mxu0
        %6015 = vmatprep.mubr.bf16.mxu0 0
        %6016 = vmatmul.mubr.bf16.gmra.mrb[0].mxu0 %v5912
        %v6017 = vpop.f32.mrb[0].mxu0
        %v6018 = vadd.f32 0.0, %v6017
        %v6019 = vpop.f32.mrb[0].mxu0
        %v6020 = vpop.f32.mrb[0].mxu0
        %v6021 = vadd.f32 0.0, %v6020
        %v6022 = vpop.f32.mrb[0].mxu0
        %6023 = vmatprep.mubr.bf16.mxu0 0
        %6024 = vmatmul.mubr.bf16.gmra.mrb[0].mxu0 %v5915
        %v6025 = vpop.f32.mrb[0].mxu0
        %v6026 = vadd.f32 0.0, %v6025
        %v6027 = vpop.f32.mrb[0].mxu0
        %v6028 = vpop.f32.mrb[0].mxu0
        %v6029 = vadd.f32 0.0, %v6028
        %v6030 = vpop.f32.mrb[0].mxu0
        %6031 = vmatprep.mubr.bf16.mxu0 0
        %6032 = vmatmul.mubr.bf16.gmra.mrb[0].mxu0 %v5918
        %v6033 = vpop.f32.mrb[0].mxu0
        %v6034 = vadd.f32 0.0, %v6033
        %v6035 = vpop.f32.mrb[0].mxu0
        %v6036 = vpop.f32.mrb[0].mxu0
        %v6037 = vadd.f32 0.0, %v6036
        %v6038 = vpop.f32.mrb[0].mxu0
        %6039 = vmatprep.mubr.bf16.mxu0 0
        %6040 = vmatmul.mubr.bf16.gmra.mrb[0].mxu0 %v5921
        %v6041 = vpop.f32.mrb[0].mxu0
        %v6042 = vadd.f32 0.0, %v6041
        %v6043 = vpop.f32.mrb[0].mxu0
        %v6044 = vpop.f32.mrb[0].mxu0
        %v6045 = vadd.f32 0.0, %v6044
        %v6046 = vpop.f32.mrb[0].mxu0
        %6047 = vmatprep.mubr.bf16.mxu0 0
        %6048 = vmatmul.mubr.bf16.gmra.mrb[0].mxu0 %v5924
        %v6049 = vpop.f32.mrb[0].mxu0
        %v6050 = vadd.f32 0.0, %v6049
        %v6051 = vpop.f32.mrb[0].mxu0
        %v6052 = vpop.f32.mrb[0].mxu0
        %v6053 = vadd.f32 0.0, %v6052
        %v6054 = vpop.f32.mrb[0].mxu0
        %6055 = vmatprep.mubr.bf16.mxu0 0
        %6056 = vmatmul.mubr.bf16.gmra.mrb[0].mxu0 %v5927
        %v6057 = vpop.f32.mrb[0].mxu0
        %v6058 = vadd.f32 0.0, %v6057
        %v6059 = vpop.f32.mrb[0].mxu0
        %v6060 = vpop.f32.mrb[0].mxu0
        %v6061 = vadd.f32 0.0, %v6060
        %v6062 = vpop.f32.mrb[0].mxu0
        %6063 = vmatprep.mubr.bf16.mxu0 0
        %6064 = vmatmul.mubr.bf16.gmra.mrb[0].mxu0 %v5930
        %v6065 = vpop.f32.mrb[0].mxu0
        %v6066 = vadd.f32 0.0, %v6065
        %v6067 = vpop.f32.mrb[0].mxu0
        %v6068 = vpop.f32.mrb[0].mxu0
        %v6069 = vadd.f32 0.0, %v6068
        %v6070 = vpop.f32.mrb[0].mxu0
        %6071 = vmatprep.mubr.bf16.mxu0 0
        %6072 = vmatmul.mubr.bf16.gmra.mrb[0].mxu0 %v5933
        %v6073 = vpop.f32.mrb[0].mxu0
        %v6074 = vadd.f32 0.0, %v6073
        %v6075 = vpop.f32.mrb[0].mxu0
        %v6076 = vpop.f32.mrb[0].mxu0
        %v6077 = vadd.f32 0.0, %v6076
        %v6078 = vpop.f32.mrb[0].mxu0
        %6079 = vdwg.mxu0
        %v6080 = vadd.f32 %v5771, %v5970
        %v6081 = vadd.f32 %v5772, %v5973
        %v6082 = vadd.f32 %v5773, %v5978
        %v6083 = vadd.f32 %v5774, %v5981
        %v6084 = vadd.f32 %v5775, %v5986
        %v6085 = vadd.f32 %v5776, %v5989
        %v6086 = vadd.f32 %v5777, %v5994
        %v6087 = vadd.f32 %v5778, %v5997
        %v6088 = vadd.f32 %v5779, %v6002
        %v6089 = vadd.f32 %v5780, %v6005
        %v6090 = vadd.f32 %v5781, %v6010
        %v6091 = vadd.f32 %v5782, %v6013
        %v6092 = vadd.f32 %v5783, %v6018
        %v6093 = vadd.f32 %v5784, %v6021
        %v6094 = vadd.f32 %v5785, %v6026
        %v6095 = vadd.f32 %v5786, %v6029
        %v6096 = vadd.f32 %v5787, %v6034
        %v6097 = vadd.f32 %v5788, %v6037
        %v6098 = vadd.f32 %v5789, %v6042
        %v6099 = vadd.f32 %v5790, %v6045
        %v6100 = vadd.f32 %v5791, %v6050
        %v6101 = vadd.f32 %v5792, %v6053
        %v6102 = vadd.f32 %v5793, %v6058
        %v6103 = vadd.f32 %v5794, %v6061
        %v6104 = vadd.f32 %v5795, %v6066
        %v6105 = vadd.f32 %v5796, %v6069
        %v6106 = vadd.f32 %v5797, %v6074
        %v6107 = vadd.f32 %v5798, %v6077
        %6108 = vst [vmem:[%s217 + $0x8] sm:$0xff] %v6080
        %6109 = vst [vmem:[%s217 + $0x18] sm:$0xff] %v6081
        %6110 = vst [vmem:[%s217 + $0x28] sm:$0xff] %v6082
        %6111 = vst [vmem:[%s217 + $0x38] sm:$0xff] %v6083
        %6112 = vst [vmem:[%s217 + $0x48] sm:$0xff] %v6084
        %6113 = vst [vmem:[%s217 + $0x58] sm:$0xff] %v6085
        %6114 = vst [vmem:[%s217 + $0x68] sm:$0xff] %v6086
        %6115 = vst [vmem:[%s217 + $0x78] sm:$0xff] %v6087
        %6116 = vst [vmem:[%s217 + $0x88] sm:$0xff] %v6088
        %6117 = vst [vmem:[%s217 + $0x98] sm:$0xff] %v6089
        %6118 = vst [vmem:[%s217 + $0xa8] sm:$0xff] %v6090
        %6119 = vst [vmem:[%s217 + $0xb8] sm:$0xff] %v6091
        %6120 = vst [vmem:[%s217 + $0xc8] sm:$0xff] %v6092
        %6121 = vst [vmem:[%s217 + $0xd8] sm:$0xff] %v6093
        %6122 = vst [vmem:[%s217 + $0xe8] sm:$0xff] %v6094
        %6123 = vst [vmem:[%s217 + $0xf8] sm:$0xff] %v6095
        %6124 = vst [vmem:[%s217 + $0x108] sm:$0xff] %v6096
        %6125 = vst [vmem:[%s217 + $0x118] sm:$0xff] %v6097
        %6126 = vst [vmem:[%s217 + $0x128] sm:$0xff] %v6098
        %6127 = vst [vmem:[%s217 + $0x138] sm:$0xff] %v6099
        %6128 = vst [vmem:[%s217 + $0x148] sm:$0xff] %v6100
        %6129 = vst [vmem:[%s217 + $0x158] sm:$0xff] %v6101
        %6130 = vst [vmem:[%s217 + $0x168] sm:$0xff] %v6102
        %6131 = vst [vmem:[%s217 + $0x178] sm:$0xff] %v6103
        %6132 = vst [vmem:[%s217 + $0x188] sm:$0xff] %v6104
        %6133 = vst [vmem:[%s217 + $0x198] sm:$0xff] %v6105
        %6134 = vst [vmem:[%s217 + $0x1a8] sm:$0xff] %v6106
        %6135 = vst [vmem:[%s217 + $0x1b8] sm:$0xff] %v6107
        %v6136 = vld [vmem:[%s4374 + $0x8] sm:$0xf]
        %v6137 = vld [vmem:[%s4374 + $0xc] sm:$0xf]
        %v6138 = vld [vmem:[%s4374 + $0x10] sm:$0xf]
        %v6139 = vld [vmem:[%s4374 + $0x14] sm:$0xf]
        %v6140 = vld [vmem:[%s4374 + $0x18] sm:$0xf]
        %v6141 = vld [vmem:[%s4374 + $0x1c] sm:$0xf]
        %v6142 = vld [vmem:[%s4374 + $0x20] sm:$0xf]
        %v6143 = vld [vmem:[%s4374 + $0x24] sm:$0xf]
        %v6144 = vld [vmem:[%s4374 + $0x28] sm:$0xf]
        %v6145 = vld [vmem:[%s4374 + $0x2c] sm:$0xf]
        %v6146 = vld [vmem:[%s4374 + $0x30] sm:$0xf]
        %v6147 = vld [vmem:[%s4374 + $0x34] sm:$0xf]
        %v6148 = vld [vmem:[%s4374 + $0x38] sm:$0xf]
        %v6149 = vld [vmem:[%s4374 + $0x3c] sm:$0xf]
        %v6150 = vld [vmem:[%s4374 + $0x40] sm:$0xf]
        %v6151 = vld [vmem:[%s4374 + $0x44] sm:$0xf]
        %v6152 = vld [vmem:[%s4374 + $0x48] sm:$0xf]
        %v6153 = vld [vmem:[%s4374 + $0x4c] sm:$0xf]
        %v6154 = vld [vmem:[%s4374 + $0x50] sm:$0xf]
        %v6155 = vld [vmem:[%s4374 + $0x54] sm:$0xf]
        %v6156 = vld [vmem:[%s4374 + $0x58] sm:$0xf]
        %v6157 = vld [vmem:[%s4374 + $0x5c] sm:$0xf]
        %v6158 = vld [vmem:[%s4374 + $0x60] sm:$0xf]
        %v6159 = vld [vmem:[%s4374 + $0x64] sm:$0xf]
        %v6160 = vld [vmem:[%s4374 + $0x68] sm:$0xf]
        %v6161 = vld [vmem:[%s4374 + $0x6c] sm:$0xf]
        %v6162 = vld [vmem:[%s4374 + $0x70] sm:$0xf]
        %v6163 = vld [vmem:[%s4374 + $0x74] sm:$0xf]
        %v6164 = vld [vmem:[%s4374 + $0x78] sm:$0x1]
        %s6165 = scalar_lea.vmem %s234, 416
        %v6166 = vld [vmem:[%s6165] sm:$0xf]
        %v6167 = vld [vmem:[%s6165 + $0x4] sm:$0xf]
        %v6168 = vld [vmem:[%s6165 + $0x8] sm:$0xf]
        %v6169 = vld [vmem:[%s6165 + $0xc] sm:$0xf]
        %v6170 = vld [vmem:[%s6165 + $0x10] sm:$0xf]
        %v6171 = vld [vmem:[%s6165 + $0x14] sm:$0xf]
        %v6172 = vld [vmem:[%s6165 + $0x18] sm:$0xf]
        %v6173 = vld [vmem:[%s6165 + $0x1c] sm:$0xf]
        %v6174 = vld [vmem:[%s217 + $0x8] sm:$0xff]
        %v6175 = vld [vmem:[%s217 + $0x18] sm:$0xff]
        %v6176 = vld [vmem:[%s217 + $0x28] sm:$0xff]
        %v6177 = vld [vmem:[%s217 + $0x38] sm:$0xff]
        %v6178 = vld [vmem:[%s217 + $0x48] sm:$0xff]
        %v6179 = vld [vmem:[%s217 + $0x58] sm:$0xff]
        %v6180 = vld [vmem:[%s217 + $0x68] sm:$0xff]
        %v6181 = vld [vmem:[%s217 + $0x78] sm:$0xff]
        %v6182 = vld [vmem:[%s217 + $0x88] sm:$0xff]
        %v6183 = vld [vmem:[%s217 + $0x98] sm:$0xff]
        %v6184 = vld [vmem:[%s217 + $0xa8] sm:$0xff]
        %v6185 = vld [vmem:[%s217 + $0xb8] sm:$0xff]
        %v6186 = vld [vmem:[%s217 + $0xc8] sm:$0xff]
        %v6187 = vld [vmem:[%s217 + $0xd8] sm:$0xff]
        %v6188 = vld [vmem:[%s217 + $0xe8] sm:$0xff]
        %v6189 = vld [vmem:[%s217 + $0xf8] sm:$0xff]
        %v6190 = vld [vmem:[%s217 + $0x108] sm:$0xff]
        %v6191 = vld [vmem:[%s217 + $0x118] sm:$0xff]
        %v6192 = vld [vmem:[%s217 + $0x128] sm:$0xff]
        %v6193 = vld [vmem:[%s217 + $0x138] sm:$0xff]
        %v6194 = vld [vmem:[%s217 + $0x148] sm:$0xff]
        %v6195 = vld [vmem:[%s217 + $0x158] sm:$0xff]
        %v6196 = vld [vmem:[%s217 + $0x168] sm:$0xff]
        %v6197 = vld [vmem:[%s217 + $0x178] sm:$0xff]
        %v6198 = vld [vmem:[%s217 + $0x188] sm:$0xff]
        %v6199 = vld [vmem:[%s217 + $0x198] sm:$0xff]
        %v6200 = vld [vmem:[%s217 + $0x1a8] sm:$0xff]
        %v6201 = vld [vmem:[%s217 + $0x1b8] sm:$0xff]
        %v6231 = vunpack.c.l.b16 %v6136
        %v6232 = vunpack.c.l.b16 %v6137
        %v6233 = vunpack.c.l.b16 %v6138
        %v6234 = vunpack.c.l.b16 %v6139
        %v6235 = vunpack.c.l.b16 %v6140
        %v6236 = vunpack.c.l.b16 %v6141
        %v6237 = vunpack.c.l.b16 %v6142
        %v6238 = vunpack.c.l.b16 %v6143
        %v6239 = vunpack.c.l.b16 %v6144
        %v6240 = vunpack.c.l.b16 %v6145
        %v6241 = vunpack.c.l.b16 %v6146
        %v6242 = vunpack.c.l.b16 %v6147
        %v6243 = vunpack.c.l.b16 %v6148
        %v6244 = vunpack.c.l.b16 %v6149
        %v6245 = vunpack.c.l.b16 %v6150
        %v6246 = vunpack.c.l.b16 %v6151
        %v6247 = vunpack.c.l.b16 %v6152
        %v6248 = vunpack.c.l.b16 %v6153
        %v6249 = vunpack.c.l.b16 %v6154
        %v6250 = vunpack.c.l.b16 %v6155
        %v6251 = vunpack.c.l.b16 %v6156
        %v6252 = vunpack.c.l.b16 %v6157
        %v6253 = vunpack.c.l.b16 %v6158
        %v6254 = vunpack.c.l.b16 %v6159
        %v6255 = vunpack.c.l.b16 %v6160
        %v6256 = vunpack.c.l.b16 %v6161
        %v6257 = vunpack.c.l.b16 %v6162
        %v6258 = vunpack.c.l.b16 %v6163
        %v6259 = vunpack.c.l.b16 %v6164
        %v6260 = vpack.c.b16 %v6232, %v6231
        %v6261 = vpack.c.b16 %v6234, %v6233
        %v6262 = vpack.c.b16 %v6236, %v6235
        %v6263 = vpack.c.b16 %v6238, %v6237
        %v6264 = vpack.c.b16 %v6240, %v6239
        %v6265 = vpack.c.b16 %v6242, %v6241
        %v6266 = vpack.c.b16 %v6244, %v6243
        %v6267 = vpack.c.b16 %v6246, %v6245
        %v6268 = vpack.c.b16 %v6248, %v6247
        %v6269 = vpack.c.b16 %v6250, %v6249
        %v6270 = vpack.c.b16 %v6252, %v6251
        %v6271 = vpack.c.b16 %v6254, %v6253
        %v6272 = vpack.c.b16 %v6256, %v6255
        %v6273 = vpack.c.b16 %v6258, %v6257
        %v6274 = vpack.c.b16 %v6259, %v6259
        %v6276 = vshrl.u32 %v6260, 16
        %v6278 = vshll.u32 %v6260, 16
        %v6280 = vrot.slane %v6278, 1
        %v6281 = vor.u32 %v6276, %v6280
        %v6283 = vshll.u32 %v6261, 16
        %v6285 = vrot.slane %v6283, 1
        %v6286 = vsel %vm851, %v6281, %v6285
        %v6287 = vshrl.u32 %v6261, 16
        %v6289 = vor.u32 %v6287, %v6285
        %v6291 = vshll.u32 %v6262, 16
        %v6293 = vrot.slane %v6291, 1
        %v6294 = vsel %vm851, %v6289, %v6293
        %v6295 = vshrl.u32 %v6262, 16
        %v6297 = vor.u32 %v6295, %v6293
        %v6299 = vshll.u32 %v6263, 16
        %v6301 = vrot.slane %v6299, 1
        %v6302 = vsel %vm851, %v6297, %v6301
        %v6303 = vshrl.u32 %v6263, 16
        %v6305 = vor.u32 %v6303, %v6301
        %v6307 = vshll.u32 %v6264, 16
        %v6309 = vrot.slane %v6307, 1
        %v6310 = vsel %vm851, %v6305, %v6309
        %v6311 = vshrl.u32 %v6264, 16
        %v6313 = vor.u32 %v6311, %v6309
        %v6315 = vshll.u32 %v6265, 16
        %v6317 = vrot.slane %v6315, 1
        %v6318 = vsel %vm851, %v6313, %v6317
        %v6319 = vshrl.u32 %v6265, 16
        %v6321 = vor.u32 %v6319, %v6317
        %v6323 = vshll.u32 %v6266, 16
        %v6325 = vrot.slane %v6323, 1
        %v6326 = vsel %vm851, %v6321, %v6325
        %v6327 = vshrl.u32 %v6266, 16
        %v6329 = vor.u32 %v6327, %v6325
        %v6331 = vshll.u32 %v6267, 16
        %v6333 = vrot.slane %v6331, 1
        %v6334 = vsel %vm851, %v6329, %v6333
        %v6335 = vshrl.u32 %v6267, 16
        %v6337 = vor.u32 %v6335, %v6333
        %v6339 = vshll.u32 %v6268, 16
        %v6341 = vrot.slane %v6339, 1
        %v6342 = vsel %vm851, %v6337, %v6341
        %v6343 = vshrl.u32 %v6268, 16
        %v6345 = vor.u32 %v6343, %v6341
        %v6347 = vshll.u32 %v6269, 16
        %v6349 = vrot.slane %v6347, 1
        %v6350 = vsel %vm851, %v6345, %v6349
        %v6351 = vshrl.u32 %v6269, 16
        %v6353 = vor.u32 %v6351, %v6349
        %v6355 = vshll.u32 %v6270, 16
        %v6357 = vrot.slane %v6355, 1
        %v6358 = vsel %vm851, %v6353, %v6357
        %v6359 = vshrl.u32 %v6270, 16
        %v6361 = vor.u32 %v6359, %v6357
        %v6363 = vshll.u32 %v6271, 16
        %v6365 = vrot.slane %v6363, 1
        %v6366 = vsel %vm851, %v6361, %v6365
        %v6367 = vshrl.u32 %v6271, 16
        %v6369 = vor.u32 %v6367, %v6365
        %v6371 = vshll.u32 %v6272, 16
        %v6373 = vrot.slane %v6371, 1
        %v6374 = vsel %vm851, %v6369, %v6373
        %v6375 = vshrl.u32 %v6272, 16
        %v6377 = vor.u32 %v6375, %v6373
        %v6379 = vshll.u32 %v6273, 16
        %v6381 = vrot.slane %v6379, 1
        %v6382 = vsel %vm851, %v6377, %v6381
        %v6383 = vshrl.u32 %v6273, 16
        %v6385 = vor.u32 %v6383, %v6381
        %v6387 = vshll.u32 %v6274, 16
        %v6389 = vrot.slane %v6387, 1
        %v6390 = vsel %vm851, %v6385, %v6389
        %v6399 = vunpack.c.l.b16 %v6166
        %v6400 = vunpack.c.l.b16 %v6167
        %v6401 = vunpack.c.l.b16 %v6168
        %v6402 = vunpack.c.l.b16 %v6169
        %v6403 = vunpack.c.l.b16 %v6170
        %v6404 = vunpack.c.l.b16 %v6171
        %v6405 = vunpack.c.l.b16 %v6172
        %v6406 = vunpack.c.l.b16 %v6173
        %v6407 = vpack.c.b16 %v6400, %v6399
        %v6408 = vpack.c.b16 %v6402, %v6401
        %v6409 = vpack.c.b16 %v6404, %v6403
        %v6410 = vpack.c.b16 %v6406, %v6405
        %v6416 = vsel %vm468, %v6286, 0
        %v6419 = vsel %vm468, %v6294, 0
        %v6422 = vsel %vm468, %v6302, 0
        %v6425 = vsel %vm468, %v6310, 0
        %v6428 = vsel %vm468, %v6318, 0
        %v6431 = vsel %vm468, %v6326, 0
        %v6434 = vsel %vm468, %v6334, 0
        %v6437 = vsel %vm468, %v6342, 0
        %v6440 = vsel %vm468, %v6350, 0
        %v6443 = vsel %vm468, %v6358, 0
        %v6446 = vsel %vm468, %v6366, 0
        %v6449 = vsel %vm468, %v6374, 0
        %v6452 = vsel %vm468, %v6382, 0
        %v6455 = vsel %vm468, %v6390, 0
        %6457 = vmatprep.subr.bf16.mxu0 0
        %6458 = vmatpush1.bf16.msra.mxu0 %v6407
        %6459 = vmatprep.subr.bf16.mxu0 0
        %6460 = vmatpush1.bf16.msra.mxu0 %v6408
        %6461 = vmatprep.subr.bf16.mxu0 0
        %6462 = vmatpush1.bf16.msra.mxu0 %v6409
        %6463 = vmatprep.subr.bf16.mxu0 0
        %6464 = vmatpush1.bf16.msra.mxu0 %v6410
        %6465 = vmatprep.subr.bf16.mxu0 0
        %6466 = vmatpush1.bf16.msra.mxu0 0
        %6467 = vmatprep.subr.bf16.mxu0 0
        %6468 = vmatpush1.bf16.msra.mxu0 0
        %6469 = vmatprep.subr.bf16.mxu0 0
        %6470 = vmatpush1.bf16.msra.mxu0 0
        %6471 = vmatprep.subr.bf16.mxu0 0
        %6472 = vmatpush1.bf16.msra.mxu0 0
        %6473 = vmatprep.subr.bf16.mxu0 0
        %6474 = vmatpush1.bf16.msra.mxu0 0
        %6475 = vmatprep.subr.bf16.mxu0 0
        %6476 = vmatpush1.bf16.msra.mxu0 0
        %6477 = vmatprep.subr.bf16.mxu0 0
        %6478 = vmatpush1.bf16.msra.mxu0 0
        %6479 = vmatprep.subr.bf16.mxu0 0
        %6480 = vmatpush1.bf16.msra.mxu0 0
        %6481 = vmatprep.subr.bf16.mxu0 0
        %6482 = vmatpush1.bf16.msra.mxu0 0
        %6483 = vmatprep.subr.bf16.mxu0 0
        %6484 = vmatpush1.bf16.msra.mxu0 0
        %6485 = vmatprep.subr.bf16.mxu0 0
        %6486 = vmatpush1.bf16.msra.mxu0 0
        %6487 = vmatprep.subr.bf16.mxu0 0
        %6488 = vmatpush1.bf16.msra.mxu0 0
        %6489 = vmatprep.mubr.bf16.mxu0 0
        %6490 = vmatmul.mubr.bf16.gmra.mrb[0].mxu0 %v6416
        %v6491 = vpop.f32.mrb[0].mxu0
        %v6492 = vadd.f32 0.0, %v6491
        %v6493 = vpop.f32.mrb[0].mxu0
        %v6494 = vpop.f32.mrb[0].mxu0
        %v6495 = vadd.f32 0.0, %v6494
        %v6496 = vpop.f32.mrb[0].mxu0
        %6497 = vmatprep.mubr.bf16.mxu0 0
        %6498 = vmatmul.mubr.bf16.gmra.mrb[0].mxu0 %v6419
        %v6499 = vpop.f32.mrb[0].mxu0
        %v6500 = vadd.f32 0.0, %v6499
        %v6501 = vpop.f32.mrb[0].mxu0
        %v6502 = vpop.f32.mrb[0].mxu0
        %v6503 = vadd.f32 0.0, %v6502
        %v6504 = vpop.f32.mrb[0].mxu0
        %6505 = vmatprep.mubr.bf16.mxu0 0
        %6506 = vmatmul.mubr.bf16.gmra.mrb[0].mxu0 %v6422
        %v6507 = vpop.f32.mrb[0].mxu0
        %v6508 = vadd.f32 0.0, %v6507
        %v6509 = vpop.f32.mrb[0].mxu0
        %v6510 = vpop.f32.mrb[0].mxu0
        %v6511 = vadd.f32 0.0, %v6510
        %v6512 = vpop.f32.mrb[0].mxu0
        %6513 = vmatprep.mubr.bf16.mxu0 0
        %6514 = vmatmul.mubr.bf16.gmra.mrb[0].mxu0 %v6425
        %v6515 = vpop.f32.mrb[0].mxu0
        %v6516 = vadd.f32 0.0, %v6515
        %v6517 = vpop.f32.mrb[0].mxu0
        %v6518 = vpop.f32.mrb[0].mxu0
        %v6519 = vadd.f32 0.0, %v6518
        %v6520 = vpop.f32.mrb[0].mxu0
        %6521 = vmatprep.mubr.bf16.mxu0 0
        %6522 = vmatmul.mubr.bf16.gmra.mrb[0].mxu0 %v6428
        %v6523 = vpop.f32.mrb[0].mxu0
        %v6524 = vadd.f32 0.0, %v6523
        %v6525 = vpop.f32.mrb[0].mxu0
        %v6526 = vpop.f32.mrb[0].mxu0
        %v6527 = vadd.f32 0.0, %v6526
        %v6528 = vpop.f32.mrb[0].mxu0
        %6529 = vmatprep.mubr.bf16.mxu0 0
        %6530 = vmatmul.mubr.bf16.gmra.mrb[0].mxu0 %v6431
        %v6531 = vpop.f32.mrb[0].mxu0
        %v6532 = vadd.f32 0.0, %v6531
        %v6533 = vpop.f32.mrb[0].mxu0
        %v6534 = vpop.f32.mrb[0].mxu0
        %v6535 = vadd.f32 0.0, %v6534
        %v6536 = vpop.f32.mrb[0].mxu0
        %6537 = vmatprep.mubr.bf16.mxu0 0
        %6538 = vmatmul.mubr.bf16.gmra.mrb[0].mxu0 %v6434
        %v6539 = vpop.f32.mrb[0].mxu0
        %v6540 = vadd.f32 0.0, %v6539
        %v6541 = vpop.f32.mrb[0].mxu0
        %v6542 = vpop.f32.mrb[0].mxu0
        %v6543 = vadd.f32 0.0, %v6542
        %v6544 = vpop.f32.mrb[0].mxu0
        %6545 = vmatprep.mubr.bf16.mxu0 0
        %6546 = vmatmul.mubr.bf16.gmra.mrb[0].mxu0 %v6437
        %v6547 = vpop.f32.mrb[0].mxu0
        %v6548 = vadd.f32 0.0, %v6547
        %v6549 = vpop.f32.mrb[0].mxu0
        %v6550 = vpop.f32.mrb[0].mxu0
        %v6551 = vadd.f32 0.0, %v6550
        %v6552 = vpop.f32.mrb[0].mxu0
        %6553 = vmatprep.mubr.bf16.mxu0 0
        %6554 = vmatmul.mubr.bf16.gmra.mrb[0].mxu0 %v6440
        %v6555 = vpop.f32.mrb[0].mxu0
        %v6556 = vadd.f32 0.0, %v6555
        %v6557 = vpop.f32.mrb[0].mxu0
        %v6558 = vpop.f32.mrb[0].mxu0
        %v6559 = vadd.f32 0.0, %v6558
        %v6560 = vpop.f32.mrb[0].mxu0
        %6561 = vmatprep.mubr.bf16.mxu0 0
        %6562 = vmatmul.mubr.bf16.gmra.mrb[0].mxu0 %v6443
        %v6563 = vpop.f32.mrb[0].mxu0
        %v6564 = vadd.f32 0.0, %v6563
        %v6565 = vpop.f32.mrb[0].mxu0
        %v6566 = vpop.f32.mrb[0].mxu0
        %v6567 = vadd.f32 0.0, %v6566
        %v6568 = vpop.f32.mrb[0].mxu0
        %6569 = vmatprep.mubr.bf16.mxu0 0
        %6570 = vmatmul.mubr.bf16.gmra.mrb[0].mxu0 %v6446
        %v6571 = vpop.f32.mrb[0].mxu0
        %v6572 = vadd.f32 0.0, %v6571
        %v6573 = vpop.f32.mrb[0].mxu0
        %v6574 = vpop.f32.mrb[0].mxu0
        %v6575 = vadd.f32 0.0, %v6574
        %v6576 = vpop.f32.mrb[0].mxu0
        %6577 = vmatprep.mubr.bf16.mxu0 0
        %6578 = vmatmul.mubr.bf16.gmra.mrb[0].mxu0 %v6449
        %v6579 = vpop.f32.mrb[0].mxu0
        %v6580 = vadd.f32 0.0, %v6579
        %v6581 = vpop.f32.mrb[0].mxu0
        %v6582 = vpop.f32.mrb[0].mxu0
        %v6583 = vadd.f32 0.0, %v6582
        %v6584 = vpop.f32.mrb[0].mxu0
        %6585 = vmatprep.mubr.bf16.mxu0 0
        %6586 = vmatmul.mubr.bf16.gmra.mrb[0].mxu0 %v6452
        %v6587 = vpop.f32.mrb[0].mxu0
        %v6588 = vadd.f32 0.0, %v6587
        %v6589 = vpop.f32.mrb[0].mxu0
        %v6590 = vpop.f32.mrb[0].mxu0
        %v6591 = vadd.f32 0.0, %v6590
        %v6592 = vpop.f32.mrb[0].mxu0
        %6593 = vmatprep.mubr.bf16.mxu0 0
        %6594 = vmatmul.mubr.bf16.gmra.mrb[0].mxu0 %v6455
        %v6595 = vpop.f32.mrb[0].mxu0
        %v6596 = vadd.f32 0.0, %v6595
        %v6597 = vpop.f32.mrb[0].mxu0
        %v6598 = vpop.f32.mrb[0].mxu0
        %v6599 = vadd.f32 0.0, %v6598
        %v6600 = vpop.f32.mrb[0].mxu0
        %6601 = vdwg.mxu0
        %v6602 = vadd.f32 %v6174, %v6492
        %v6603 = vadd.f32 %v6175, %v6495
        %v6604 = vadd.f32 %v6176, %v6500
        %v6605 = vadd.f32 %v6177, %v6503
        %v6606 = vadd.f32 %v6178, %v6508
        %v6607 = vadd.f32 %v6179, %v6511
        %v6608 = vadd.f32 %v6180, %v6516
        %v6609 = vadd.f32 %v6181, %v6519
        %v6610 = vadd.f32 %v6182, %v6524
        %v6611 = vadd.f32 %v6183, %v6527
        %v6612 = vadd.f32 %v6184, %v6532
        %v6613 = vadd.f32 %v6185, %v6535
        %v6614 = vadd.f32 %v6186, %v6540
        %v6615 = vadd.f32 %v6187, %v6543
        %v6616 = vadd.f32 %v6188, %v6548
        %v6617 = vadd.f32 %v6189, %v6551
        %v6618 = vadd.f32 %v6190, %v6556
        %v6619 = vadd.f32 %v6191, %v6559
        %v6620 = vadd.f32 %v6192, %v6564
        %v6621 = vadd.f32 %v6193, %v6567
        %v6622 = vadd.f32 %v6194, %v6572
        %v6623 = vadd.f32 %v6195, %v6575
        %v6624 = vadd.f32 %v6196, %v6580
        %v6625 = vadd.f32 %v6197, %v6583
        %v6626 = vadd.f32 %v6198, %v6588
        %v6627 = vadd.f32 %v6199, %v6591
        %v6628 = vadd.f32 %v6200, %v6596
        %v6629 = vadd.f32 %v6201, %v6599
        %6630 = vst [vmem:[%s217 + $0x8] sm:$0xff] %v6602
        %6631 = vst [vmem:[%s217 + $0x18] sm:$0xff] %v6603
        %6632 = vst [vmem:[%s217 + $0x28] sm:$0xff] %v6604
        %6633 = vst [vmem:[%s217 + $0x38] sm:$0xff] %v6605
        %6634 = vst [vmem:[%s217 + $0x48] sm:$0xff] %v6606
        %6635 = vst [vmem:[%s217 + $0x58] sm:$0xff] %v6607
        %6636 = vst [vmem:[%s217 + $0x68] sm:$0xff] %v6608
        %6637 = vst [vmem:[%s217 + $0x78] sm:$0xff] %v6609
        %6638 = vst [vmem:[%s217 + $0x88] sm:$0xff] %v6610
        %6639 = vst [vmem:[%s217 + $0x98] sm:$0xff] %v6611
        %6640 = vst [vmem:[%s217 + $0xa8] sm:$0xff] %v6612
        %6641 = vst [vmem:[%s217 + $0xb8] sm:$0xff] %v6613
        %6642 = vst [vmem:[%s217 + $0xc8] sm:$0xff] %v6614
        %6643 = vst [vmem:[%s217 + $0xd8] sm:$0xff] %v6615
        %6644 = vst [vmem:[%s217 + $0xe8] sm:$0xff] %v6616
        %6645 = vst [vmem:[%s217 + $0xf8] sm:$0xff] %v6617
        %6646 = vst [vmem:[%s217 + $0x108] sm:$0xff] %v6618
        %6647 = vst [vmem:[%s217 + $0x118] sm:$0xff] %v6619
        %6648 = vst [vmem:[%s217 + $0x128] sm:$0xff] %v6620
        %6649 = vst [vmem:[%s217 + $0x138] sm:$0xff] %v6621
        %6650 = vst [vmem:[%s217 + $0x148] sm:$0xff] %v6622
        %6651 = vst [vmem:[%s217 + $0x158] sm:$0xff] %v6623
        %6652 = vst [vmem:[%s217 + $0x168] sm:$0xff] %v6624
        %6653 = vst [vmem:[%s217 + $0x178] sm:$0xff] %v6625
        %6654 = vst [vmem:[%s217 + $0x188] sm:$0xff] %v6626
        %6655 = vst [vmem:[%s217 + $0x198] sm:$0xff] %v6627
        %6656 = vst [vmem:[%s217 + $0x1a8] sm:$0xff] %v6628
        %6657 = vst [vmem:[%s217 + $0x1b8] sm:$0xff] %v6629
        %v6658 = vld [vmem:[%s4374 + $0x8] sm:$0xe]
        %v6659 = vld [vmem:[%s4374 + $0xc] sm:$0xf]
        %v6660 = vld [vmem:[%s4374 + $0x10] sm:$0xf]
        %v6661 = vld [vmem:[%s4374 + $0x14] sm:$0xf]
        %v6662 = vld [vmem:[%s4374 + $0x18] sm:$0xf]
        %v6663 = vld [vmem:[%s4374 + $0x1c] sm:$0xf]
        %v6664 = vld [vmem:[%s4374 + $0x20] sm:$0xf]
        %v6665 = vld [vmem:[%s4374 + $0x24] sm:$0xf]
        %v6666 = vld [vmem:[%s4374 + $0x28] sm:$0xf]
        %v6667 = vld [vmem:[%s4374 + $0x2c] sm:$0xf]
        %v6668 = vld [vmem:[%s4374 + $0x30] sm:$0xf]
        %v6669 = vld [vmem:[%s4374 + $0x34] sm:$0xf]
        %v6670 = vld [vmem:[%s4374 + $0x38] sm:$0xf]
        %v6671 = vld [vmem:[%s4374 + $0x3c] sm:$0xf]
        %v6672 = vld [vmem:[%s4374 + $0x40] sm:$0xf]
        %v6673 = vld [vmem:[%s4374 + $0x44] sm:$0xf]
        %v6674 = vld [vmem:[%s4374 + $0x48] sm:$0xf]
        %v6675 = vld [vmem:[%s4374 + $0x4c] sm:$0xf]
        %v6676 = vld [vmem:[%s4374 + $0x50] sm:$0xf]
        %v6677 = vld [vmem:[%s4374 + $0x54] sm:$0xf]
        %v6678 = vld [vmem:[%s4374 + $0x58] sm:$0xf]
        %v6679 = vld [vmem:[%s4374 + $0x5c] sm:$0xf]
        %v6680 = vld [vmem:[%s4374 + $0x60] sm:$0xf]
        %v6681 = vld [vmem:[%s4374 + $0x64] sm:$0xf]
        %v6682 = vld [vmem:[%s4374 + $0x68] sm:$0xf]
        %v6683 = vld [vmem:[%s4374 + $0x6c] sm:$0xf]
        %v6684 = vld [vmem:[%s4374 + $0x70] sm:$0xf]
        %v6685 = vld [vmem:[%s4374 + $0x74] sm:$0xf]
        %v6686 = vld [vmem:[%s4374 + $0x78] sm:$0x1]
        %s6687 = scalar_lea.vmem %s234, 448
        %v6688 = vld [vmem:[%s6687] sm:$0xf]
        %v6689 = vld [vmem:[%s6687 + $0x4] sm:$0xf]
        %v6690 = vld [vmem:[%s6687 + $0x8] sm:$0xf]
        %v6691 = vld [vmem:[%s6687 + $0xc] sm:$0xf]
        %v6692 = vld [vmem:[%s6687 + $0x10] sm:$0xf]
        %v6693 = vld [vmem:[%s6687 + $0x14] sm:$0xf]
        %v6694 = vld [vmem:[%s6687 + $0x18] sm:$0xf]
        %v6695 = vld [vmem:[%s6687 + $0x1c] sm:$0xf]
        %v6696 = vld [vmem:[%s217 + $0x8] sm:$0xff]
        %v6697 = vld [vmem:[%s217 + $0x18] sm:$0xff]
        %v6698 = vld [vmem:[%s217 + $0x28] sm:$0xff]
        %v6699 = vld [vmem:[%s217 + $0x38] sm:$0xff]
        %v6700 = vld [vmem:[%s217 + $0x48] sm:$0xff]
        %v6701 = vld [vmem:[%s217 + $0x58] sm:$0xff]
        %v6702 = vld [vmem:[%s217 + $0x68] sm:$0xff]
        %v6703 = vld [vmem:[%s217 + $0x78] sm:$0xff]
        %v6704 = vld [vmem:[%s217 + $0x88] sm:$0xff]
        %v6705 = vld [vmem:[%s217 + $0x98] sm:$0xff]
        %v6706 = vld [vmem:[%s217 + $0xa8] sm:$0xff]
        %v6707 = vld [vmem:[%s217 + $0xb8] sm:$0xff]
        %v6708 = vld [vmem:[%s217 + $0xc8] sm:$0xff]
        %v6709 = vld [vmem:[%s217 + $0xd8] sm:$0xff]
        %v6710 = vld [vmem:[%s217 + $0xe8] sm:$0xff]
        %v6711 = vld [vmem:[%s217 + $0xf8] sm:$0xff]
        %v6712 = vld [vmem:[%s217 + $0x108] sm:$0xff]
        %v6713 = vld [vmem:[%s217 + $0x118] sm:$0xff]
        %v6714 = vld [vmem:[%s217 + $0x128] sm:$0xff]
        %v6715 = vld [vmem:[%s217 + $0x138] sm:$0xff]
        %v6716 = vld [vmem:[%s217 + $0x148] sm:$0xff]
        %v6717 = vld [vmem:[%s217 + $0x158] sm:$0xff]
        %v6718 = vld [vmem:[%s217 + $0x168] sm:$0xff]
        %v6719 = vld [vmem:[%s217 + $0x178] sm:$0xff]
        %v6720 = vld [vmem:[%s217 + $0x188] sm:$0xff]
        %v6721 = vld [vmem:[%s217 + $0x198] sm:$0xff]
        %v6722 = vld [vmem:[%s217 + $0x1a8] sm:$0xff]
        %v6723 = vld [vmem:[%s217 + $0x1b8] sm:$0xff]
        %v6753 = vunpack.c.l.b16 %v6658
        %v6754 = vunpack.c.l.b16 %v6659
        %v6755 = vunpack.c.l.b16 %v6660
        %v6756 = vunpack.c.l.b16 %v6661
        %v6757 = vunpack.c.l.b16 %v6662
        %v6758 = vunpack.c.l.b16 %v6663
        %v6759 = vunpack.c.l.b16 %v6664
        %v6760 = vunpack.c.l.b16 %v6665
        %v6761 = vunpack.c.l.b16 %v6666
        %v6762 = vunpack.c.l.b16 %v6667
        %v6763 = vunpack.c.l.b16 %v6668
        %v6764 = vunpack.c.l.b16 %v6669
        %v6765 = vunpack.c.l.b16 %v6670
        %v6766 = vunpack.c.l.b16 %v6671
        %v6767 = vunpack.c.l.b16 %v6672
        %v6768 = vunpack.c.l.b16 %v6673
        %v6769 = vunpack.c.l.b16 %v6674
        %v6770 = vunpack.c.l.b16 %v6675
        %v6771 = vunpack.c.l.b16 %v6676
        %v6772 = vunpack.c.l.b16 %v6677
        %v6773 = vunpack.c.l.b16 %v6678
        %v6774 = vunpack.c.l.b16 %v6679
        %v6775 = vunpack.c.l.b16 %v6680
        %v6776 = vunpack.c.l.b16 %v6681
        %v6777 = vunpack.c.l.b16 %v6682
        %v6778 = vunpack.c.l.b16 %v6683
        %v6779 = vunpack.c.l.b16 %v6684
        %v6780 = vunpack.c.l.b16 %v6685
        %v6781 = vunpack.c.l.b16 %v6686
        %v6782 = vpack.c.b16 %v6754, %v6753
        %v6783 = vpack.c.b16 %v6756, %v6755
        %v6784 = vpack.c.b16 %v6758, %v6757
        %v6785 = vpack.c.b16 %v6760, %v6759
        %v6786 = vpack.c.b16 %v6762, %v6761
        %v6787 = vpack.c.b16 %v6764, %v6763
        %v6788 = vpack.c.b16 %v6766, %v6765
        %v6789 = vpack.c.b16 %v6768, %v6767
        %v6790 = vpack.c.b16 %v6770, %v6769
        %v6791 = vpack.c.b16 %v6772, %v6771
        %v6792 = vpack.c.b16 %v6774, %v6773
        %v6793 = vpack.c.b16 %v6776, %v6775
        %v6794 = vpack.c.b16 %v6778, %v6777
        %v6795 = vpack.c.b16 %v6780, %v6779
        %v6796 = vpack.c.b16 %v6781, %v6781
        %v6797 = vrot.slane %v6782, 1
        %v6798 = vrot.slane %v6783, 1
        %v6799 = vsel %vm1374, %v6797, %v6798
        %v6800 = vrot.slane %v6784, 1
        %v6801 = vsel %vm1374, %v6798, %v6800
        %v6802 = vrot.slane %v6785, 1
        %v6803 = vsel %vm1374, %v6800, %v6802
        %v6804 = vrot.slane %v6786, 1
        %v6805 = vsel %vm1374, %v6802, %v6804
        %v6806 = vrot.slane %v6787, 1
        %v6807 = vsel %vm1374, %v6804, %v6806
        %v6808 = vrot.slane %v6788, 1
        %v6809 = vsel %vm1374, %v6806, %v6808
        %v6810 = vrot.slane %v6789, 1
        %v6811 = vsel %vm1374, %v6808, %v6810
        %v6812 = vrot.slane %v6790, 1
        %v6813 = vsel %vm1374, %v6810, %v6812
        %v6814 = vrot.slane %v6791, 1
        %v6815 = vsel %vm1374, %v6812, %v6814
        %v6816 = vrot.slane %v6792, 1
        %v6817 = vsel %vm1374, %v6814, %v6816
        %v6818 = vrot.slane %v6793, 1
        %v6819 = vsel %vm1374, %v6816, %v6818
        %v6820 = vrot.slane %v6794, 1
        %v6821 = vsel %vm1374, %v6818, %v6820
        %v6822 = vrot.slane %v6795, 1
        %v6823 = vsel %vm1374, %v6820, %v6822
        %v6824 = vrot.slane %v6796, 1
        %v6825 = vsel %vm1374, %v6822, %v6824
        %v6834 = vunpack.c.l.b16 %v6688
        %v6835 = vunpack.c.l.b16 %v6689
        %v6836 = vunpack.c.l.b16 %v6690
        %v6837 = vunpack.c.l.b16 %v6691
        %v6838 = vunpack.c.l.b16 %v6692
        %v6839 = vunpack.c.l.b16 %v6693
        %v6840 = vunpack.c.l.b16 %v6694
        %v6841 = vunpack.c.l.b16 %v6695
        %v6842 = vpack.c.b16 %v6835, %v6834
        %v6843 = vpack.c.b16 %v6837, %v6836
        %v6844 = vpack.c.b16 %v6839, %v6838
        %v6845 = vpack.c.b16 %v6841, %v6840
        %v6851 = vsel %vm468, %v6799, 0
        %v6854 = vsel %vm468, %v6801, 0
        %v6857 = vsel %vm468, %v6803, 0
        %v6860 = vsel %vm468, %v6805, 0
        %v6863 = vsel %vm468, %v6807, 0
        %v6866 = vsel %vm468, %v6809, 0
        %v6869 = vsel %vm468, %v6811, 0
        %v6872 = vsel %vm468, %v6813, 0
        %v6875 = vsel %vm468, %v6815, 0
        %v6878 = vsel %vm468, %v6817, 0
        %v6881 = vsel %vm468, %v6819, 0
        %v6884 = vsel %vm468, %v6821, 0
        %v6887 = vsel %vm468, %v6823, 0
        %v6890 = vsel %vm468, %v6825, 0
        %6892 = vmatprep.subr.bf16.mxu0 0
        %6893 = vmatpush1.bf16.msra.mxu0 %v6842
        %6894 = vmatprep.subr.bf16.mxu0 0
        %6895 = vmatpush1.bf16.msra.mxu0 %v6843
        %6896 = vmatprep.subr.bf16.mxu0 0
        %6897 = vmatpush1.bf16.msra.mxu0 %v6844
        %6898 = vmatprep.subr.bf16.mxu0 0
        %6899 = vmatpush1.bf16.msra.mxu0 %v6845
        %6900 = vmatprep.subr.bf16.mxu0 0
        %6901 = vmatpush1.bf16.msra.mxu0 0
        %6902 = vmatprep.subr.bf16.mxu0 0
        %6903 = vmatpush1.bf16.msra.mxu0 0
        %6904 = vmatprep.subr.bf16.mxu0 0
        %6905 = vmatpush1.bf16.msra.mxu0 0
        %6906 = vmatprep.subr.bf16.mxu0 0
        %6907 = vmatpush1.bf16.msra.mxu0 0
        %6908 = vmatprep.subr.bf16.mxu0 0
        %6909 = vmatpush1.bf16.msra.mxu0 0
        %6910 = vmatprep.subr.bf16.mxu0 0
        %6911 = vmatpush1.bf16.msra.mxu0 0
        %6912 = vmatprep.subr.bf16.mxu0 0
        %6913 = vmatpush1.bf16.msra.mxu0 0
        %6914 = vmatprep.subr.bf16.mxu0 0
        %6915 = vmatpush1.bf16.msra.mxu0 0
        %6916 = vmatprep.subr.bf16.mxu0 0
        %6917 = vmatpush1.bf16.msra.mxu0 0
        %6918 = vmatprep.subr.bf16.mxu0 0
        %6919 = vmatpush1.bf16.msra.mxu0 0
        %6920 = vmatprep.subr.bf16.mxu0 0
        %6921 = vmatpush1.bf16.msra.mxu0 0
        %6922 = vmatprep.subr.bf16.mxu0 0
        %6923 = vmatpush1.bf16.msra.mxu0 0
        %6924 = vmatprep.mubr.bf16.mxu0 0
        %6925 = vmatmul.mubr.bf16.gmra.mrb[0].mxu0 %v6851
        %v6926 = vpop.f32.mrb[0].mxu0
        %v6927 = vadd.f32 0.0, %v6926
        %v6928 = vpop.f32.mrb[0].mxu0
        %v6929 = vpop.f32.mrb[0].mxu0
        %v6930 = vadd.f32 0.0, %v6929
        %v6931 = vpop.f32.mrb[0].mxu0
        %6932 = vmatprep.mubr.bf16.mxu0 0
        %6933 = vmatmul.mubr.bf16.gmra.mrb[0].mxu0 %v6854
        %v6934 = vpop.f32.mrb[0].mxu0
        %v6935 = vadd.f32 0.0, %v6934
        %v6936 = vpop.f32.mrb[0].mxu0
        %v6937 = vpop.f32.mrb[0].mxu0
        %v6938 = vadd.f32 0.0, %v6937
        %v6939 = vpop.f32.mrb[0].mxu0
        %6940 = vmatprep.mubr.bf16.mxu0 0
        %6941 = vmatmul.mubr.bf16.gmra.mrb[0].mxu0 %v6857
        %v6942 = vpop.f32.mrb[0].mxu0
        %v6943 = vadd.f32 0.0, %v6942
        %v6944 = vpop.f32.mrb[0].mxu0
        %v6945 = vpop.f32.mrb[0].mxu0
        %v6946 = vadd.f32 0.0, %v6945
        %v6947 = vpop.f32.mrb[0].mxu0
        %6948 = vmatprep.mubr.bf16.mxu0 0
        %6949 = vmatmul.mubr.bf16.gmra.mrb[0].mxu0 %v6860
        %v6950 = vpop.f32.mrb[0].mxu0
        %v6951 = vadd.f32 0.0, %v6950
        %v6952 = vpop.f32.mrb[0].mxu0
        %v6953 = vpop.f32.mrb[0].mxu0
        %v6954 = vadd.f32 0.0, %v6953
        %v6955 = vpop.f32.mrb[0].mxu0
        %6956 = vmatprep.mubr.bf16.mxu0 0
        %6957 = vmatmul.mubr.bf16.gmra.mrb[0].mxu0 %v6863
        %v6958 = vpop.f32.mrb[0].mxu0
        %v6959 = vadd.f32 0.0, %v6958
        %v6960 = vpop.f32.mrb[0].mxu0
        %v6961 = vpop.f32.mrb[0].mxu0
        %v6962 = vadd.f32 0.0, %v6961
        %v6963 = vpop.f32.mrb[0].mxu0
        %6964 = vmatprep.mubr.bf16.mxu0 0
        %6965 = vmatmul.mubr.bf16.gmra.mrb[0].mxu0 %v6866
        %v6966 = vpop.f32.mrb[0].mxu0
        %v6967 = vadd.f32 0.0, %v6966
        %v6968 = vpop.f32.mrb[0].mxu0
        %v6969 = vpop.f32.mrb[0].mxu0
        %v6970 = vadd.f32 0.0, %v6969
        %v6971 = vpop.f32.mrb[0].mxu0
        %6972 = vmatprep.mubr.bf16.mxu0 0
        %6973 = vmatmul.mubr.bf16.gmra.mrb[0].mxu0 %v6869
        %v6974 = vpop.f32.mrb[0].mxu0
        %v6975 = vadd.f32 0.0, %v6974
        %v6976 = vpop.f32.mrb[0].mxu0
        %v6977 = vpop.f32.mrb[0].mxu0
        %v6978 = vadd.f32 0.0, %v6977
        %v6979 = vpop.f32.mrb[0].mxu0
        %6980 = vmatprep.mubr.bf16.mxu0 0
        %6981 = vmatmul.mubr.bf16.gmra.mrb[0].mxu0 %v6872
        %v6982 = vpop.f32.mrb[0].mxu0
        %v6983 = vadd.f32 0.0, %v6982
        %v6984 = vpop.f32.mrb[0].mxu0
        %v6985 = vpop.f32.mrb[0].mxu0
        %v6986 = vadd.f32 0.0, %v6985
        %v6987 = vpop.f32.mrb[0].mxu0
        %6988 = vmatprep.mubr.bf16.mxu0 0
        %6989 = vmatmul.mubr.bf16.gmra.mrb[0].mxu0 %v6875
        %v6990 = vpop.f32.mrb[0].mxu0
        %v6991 = vadd.f32 0.0, %v6990
        %v6992 = vpop.f32.mrb[0].mxu0
        %v6993 = vpop.f32.mrb[0].mxu0
        %v6994 = vadd.f32 0.0, %v6993
        %v6995 = vpop.f32.mrb[0].mxu0
        %6996 = vmatprep.mubr.bf16.mxu0 0
        %6997 = vmatmul.mubr.bf16.gmra.mrb[0].mxu0 %v6878
        %v6998 = vpop.f32.mrb[0].mxu0
        %v6999 = vadd.f32 0.0, %v6998
        %v7000 = vpop.f32.mrb[0].mxu0
        %v7001 = vpop.f32.mrb[0].mxu0
        %v7002 = vadd.f32 0.0, %v7001
        %v7003 = vpop.f32.mrb[0].mxu0
        %7004 = vmatprep.mubr.bf16.mxu0 0
        %7005 = vmatmul.mubr.bf16.gmra.mrb[0].mxu0 %v6881
        %v7006 = vpop.f32.mrb[0].mxu0
        %v7007 = vadd.f32 0.0, %v7006
        %v7008 = vpop.f32.mrb[0].mxu0
        %v7009 = vpop.f32.mrb[0].mxu0
        %v7010 = vadd.f32 0.0, %v7009
        %v7011 = vpop.f32.mrb[0].mxu0
        %7012 = vmatprep.mubr.bf16.mxu0 0
        %7013 = vmatmul.mubr.bf16.gmra.mrb[0].mxu0 %v6884
        %v7014 = vpop.f32.mrb[0].mxu0
        %v7015 = vadd.f32 0.0, %v7014
        %v7016 = vpop.f32.mrb[0].mxu0
        %v7017 = vpop.f32.mrb[0].mxu0
        %v7018 = vadd.f32 0.0, %v7017
        %v7019 = vpop.f32.mrb[0].mxu0
        %7020 = vmatprep.mubr.bf16.mxu0 0
        %7021 = vmatmul.mubr.bf16.gmra.mrb[0].mxu0 %v6887
        %v7022 = vpop.f32.mrb[0].mxu0
        %v7023 = vadd.f32 0.0, %v7022
        %v7024 = vpop.f32.mrb[0].mxu0
        %v7025 = vpop.f32.mrb[0].mxu0
        %v7026 = vadd.f32 0.0, %v7025
        %v7027 = vpop.f32.mrb[0].mxu0
        %7028 = vmatprep.mubr.bf16.mxu0 0
        %7029 = vmatmul.mubr.bf16.gmra.mrb[0].mxu0 %v6890
        %v7030 = vpop.f32.mrb[0].mxu0
        %v7031 = vadd.f32 0.0, %v7030
        %v7032 = vpop.f32.mrb[0].mxu0
        %v7033 = vpop.f32.mrb[0].mxu0
        %v7034 = vadd.f32 0.0, %v7033
        %v7035 = vpop.f32.mrb[0].mxu0
        %7036 = vdwg.mxu0
        %v7037 = vadd.f32 %v6696, %v6927
        %v7038 = vadd.f32 %v6697, %v6930
        %v7039 = vadd.f32 %v6698, %v6935
        %v7040 = vadd.f32 %v6699, %v6938
        %v7041 = vadd.f32 %v6700, %v6943
        %v7042 = vadd.f32 %v6701, %v6946
        %v7043 = vadd.f32 %v6702, %v6951
        %v7044 = vadd.f32 %v6703, %v6954
        %v7045 = vadd.f32 %v6704, %v6959
        %v7046 = vadd.f32 %v6705, %v6962
        %v7047 = vadd.f32 %v6706, %v6967
        %v7048 = vadd.f32 %v6707, %v6970
        %v7049 = vadd.f32 %v6708, %v6975
        %v7050 = vadd.f32 %v6709, %v6978
        %v7051 = vadd.f32 %v6710, %v6983
        %v7052 = vadd.f32 %v6711, %v6986
        %v7053 = vadd.f32 %v6712, %v6991
        %v7054 = vadd.f32 %v6713, %v6994
        %v7055 = vadd.f32 %v6714, %v6999
        %v7056 = vadd.f32 %v6715, %v7002
        %v7057 = vadd.f32 %v6716, %v7007
        %v7058 = vadd.f32 %v6717, %v7010
        %v7059 = vadd.f32 %v6718, %v7015
        %v7060 = vadd.f32 %v6719, %v7018
        %v7061 = vadd.f32 %v6720, %v7023
        %v7062 = vadd.f32 %v6721, %v7026
        %v7063 = vadd.f32 %v6722, %v7031
        %v7064 = vadd.f32 %v6723, %v7034
        %7065 = vst [vmem:[%s217 + $0x8] sm:$0xff] %v7037
        %7066 = vst [vmem:[%s217 + $0x18] sm:$0xff] %v7038
        %7067 = vst [vmem:[%s217 + $0x28] sm:$0xff] %v7039
        %7068 = vst [vmem:[%s217 + $0x38] sm:$0xff] %v7040
        %7069 = vst [vmem:[%s217 + $0x48] sm:$0xff] %v7041
        %7070 = vst [vmem:[%s217 + $0x58] sm:$0xff] %v7042
        %7071 = vst [vmem:[%s217 + $0x68] sm:$0xff] %v7043
        %7072 = vst [vmem:[%s217 + $0x78] sm:$0xff] %v7044
        %7073 = vst [vmem:[%s217 + $0x88] sm:$0xff] %v7045
        %7074 = vst [vmem:[%s217 + $0x98] sm:$0xff] %v7046
        %7075 = vst [vmem:[%s217 + $0xa8] sm:$0xff] %v7047
        %7076 = vst [vmem:[%s217 + $0xb8] sm:$0xff] %v7048
        %7077 = vst [vmem:[%s217 + $0xc8] sm:$0xff] %v7049
        %7078 = vst [vmem:[%s217 + $0xd8] sm:$0xff] %v7050
        %7079 = vst [vmem:[%s217 + $0xe8] sm:$0xff] %v7051
        %7080 = vst [vmem:[%s217 + $0xf8] sm:$0xff] %v7052
        %7081 = vst [vmem:[%s217 + $0x108] sm:$0xff] %v7053
        %7082 = vst [vmem:[%s217 + $0x118] sm:$0xff] %v7054
        %7083 = vst [vmem:[%s217 + $0x128] sm:$0xff] %v7055
        %7084 = vst [vmem:[%s217 + $0x138] sm:$0xff] %v7056
        %7085 = vst [vmem:[%s217 + $0x148] sm:$0xff] %v7057
        %7086 = vst [vmem:[%s217 + $0x158] sm:$0xff] %v7058
        %7087 = vst [vmem:[%s217 + $0x168] sm:$0xff] %v7059
        %7088 = vst [vmem:[%s217 + $0x178] sm:$0xff] %v7060
        %7089 = vst [vmem:[%s217 + $0x188] sm:$0xff] %v7061
        %7090 = vst [vmem:[%s217 + $0x198] sm:$0xff] %v7062
        %7091 = vst [vmem:[%s217 + $0x1a8] sm:$0xff] %v7063
        %7092 = vst [vmem:[%s217 + $0x1b8] sm:$0xff] %v7064
        %v7093 = vld [vmem:[%s4374 + $0x10] sm:$0xf]
        %v7094 = vld [vmem:[%s4374 + $0x14] sm:$0xf]
        %v7095 = vld [vmem:[%s4374 + $0x18] sm:$0xf]
        %v7096 = vld [vmem:[%s4374 + $0x1c] sm:$0xf]
        %v7097 = vld [vmem:[%s4374 + $0x20] sm:$0xf]
        %v7098 = vld [vmem:[%s4374 + $0x24] sm:$0xf]
        %v7099 = vld [vmem:[%s4374 + $0x28] sm:$0xf]
        %v7100 = vld [vmem:[%s4374 + $0x2c] sm:$0xf]
        %v7101 = vld [vmem:[%s4374 + $0x30] sm:$0xf]
        %v7102 = vld [vmem:[%s4374 + $0x34] sm:$0xf]
        %v7103 = vld [vmem:[%s4374 + $0x38] sm:$0xf]
        %v7104 = vld [vmem:[%s4374 + $0x3c] sm:$0xf]
        %v7105 = vld [vmem:[%s4374 + $0x40] sm:$0xf]
        %v7106 = vld [vmem:[%s4374 + $0x44] sm:$0xf]
        %v7107 = vld [vmem:[%s4374 + $0x48] sm:$0xf]
        %v7108 = vld [vmem:[%s4374 + $0x4c] sm:$0xf]
        %v7109 = vld [vmem:[%s4374 + $0x50] sm:$0xf]
        %v7110 = vld [vmem:[%s4374 + $0x54] sm:$0xf]
        %v7111 = vld [vmem:[%s4374 + $0x58] sm:$0xf]
        %v7112 = vld [vmem:[%s4374 + $0x5c] sm:$0xf]
        %v7113 = vld [vmem:[%s4374 + $0x60] sm:$0xf]
        %v7114 = vld [vmem:[%s4374 + $0x64] sm:$0xf]
        %v7115 = vld [vmem:[%s4374 + $0x68] sm:$0xf]
        %v7116 = vld [vmem:[%s4374 + $0x6c] sm:$0xf]
        %v7117 = vld [vmem:[%s4374 + $0x70] sm:$0xf]
        %v7118 = vld [vmem:[%s4374 + $0x74] sm:$0xf]
        %v7119 = vld [vmem:[%s4374 + $0x78] sm:$0xf]
        %v7120 = vld [vmem:[%s4374 + $0x7c] sm:$0xf]
        %s7121 = scalar_lea.vmem %s234, 480
        %v7122 = vld [vmem:[%s7121] sm:$0xf]
        %v7123 = vld [vmem:[%s7121 + $0x4] sm:$0xf]
        %v7124 = vld [vmem:[%s7121 + $0x8] sm:$0xf]
        %v7125 = vld [vmem:[%s7121 + $0xc] sm:$0xf]
        %v7126 = vld [vmem:[%s7121 + $0x10] sm:$0xf]
        %v7127 = vld [vmem:[%s7121 + $0x14] sm:$0xf]
        %v7128 = vld [vmem:[%s7121 + $0x18] sm:$0xf]
        %v7129 = vld [vmem:[%s7121 + $0x1c] sm:$0xf]
        %v7130 = vld [vmem:[%s217 + $0x8] sm:$0xff]
        %v7131 = vld [vmem:[%s217 + $0x18] sm:$0xff]
        %v7132 = vld [vmem:[%s217 + $0x28] sm:$0xff]
        %v7133 = vld [vmem:[%s217 + $0x38] sm:$0xff]
        %v7134 = vld [vmem:[%s217 + $0x48] sm:$0xff]
        %v7135 = vld [vmem:[%s217 + $0x58] sm:$0xff]
        %v7136 = vld [vmem:[%s217 + $0x68] sm:$0xff]
        %v7137 = vld [vmem:[%s217 + $0x78] sm:$0xff]
        %v7138 = vld [vmem:[%s217 + $0x88] sm:$0xff]
        %v7139 = vld [vmem:[%s217 + $0x98] sm:$0xff]
        %v7140 = vld [vmem:[%s217 + $0xa8] sm:$0xff]
        %v7141 = vld [vmem:[%s217 + $0xb8] sm:$0xff]
        %v7142 = vld [vmem:[%s217 + $0xc8] sm:$0xff]
        %v7143 = vld [vmem:[%s217 + $0xd8] sm:$0xff]
        %v7144 = vld [vmem:[%s217 + $0xe8] sm:$0xff]
        %v7145 = vld [vmem:[%s217 + $0xf8] sm:$0xff]
        %v7146 = vld [vmem:[%s217 + $0x108] sm:$0xff]
        %v7147 = vld [vmem:[%s217 + $0x118] sm:$0xff]
        %v7148 = vld [vmem:[%s217 + $0x128] sm:$0xff]
        %v7149 = vld [vmem:[%s217 + $0x138] sm:$0xff]
        %v7150 = vld [vmem:[%s217 + $0x148] sm:$0xff]
        %v7151 = vld [vmem:[%s217 + $0x158] sm:$0xff]
        %v7152 = vld [vmem:[%s217 + $0x168] sm:$0xff]
        %v7153 = vld [vmem:[%s217 + $0x178] sm:$0xff]
        %v7154 = vld [vmem:[%s217 + $0x188] sm:$0xff]
        %v7155 = vld [vmem:[%s217 + $0x198] sm:$0xff]
        %v7156 = vld [vmem:[%s217 + $0x1a8] sm:$0xff]
        %v7157 = vld [vmem:[%s217 + $0x1b8] sm:$0xff]
        %v7186 = vunpack.c.l.b16 %v7093
        %v7187 = vunpack.c.l.b16 %v7094
        %v7188 = vunpack.c.l.b16 %v7095
        %v7189 = vunpack.c.l.b16 %v7096
        %v7190 = vunpack.c.l.b16 %v7097
        %v7191 = vunpack.c.l.b16 %v7098
        %v7192 = vunpack.c.l.b16 %v7099
        %v7193 = vunpack.c.l.b16 %v7100
        %v7194 = vunpack.c.l.b16 %v7101
        %v7195 = vunpack.c.l.b16 %v7102
        %v7196 = vunpack.c.l.b16 %v7103
        %v7197 = vunpack.c.l.b16 %v7104
        %v7198 = vunpack.c.l.b16 %v7105
        %v7199 = vunpack.c.l.b16 %v7106
        %v7200 = vunpack.c.l.b16 %v7107
        %v7201 = vunpack.c.l.b16 %v7108
        %v7202 = vunpack.c.l.b16 %v7109
        %v7203 = vunpack.c.l.b16 %v7110
        %v7204 = vunpack.c.l.b16 %v7111
        %v7205 = vunpack.c.l.b16 %v7112
        %v7206 = vunpack.c.l.b16 %v7113
        %v7207 = vunpack.c.l.b16 %v7114
        %v7208 = vunpack.c.l.b16 %v7115
        %v7209 = vunpack.c.l.b16 %v7116
        %v7210 = vunpack.c.l.b16 %v7117
        %v7211 = vunpack.c.l.b16 %v7118
        %v7212 = vunpack.c.l.b16 %v7119
        %v7213 = vunpack.c.l.b16 %v7120
        %v7214 = vpack.c.b16 %v7187, %v7186
        %v7215 = vpack.c.b16 %v7189, %v7188
        %v7216 = vpack.c.b16 %v7191, %v7190
        %v7217 = vpack.c.b16 %v7193, %v7192
        %v7218 = vpack.c.b16 %v7195, %v7194
        %v7219 = vpack.c.b16 %v7197, %v7196
        %v7220 = vpack.c.b16 %v7199, %v7198
        %v7221 = vpack.c.b16 %v7201, %v7200
        %v7222 = vpack.c.b16 %v7203, %v7202
        %v7223 = vpack.c.b16 %v7205, %v7204
        %v7224 = vpack.c.b16 %v7207, %v7206
        %v7225 = vpack.c.b16 %v7209, %v7208
        %v7226 = vpack.c.b16 %v7211, %v7210
        %v7227 = vpack.c.b16 %v7213, %v7212
        %v7236 = vunpack.c.l.b16 %v7122
        %v7237 = vunpack.c.l.b16 %v7123
        %v7238 = vunpack.c.l.b16 %v7124
        %v7239 = vunpack.c.l.b16 %v7125
        %v7240 = vunpack.c.l.b16 %v7126
        %v7241 = vunpack.c.l.b16 %v7127
        %v7242 = vunpack.c.l.b16 %v7128
        %v7243 = vunpack.c.l.b16 %v7129
        %v7244 = vpack.c.b16 %v7237, %v7236
        %v7245 = vpack.c.b16 %v7239, %v7238
        %v7246 = vpack.c.b16 %v7241, %v7240
        %v7247 = vpack.c.b16 %v7243, %v7242
        %v7253 = vsel %vm468, %v7214, 0
        %v7256 = vsel %vm468, %v7215, 0
        %v7259 = vsel %vm468, %v7216, 0
        %v7262 = vsel %vm468, %v7217, 0
        %v7265 = vsel %vm468, %v7218, 0
        %v7268 = vsel %vm468, %v7219, 0
        %v7271 = vsel %vm468, %v7220, 0
        %v7274 = vsel %vm468, %v7221, 0
        %v7277 = vsel %vm468, %v7222, 0
        %v7280 = vsel %vm468, %v7223, 0
        %v7283 = vsel %vm468, %v7224, 0
        %v7286 = vsel %vm468, %v7225, 0
        %v7289 = vsel %vm468, %v7226, 0
        %v7292 = vsel %vm468, %v7227, 0
        %7294 = vmatprep.subr.bf16.mxu0 0
        %7295 = vmatpush1.bf16.msra.mxu0 %v7244
        %7296 = vmatprep.subr.bf16.mxu0 0
        %7297 = vmatpush1.bf16.msra.mxu0 %v7245
        %7298 = vmatprep.subr.bf16.mxu0 0
        %7299 = vmatpush1.bf16.msra.mxu0 %v7246
        %7300 = vmatprep.subr.bf16.mxu0 0
        %7301 = vmatpush1.bf16.msra.mxu0 %v7247
        %7302 = vmatprep.subr.bf16.mxu0 0
        %7303 = vmatpush1.bf16.msra.mxu0 0
        %7304 = vmatprep.subr.bf16.mxu0 0
        %7305 = vmatpush1.bf16.msra.mxu0 0
        %7306 = vmatprep.subr.bf16.mxu0 0
        %7307 = vmatpush1.bf16.msra.mxu0 0
        %7308 = vmatprep.subr.bf16.mxu0 0
        %7309 = vmatpush1.bf16.msra.mxu0 0
        %7310 = vmatprep.subr.bf16.mxu0 0
        %7311 = vmatpush1.bf16.msra.mxu0 0
        %7312 = vmatprep.subr.bf16.mxu0 0
        %7313 = vmatpush1.bf16.msra.mxu0 0
        %7314 = vmatprep.subr.bf16.mxu0 0
        %7315 = vmatpush1.bf16.msra.mxu0 0
        %7316 = vmatprep.subr.bf16.mxu0 0
        %7317 = vmatpush1.bf16.msra.mxu0 0
        %7318 = vmatprep.subr.bf16.mxu0 0
        %7319 = vmatpush1.bf16.msra.mxu0 0
        %7320 = vmatprep.subr.bf16.mxu0 0
        %7321 = vmatpush1.bf16.msra.mxu0 0
        %7322 = vmatprep.subr.bf16.mxu0 0
        %7323 = vmatpush1.bf16.msra.mxu0 0
        %7324 = vmatprep.subr.bf16.mxu0 0
        %7325 = vmatpush1.bf16.msra.mxu0 0
        %7326 = vmatprep.mubr.bf16.mxu0 0
        %7327 = vmatmul.mubr.bf16.gmra.mrb[0].mxu0 %v7253
        %v7328 = vpop.f32.mrb[0].mxu0
        %v7329 = vadd.f32 0.0, %v7328
        %v7330 = vpop.f32.mrb[0].mxu0
        %v7331 = vpop.f32.mrb[0].mxu0
        %v7332 = vadd.f32 0.0, %v7331
        %v7333 = vpop.f32.mrb[0].mxu0
        %7334 = vmatprep.mubr.bf16.mxu0 0
        %7335 = vmatmul.mubr.bf16.gmra.mrb[0].mxu0 %v7256
        %v7336 = vpop.f32.mrb[0].mxu0
        %v7337 = vadd.f32 0.0, %v7336
        %v7338 = vpop.f32.mrb[0].mxu0
        %v7339 = vpop.f32.mrb[0].mxu0
        %v7340 = vadd.f32 0.0, %v7339
        %v7341 = vpop.f32.mrb[0].mxu0
        %7342 = vmatprep.mubr.bf16.mxu0 0
        %7343 = vmatmul.mubr.bf16.gmra.mrb[0].mxu0 %v7259
        %v7344 = vpop.f32.mrb[0].mxu0
        %v7345 = vadd.f32 0.0, %v7344
        %v7346 = vpop.f32.mrb[0].mxu0
        %v7347 = vpop.f32.mrb[0].mxu0
        %v7348 = vadd.f32 0.0, %v7347
        %v7349 = vpop.f32.mrb[0].mxu0
        %7350 = vmatprep.mubr.bf16.mxu0 0
        %7351 = vmatmul.mubr.bf16.gmra.mrb[0].mxu0 %v7262
        %v7352 = vpop.f32.mrb[0].mxu0
        %v7353 = vadd.f32 0.0, %v7352
        %v7354 = vpop.f32.mrb[0].mxu0
        %v7355 = vpop.f32.mrb[0].mxu0
        %v7356 = vadd.f32 0.0, %v7355
        %v7357 = vpop.f32.mrb[0].mxu0
        %7358 = vmatprep.mubr.bf16.mxu0 0
        %7359 = vmatmul.mubr.bf16.gmra.mrb[0].mxu0 %v7265
        %v7360 = vpop.f32.mrb[0].mxu0
        %v7361 = vadd.f32 0.0, %v7360
        %v7362 = vpop.f32.mrb[0].mxu0
        %v7363 = vpop.f32.mrb[0].mxu0
        %v7364 = vadd.f32 0.0, %v7363
        %v7365 = vpop.f32.mrb[0].mxu0
        %7366 = vmatprep.mubr.bf16.mxu0 0
        %7367 = vmatmul.mubr.bf16.gmra.mrb[0].mxu0 %v7268
        %v7368 = vpop.f32.mrb[0].mxu0
        %v7369 = vadd.f32 0.0, %v7368
        %v7370 = vpop.f32.mrb[0].mxu0
        %v7371 = vpop.f32.mrb[0].mxu0
        %v7372 = vadd.f32 0.0, %v7371
        %v7373 = vpop.f32.mrb[0].mxu0
        %7374 = vmatprep.mubr.bf16.mxu0 0
        %7375 = vmatmul.mubr.bf16.gmra.mrb[0].mxu0 %v7271
        %v7376 = vpop.f32.mrb[0].mxu0
        %v7377 = vadd.f32 0.0, %v7376
        %v7378 = vpop.f32.mrb[0].mxu0
        %v7379 = vpop.f32.mrb[0].mxu0
        %v7380 = vadd.f32 0.0, %v7379
        %v7381 = vpop.f32.mrb[0].mxu0
        %7382 = vmatprep.mubr.bf16.mxu0 0
        %7383 = vmatmul.mubr.bf16.gmra.mrb[0].mxu0 %v7274
        %v7384 = vpop.f32.mrb[0].mxu0
        %v7385 = vadd.f32 0.0, %v7384
        %v7386 = vpop.f32.mrb[0].mxu0
        %v7387 = vpop.f32.mrb[0].mxu0
        %v7388 = vadd.f32 0.0, %v7387
        %v7389 = vpop.f32.mrb[0].mxu0
        %7390 = vmatprep.mubr.bf16.mxu0 0
        %7391 = vmatmul.mubr.bf16.gmra.mrb[0].mxu0 %v7277
        %v7392 = vpop.f32.mrb[0].mxu0
        %v7393 = vadd.f32 0.0, %v7392
        %v7394 = vpop.f32.mrb[0].mxu0
        %v7395 = vpop.f32.mrb[0].mxu0
        %v7396 = vadd.f32 0.0, %v7395
        %v7397 = vpop.f32.mrb[0].mxu0
        %7398 = vmatprep.mubr.bf16.mxu0 0
        %7399 = vmatmul.mubr.bf16.gmra.mrb[0].mxu0 %v7280
        %v7400 = vpop.f32.mrb[0].mxu0
        %v7401 = vadd.f32 0.0, %v7400
        %v7402 = vpop.f32.mrb[0].mxu0
        %v7403 = vpop.f32.mrb[0].mxu0
        %v7404 = vadd.f32 0.0, %v7403
        %v7405 = vpop.f32.mrb[0].mxu0
        %7406 = vmatprep.mubr.bf16.mxu0 0
        %7407 = vmatmul.mubr.bf16.gmra.mrb[0].mxu0 %v7283
        %v7408 = vpop.f32.mrb[0].mxu0
        %v7409 = vadd.f32 0.0, %v7408
        %v7410 = vpop.f32.mrb[0].mxu0
        %v7411 = vpop.f32.mrb[0].mxu0
        %v7412 = vadd.f32 0.0, %v7411
        %v7413 = vpop.f32.mrb[0].mxu0
        %7414 = vmatprep.mubr.bf16.mxu0 0
        %7415 = vmatmul.mubr.bf16.gmra.mrb[0].mxu0 %v7286
        %v7416 = vpop.f32.mrb[0].mxu0
        %v7417 = vadd.f32 0.0, %v7416
        %v7418 = vpop.f32.mrb[0].mxu0
        %v7419 = vpop.f32.mrb[0].mxu0
        %v7420 = vadd.f32 0.0, %v7419
        %v7421 = vpop.f32.mrb[0].mxu0
        %7422 = vmatprep.mubr.bf16.mxu0 0
        %7423 = vmatmul.mubr.bf16.gmra.mrb[0].mxu0 %v7289
        %v7424 = vpop.f32.mrb[0].mxu0
        %v7425 = vadd.f32 0.0, %v7424
        %v7426 = vpop.f32.mrb[0].mxu0
        %v7427 = vpop.f32.mrb[0].mxu0
        %v7428 = vadd.f32 0.0, %v7427
        %v7429 = vpop.f32.mrb[0].mxu0
        %7430 = vmatprep.mubr.bf16.mxu0 0
        %7431 = vmatmul.mubr.bf16.gmra.mrb[0].mxu0 %v7292
        %v7432 = vpop.f32.mrb[0].mxu0
        %v7433 = vadd.f32 0.0, %v7432
        %v7434 = vpop.f32.mrb[0].mxu0
        %v7435 = vpop.f32.mrb[0].mxu0
        %v7436 = vadd.f32 0.0, %v7435
        %v7437 = vpop.f32.mrb[0].mxu0
        %7438 = vdwg.mxu0
        %v7439 = vadd.f32 %v7130, %v7329
        %v7440 = vadd.f32 %v7131, %v7332
        %v7441 = vadd.f32 %v7132, %v7337
        %v7442 = vadd.f32 %v7133, %v7340
        %v7443 = vadd.f32 %v7134, %v7345
        %v7444 = vadd.f32 %v7135, %v7348
        %v7445 = vadd.f32 %v7136, %v7353
        %v7446 = vadd.f32 %v7137, %v7356
        %v7447 = vadd.f32 %v7138, %v7361
        %v7448 = vadd.f32 %v7139, %v7364
        %v7449 = vadd.f32 %v7140, %v7369
        %v7450 = vadd.f32 %v7141, %v7372
        %v7451 = vadd.f32 %v7142, %v7377
        %v7452 = vadd.f32 %v7143, %v7380
        %v7453 = vadd.f32 %v7144, %v7385
        %v7454 = vadd.f32 %v7145, %v7388
        %v7455 = vadd.f32 %v7146, %v7393
        %v7456 = vadd.f32 %v7147, %v7396
        %v7457 = vadd.f32 %v7148, %v7401
        %v7458 = vadd.f32 %v7149, %v7404
        %v7459 = vadd.f32 %v7150, %v7409
        %v7460 = vadd.f32 %v7151, %v7412
        %v7461 = vadd.f32 %v7152, %v7417
        %v7462 = vadd.f32 %v7153, %v7420
        %v7463 = vadd.f32 %v7154, %v7425
        %v7464 = vadd.f32 %v7155, %v7428
        %v7465 = vadd.f32 %v7156, %v7433
        %v7466 = vadd.f32 %v7157, %v7436
        %7467 = vst [vmem:[%s217 + $0x8] sm:$0xff] %v7439
        %7468 = vst [vmem:[%s217 + $0x18] sm:$0xff] %v7440
        %7469 = vst [vmem:[%s217 + $0x28] sm:$0xff] %v7441
        %7470 = vst [vmem:[%s217 + $0x38] sm:$0xff] %v7442
        %7471 = vst [vmem:[%s217 + $0x48] sm:$0xff] %v7443
        %7472 = vst [vmem:[%s217 + $0x58] sm:$0xff] %v7444
        %7473 = vst [vmem:[%s217 + $0x68] sm:$0xff] %v7445
        %7474 = vst [vmem:[%s217 + $0x78] sm:$0xff] %v7446
        %7475 = vst [vmem:[%s217 + $0x88] sm:$0xff] %v7447
        %7476 = vst [vmem:[%s217 + $0x98] sm:$0xff] %v7448
        %7477 = vst [vmem:[%s217 + $0xa8] sm:$0xff] %v7449
        %7478 = vst [vmem:[%s217 + $0xb8] sm:$0xff] %v7450
        %7479 = vst [vmem:[%s217 + $0xc8] sm:$0xff] %v7451
        %7480 = vst [vmem:[%s217 + $0xd8] sm:$0xff] %v7452
        %7481 = vst [vmem:[%s217 + $0xe8] sm:$0xff] %v7453
        %7482 = vst [vmem:[%s217 + $0xf8] sm:$0xff] %v7454
        %7483 = vst [vmem:[%s217 + $0x108] sm:$0xff] %v7455
        %7484 = vst [vmem:[%s217 + $0x118] sm:$0xff] %v7456
        %7485 = vst [vmem:[%s217 + $0x128] sm:$0xff] %v7457
        %7486 = vst [vmem:[%s217 + $0x138] sm:$0xff] %v7458
        %7487 = vst [vmem:[%s217 + $0x148] sm:$0xff] %v7459
        %7488 = vst [vmem:[%s217 + $0x158] sm:$0xff] %v7460
        %7489 = vst [vmem:[%s217 + $0x168] sm:$0xff] %v7461
        %7490 = vst [vmem:[%s217 + $0x178] sm:$0xff] %v7462
        %7491 = vst [vmem:[%s217 + $0x188] sm:$0xff] %v7463
        %7492 = vst [vmem:[%s217 + $0x198] sm:$0xff] %v7464
        %7493 = vst [vmem:[%s217 + $0x1a8] sm:$0xff] %v7465
        %7494 = vst [vmem:[%s217 + $0x1b8] sm:$0xff] %v7466
        %v7495 = vld [vmem:[%s4374 + $0x10] sm:$0xf]
        %v7496 = vld [vmem:[%s4374 + $0x14] sm:$0xf]
        %v7497 = vld [vmem:[%s4374 + $0x18] sm:$0xf]
        %v7498 = vld [vmem:[%s4374 + $0x1c] sm:$0xf]
        %v7499 = vld [vmem:[%s4374 + $0x20] sm:$0xf]
        %v7500 = vld [vmem:[%s4374 + $0x24] sm:$0xf]
        %v7501 = vld [vmem:[%s4374 + $0x28] sm:$0xf]
        %v7502 = vld [vmem:[%s4374 + $0x2c] sm:$0xf]
        %v7503 = vld [vmem:[%s4374 + $0x30] sm:$0xf]
        %v7504 = vld [vmem:[%s4374 + $0x34] sm:$0xf]
        %v7505 = vld [vmem:[%s4374 + $0x38] sm:$0xf]
        %v7506 = vld [vmem:[%s4374 + $0x3c] sm:$0xf]
        %v7507 = vld [vmem:[%s4374 + $0x40] sm:$0xf]
        %v7508 = vld [vmem:[%s4374 + $0x44] sm:$0xf]
        %v7509 = vld [vmem:[%s4374 + $0x48] sm:$0xf]
        %v7510 = vld [vmem:[%s4374 + $0x4c] sm:$0xf]
        %v7511 = vld [vmem:[%s4374 + $0x50] sm:$0xf]
        %v7512 = vld [vmem:[%s4374 + $0x54] sm:$0xf]
        %v7513 = vld [vmem:[%s4374 + $0x58] sm:$0xf]
        %v7514 = vld [vmem:[%s4374 + $0x5c] sm:$0xf]
        %v7515 = vld [vmem:[%s4374 + $0x60] sm:$0xf]
        %v7516 = vld [vmem:[%s4374 + $0x64] sm:$0xf]
        %v7517 = vld [vmem:[%s4374 + $0x68] sm:$0xf]
        %v7518 = vld [vmem:[%s4374 + $0x6c] sm:$0xf]
        %v7519 = vld [vmem:[%s4374 + $0x70] sm:$0xf]
        %v7520 = vld [vmem:[%s4374 + $0x74] sm:$0xf]
        %v7521 = vld [vmem:[%s4374 + $0x78] sm:$0xf]
        %v7522 = vld [vmem:[%s4374 + $0x7c] sm:$0xf]
        %s7523 = scalar_lea.vmem %s234, 512
        %v7524 = vld [vmem:[%s7523] sm:$0xf]
        %v7525 = vld [vmem:[%s7523 + $0x4] sm:$0xf]
        %v7526 = vld [vmem:[%s7523 + $0x8] sm:$0xf]
        %v7527 = vld [vmem:[%s7523 + $0xc] sm:$0xf]
        %v7528 = vld [vmem:[%s7523 + $0x10] sm:$0xf]
        %v7529 = vld [vmem:[%s7523 + $0x14] sm:$0xf]
        %v7530 = vld [vmem:[%s7523 + $0x18] sm:$0xf]
        %v7531 = vld [vmem:[%s7523 + $0x1c] sm:$0xf]
        %v7532 = vld [vmem:[%s217 + $0x8] sm:$0xff]
        %v7533 = vld [vmem:[%s217 + $0x18] sm:$0xff]
        %v7534 = vld [vmem:[%s217 + $0x28] sm:$0xff]
        %v7535 = vld [vmem:[%s217 + $0x38] sm:$0xff]
        %v7536 = vld [vmem:[%s217 + $0x48] sm:$0xff]
        %v7537 = vld [vmem:[%s217 + $0x58] sm:$0xff]
        %v7538 = vld [vmem:[%s217 + $0x68] sm:$0xff]
        %v7539 = vld [vmem:[%s217 + $0x78] sm:$0xff]
        %v7540 = vld [vmem:[%s217 + $0x88] sm:$0xff]
        %v7541 = vld [vmem:[%s217 + $0x98] sm:$0xff]
        %v7542 = vld [vmem:[%s217 + $0xa8] sm:$0xff]
        %v7543 = vld [vmem:[%s217 + $0xb8] sm:$0xff]
        %v7544 = vld [vmem:[%s217 + $0xc8] sm:$0xff]
        %v7545 = vld [vmem:[%s217 + $0xd8] sm:$0xff]
        %v7546 = vld [vmem:[%s217 + $0xe8] sm:$0xff]
        %v7547 = vld [vmem:[%s217 + $0xf8] sm:$0xff]
        %v7548 = vld [vmem:[%s217 + $0x108] sm:$0xff]
        %v7549 = vld [vmem:[%s217 + $0x118] sm:$0xff]
        %v7550 = vld [vmem:[%s217 + $0x128] sm:$0xff]
        %v7551 = vld [vmem:[%s217 + $0x138] sm:$0xff]
        %v7552 = vld [vmem:[%s217 + $0x148] sm:$0xff]
        %v7553 = vld [vmem:[%s217 + $0x158] sm:$0xff]
        %v7554 = vld [vmem:[%s217 + $0x168] sm:$0xff]
        %v7555 = vld [vmem:[%s217 + $0x178] sm:$0xff]
        %v7556 = vld [vmem:[%s217 + $0x188] sm:$0xff]
        %v7557 = vld [vmem:[%s217 + $0x198] sm:$0xff]
        %v7558 = vld [vmem:[%s217 + $0x1a8] sm:$0xff]
        %v7559 = vld [vmem:[%s217 + $0x1b8] sm:$0x7f]
        %v7588 = vunpack.c.l.b16 %v7495
        %v7589 = vunpack.c.l.b16 %v7496
        %v7590 = vunpack.c.l.b16 %v7497
        %v7591 = vunpack.c.l.b16 %v7498
        %v7592 = vunpack.c.l.b16 %v7499
        %v7593 = vunpack.c.l.b16 %v7500
        %v7594 = vunpack.c.l.b16 %v7501
        %v7595 = vunpack.c.l.b16 %v7502
        %v7596 = vunpack.c.l.b16 %v7503
        %v7597 = vunpack.c.l.b16 %v7504
        %v7598 = vunpack.c.l.b16 %v7505
        %v7599 = vunpack.c.l.b16 %v7506
        %v7600 = vunpack.c.l.b16 %v7507
        %v7601 = vunpack.c.l.b16 %v7508
        %v7602 = vunpack.c.l.b16 %v7509
        %v7603 = vunpack.c.l.b16 %v7510
        %v7604 = vunpack.c.l.b16 %v7511
        %v7605 = vunpack.c.l.b16 %v7512
        %v7606 = vunpack.c.l.b16 %v7513
        %v7607 = vunpack.c.l.b16 %v7514
        %v7608 = vunpack.c.l.b16 %v7515
        %v7609 = vunpack.c.l.b16 %v7516
        %v7610 = vunpack.c.l.b16 %v7517
        %v7611 = vunpack.c.l.b16 %v7518
        %v7612 = vunpack.c.l.b16 %v7519
        %v7613 = vunpack.c.l.b16 %v7520
        %v7614 = vunpack.c.l.b16 %v7521
        %v7615 = vunpack.c.l.b16 %v7522
        %v7616 = vpack.c.b16 %v7589, %v7588
        %v7617 = vpack.c.b16 %v7591, %v7590
        %v7618 = vpack.c.b16 %v7593, %v7592
        %v7619 = vpack.c.b16 %v7595, %v7594
        %v7620 = vpack.c.b16 %v7597, %v7596
        %v7621 = vpack.c.b16 %v7599, %v7598
        %v7622 = vpack.c.b16 %v7601, %v7600
        %v7623 = vpack.c.b16 %v7603, %v7602
        %v7624 = vpack.c.b16 %v7605, %v7604
        %v7625 = vpack.c.b16 %v7607, %v7606
        %v7626 = vpack.c.b16 %v7609, %v7608
        %v7627 = vpack.c.b16 %v7611, %v7610
        %v7628 = vpack.c.b16 %v7613, %v7612
        %v7629 = vpack.c.b16 %v7615, %v7614
        %v7631 = vshrl.u32 %v7616, 16
        %v7633 = vshll.u32 %v7616, 16
        %v7635 = vrot.slane %v7633, 1
        %v7636 = vor.u32 %v7631, %v7635
        %v7638 = vshll.u32 %v7617, 16
        %v7640 = vrot.slane %v7638, 1
        %v7641 = vsel %vm851, %v7636, %v7640
        %v7642 = vshrl.u32 %v7617, 16
        %v7644 = vor.u32 %v7642, %v7640
        %v7646 = vshll.u32 %v7618, 16
        %v7648 = vrot.slane %v7646, 1
        %v7649 = vsel %vm851, %v7644, %v7648
        %v7650 = vshrl.u32 %v7618, 16
        %v7652 = vor.u32 %v7650, %v7648
        %v7654 = vshll.u32 %v7619, 16
        %v7656 = vrot.slane %v7654, 1
        %v7657 = vsel %vm851, %v7652, %v7656
        %v7658 = vshrl.u32 %v7619, 16
        %v7660 = vor.u32 %v7658, %v7656
        %v7662 = vshll.u32 %v7620, 16
        %v7664 = vrot.slane %v7662, 1
        %v7665 = vsel %vm851, %v7660, %v7664
        %v7666 = vshrl.u32 %v7620, 16
        %v7668 = vor.u32 %v7666, %v7664
        %v7670 = vshll.u32 %v7621, 16
        %v7672 = vrot.slane %v7670, 1
        %v7673 = vsel %vm851, %v7668, %v7672
        %v7674 = vshrl.u32 %v7621, 16
        %v7676 = vor.u32 %v7674, %v7672
        %v7678 = vshll.u32 %v7622, 16
        %v7680 = vrot.slane %v7678, 1
        %v7681 = vsel %vm851, %v7676, %v7680
        %v7682 = vshrl.u32 %v7622, 16
        %v7684 = vor.u32 %v7682, %v7680
        %v7686 = vshll.u32 %v7623, 16
        %v7688 = vrot.slane %v7686, 1
        %v7689 = vsel %vm851, %v7684, %v7688
        %v7690 = vshrl.u32 %v7623, 16
        %v7692 = vor.u32 %v7690, %v7688
        %v7694 = vshll.u32 %v7624, 16
        %v7696 = vrot.slane %v7694, 1
        %v7697 = vsel %vm851, %v7692, %v7696
        %v7698 = vshrl.u32 %v7624, 16
        %v7700 = vor.u32 %v7698, %v7696
        %v7702 = vshll.u32 %v7625, 16
        %v7704 = vrot.slane %v7702, 1
        %v7705 = vsel %vm851, %v7700, %v7704
        %v7706 = vshrl.u32 %v7625, 16
        %v7708 = vor.u32 %v7706, %v7704
        %v7710 = vshll.u32 %v7626, 16
        %v7712 = vrot.slane %v7710, 1
        %v7713 = vsel %vm851, %v7708, %v7712
        %v7714 = vshrl.u32 %v7626, 16
        %v7716 = vor.u32 %v7714, %v7712
        %v7718 = vshll.u32 %v7627, 16
        %v7720 = vrot.slane %v7718, 1
        %v7721 = vsel %vm851, %v7716, %v7720
        %v7722 = vshrl.u32 %v7627, 16
        %v7724 = vor.u32 %v7722, %v7720
        %v7726 = vshll.u32 %v7628, 16
        %v7728 = vrot.slane %v7726, 1
        %v7729 = vsel %vm851, %v7724, %v7728
        %v7730 = vshrl.u32 %v7628, 16
        %v7732 = vor.u32 %v7730, %v7728
        %v7734 = vshll.u32 %v7629, 16
        %v7736 = vrot.slane %v7734, 1
        %v7737 = vsel %vm851, %v7732, %v7736
        %v7738 = vshrl.u32 %v7629, 16
        %v7740 = vor.u32 %v7738, %v7736
        %v7749 = vunpack.c.l.b16 %v7524
        %v7750 = vunpack.c.l.b16 %v7525
        %v7751 = vunpack.c.l.b16 %v7526
        %v7752 = vunpack.c.l.b16 %v7527
        %v7753 = vunpack.c.l.b16 %v7528
        %v7754 = vunpack.c.l.b16 %v7529
        %v7755 = vunpack.c.l.b16 %v7530
        %v7756 = vunpack.c.l.b16 %v7531
        %v7757 = vpack.c.b16 %v7750, %v7749
        %v7758 = vpack.c.b16 %v7752, %v7751
        %v7759 = vpack.c.b16 %v7754, %v7753
        %v7760 = vpack.c.b16 %v7756, %v7755
        %v7766 = vsel %vm468, %v7641, 0
        %v7769 = vsel %vm468, %v7649, 0
        %v7772 = vsel %vm468, %v7657, 0
        %v7775 = vsel %vm468, %v7665, 0
        %v7778 = vsel %vm468, %v7673, 0
        %v7781 = vsel %vm468, %v7681, 0
        %v7784 = vsel %vm468, %v7689, 0
        %v7787 = vsel %vm468, %v7697, 0
        %v7790 = vsel %vm468, %v7705, 0
        %v7793 = vsel %vm468, %v7713, 0
        %v7796 = vsel %vm468, %v7721, 0
        %v7799 = vsel %vm468, %v7729, 0
        %v7802 = vsel %vm468, %v7737, 0
        %v7805 = vsel %vm468, %v7740, 0
        %7807 = vmatprep.subr.bf16.mxu0 0
        %7808 = vmatpush1.bf16.msra.mxu0 %v7757
        %7809 = vmatprep.subr.bf16.mxu0 0
        %7810 = vmatpush1.bf16.msra.mxu0 %v7758
        %7811 = vmatprep.subr.bf16.mxu0 0
        %7812 = vmatpush1.bf16.msra.mxu0 %v7759
        %7813 = vmatprep.subr.bf16.mxu0 0
        %7814 = vmatpush1.bf16.msra.mxu0 %v7760
        %7815 = vmatprep.subr.bf16.mxu0 0
        %7816 = vmatpush1.bf16.msra.mxu0 0
        %7817 = vmatprep.subr.bf16.mxu0 0
        %7818 = vmatpush1.bf16.msra.mxu0 0
        %7819 = vmatprep.subr.bf16.mxu0 0
        %7820 = vmatpush1.bf16.msra.mxu0 0
        %7821 = vmatprep.subr.bf16.mxu0 0
        %7822 = vmatpush1.bf16.msra.mxu0 0
        %7823 = vmatprep.subr.bf16.mxu0 0
        %7824 = vmatpush1.bf16.msra.mxu0 0
        %7825 = vmatprep.subr.bf16.mxu0 0
        %7826 = vmatpush1.bf16.msra.mxu0 0
        %7827 = vmatprep.subr.bf16.mxu0 0
        %7828 = vmatpush1.bf16.msra.mxu0 0
        %7829 = vmatprep.subr.bf16.mxu0 0
        %7830 = vmatpush1.bf16.msra.mxu0 0
        %7831 = vmatprep.subr.bf16.mxu0 0
        %7832 = vmatpush1.bf16.msra.mxu0 0
        %7833 = vmatprep.subr.bf16.mxu0 0
        %7834 = vmatpush1.bf16.msra.mxu0 0
        %7835 = vmatprep.subr.bf16.mxu0 0
        %7836 = vmatpush1.bf16.msra.mxu0 0
        %7837 = vmatprep.subr.bf16.mxu0 0
        %7838 = vmatpush1.bf16.msra.mxu0 0
        %7839 = vmatprep.mubr.bf16.mxu0 0
        %7840 = vmatmul.mubr.bf16.gmra.mrb[0].mxu0 %v7766
        %v7841 = vpop.f32.mrb[0].mxu0
        %v7842 = vadd.f32 0.0, %v7841
        %v7843 = vpop.f32.mrb[0].mxu0
        %v7844 = vpop.f32.mrb[0].mxu0
        %v7845 = vadd.f32 0.0, %v7844
        %v7846 = vpop.f32.mrb[0].mxu0
        %7847 = vmatprep.mubr.bf16.mxu0 0
        %7848 = vmatmul.mubr.bf16.gmra.mrb[0].mxu0 %v7769
        %v7849 = vpop.f32.mrb[0].mxu0
        %v7850 = vadd.f32 0.0, %v7849
        %v7851 = vpop.f32.mrb[0].mxu0
        %v7852 = vpop.f32.mrb[0].mxu0
        %v7853 = vadd.f32 0.0, %v7852
        %v7854 = vpop.f32.mrb[0].mxu0
        %7855 = vmatprep.mubr.bf16.mxu0 0
        %7856 = vmatmul.mubr.bf16.gmra.mrb[0].mxu0 %v7772
        %v7857 = vpop.f32.mrb[0].mxu0
        %v7858 = vadd.f32 0.0, %v7857
        %v7859 = vpop.f32.mrb[0].mxu0
        %v7860 = vpop.f32.mrb[0].mxu0
        %v7861 = vadd.f32 0.0, %v7860
        %v7862 = vpop.f32.mrb[0].mxu0
        %7863 = vmatprep.mubr.bf16.mxu0 0
        %7864 = vmatmul.mubr.bf16.gmra.mrb[0].mxu0 %v7775
        %v7865 = vpop.f32.mrb[0].mxu0
        %v7866 = vadd.f32 0.0, %v7865
        %v7867 = vpop.f32.mrb[0].mxu0
        %v7868 = vpop.f32.mrb[0].mxu0
        %v7869 = vadd.f32 0.0, %v7868
        %v7870 = vpop.f32.mrb[0].mxu0
        %7871 = vmatprep.mubr.bf16.mxu0 0
        %7872 = vmatmul.mubr.bf16.gmra.mrb[0].mxu0 %v7778
        %v7873 = vpop.f32.mrb[0].mxu0
        %v7874 = vadd.f32 0.0, %v7873
        %v7875 = vpop.f32.mrb[0].mxu0
        %v7876 = vpop.f32.mrb[0].mxu0
        %v7877 = vadd.f32 0.0, %v7876
        %v7878 = vpop.f32.mrb[0].mxu0
        %7879 = vmatprep.mubr.bf16.mxu0 0
        %7880 = vmatmul.mubr.bf16.gmra.mrb[0].mxu0 %v7781
        %v7881 = vpop.f32.mrb[0].mxu0
        %v7882 = vadd.f32 0.0, %v7881
        %v7883 = vpop.f32.mrb[0].mxu0
        %v7884 = vpop.f32.mrb[0].mxu0
        %v7885 = vadd.f32 0.0, %v7884
        %v7886 = vpop.f32.mrb[0].mxu0
        %7887 = vmatprep.mubr.bf16.mxu0 0
        %7888 = vmatmul.mubr.bf16.gmra.mrb[0].mxu0 %v7784
        %v7889 = vpop.f32.mrb[0].mxu0
        %v7890 = vadd.f32 0.0, %v7889
        %v7891 = vpop.f32.mrb[0].mxu0
        %v7892 = vpop.f32.mrb[0].mxu0
        %v7893 = vadd.f32 0.0, %v7892
        %v7894 = vpop.f32.mrb[0].mxu0
        %7895 = vmatprep.mubr.bf16.mxu0 0
        %7896 = vmatmul.mubr.bf16.gmra.mrb[0].mxu0 %v7787
        %v7897 = vpop.f32.mrb[0].mxu0
        %v7898 = vadd.f32 0.0, %v7897
        %v7899 = vpop.f32.mrb[0].mxu0
        %v7900 = vpop.f32.mrb[0].mxu0
        %v7901 = vadd.f32 0.0, %v7900
        %v7902 = vpop.f32.mrb[0].mxu0
        %7903 = vmatprep.mubr.bf16.mxu0 0
        %7904 = vmatmul.mubr.bf16.gmra.mrb[0].mxu0 %v7790
        %v7905 = vpop.f32.mrb[0].mxu0
        %v7906 = vadd.f32 0.0, %v7905
        %v7907 = vpop.f32.mrb[0].mxu0
        %v7908 = vpop.f32.mrb[0].mxu0
        %v7909 = vadd.f32 0.0, %v7908
        %v7910 = vpop.f32.mrb[0].mxu0
        %7911 = vmatprep.mubr.bf16.mxu0 0
        %7912 = vmatmul.mubr.bf16.gmra.mrb[0].mxu0 %v7793
        %v7913 = vpop.f32.mrb[0].mxu0
        %v7914 = vadd.f32 0.0, %v7913
        %v7915 = vpop.f32.mrb[0].mxu0
        %v7916 = vpop.f32.mrb[0].mxu0
        %v7917 = vadd.f32 0.0, %v7916
        %v7918 = vpop.f32.mrb[0].mxu0
        %7919 = vmatprep.mubr.bf16.mxu0 0
        %7920 = vmatmul.mubr.bf16.gmra.mrb[0].mxu0 %v7796
        %v7921 = vpop.f32.mrb[0].mxu0
        %v7922 = vadd.f32 0.0, %v7921
        %v7923 = vpop.f32.mrb[0].mxu0
        %v7924 = vpop.f32.mrb[0].mxu0
        %v7925 = vadd.f32 0.0, %v7924
        %v7926 = vpop.f32.mrb[0].mxu0
        %7927 = vmatprep.mubr.bf16.mxu0 0
        %7928 = vmatmul.mubr.bf16.gmra.mrb[0].mxu0 %v7799
        %v7929 = vpop.f32.mrb[0].mxu0
        %v7930 = vadd.f32 0.0, %v7929
        %v7931 = vpop.f32.mrb[0].mxu0
        %v7932 = vpop.f32.mrb[0].mxu0
        %v7933 = vadd.f32 0.0, %v7932
        %v7934 = vpop.f32.mrb[0].mxu0
        %7935 = vmatprep.mubr.bf16.mxu0 0
        %7936 = vmatmul.mubr.bf16.gmra.mrb[0].mxu0 %v7802
        %v7937 = vpop.f32.mrb[0].mxu0
        %v7938 = vadd.f32 0.0, %v7937
        %v7939 = vpop.f32.mrb[0].mxu0
        %v7940 = vpop.f32.mrb[0].mxu0
        %v7941 = vadd.f32 0.0, %v7940
        %v7942 = vpop.f32.mrb[0].mxu0
        %7943 = vmatprep.mubr.bf16.mxu0 0
        %7944 = vmatmul.mubr.bf16.gmra.mrb[0].mxu0 %v7805
        %v7945 = vpop.f32.mrb[0].mxu0
        %v7946 = vadd.f32 0.0, %v7945
        %v7947 = vpop.f32.mrb[0].mxu0
        %v7948 = vpop.f32.mrb[0].mxu0
        %v7949 = vadd.f32 0.0, %v7948
        %v7950 = vpop.f32.mrb[0].mxu0
        %7951 = vdwg.mxu0
        %v7952 = vadd.f32 %v7532, %v7842
        %v7953 = vadd.f32 %v7533, %v7845
        %v7954 = vadd.f32 %v7534, %v7850
        %v7955 = vadd.f32 %v7535, %v7853
        %v7956 = vadd.f32 %v7536, %v7858
        %v7957 = vadd.f32 %v7537, %v7861
        %v7958 = vadd.f32 %v7538, %v7866
        %v7959 = vadd.f32 %v7539, %v7869
        %v7960 = vadd.f32 %v7540, %v7874
        %v7961 = vadd.f32 %v7541, %v7877
        %v7962 = vadd.f32 %v7542, %v7882
        %v7963 = vadd.f32 %v7543, %v7885
        %v7964 = vadd.f32 %v7544, %v7890
        %v7965 = vadd.f32 %v7545, %v7893
        %v7966 = vadd.f32 %v7546, %v7898
        %v7967 = vadd.f32 %v7547, %v7901
        %v7968 = vadd.f32 %v7548, %v7906
        %v7969 = vadd.f32 %v7549, %v7909
        %v7970 = vadd.f32 %v7550, %v7914
        %v7971 = vadd.f32 %v7551, %v7917
        %v7972 = vadd.f32 %v7552, %v7922
        %v7973 = vadd.f32 %v7553, %v7925
        %v7974 = vadd.f32 %v7554, %v7930
        %v7975 = vadd.f32 %v7555, %v7933
        %v7976 = vadd.f32 %v7556, %v7938
        %v7977 = vadd.f32 %v7557, %v7941
        %v7978 = vadd.f32 %v7558, %v7946
        %v7979 = vadd.f32 %v7559, %v7949
        %7980 = vst [vmem:[%s217 + $0x8] sm:$0xff] %v7952
        %7981 = vst [vmem:[%s217 + $0x18] sm:$0xff] %v7953
        %7982 = vst [vmem:[%s217 + $0x28] sm:$0xff] %v7954
        %7983 = vst [vmem:[%s217 + $0x38] sm:$0xff] %v7955
        %7984 = vst [vmem:[%s217 + $0x48] sm:$0xff] %v7956
        %7985 = vst [vmem:[%s217 + $0x58] sm:$0xff] %v7957
        %7986 = vst [vmem:[%s217 + $0x68] sm:$0xff] %v7958
        %7987 = vst [vmem:[%s217 + $0x78] sm:$0xff] %v7959
        %7988 = vst [vmem:[%s217 + $0x88] sm:$0xff] %v7960
        %7989 = vst [vmem:[%s217 + $0x98] sm:$0xff] %v7961
        %7990 = vst [vmem:[%s217 + $0xa8] sm:$0xff] %v7962
        %7991 = vst [vmem:[%s217 + $0xb8] sm:$0xff] %v7963
        %7992 = vst [vmem:[%s217 + $0xc8] sm:$0xff] %v7964
        %7993 = vst [vmem:[%s217 + $0xd8] sm:$0xff] %v7965
        %7994 = vst [vmem:[%s217 + $0xe8] sm:$0xff] %v7966
        %7995 = vst [vmem:[%s217 + $0xf8] sm:$0xff] %v7967
        %7996 = vst [vmem:[%s217 + $0x108] sm:$0xff] %v7968
        %7997 = vst [vmem:[%s217 + $0x118] sm:$0xff] %v7969
        %7998 = vst [vmem:[%s217 + $0x128] sm:$0xff] %v7970
        %7999 = vst [vmem:[%s217 + $0x138] sm:$0xff] %v7971
        %8000 = vst [vmem:[%s217 + $0x148] sm:$0xff] %v7972
        %8001 = vst [vmem:[%s217 + $0x158] sm:$0xff] %v7973
        %8002 = vst [vmem:[%s217 + $0x168] sm:$0xff] %v7974
        %8003 = vst [vmem:[%s217 + $0x178] sm:$0xff] %v7975
        %8004 = vst [vmem:[%s217 + $0x188] sm:$0xff] %v7976
        %8005 = vst [vmem:[%s217 + $0x198] sm:$0xff] %v7977
        %8006 = vst [vmem:[%s217 + $0x1a8] sm:$0xff] %v7978
        %8007 = vst [vmem:[%s217 + $0x1b8] sm:$0x7f] %v7979
        %v8008 = vld [vmem:[%s4374 + $0x10] sm:$0xe]
        %v8009 = vld [vmem:[%s4374 + $0x14] sm:$0xf]
        %v8010 = vld [vmem:[%s4374 + $0x18] sm:$0xf]
        %v8011 = vld [vmem:[%s4374 + $0x1c] sm:$0xf]
        %v8012 = vld [vmem:[%s4374 + $0x20] sm:$0xf]
        %v8013 = vld [vmem:[%s4374 + $0x24] sm:$0xf]
        %v8014 = vld [vmem:[%s4374 + $0x28] sm:$0xf]
        %v8015 = vld [vmem:[%s4374 + $0x2c] sm:$0xf]
        %v8016 = vld [vmem:[%s4374 + $0x30] sm:$0xf]
        %v8017 = vld [vmem:[%s4374 + $0x34] sm:$0xf]
        %v8018 = vld [vmem:[%s4374 + $0x38] sm:$0xf]
        %v8019 = vld [vmem:[%s4374 + $0x3c] sm:$0xf]
        %v8020 = vld [vmem:[%s4374 + $0x40] sm:$0xf]
        %v8021 = vld [vmem:[%s4374 + $0x44] sm:$0xf]
        %v8022 = vld [vmem:[%s4374 + $0x48] sm:$0xf]
        %v8023 = vld [vmem:[%s4374 + $0x4c] sm:$0xf]
        %v8024 = vld [vmem:[%s4374 + $0x50] sm:$0xf]
        %v8025 = vld [vmem:[%s4374 + $0x54] sm:$0xf]
        %v8026 = vld [vmem:[%s4374 + $0x58] sm:$0xf]
        %v8027 = vld [vmem:[%s4374 + $0x5c] sm:$0xf]
        %v8028 = vld [vmem:[%s4374 + $0x60] sm:$0xf]
        %v8029 = vld [vmem:[%s4374 + $0x64] sm:$0xf]
        %v8030 = vld [vmem:[%s4374 + $0x68] sm:$0xf]
        %v8031 = vld [vmem:[%s4374 + $0x6c] sm:$0xf]
        %v8032 = vld [vmem:[%s4374 + $0x70] sm:$0xf]
        %v8033 = vld [vmem:[%s4374 + $0x74] sm:$0xf]
        %v8034 = vld [vmem:[%s4374 + $0x78] sm:$0xf]
        %v8035 = vld [vmem:[%s4374 + $0x7c] sm:$0xf]
        %s8036 = scalar_lea.vmem %s234, 544
        %v8037 = vld [vmem:[%s8036] sm:$0xf]
        %v8038 = vld [vmem:[%s8036 + $0x4] sm:$0xf]
        %v8039 = vld [vmem:[%s8036 + $0x8] sm:$0xf]
        %v8040 = vld [vmem:[%s8036 + $0xc] sm:$0xf]
        %v8041 = vld [vmem:[%s8036 + $0x10] sm:$0xf]
        %v8042 = vld [vmem:[%s8036 + $0x14] sm:$0xf]
        %v8043 = vld [vmem:[%s8036 + $0x18] sm:$0xf]
        %v8044 = vld [vmem:[%s8036 + $0x1c] sm:$0xf]
        %v8045 = vld [vmem:[%s217 + $0x8] sm:$0xff]
        %v8046 = vld [vmem:[%s217 + $0x18] sm:$0xff]
        %v8047 = vld [vmem:[%s217 + $0x28] sm:$0xff]
        %v8048 = vld [vmem:[%s217 + $0x38] sm:$0xff]
        %v8049 = vld [vmem:[%s217 + $0x48] sm:$0xff]
        %v8050 = vld [vmem:[%s217 + $0x58] sm:$0xff]
        %v8051 = vld [vmem:[%s217 + $0x68] sm:$0xff]
        %v8052 = vld [vmem:[%s217 + $0x78] sm:$0xff]
        %v8053 = vld [vmem:[%s217 + $0x88] sm:$0xff]
        %v8054 = vld [vmem:[%s217 + $0x98] sm:$0xff]
        %v8055 = vld [vmem:[%s217 + $0xa8] sm:$0xff]
        %v8056 = vld [vmem:[%s217 + $0xb8] sm:$0xff]
        %v8057 = vld [vmem:[%s217 + $0xc8] sm:$0xff]
        %v8058 = vld [vmem:[%s217 + $0xd8] sm:$0xff]
        %v8059 = vld [vmem:[%s217 + $0xe8] sm:$0xff]
        %v8060 = vld [vmem:[%s217 + $0xf8] sm:$0xff]
        %v8061 = vld [vmem:[%s217 + $0x108] sm:$0xff]
        %v8062 = vld [vmem:[%s217 + $0x118] sm:$0xff]
        %v8063 = vld [vmem:[%s217 + $0x128] sm:$0xff]
        %v8064 = vld [vmem:[%s217 + $0x138] sm:$0xff]
        %v8065 = vld [vmem:[%s217 + $0x148] sm:$0xff]
        %v8066 = vld [vmem:[%s217 + $0x158] sm:$0xff]
        %v8067 = vld [vmem:[%s217 + $0x168] sm:$0xff]
        %v8068 = vld [vmem:[%s217 + $0x178] sm:$0xff]
        %v8069 = vld [vmem:[%s217 + $0x188] sm:$0xff]
        %v8070 = vld [vmem:[%s217 + $0x198] sm:$0xff]
        %v8071 = vld [vmem:[%s217 + $0x1a8] sm:$0xff]
        %v8072 = vld [vmem:[%s217 + $0x1b8] sm:$0x3f]
        %v8101 = vunpack.c.l.b16 %v8008
        %v8102 = vunpack.c.l.b16 %v8009
        %v8103 = vunpack.c.l.b16 %v8010
        %v8104 = vunpack.c.l.b16 %v8011
        %v8105 = vunpack.c.l.b16 %v8012
        %v8106 = vunpack.c.l.b16 %v8013
        %v8107 = vunpack.c.l.b16 %v8014
        %v8108 = vunpack.c.l.b16 %v8015
        %v8109 = vunpack.c.l.b16 %v8016
        %v8110 = vunpack.c.l.b16 %v8017
        %v8111 = vunpack.c.l.b16 %v8018
        %v8112 = vunpack.c.l.b16 %v8019
        %v8113 = vunpack.c.l.b16 %v8020
        %v8114 = vunpack.c.l.b16 %v8021
        %v8115 = vunpack.c.l.b16 %v8022
        %v8116 = vunpack.c.l.b16 %v8023
        %v8117 = vunpack.c.l.b16 %v8024
        %v8118 = vunpack.c.l.b16 %v8025
        %v8119 = vunpack.c.l.b16 %v8026
        %v8120 = vunpack.c.l.b16 %v8027
        %v8121 = vunpack.c.l.b16 %v8028
        %v8122 = vunpack.c.l.b16 %v8029
        %v8123 = vunpack.c.l.b16 %v8030
        %v8124 = vunpack.c.l.b16 %v8031
        %v8125 = vunpack.c.l.b16 %v8032
        %v8126 = vunpack.c.l.b16 %v8033
        %v8127 = vunpack.c.l.b16 %v8034
        %v8128 = vunpack.c.l.b16 %v8035
        %v8129 = vpack.c.b16 %v8102, %v8101
        %v8130 = vpack.c.b16 %v8104, %v8103
        %v8131 = vpack.c.b16 %v8106, %v8105
        %v8132 = vpack.c.b16 %v8108, %v8107
        %v8133 = vpack.c.b16 %v8110, %v8109
        %v8134 = vpack.c.b16 %v8112, %v8111
        %v8135 = vpack.c.b16 %v8114, %v8113
        %v8136 = vpack.c.b16 %v8116, %v8115
        %v8137 = vpack.c.b16 %v8118, %v8117
        %v8138 = vpack.c.b16 %v8120, %v8119
        %v8139 = vpack.c.b16 %v8122, %v8121
        %v8140 = vpack.c.b16 %v8124, %v8123
        %v8141 = vpack.c.b16 %v8126, %v8125
        %v8142 = vpack.c.b16 %v8128, %v8127
        %v8143 = vrot.slane %v8129, 1
        %v8144 = vrot.slane %v8130, 1
        %v8145 = vsel %vm1374, %v8143, %v8144
        %v8146 = vrot.slane %v8131, 1
        %v8147 = vsel %vm1374, %v8144, %v8146
        %v8148 = vrot.slane %v8132, 1
        %v8149 = vsel %vm1374, %v8146, %v8148
        %v8150 = vrot.slane %v8133, 1
        %v8151 = vsel %vm1374, %v8148, %v8150
        %v8152 = vrot.slane %v8134, 1
        %v8153 = vsel %vm1374, %v8150, %v8152
        %v8154 = vrot.slane %v8135, 1
        %v8155 = vsel %vm1374, %v8152, %v8154
        %v8156 = vrot.slane %v8136, 1
        %v8157 = vsel %vm1374, %v8154, %v8156
        %v8158 = vrot.slane %v8137, 1
        %v8159 = vsel %vm1374, %v8156, %v8158
        %v8160 = vrot.slane %v8138, 1
        %v8161 = vsel %vm1374, %v8158, %v8160
        %v8162 = vrot.slane %v8139, 1
        %v8163 = vsel %vm1374, %v8160, %v8162
        %v8164 = vrot.slane %v8140, 1
        %v8165 = vsel %vm1374, %v8162, %v8164
        %v8166 = vrot.slane %v8141, 1
        %v8167 = vsel %vm1374, %v8164, %v8166
        %v8168 = vrot.slane %v8142, 1
        %v8169 = vsel %vm1374, %v8166, %v8168
        %v8178 = vunpack.c.l.b16 %v8037
        %v8179 = vunpack.c.l.b16 %v8038
        %v8180 = vunpack.c.l.b16 %v8039
        %v8181 = vunpack.c.l.b16 %v8040
        %v8182 = vunpack.c.l.b16 %v8041
        %v8183 = vunpack.c.l.b16 %v8042
        %v8184 = vunpack.c.l.b16 %v8043
        %v8185 = vunpack.c.l.b16 %v8044
        %v8186 = vpack.c.b16 %v8179, %v8178
        %v8187 = vpack.c.b16 %v8181, %v8180
        %v8188 = vpack.c.b16 %v8183, %v8182
        %v8189 = vpack.c.b16 %v8185, %v8184
        %v8195 = vsel %vm468, %v8145, 0
        %v8198 = vsel %vm468, %v8147, 0
        %v8201 = vsel %vm468, %v8149, 0
        %v8204 = vsel %vm468, %v8151, 0
        %v8207 = vsel %vm468, %v8153, 0
        %v8210 = vsel %vm468, %v8155, 0
        %v8213 = vsel %vm468, %v8157, 0
        %v8216 = vsel %vm468, %v8159, 0
        %v8219 = vsel %vm468, %v8161, 0
        %v8222 = vsel %vm468, %v8163, 0
        %v8225 = vsel %vm468, %v8165, 0
        %v8228 = vsel %vm468, %v8167, 0
        %v8231 = vsel %vm468, %v8169, 0
        %v8234 = vsel %vm468, %v8168, 0
        %8236 = vmatprep.subr.bf16.mxu0 0
        %8237 = vmatpush1.bf16.msra.mxu0 %v8186
        %8238 = vmatprep.subr.bf16.mxu0 0
        %8239 = vmatpush1.bf16.msra.mxu0 %v8187
        %8240 = vmatprep.subr.bf16.mxu0 0
        %8241 = vmatpush1.bf16.msra.mxu0 %v8188
        %8242 = vmatprep.subr.bf16.mxu0 0
        %8243 = vmatpush1.bf16.msra.mxu0 %v8189
        %8244 = vmatprep.subr.bf16.mxu0 0
        %8245 = vmatpush1.bf16.msra.mxu0 0
        %8246 = vmatprep.subr.bf16.mxu0 0
        %8247 = vmatpush1.bf16.msra.mxu0 0
        %8248 = vmatprep.subr.bf16.mxu0 0
        %8249 = vmatpush1.bf16.msra.mxu0 0
        %8250 = vmatprep.subr.bf16.mxu0 0
        %8251 = vmatpush1.bf16.msra.mxu0 0
        %8252 = vmatprep.subr.bf16.mxu0 0
        %8253 = vmatpush1.bf16.msra.mxu0 0
        %8254 = vmatprep.subr.bf16.mxu0 0
        %8255 = vmatpush1.bf16.msra.mxu0 0
        %8256 = vmatprep.subr.bf16.mxu0 0
        %8257 = vmatpush1.bf16.msra.mxu0 0
        %8258 = vmatprep.subr.bf16.mxu0 0
        %8259 = vmatpush1.bf16.msra.mxu0 0
        %8260 = vmatprep.subr.bf16.mxu0 0
        %8261 = vmatpush1.bf16.msra.mxu0 0
        %8262 = vmatprep.subr.bf16.mxu0 0
        %8263 = vmatpush1.bf16.msra.mxu0 0
        %8264 = vmatprep.subr.bf16.mxu0 0
        %8265 = vmatpush1.bf16.msra.mxu0 0
        %8266 = vmatprep.subr.bf16.mxu0 0
        %8267 = vmatpush1.bf16.msra.mxu0 0
        %8268 = vmatprep.mubr.bf16.mxu0 0
        %8269 = vmatmul.mubr.bf16.gmra.mrb[0].mxu0 %v8195
        %v8270 = vpop.f32.mrb[0].mxu0
        %v8271 = vadd.f32 0.0, %v8270
        %v8272 = vpop.f32.mrb[0].mxu0
        %v8273 = vpop.f32.mrb[0].mxu0
        %v8274 = vadd.f32 0.0, %v8273
        %v8275 = vpop.f32.mrb[0].mxu0
        %8276 = vmatprep.mubr.bf16.mxu0 0
        %8277 = vmatmul.mubr.bf16.gmra.mrb[0].mxu0 %v8198
        %v8278 = vpop.f32.mrb[0].mxu0
        %v8279 = vadd.f32 0.0, %v8278
        %v8280 = vpop.f32.mrb[0].mxu0
        %v8281 = vpop.f32.mrb[0].mxu0
        %v8282 = vadd.f32 0.0, %v8281
        %v8283 = vpop.f32.mrb[0].mxu0
        %8284 = vmatprep.mubr.bf16.mxu0 0
        %8285 = vmatmul.mubr.bf16.gmra.mrb[0].mxu0 %v8201
        %v8286 = vpop.f32.mrb[0].mxu0
        %v8287 = vadd.f32 0.0, %v8286
        %v8288 = vpop.f32.mrb[0].mxu0
        %v8289 = vpop.f32.mrb[0].mxu0
        %v8290 = vadd.f32 0.0, %v8289
        %v8291 = vpop.f32.mrb[0].mxu0
        %8292 = vmatprep.mubr.bf16.mxu0 0
        %8293 = vmatmul.mubr.bf16.gmra.mrb[0].mxu0 %v8204
        %v8294 = vpop.f32.mrb[0].mxu0
        %v8295 = vadd.f32 0.0, %v8294
        %v8296 = vpop.f32.mrb[0].mxu0
        %v8297 = vpop.f32.mrb[0].mxu0
        %v8298 = vadd.f32 0.0, %v8297
        %v8299 = vpop.f32.mrb[0].mxu0
        %8300 = vmatprep.mubr.bf16.mxu0 0
        %8301 = vmatmul.mubr.bf16.gmra.mrb[0].mxu0 %v8207
        %v8302 = vpop.f32.mrb[0].mxu0
        %v8303 = vadd.f32 0.0, %v8302
        %v8304 = vpop.f32.mrb[0].mxu0
        %v8305 = vpop.f32.mrb[0].mxu0
        %v8306 = vadd.f32 0.0, %v8305
        %v8307 = vpop.f32.mrb[0].mxu0
        %8308 = vmatprep.mubr.bf16.mxu0 0
        %8309 = vmatmul.mubr.bf16.gmra.mrb[0].mxu0 %v8210
        %v8310 = vpop.f32.mrb[0].mxu0
        %v8311 = vadd.f32 0.0, %v8310
        %v8312 = vpop.f32.mrb[0].mxu0
        %v8313 = vpop.f32.mrb[0].mxu0
        %v8314 = vadd.f32 0.0, %v8313
        %v8315 = vpop.f32.mrb[0].mxu0
        %8316 = vmatprep.mubr.bf16.mxu0 0
        %8317 = vmatmul.mubr.bf16.gmra.mrb[0].mxu0 %v8213
        %v8318 = vpop.f32.mrb[0].mxu0
        %v8319 = vadd.f32 0.0, %v8318
        %v8320 = vpop.f32.mrb[0].mxu0
        %v8321 = vpop.f32.mrb[0].mxu0
        %v8322 = vadd.f32 0.0, %v8321
        %v8323 = vpop.f32.mrb[0].mxu0
        %8324 = vmatprep.mubr.bf16.mxu0 0
        %8325 = vmatmul.mubr.bf16.gmra.mrb[0].mxu0 %v8216
        %v8326 = vpop.f32.mrb[0].mxu0
        %v8327 = vadd.f32 0.0, %v8326
        %v8328 = vpop.f32.mrb[0].mxu0
        %v8329 = vpop.f32.mrb[0].mxu0
        %v8330 = vadd.f32 0.0, %v8329
        %v8331 = vpop.f32.mrb[0].mxu0
        %8332 = vmatprep.mubr.bf16.mxu0 0
        %8333 = vmatmul.mubr.bf16.gmra.mrb[0].mxu0 %v8219
        %v8334 = vpop.f32.mrb[0].mxu0
        %v8335 = vadd.f32 0.0, %v8334
        %v8336 = vpop.f32.mrb[0].mxu0
        %v8337 = vpop.f32.mrb[0].mxu0
        %v8338 = vadd.f32 0.0, %v8337
        %v8339 = vpop.f32.mrb[0].mxu0
        %8340 = vmatprep.mubr.bf16.mxu0 0
        %8341 = vmatmul.mubr.bf16.gmra.mrb[0].mxu0 %v8222
        %v8342 = vpop.f32.mrb[0].mxu0
        %v8343 = vadd.f32 0.0, %v8342
        %v8344 = vpop.f32.mrb[0].mxu0
        %v8345 = vpop.f32.mrb[0].mxu0
        %v8346 = vadd.f32 0.0, %v8345
        %v8347 = vpop.f32.mrb[0].mxu0
        %8348 = vmatprep.mubr.bf16.mxu0 0
        %8349 = vmatmul.mubr.bf16.gmra.mrb[0].mxu0 %v8225
        %v8350 = vpop.f32.mrb[0].mxu0
        %v8351 = vadd.f32 0.0, %v8350
        %v8352 = vpop.f32.mrb[0].mxu0
        %v8353 = vpop.f32.mrb[0].mxu0
        %v8354 = vadd.f32 0.0, %v8353
        %v8355 = vpop.f32.mrb[0].mxu0
        %8356 = vmatprep.mubr.bf16.mxu0 0
        %8357 = vmatmul.mubr.bf16.gmra.mrb[0].mxu0 %v8228
        %v8358 = vpop.f32.mrb[0].mxu0
        %v8359 = vadd.f32 0.0, %v8358
        %v8360 = vpop.f32.mrb[0].mxu0
        %v8361 = vpop.f32.mrb[0].mxu0
        %v8362 = vadd.f32 0.0, %v8361
        %v8363 = vpop.f32.mrb[0].mxu0
        %8364 = vmatprep.mubr.bf16.mxu0 0
        %8365 = vmatmul.mubr.bf16.gmra.mrb[0].mxu0 %v8231
        %v8366 = vpop.f32.mrb[0].mxu0
        %v8367 = vadd.f32 0.0, %v8366
        %v8368 = vpop.f32.mrb[0].mxu0
        %v8369 = vpop.f32.mrb[0].mxu0
        %v8370 = vadd.f32 0.0, %v8369
        %v8371 = vpop.f32.mrb[0].mxu0
        %8372 = vmatprep.mubr.bf16.mxu0 0
        %8373 = vmatmul.mubr.bf16.gmra.mrb[0].mxu0 %v8234
        %v8374 = vpop.f32.mrb[0].mxu0
        %v8375 = vadd.f32 0.0, %v8374
        %v8376 = vpop.f32.mrb[0].mxu0
        %v8377 = vpop.f32.mrb[0].mxu0
        %v8378 = vadd.f32 0.0, %v8377
        %v8379 = vpop.f32.mrb[0].mxu0
        %8380 = vdwg.mxu0
        %v8381 = vadd.f32 %v8045, %v8271
        %v8382 = vadd.f32 %v8046, %v8274
        %v8383 = vadd.f32 %v8047, %v8279
        %v8384 = vadd.f32 %v8048, %v8282
        %v8385 = vadd.f32 %v8049, %v8287
        %v8386 = vadd.f32 %v8050, %v8290
        %v8387 = vadd.f32 %v8051, %v8295
        %v8388 = vadd.f32 %v8052, %v8298
        %v8389 = vadd.f32 %v8053, %v8303
        %v8390 = vadd.f32 %v8054, %v8306
        %v8391 = vadd.f32 %v8055, %v8311
        %v8392 = vadd.f32 %v8056, %v8314
        %v8393 = vadd.f32 %v8057, %v8319
        %v8394 = vadd.f32 %v8058, %v8322
        %v8395 = vadd.f32 %v8059, %v8327
        %v8396 = vadd.f32 %v8060, %v8330
        %v8397 = vadd.f32 %v8061, %v8335
        %v8398 = vadd.f32 %v8062, %v8338
        %v8399 = vadd.f32 %v8063, %v8343
        %v8400 = vadd.f32 %v8064, %v8346
        %v8401 = vadd.f32 %v8065, %v8351
        %v8402 = vadd.f32 %v8066, %v8354
        %v8403 = vadd.f32 %v8067, %v8359
        %v8404 = vadd.f32 %v8068, %v8362
        %v8405 = vadd.f32 %v8069, %v8367
        %v8406 = vadd.f32 %v8070, %v8370
        %v8407 = vadd.f32 %v8071, %v8375
        %v8408 = vadd.f32 %v8072, %v8378
        %8409 = vst [vmem:[%s217 + $0x8] sm:$0xff] %v8381
        %8410 = vst [vmem:[%s217 + $0x18] sm:$0xff] %v8382
        %8411 = vst [vmem:[%s217 + $0x28] sm:$0xff] %v8383
        %8412 = vst [vmem:[%s217 + $0x38] sm:$0xff] %v8384
        %8413 = vst [vmem:[%s217 + $0x48] sm:$0xff] %v8385
        %8414 = vst [vmem:[%s217 + $0x58] sm:$0xff] %v8386
        %8415 = vst [vmem:[%s217 + $0x68] sm:$0xff] %v8387
        %8416 = vst [vmem:[%s217 + $0x78] sm:$0xff] %v8388
        %8417 = vst [vmem:[%s217 + $0x88] sm:$0xff] %v8389
        %8418 = vst [vmem:[%s217 + $0x98] sm:$0xff] %v8390
        %8419 = vst [vmem:[%s217 + $0xa8] sm:$0xff] %v8391
        %8420 = vst [vmem:[%s217 + $0xb8] sm:$0xff] %v8392
        %8421 = vst [vmem:[%s217 + $0xc8] sm:$0xff] %v8393
        %8422 = vst [vmem:[%s217 + $0xd8] sm:$0xff] %v8394
        %8423 = vst [vmem:[%s217 + $0xe8] sm:$0xff] %v8395
        %8424 = vst [vmem:[%s217 + $0xf8] sm:$0xff] %v8396
        %8425 = vst [vmem:[%s217 + $0x108] sm:$0xff] %v8397
        %8426 = vst [vmem:[%s217 + $0x118] sm:$0xff] %v8398
        %8427 = vst [vmem:[%s217 + $0x128] sm:$0xff] %v8399
        %8428 = vst [vmem:[%s217 + $0x138] sm:$0xff] %v8400
        %8429 = vst [vmem:[%s217 + $0x148] sm:$0xff] %v8401
        %8430 = vst [vmem:[%s217 + $0x158] sm:$0xff] %v8402
        %8431 = vst [vmem:[%s217 + $0x168] sm:$0xff] %v8403
        %8432 = vst [vmem:[%s217 + $0x178] sm:$0xff] %v8404
        %8433 = vst [vmem:[%s217 + $0x188] sm:$0xff] %v8405
        %8434 = vst [vmem:[%s217 + $0x198] sm:$0xff] %v8406
        %8435 = vst [vmem:[%s217 + $0x1a8] sm:$0xff] %v8407
        %8436 = vst [vmem:[%s217 + $0x1b8] sm:$0x3f] %v8408
        %s8437 = sand.u32 %s116, 1
        %s8438 = sand.u32 %s116, 1
        %s8439 = smul.addr %s8438, 448
        %s8440 = scalar_lea.vmem [#allocation2], %s8439
        // Predicated region
        $region33: #{grouped_conv2d_pallas.1} parent=31 // pred_check
          %p8441 = pneg %p126
        $region34: #{grouped_conv2d_pallas.1} parent=31 // pred_check_branch
          %8443 = sbr.rel (%p8441) target = $region36
        $region35: #{grouped_conv2d_pallas.1} parent=31 // pred_region
          %s8444 = smul.u32 2, %s18
          %s8445 = smul.addr %s19, 112
          %s8446 = sadd.s32 %s8444, %s8445
          %s8447 = smul.addr %s8446, 8
          %s8448 = scalar_lea.vmem %s3, %s8447
          // Predicated region
          $region37: #{grouped_conv2d_pallas.1} parent=35 // pred_check
            _
          $region38: #{grouped_conv2d_pallas.1} parent=35 // pred_check_branch
            %8450 = sbr.rel (0) target = $region40
          $region39: #{grouped_conv2d_pallas.1} parent=35 // pred_region
            // Predicated region
            $region41: #{grouped_conv2d_pallas.1} parent=39 // pred_check
              _
            $region42: #{grouped_conv2d_pallas.1} parent=39 // pred_check_branch
              %8452 = sbr.rel (0) target = $region44
            $region43: #{grouped_conv2d_pallas.1} parent=39 // pred_region
              loop: start=0, step=1, limit=1
              $region45: #{grouped_conv2d_pallas.1} parent=43 // loop_pre_header
                _
              $region46: #{grouped_conv2d_pallas.1} parent=43 // loop_header
                %s8454 = sphi 0, %s8458
                %p8455 = scmp.ge.s32.totalorder %s8454, 1
                %s8459 = sphi %s8440, %s8440
                %s8460 = sphi %s8448, %s8448
              $region47: #{grouped_conv2d_pallas.1} parent=43 // loop_header_branch
                %8457 = sbr.rel (%p8455) target = $region51
              $region48: #{grouped_conv2d_pallas.1} parent=43 // loop_body
                %v8461 = vld [vmem:[%s8459] sm:$0xff]
                %8462 = vst [vmem:[%s8460] sm:$0xff] %v8461
                %v8463 = vld [vmem:[%s8459 + $0x8] sm:$0xff]
                %8464 = vst [vmem:[%s8460 + $0x8] sm:$0xff] %v8463
                %v8465 = vld [vmem:[%s8459 + $0x10] sm:$0xff]
                %8466 = vst [vmem:[%s8460 + $0x20] sm:$0xff] %v8465
                %v8467 = vld [vmem:[%s8459 + $0x18] sm:$0xff]
                %8468 = vst [vmem:[%s8460 + $0x28] sm:$0xff] %v8467
                %v8469 = vld [vmem:[%s8459 + $0x20] sm:$0xff]
                %8470 = vst [vmem:[%s8460 + $0x40] sm:$0xff] %v8469
                %v8471 = vld [vmem:[%s8459 + $0x28] sm:$0xff]
                %8472 = vst [vmem:[%s8460 + $0x48] sm:$0xff] %v8471
                %v8473 = vld [vmem:[%s8459 + $0x30] sm:$0xff]
                %8474 = vst [vmem:[%s8460 + $0x60] sm:$0xff] %v8473
                %v8475 = vld [vmem:[%s8459 + $0x38] sm:$0xff]
                %8476 = vst [vmem:[%s8460 + $0x68] sm:$0xff] %v8475
                %v8477 = vld [vmem:[%s8459 + $0x40] sm:$0xff]
                %8478 = vst [vmem:[%s8460 + $0x80] sm:$0xff] %v8477
                %v8479 = vld [vmem:[%s8459 + $0x48] sm:$0xff]
                %8480 = vst [vmem:[%s8460 + $0x88] sm:$0xff] %v8479
                %v8481 = vld [vmem:[%s8459 + $0x50] sm:$0xff]
                %8482 = vst [vmem:[%s8460 + $0xa0] sm:$0xff] %v8481
                %v8483 = vld [vmem:[%s8459 + $0x58] sm:$0xff]
                %8484 = vst [vmem:[%s8460 + $0xa8] sm:$0xff] %v8483
                %v8485 = vld [vmem:[%s8459 + $0x60] sm:$0xff]
                %8486 = vst [vmem:[%s8460 + $0xc0] sm:$0xff] %v8485
                %v8487 = vld [vmem:[%s8459 + $0x68] sm:$0xff]
                %8488 = vst [vmem:[%s8460 + $0xc8] sm:$0xff] %v8487
                %v8489 = vld [vmem:[%s8459 + $0x70] sm:$0xff]
                %8490 = vst [vmem:[%s8460 + $0xe0] sm:$0xff] %v8489
                %v8491 = vld [vmem:[%s8459 + $0x78] sm:$0xff]
                %8492 = vst [vmem:[%s8460 + $0xe8] sm:$0xff] %v8491
                %v8493 = vld [vmem:[%s8459 + $0x80] sm:$0xff]
                %8494 = vst [vmem:[%s8460 + $0x100] sm:$0xff] %v8493
                %v8495 = vld [vmem:[%s8459 + $0x88] sm:$0xff]
                %8496 = vst [vmem:[%s8460 + $0x108] sm:$0xff] %v8495
                %v8497 = vld [vmem:[%s8459 + $0x90] sm:$0xff]
                %8498 = vst [vmem:[%s8460 + $0x120] sm:$0xff] %v8497
                %v8499 = vld [vmem:[%s8459 + $0x98] sm:$0xff]
                %8500 = vst [vmem:[%s8460 + $0x128] sm:$0xff] %v8499
                %v8501 = vld [vmem:[%s8459 + $0xa0] sm:$0xff]
                %8502 = vst [vmem:[%s8460 + $0x140] sm:$0xff] %v8501
                %v8503 = vld [vmem:[%s8459 + $0xa8] sm:$0xff]
                %8504 = vst [vmem:[%s8460 + $0x148] sm:$0xff] %v8503
                %v8505 = vld [vmem:[%s8459 + $0xb0] sm:$0xff]
                %8506 = vst [vmem:[%s8460 + $0x160] sm:$0xff] %v8505
                %v8507 = vld [vmem:[%s8459 + $0xb8] sm:$0xff]
                %8508 = vst [vmem:[%s8460 + $0x168] sm:$0xff] %v8507
                %v8509 = vld [vmem:[%s8459 + $0xc0] sm:$0xff]
                %8510 = vst [vmem:[%s8460 + $0x180] sm:$0xff] %v8509
                %v8511 = vld [vmem:[%s8459 + $0xc8] sm:$0xff]
                %8512 = vst [vmem:[%s8460 + $0x188] sm:$0xff] %v8511
                %v8513 = vld [vmem:[%s8459 + $0xd0] sm:$0xff]
                %8514 = vst [vmem:[%s8460 + $0x1a0] sm:$0xff] %v8513
                %v8515 = vld [vmem:[%s8459 + $0xd8] sm:$0xff]
                %8516 = vst [vmem:[%s8460 + $0x1a8] sm:$0xff] %v8515
                %v8517 = vld [vmem:[%s8459 + $0xe0] sm:$0xff]
                %8518 = vst [vmem:[%s8460 + $0x1c0] sm:$0xff] %v8517
                %v8519 = vld [vmem:[%s8459 + $0xe8] sm:$0xff]
                %8520 = vst [vmem:[%s8460 + $0x1c8] sm:$0xff] %v8519
                %v8521 = vld [vmem:[%s8459 + $0xf0] sm:$0xff]
                %8522 = vst [vmem:[%s8460 + $0x1e0] sm:$0xff] %v8521
                %v8523 = vld [vmem:[%s8459 + $0xf8] sm:$0xff]
                %8524 = vst [vmem:[%s8460 + $0x1e8] sm:$0xff] %v8523
                %v8525 = vld [vmem:[%s8459 + $0x100] sm:$0xff]
                %8526 = vst [vmem:[%s8460 + $0x200] sm:$0xff] %v8525
                %v8527 = vld [vmem:[%s8459 + $0x108] sm:$0xff]
                %8528 = vst [vmem:[%s8460 + $0x208] sm:$0xff] %v8527
                %v8529 = vld [vmem:[%s8459 + $0x110] sm:$0xff]
                %8530 = vst [vmem:[%s8460 + $0x220] sm:$0xff] %v8529
                %v8531 = vld [vmem:[%s8459 + $0x118] sm:$0xff]
                %8532 = vst [vmem:[%s8460 + $0x228] sm:$0xff] %v8531
                %v8533 = vld [vmem:[%s8459 + $0x120] sm:$0xff]
                %8534 = vst [vmem:[%s8460 + $0x240] sm:$0xff] %v8533
                %v8535 = vld [vmem:[%s8459 + $0x128] sm:$0xff]
                %8536 = vst [vmem:[%s8460 + $0x248] sm:$0xff] %v8535
                %v8537 = vld [vmem:[%s8459 + $0x130] sm:$0xff]
                %8538 = vst [vmem:[%s8460 + $0x260] sm:$0xff] %v8537
                %v8539 = vld [vmem:[%s8459 + $0x138] sm:$0xff]
                %8540 = vst [vmem:[%s8460 + $0x268] sm:$0xff] %v8539
                %v8541 = vld [vmem:[%s8459 + $0x140] sm:$0xff]
                %8542 = vst [vmem:[%s8460 + $0x280] sm:$0xff] %v8541
                %v8543 = vld [vmem:[%s8459 + $0x148] sm:$0xff]
                %8544 = vst [vmem:[%s8460 + $0x288] sm:$0xff] %v8543
                %v8545 = vld [vmem:[%s8459 + $0x150] sm:$0xff]
                %8546 = vst [vmem:[%s8460 + $0x2a0] sm:$0xff] %v8545
                %v8547 = vld [vmem:[%s8459 + $0x158] sm:$0xff]
                %8548 = vst [vmem:[%s8460 + $0x2a8] sm:$0xff] %v8547
                %v8549 = vld [vmem:[%s8459 + $0x160] sm:$0xff]
                %8550 = vst [vmem:[%s8460 + $0x2c0] sm:$0xff] %v8549
                %v8551 = vld [vmem:[%s8459 + $0x168] sm:$0xff]
                %8552 = vst [vmem:[%s8460 + $0x2c8] sm:$0xff] %v8551
                %v8553 = vld [vmem:[%s8459 + $0x170] sm:$0xff]
                %8554 = vst [vmem:[%s8460 + $0x2e0] sm:$0xff] %v8553
                %v8555 = vld [vmem:[%s8459 + $0x178] sm:$0xff]
                %8556 = vst [vmem:[%s8460 + $0x2e8] sm:$0xff] %v8555
                %v8557 = vld [vmem:[%s8459 + $0x180] sm:$0xff]
                %8558 = vst [vmem:[%s8460 + $0x300] sm:$0xff] %v8557
                %v8559 = vld [vmem:[%s8459 + $0x188] sm:$0xff]
                %8560 = vst [vmem:[%s8460 + $0x308] sm:$0xff] %v8559
                %v8561 = vld [vmem:[%s8459 + $0x190] sm:$0xff]
                %8562 = vst [vmem:[%s8460 + $0x320] sm:$0xff] %v8561
                %v8563 = vld [vmem:[%s8459 + $0x198] sm:$0xff]
                %8564 = vst [vmem:[%s8460 + $0x328] sm:$0xff] %v8563
                %v8565 = vld [vmem:[%s8459 + $0x1a0] sm:$0xff]
                %8566 = vst [vmem:[%s8460 + $0x340] sm:$0xff] %v8565
                %v8567 = vld [vmem:[%s8459 + $0x1a8] sm:$0xff]
                %8568 = vst [vmem:[%s8460 + $0x348] sm:$0xff] %v8567
                %v8569 = vld [vmem:[%s8459 + $0x1b0] sm:$0xff]
                %8570 = vst [vmem:[%s8460 + $0x360] sm:$0xff] %v8569
                %v8571 = vld [vmem:[%s8459 + $0x1b8] sm:$0xff]
                %8572 = vst [vmem:[%s8460 + $0x368] sm:$0xff] %v8571
              $region49: #{grouped_conv2d_pallas.1} parent=43 // loop_footer
                %s8458 = sadd.s32 1, %s8454
              $region50: #{grouped_conv2d_pallas.1} parent=43 // loop_footer_branch
                %8453 = sbr.rel target = $region46
              $region51: #{grouped_conv2d_pallas.1} parent=43 // loop_exit
                _
            $region44: #{grouped_conv2d_pallas.1} parent=39 // pred_fallthru
              _
            // Predicated region
            $region52: #{grouped_conv2d_pallas.1} parent=39 // pred_check
              _
            $region53: #{grouped_conv2d_pallas.1} parent=39 // pred_check_branch
              %8574 = sbr.rel target = $region55
            $region54: #{grouped_conv2d_pallas.1} parent=39 // pred_region
              _
            $region55: #{grouped_conv2d_pallas.1} parent=39 // pred_fallthru
              _
          $region40: #{grouped_conv2d_pallas.1} parent=35 // pred_fallthru
            _
          %8575 = vnop
        $region36: #{grouped_conv2d_pallas.1} parent=31 // pred_fallthru
          _
      $region32: #{grouped_conv2d_pallas.1} parent=5 // pred_fallthru
        _
      %p8576 = scmp.le.s32.totalorder 2, %s9
      // Predicated region
      $region56: #{grouped_conv2d_pallas.1} parent=5 // pred_check
        %p8577 = pneg %p8576
      $region57: #{grouped_conv2d_pallas.1} parent=5 // pred_check_branch
        %8579 = sbr.rel (%p8577) target = $region59
      $region58: #{grouped_conv2d_pallas.1} parent=5 // pred_region
        %s8580 = ssub.s32 %s9, 2
        // Predicated region
        $region60: #{grouped_conv2d_pallas.1} parent=58 // pred_check
          %p8581 = pneg %p132
        $region61: #{grouped_conv2d_pallas.1} parent=58 // pred_check_branch
          %8583 = sbr.rel (%p8581) target = $region63
        $region62: #{grouped_conv2d_pallas.1} parent=58 // pred_region
          %s8584 = sand.u32 %s117, 1
          %s8585 = sand.u32 %s117, 1
          %s8586 = smul.addr %s8585, 448
          %s8587 = scalar_lea.vmem [#allocation2], %s8586
        $region63: #{grouped_conv2d_pallas.1} parent=58 // pred_fallthru
          _
      $region59: #{grouped_conv2d_pallas.1} parent=5 // pred_fallthru
        _
    $region6: #{grouped_conv2d_pallas.1} parent=1 // loop_footer
      %s13 = sadd.s32 1, %s9
    $region7: #{grouped_conv2d_pallas.1} parent=1 // loop_footer_branch
      %8 = sbr.rel target = $region3
    $region8: #{grouped_conv2d_pallas.1} parent=1 // loop_exit
      _

</llo_original>
